<compile_context>
chip_gen: v7x
topology: tpu7x:2x2x1
jax: 0.10.0
libtpu: 0.0.40
codegen_flags: <defaults>
</compile_context>

<pallas_src>
import functools

import numpy as np
import jax
import jax.numpy as jnp
from jax.experimental import pallas as pl
from jax.experimental.pallas import tpu as pltpu


def _round_up(x, m):
    return ((x + m - 1) // m) * m


def _vmem_capacity_bytes(default=64 << 20):
    """Best-effort physical VMEM size; used to pick per-generation tiling."""
    try:
        info = pltpu.get_tpu_info()
        for attr in ("vmem_capacity_bytes", "vmem_size_bytes", "vmem_bytes"):
            v = getattr(info, attr, None)
            if v:
                return int(v)
    except Exception:
        pass
    return default


# ---------------------------------------------------------------------------
# Host-side (trace-time) linear operators.  AdaptiveAvgPool2d and bilinear
# interpolation are linear maps over the spatial axes -> matmuls on the MXU.
# ---------------------------------------------------------------------------
def _adaptive_pool_matrix(in_size: int, out_size: int) -> np.ndarray:
    m = np.zeros((out_size, in_size), dtype=np.float32)
    for i in range(out_size):
        start = (i * in_size) // out_size
        end = -(-((i + 1) * in_size) // out_size)  # ceil
        m[i, start:end] = 1.0 / (end - start)
    return m


def _bilinear_matrix(in_size: int, out_size: int, align_corners: bool) -> np.ndarray:
    m = np.zeros((out_size, in_size), dtype=np.float32)
    for j in range(out_size):
        if align_corners:
            src = 0.0 if out_size == 1 else j * (in_size - 1) / (out_size - 1)
        else:
            src = (j + 0.5) * in_size / out_size - 0.5
            src = max(src, 0.0)
        i0 = min(int(np.floor(src)), in_size - 1)
        i1 = min(i0 + 1, in_size - 1)
        w1 = src - i0
        m[j, i0] += 1.0 - w1
        m[j, i1] += w1
    return m


# ---------------------------------------------------------------------------
# Stage A: fused adaptive-pool (HW-chunked reduction) -> 1x1 conv (BN folded)
# -> ReLU -> per-tap bottleneck-weight contraction Z, for ALL branches.
# Only the tiny Z matrix (Ktot, Cout) is written to HBM.
# ---------------------------------------------------------------------------
def _branch_kernel(p_ref, x_ref, w1_ref, b1_ref, wbr_ref, z_ref, pooled_ref, *,
                   branch_meta, num_hw_steps):
    k = pl.program_id(1)

    @pl.when(k == 0)
    def _init():
        pooled_ref[...] = jnp.zeros_like(pooled_ref)

    # one matmul pools every branch scale at once over this HW chunk
    pooled_ref[...] += jnp.dot(p_ref[...], x_ref[0],
                               preferred_element_type=jnp.float32)

    @pl.when(k == num_hw_steps - 1)
    def _finalize():
        pooled = pooled_ref[...].astype(jnp.bfloat16)
        for b, (off, ss, ssp) in enumerate(branch_meta):
            pb = pooled[off:off + ssp]                                # (ssp, Cin_pad)
            yb = jnp.dot(pb, w1_ref[b], preferred_element_type=jnp.float32)
            yb = jnp.maximum(yb + b1_ref[b], 0.0)                     # BN bias + ReLU
            rows = jax.lax.broadcasted_iota(jnp.int32, yb.shape, 0)
            yb = jnp.where(rows < ss, yb, 0.0).astype(jnp.bfloat16)   # zero pad rows
            z0 = 9 * off
            for t in range(9):                                        # tap = (dy, dx)
                z = jnp.dot(yb, wbr_ref[b, t], preferred_element_type=jnp.float32)
                z_ref[0, z0 + t * ssp:z0 + (t + 1) * ssp, :] = z.astype(z_ref.dtype)


def _branch_stage(p_all, x_flat, w1_all, b1_all, wbr_all, *,
                  branch_meta, ktot, cout, hw_chunk, vmem_limit):
    n, hw, cin_pad = x_flat.shape
    nb = w1_all.shape[0]
    sp_total = p_all.shape[0]
    num_hw_steps = hw // hw_chunk
    kernel = functools.partial(_branch_kernel, branch_meta=branch_meta,
                               num_hw_steps=num_hw_steps)
    return pl.pallas_call(
        kernel,
        out_shape=jax.ShapeDtypeStruct((n, ktot, cout), jnp.bfloat16),
        grid=(n, num_hw_steps),
        in_specs=[
            pl.BlockSpec((sp_total, hw_chunk), lambda i, k: (0, k)),
            pl.BlockSpec((1, hw_chunk, cin_pad), lambda i, k: (i, k, 0)),
            pl.BlockSpec((nb, cin_pad, cout), lambda i, k: (0, 0, 0)),
            pl.BlockSpec((nb, 1, cout), lambda i, k: (0, 0, 0)),
            pl.BlockSpec((nb, 9, cout, cout), lambda i, k: (0, 0, 0, 0)),
        ],
        out_specs=pl.BlockSpec((1, ktot, cout), lambda i, k: (i, 0, 0)),
        scratch_shapes=[pltpu.VMEM((sp_total, cin_pad), jnp.float32)],
        compiler_params=pltpu.CompilerParams(
            dimension_semantics=("parallel", "arbitrary"),
            vmem_limit_bytes=vmem_limit),
    )(p_all, x_flat, w1_all, b1_all, wbr_all)


# ---------------------------------------------------------------------------
# Stage B: 3x3 bottleneck conv (BN folded) + bias + ReLU as a tiled reduction.
#   grid = (N, Cout tiles, K steps).  Steps 0..KCx-1: one Cin chunk of the
#   identity (x) channels through the 9 conv taps (contiguous row windows of
#   the zero-padded flattened NHWC map).  Last step: ONE lane-dense matmul
#   U_all @ Z adds every branch's upsample+concat+conv contribution, then
#   bias + ReLU finalize into a bf16 output block.
# ---------------------------------------------------------------------------
def _bottleneck_kernel(x_ref, wx_ref, u_ref, z_ref, bias_ref, o_ref, acc_ref, *,
                       wp, hwp, num_cin_steps):
    k = pl.program_id(2)

    @pl.when(k == 0)
    def _init():
        acc_ref[...] = jnp.zeros_like(acc_ref)

    @pl.when(k < num_cin_steps)                 # identity (x) channels, one chunk / step
    def _identity_taps():
        acc = acc_ref[...]
        # TODO(synk): the 9 overlapping row windows start at dy*wp+dx (not always
        # 16-sublane aligned for bf16); if MLIR shows per-tap relayout copies, pad
        # the row stride and handle the dx shift with pltpu.roll instead.
        for dy in range(3):
            for dx in range(3):
                start = dy * wp + dx            # contiguous window of the padded map
                xs = x_ref[0, start:start + hwp, :]          # (H*Wp, ck) bf16
                acc = acc + jnp.dot(xs, wx_ref[dy, dx],
                                    preferred_element_type=jnp.float32)
        acc_ref[...] = acc

    @pl.when(k == num_cin_steps)                # branches (single matmul) + finalize
    def _branches_and_finalize():
        acc = acc_ref[...] + jnp.dot(u_ref[...], z_ref[0],
                                     preferred_element_type=jnp.float32)
        o_ref[0] = jnp.maximum(acc + bias_ref[...], 0.0).astype(o_ref.dtype)


def _bottleneck_stage(x_rows, w_x, u_all, z_all, bias3, *, wp, cout, ck, co_t,
                      vmem_limit):
    n, rpad, cin_pad = x_rows.shape
    hwp, ktot = u_all.shape
    kcx = cin_pad // ck                         # identity-channel reduction steps
    kc = kcx + 1                                # + 1 branch/finalize step
    n_co = cout // co_t
    kernel = functools.partial(_bottleneck_kernel, wp=wp, hwp=hwp,
                               num_cin_steps=kcx)
    return pl.pallas_call(
        kernel,
        out_shape=jax.ShapeDtypeStruct((n, hwp, cout), jnp.bfloat16),
        grid=(n, n_co, kc),
        in_specs=[
            pl.BlockSpec((1, rpad, ck),
                         lambda i, j, k: (i, 0, jnp.minimum(k, kcx - 1))),
            pl.BlockSpec((3, 3, ck, co_t),
                         lambda i, j, k: (0, 0, jnp.minimum(k, kcx - 1), j)),
            pl.BlockSpec((hwp, ktot), lambda i, j, k: (0, 0)),
            pl.BlockSpec((1, ktot, co_t), lambda i, j, k: (i, 0, j)),
            pl.BlockSpec((1, co_t), lambda i, j, k: (0, j)),
        ],
        out_specs=pl.BlockSpec((1, hwp, co_t), lambda i, j, k: (i, 0, j)),
        scratch_shapes=[pltpu.VMEM((hwp, co_t), jnp.float32)],
        compiler_params=pltpu.CompilerParams(
            dimension_semantics=("parallel", "parallel", "arbitrary"),
            vmem_limit_bytes=vmem_limit),
    )(x_rows, w_x, u_all, z_all, bias3)


# ---------------------------------------------------------------------------
# Public wrapper: NCHW f32 in / NCHW f32 out.
# ---------------------------------------------------------------------------
def pyramid_pooling_module(x_nchw, params, pool_scales, align_corners=False):
    n, cin, h, w = x_nchw.shape
    cout = params["branches"][0]["w"].shape[1]
    nb = len(pool_scales)
    hw = h * w
    hp, wp = h + 2, w + 2
    hwp = h * wp

    # ------- per-generation VMEM / tiling budgets ------------------------------
    vmem_cap = _vmem_capacity_bytes()
    if vmem_cap <= (64 << 20):                 # v7x-class: 64 MiB physical VMEM
        vmem_limit = 52 << 20
        ck_max, co_target = 512, 256
        a_chunk_target = 4 << 20
    else:                                      # v5e / v6e: 128 MiB physical VMEM
        vmem_limit = 100 << 20
        ck_max, co_target = 1024, 1 << 30      # co_target huge -> full-Cout tiles
        a_chunk_target = 12 << 20
    vmem_limit = max(32 << 20, min(vmem_limit, vmem_cap - (8 << 20)))

    # Cin chunking of the identity part of the bottleneck reduction
    cin_pad = _round_up(cin, 8)
    if cin_pad > ck_max:
        ck = ck_max
        cin_pad = _round_up(cin_pad, ck)
    else:
        ck = cin_pad

    # Cout tiling (second parallel grid axis; >=2 work units on v7x megacore)
    co_t = co_target if (cout > co_target and cout % co_target == 0) else cout

    # per-branch pooled-row layout: each branch padded to a sublane multiple
    branch_meta = []                            # (row offset, s*s, padded rows)
    off = 0
    for s in pool_scales:
        ss = s * s
        ssp = _round_up(ss, 8)
        branch_meta.append((off, ss, ssp))
        off += ssp
    sp_total = off
    ktot = 9 * sp_total                         # K of the fused branch matmul

    # ------- trace-time constants: pooling matrix P, lane-dense upsample U_all -
    p_all = np.zeros((sp_total, hw), np.float32)
    u_all = np.zeros((h, wp, ktot), np.float32)
    for b, s in enumerate(pool_scales):
        off_b, ss, ssp = branch_meta[b]
        p_all[off_b:off_b + ss, :] = np.kron(_adaptive_pool_matrix(h, s),
                                             _adaptive_pool_matrix(w, s))
        uh = _bilinear_matrix(s, h, align_corners)
        uw = _bilinear_matrix(s, w, align_corners)
        # zero rows model the conv's zero padding of the upsampled feature map
        uh_p = np.zeros((hp, s), np.float32); uh_p[1:h + 1] = uh
        uw_p = np.zeros((wp, s), np.float32); uw_p[1:w + 1] = uw
        for dy in range(3):
            for dx in range(3):
                t = dy * 3 + dx
                blk = np.kron(uh_p[dy:dy + h], uw_p[dx:dx + w]).reshape(h, w, ss)
                c0 = 9 * off_b + t * ssp
                u_all[:, :w, c0:c0 + ss] = blk
    # TODO(synk): for very large H,W switch U_all to the separable row x column
    # form (two small matmuls per tap) instead of this kron matrix.
    p_all = jnp.asarray(p_all, jnp.bfloat16)
    u_all = jnp.asarray(u_all.reshape(hwp, ktot), jnp.bfloat16)

    # ------- fold BN scales into conv weights; pad; cast to bf16 ---------------
    w1, b1 = [], []
    for br in params["branches"]:
        wf = br["w"] * br["scale"]                                   # (Cin, Cout)
        w1.append(jnp.pad(wf, ((0, cin_pad - cin), (0, 0))))
        b1.append(br["bias"])
    w1_all = jnp.stack(w1).astype(jnp.bfloat16)                      # (B, Cin_pad, Cout)
    b1_all = jnp.stack(b1).astype(jnp.float32)                       # (B, 1, Cout)

    bt = params["bottleneck"]
    w3f = bt["w"] * bt["scale"]                                      # (3,3,Ct,Cout) HWIO
    w_x = jnp.pad(w3f[:, :, :cin, :],
                  ((0, 0), (0, 0), (0, cin_pad - cin), (0, 0))).astype(jnp.bfloat16)
    wbr = w3f[:, :, cin:, :].reshape(3, 3, nb, cout, cout)
    wbr_all = jnp.transpose(wbr, (2, 0, 1, 3, 4)).reshape(nb, 9, cout, cout)
    wbr_all = wbr_all.astype(jnp.bfloat16)                           # (B, 9, Cout, Cout)
    b3 = bt["bias"].astype(jnp.float32)                              # (1, Cout)

    # ------- activations: channels-last bf16, channel- and spatially-padded ----
    x_nhwc = jnp.transpose(x_nchw, (0, 2, 3, 1)).astype(jnp.bfloat16)
    x_nhwc = jnp.pad(x_nhwc, ((0, 0), (0, 0), (0, 0), (0, cin_pad - cin)))
    x_flat = x_nhwc.reshape(n, hw, cin_pad)                          # stage A input
    x_pad = jnp.pad(x_nhwc, ((0, 0), (1, 1), (1, 1), (0, 0)))        # (N, H+2, W+2, Cp)
    x_rows = x_pad.reshape(n, hp * wp, cin_pad)
    x_rows = jnp.pad(x_rows, ((0, 0), (0, 8), (0, 0)))               # slack for dy=2 taps

    # HW chunking of the stage-A pooling reduction (bounds VMEM vs image size)
    hw_chunk = hw
    max_rows = max(128, a_chunk_target // (2 * cin_pad))
    if hw > max_rows and hw % 128 == 0:
        c = (min(hw, max_rows) // 128) * 128
        while c >= 128:
            if hw % c == 0:
                hw_chunk = c
                break
            c -= 128

    z_all = _branch_stage(p_all, x_flat, w1_all, b1_all, wbr_all,
                          branch_meta=branch_meta, ktot=ktot, cout=cout,
                          hw_chunk=hw_chunk, vmem_limit=vmem_limit)
    out_rows = _bottleneck_stage(x_rows, w_x, u_all, z_all, b3,
                                 wp=wp, cout=cout, ck=ck, co_t=co_t,
                                 vmem_limit=vmem_limit)
    out = out_rows.reshape(n, h, wp, cout)[:, :, :w, :]              # strip dead cols
    return jnp.transpose(out, (0, 3, 1, 2)).astype(jnp.float32)      # NCHW f32


# ---------------------------------------------------------------------------
# Pure-JAX f32 reference (same math, no Pallas) for a correctness check.
# ---------------------------------------------------------------------------
def ppm_reference(x_nchw, params, pool_scales, align_corners=False):
    n, cin, h, w = x_nchw.shape
    cout = params["branches"][0]["w"].shape[1]
    x = jnp.transpose(x_nchw, (0, 2, 3, 1)).astype(jnp.float32)
    x_flat = x.reshape(n, h * w, cin)
    feats = [x_flat]
    for i, s in enumerate(pool_scales):
        p = jnp.asarray(np.kron(_adaptive_pool_matrix(h, s), _adaptive_pool_matrix(w, s)))
        u = jnp.asarray(np.kron(_bilinear_matrix(s, h, align_corners),
                                _bilinear_matrix(s, w, align_corners)))
        br = params["branches"][i]
        pooled = jnp.einsum("sq,nqc->nsc", p, x_flat)
        y = jnp.maximum(jnp.einsum("nsc,co->nso", pooled, br["w"]) * br["scale"] + br["bias"], 0.0)
        feats.append(jnp.einsum("qs,nso->nqo", u, y))
    cat = jnp.concatenate(feats, axis=-1).reshape(n, h, w, cin + cout * len(pool_scales))
    catp = jnp.pad(cat, ((0, 0), (1, 1), (1, 1), (0, 0)))
    bt = params["bottleneck"]
    out = jnp.zeros((n, h, w, cout), jnp.float32)
    for dy in range(3):
        for dx in range(3):
            out = out + jnp.einsum("nhwc,co->nhwo",
                                   catp[:, dy:dy + h, dx:dx + w, :], bt["w"][dy, dx])
    out = jnp.maximum(out * bt["scale"] + bt["bias"], 0.0)
    return jnp.transpose(out, (0, 3, 1, 2))


# ---------------------------------------------------------------------------
# Deterministic synthetic parameter initialization (shapes from __init__).
# ---------------------------------------------------------------------------
def _fold_bn(key, c, eps=1e-5):
    k1, k2, k3, k4 = jax.random.split(key, 4)
    gamma = 1.0 + 0.1 * jax.random.normal(k1, (c,), jnp.float32)
    beta = 0.1 * jax.random.normal(k2, (c,), jnp.float32)
    mean = 0.05 * jax.random.normal(k3, (c,), jnp.float32)
    var = jax.random.uniform(k4, (c,), jnp.float32, minval=0.5, maxval=1.5)
    scale = gamma / jnp.sqrt(var + eps)
    bias = beta - mean * scale
    return scale.reshape(1, c), bias.reshape(1, c)


def init_params(key, in_channels, out_channels, pool_scales):
    params = {"branches": []}
    for _ in pool_scales:
        key, kw, kbn = jax.random.split(key, 3)
        w = 0.1 * jax.random.normal(kw, (in_channels, out_channels), jnp.float32)  # 1x1 conv
        scale, bias = _fold_bn(kbn, out_channels)
        params["branches"].append({"w": w, "scale": scale, "bias": bias})
    ct = in_channels + out_channels * len(pool_scales)
    key, kw, kbn = jax.random.split(key, 3)
    w3 = 0.05 * jax.random.normal(kw, (3, 3, ct, out_channels), jnp.float32)        # 3x3 conv (HWIO)
    scale, bias = _fold_bn(kbn, out_channels)
    params["bottleneck"] = {"w": w3, "scale": scale, "bias": bias}
    return params


if __name__ == "__main__":
    key = jax.random.PRNGKey(0)
    key, kx = jax.random.split(key)

    n, cin, h, w = 2, 4, 16, 16
    cout = 4
    pool_scales = (1, 2, 3, 6)

    x = jax.random.normal(kx, (n, cin, h, w), jnp.float32)
    params = init_params(key, cin, cout, pool_scales)

    fwd = jax.jit(functools.partial(pyramid_pooling_module,
                                    pool_scales=pool_scales, align_corners=False))
    out = jax.block_until_ready(fwd(x, params))
    assert out.shape == (n, cout, h, w), out.shape

    ref = jax.block_until_ready(ppm_reference(x, params, pool_scales, align_corners=False))
    max_err = float(jnp.max(jnp.abs(out - ref)))
    assert max_err < 5e-2, f"max abs error too large: {max_err}"
    print("KERNEL_OK")
</pallas_src>

<mosaic_0001>
module attributes {stable_mosaic.version = 11 : i64} {
  func.func @_branch_kernel(%arg0: i32, %arg1: i32, %arg2: memref<72x256xbf16, #tpu.memory_space<vmem>>, %arg3: memref<1x256x8xbf16, #tpu.memory_space<vmem>>, %arg4: memref<4x8x4xbf16, #tpu.memory_space<vmem>>, %arg5: memref<4x1x4xf32, #tpu.memory_space<vmem>>, %arg6: memref<4x9x4x4xbf16, #tpu.memory_space<vmem>>, %arg7: memref<1x648x4xbf16, #tpu.memory_space<vmem>>, %arg8: memref<72x8xf32, #tpu.memory_space<vmem>>) attributes {dimension_semantics = [#tpu.dimension_semantics<parallel>, #tpu.dimension_semantics<arbitrary>], iteration_bounds = array<i64: 2, 1>, scalar_prefetch = 0 : i64, scratch_operands = 1 : i64, tpu.core_type = #tpu.core_type<tc>, window_params = [{transform_indices = @transform_0, window_bounds = array<i64: 72, 256>}, {transform_indices = @transform_1, window_bounds = array<i64: 1, 256, 8>}, {pipeline_mode = #tpu.pipeline_mode<synchronous>, transform_indices = @transform_2, window_bounds = array<i64: 4, 8, 4>}, {pipeline_mode = #tpu.pipeline_mode<synchronous>, transform_indices = @transform_3, window_bounds = array<i64: 4, 1, 4>}, {pipeline_mode = #tpu.pipeline_mode<synchronous>, transform_indices = @transform_4, window_bounds = array<i64: 4, 9, 4, 4>}, {transform_indices = @transform_5, window_bounds = array<i64: 1, 648, 4>}]} {
    %c0_i32 = arith.constant 0 : i32
    %0 = arith.cmpi eq, %arg1, %c0_i32 : i32
    %1 = arith.extui %0 : i1 to i32
    %c0_i32_0 = arith.constant 0 : i32
    %2 = arith.cmpi ne, %1, %c0_i32_0 : i32
    scf.if %2 {
      %cst_11 = arith.constant 0.000000e+00 : f32
      %13 = vector.broadcast %cst_11 : f32 to vector<72x8xf32>
      %c0_12 = arith.constant 0 : index
      %c0_13 = arith.constant 0 : index
      %14 = vector.load %arg8[%c0_12, %c0_13] : memref<72x8xf32, #tpu.memory_space<vmem>>, vector<72x8xf32>
      tpu.vector_store %arg8[%c0_12, %c0_13], %13 {strides = array<i32>} : memref<72x8xf32, #tpu.memory_space<vmem>>, vector<72x8xf32>,
    } else {
    }
    %c0 = arith.constant 0 : index
    %c0_1 = arith.constant 0 : index
    %3 = vector.load %arg8[%c0, %c0_1] : memref<72x8xf32, #tpu.memory_space<vmem>>, vector<72x8xf32>
    %c0_2 = arith.constant 0 : index
    %c0_3 = arith.constant 0 : index
    %4 = vector.load %arg2[%c0_2, %c0_3] : memref<72x256xbf16, #tpu.memory_space<vmem>>, vector<72x256xbf16>
    %c0_4 = arith.constant 0 : index
    %c0_5 = arith.constant 0 : index
    %c0_6 = arith.constant 0 : index
    %5 = vector.load %arg3[%c0_4, %c0_5, %c0_6] : memref<1x256x8xbf16, #tpu.memory_space<vmem>>, vector<1x256x8xbf16>
    %6 = vector.shape_cast %5 : vector<1x256x8xbf16> to vector<256x8xbf16>
    %cst = arith.constant dense<0.000000e+00> : vector<72x8xf32>
    %7 = tpu.matmul %4, %6, %cst {dimension_numbers = #tpu.dot_dimension_numbers<[1], [0], [0], [1], [0, 0, 1, 1], [], []>} : vector<72x256xbf16>, vector<256x8xbf16>, vector<72x8xf32> -> vector<72x8xf32>
    %8 = arith.addf %3, %7 : vector<72x8xf32>
    %c0_7 = arith.constant 0 : index
    %c0_8 = arith.constant 0 : index
    %9 = vector.load %arg8[%c0_7, %c0_8] : memref<72x8xf32, #tpu.memory_space<vmem>>, vector<72x8xf32>
    tpu.vector_store %arg8[%c0_7, %c0_8], %8 {strides = array<i32>} : memref<72x8xf32, #tpu.memory_space<vmem>>, vector<72x8xf32>,
    %c0_i32_9 = arith.constant 0 : i32
    %10 = arith.cmpi eq, %arg1, %c0_i32_9 : i32
    %11 = arith.extui %10 : i1 to i32
    %c0_i32_10 = arith.constant 0 : i32
    %12 = arith.cmpi ne, %11, %c0_i32_10 : i32
    scf.if %12 {
      %c0_11 = arith.constant 0 : index
      %c0_12 = arith.constant 0 : index
      %13 = vector.load %arg8[%c0_11, %c0_12] : memref<72x8xf32, #tpu.memory_space<vmem>>, vector<72x8xf32>
      %14 = arith.truncf %13 : vector<72x8xf32> to vector<72x8xbf16>
      %15 = vector.extract_strided_slice %14 {offsets = [0, 0], sizes = [8, 8], strides = [1, 1]} : vector<72x8xbf16> to vector<8x8xbf16>
      %c0_13 = arith.constant 0 : index
      %c0_14 = arith.constant 0 : index
      %c0_15 = arith.constant 0 : index
      %16 = vector.load %arg4[%c0_13, %c0_14, %c0_15] : memref<4x8x4xbf16, #tpu.memory_space<vmem>>, vector<1x8x4xbf16>
      %17 = vector.shape_cast %16 : vector<1x8x4xbf16> to vector<8x4xbf16>
      %cst_16 = arith.constant dense<0.000000e+00> : vector<8x4xf32>
      %18 = tpu.matmul %15, %17, %cst_16 {dimension_numbers = #tpu.dot_dimension_numbers<[1], [0], [0], [1], [0, 0, 1, 1], [], []>} : vector<8x8xbf16>, vector<8x4xbf16>, vector<8x4xf32> -> vector<8x4xf32>
      %c0_17 = arith.constant 0 : index
      %c0_18 = arith.constant 0 : index
      %c0_19 = arith.constant 0 : index
      %19 = vector.load %arg5[%c0_17, %c0_18, %c0_19] : memref<4x1x4xf32, #tpu.memory_space<vmem>>, vector<1x1x4xf32>
      %20 = vector.shape_cast %19 : vector<1x1x4xf32> to vector<1x4xf32>
      %21 = vector.broadcast %20 : vector<1x4xf32> to vector<8x4xf32>
      %22 = arith.addf %18, %21 : vector<8x4xf32>
      %cst_20 = arith.constant 0.000000e+00 : f32
      %23 = vector.broadcast %cst_20 : f32 to vector<8x4xf32>
      %24 = arith.maximumf %22, %23 : vector<8x4xf32>
      %25 = tpu.iota {dimensions = array<i32: 0>} : vector<8x4xi32>
      %c1_i32 = arith.constant 1 : i32
      %26 = vector.broadcast %c1_i32 : i32 to vector<8x4xi32>
      %27 = arith.cmpi slt, %25, %26 : vector<8x4xi32>
      %cst_21 = arith.constant 0.000000e+00 : f32
      %28 = vector.broadcast %cst_21 : f32 to vector<8x4xf32>
      %29 = arith.select %27, %24, %28 : vector<8x4xi1>, vector<8x4xf32>
      %30 = arith.truncf %29 : vector<8x4xf32> to vector<8x4xbf16>
      %c0_22 = arith.constant 0 : index
      %c0_23 = arith.constant 0 : index
      %c0_24 = arith.constant 0 : index
      %c0_25 = arith.constant 0 : index
      %31 = vector.load %arg6[%c0_22, %c0_23, %c0_24, %c0_25] : memref<4x9x4x4xbf16, #tpu.memory_space<vmem>>, vector<1x1x4x4xbf16>
      %32 = vector.shape_cast %31 : vector<1x1x4x4xbf16> to vector<4x4xbf16>
      %cst_26 = arith.constant dense<0.000000e+00> : vector<8x4xf32>
      %33 = tpu.matmul %30, %32, %cst_26 {dimension_numbers = #tpu.dot_dimension_numbers<[1], [0], [0], [1], [0, 0, 1, 1], [], []>} : vector<8x4xbf16>, vector<4x4xbf16>, vector<8x4xf32> -> vector<8x4xf32>
      %34 = arith.truncf %33 : vector<8x4xf32> to vector<8x4xbf16>
      %c0_27 = arith.constant 0 : index
      %c0_28 = arith.constant 0 : index
      %c0_29 = arith.constant 0 : index
      %35 = vector.load %arg7[%c0_27, %c0_28, %c0_29] : memref<1x648x4xbf16, #tpu.memory_space<vmem>>, vector<1x8x4xbf16>
      %36 = vector.shape_cast %35 : vector<1x8x4xbf16> to vector<8x4xbf16>
      %37 = vector.shape_cast %34 : vector<8x4xbf16> to vector<1x8x4xbf16>
      tpu.vector_store %arg7[%c0_27, %c0_28, %c0_29], %37 {strides = array<i32>} : memref<1x648x4xbf16, #tpu.memory_space<vmem>>, vector<1x8x4xbf16>,
      %c0_30 = arith.constant 0 : index
      %c1 = arith.constant 1 : index
      %c0_31 = arith.constant 0 : index
      %c0_32 = arith.constant 0 : index
      %38 = vector.load %arg6[%c0_30, %c1, %c0_31, %c0_32] : memref<4x9x4x4xbf16, #tpu.memory_space<vmem>>, vector<1x1x4x4xbf16>
      %39 = vector.shape_cast %38 : vector<1x1x4x4xbf16> to vector<4x4xbf16>
      %cst_33 = arith.constant dense<0.000000e+00> : vector<8x4xf32>
      %40 = tpu.matmul %30, %39, %cst_33 {dimension_numbers = #tpu.dot_dimension_numbers<[1], [0], [0], [1], [0, 0, 1, 1], [], []>} : vector<8x4xbf16>, vector<4x4xbf16>, vector<8x4xf32> -> vector<8x4xf32>
      %41 = arith.truncf %40 : vector<8x4xf32> to vector<8x4xbf16>
      %c0_34 = arith.constant 0 : index
      %c8 = arith.constant 8 : index
      %c0_35 = arith.constant 0 : index
      %42 = vector.load %arg7[%c0_34, %c8, %c0_35] : memref<1x648x4xbf16, #tpu.memory_space<vmem>>, vector<1x8x4xbf16>
      %43 = vector.shape_cast %42 : vector<1x8x4xbf16> to vector<8x4xbf16>
      %44 = vector.shape_cast %41 : vector<8x4xbf16> to vector<1x8x4xbf16>
      tpu.vector_store %arg7[%c0_34, %c8, %c0_35], %44 {strides = array<i32>} : memref<1x648x4xbf16, #tpu.memory_space<vmem>>, vector<1x8x4xbf16>,
      %c0_36 = arith.constant 0 : index
      %c2 = arith.constant 2 : index
      %c0_37 = arith.constant 0 : index
      %c0_38 = arith.constant 0 : index
      %45 = vector.load %arg6[%c0_36, %c2, %c0_37, %c0_38] : memref<4x9x4x4xbf16, #tpu.memory_space<vmem>>, vector<1x1x4x4xbf16>
      %46 = vector.shape_cast %45 : vector<1x1x4x4xbf16> to vector<4x4xbf16>
      %cst_39 = arith.constant dense<0.000000e+00> : vector<8x4xf32>
      %47 = tpu.matmul %30, %46, %cst_39 {dimension_numbers = #tpu.dot_dimension_numbers<[1], [0], [0], [1], [0, 0, 1, 1], [], []>} : vector<8x4xbf16>, vector<4x4xbf16>, vector<8x4xf32> -> vector<8x4xf32>
      %48 = arith.truncf %47 : vector<8x4xf32> to vector<8x4xbf16>
      %c0_40 = arith.constant 0 : index
      %c16 = arith.constant 16 : index
      %c0_41 = arith.constant 0 : index
      %49 = vector.load %arg7[%c0_40, %c16, %c0_41] : memref<1x648x4xbf16, #tpu.memory_space<vmem>>, vector<1x8x4xbf16>
      %50 = vector.shape_cast %49 : vector<1x8x4xbf16> to vector<8x4xbf16>
      %51 = vector.shape_cast %48 : vector<8x4xbf16> to vector<1x8x4xbf16>
      tpu.vector_store %arg7[%c0_40, %c16, %c0_41], %51 {strides = array<i32>} : memref<1x648x4xbf16, #tpu.memory_space<vmem>>, vector<1x8x4xbf16>,
      %c0_42 = arith.constant 0 : index
      %c3 = arith.constant 3 : index
      %c0_43 = arith.constant 0 : index
      %c0_44 = arith.constant 0 : index
      %52 = vector.load %arg6[%c0_42, %c3, %c0_43, %c0_44] : memref<4x9x4x4xbf16, #tpu.memory_space<vmem>>, vector<1x1x4x4xbf16>
      %53 = vector.shape_cast %52 : vector<1x1x4x4xbf16> to vector<4x4xbf16>
      %cst_45 = arith.constant dense<0.000000e+00> : vector<8x4xf32>
      %54 = tpu.matmul %30, %53, %cst_45 {dimension_numbers = #tpu.dot_dimension_numbers<[1], [0], [0], [1], [0, 0, 1, 1], [], []>} : vector<8x4xbf16>, vector<4x4xbf16>, vector<8x4xf32> -> vector<8x4xf32>
      %55 = arith.truncf %54 : vector<8x4xf32> to vector<8x4xbf16>
      %c0_46 = arith.constant 0 : index
      %c24 = arith.constant 24 : index
      %c0_47 = arith.constant 0 : index
      %56 = vector.load %arg7[%c0_46, %c24, %c0_47] : memref<1x648x4xbf16, #tpu.memory_space<vmem>>, vector<1x8x4xbf16>
      %57 = vector.shape_cast %56 : vector<1x8x4xbf16> to vector<8x4xbf16>
      %58 = vector.shape_cast %55 : vector<8x4xbf16> to vector<1x8x4xbf16>
      tpu.vector_store %arg7[%c0_46, %c24, %c0_47], %58 {strides = array<i32>} : memref<1x648x4xbf16, #tpu.memory_space<vmem>>, vector<1x8x4xbf16>,
      %c0_48 = arith.constant 0 : index
      %c4 = arith.constant 4 : index
      %c0_49 = arith.constant 0 : index
      %c0_50 = arith.constant 0 : index
      %59 = vector.load %arg6[%c0_48, %c4, %c0_49, %c0_50] : memref<4x9x4x4xbf16, #tpu.memory_space<vmem>>, vector<1x1x4x4xbf16>
      %60 = vector.shape_cast %59 : vector<1x1x4x4xbf16> to vector<4x4xbf16>
      %cst_51 = arith.constant dense<0.000000e+00> : vector<8x4xf32>
      %61 = tpu.matmul %30, %60, %cst_51 {dimension_numbers = #tpu.dot_dimension_numbers<[1], [0], [0], [1], [0, 0, 1, 1], [], []>} : vector<8x4xbf16>, vector<4x4xbf16>, vector<8x4xf32> -> vector<8x4xf32>
      %62 = arith.truncf %61 : vector<8x4xf32> to vector<8x4xbf16>
      %c0_52 = arith.constant 0 : index
      %c32 = arith.constant 32 : index
      %c0_53 = arith.constant 0 : index
      %63 = vector.load %arg7[%c0_52, %c32, %c0_53] : memref<1x648x4xbf16, #tpu.memory_space<vmem>>, vector<1x8x4xbf16>
      %64 = vector.shape_cast %63 : vector<1x8x4xbf16> to vector<8x4xbf16>
      %65 = vector.shape_cast %62 : vector<8x4xbf16> to vector<1x8x4xbf16>
      tpu.vector_store %arg7[%c0_52, %c32, %c0_53], %65 {strides = array<i32>} : memref<1x648x4xbf16, #tpu.memory_space<vmem>>, vector<1x8x4xbf16>,
      %c0_54 = arith.constant 0 : index
      %c5 = arith.constant 5 : index
      %c0_55 = arith.constant 0 : index
      %c0_56 = arith.constant 0 : index
      %66 = vector.load %arg6[%c0_54, %c5, %c0_55, %c0_56] : memref<4x9x4x4xbf16, #tpu.memory_space<vmem>>, vector<1x1x4x4xbf16>
      %67 = vector.shape_cast %66 : vector<1x1x4x4xbf16> to vector<4x4xbf16>
      %cst_57 = arith.constant dense<0.000000e+00> : vector<8x4xf32>
      %68 = tpu.matmul %30, %67, %cst_57 {dimension_numbers = #tpu.dot_dimension_numbers<[1], [0], [0], [1], [0, 0, 1, 1], [], []>} : vector<8x4xbf16>, vector<4x4xbf16>, vector<8x4xf32> -> vector<8x4xf32>
      %69 = arith.truncf %68 : vector<8x4xf32> to vector<8x4xbf16>
      %c0_58 = arith.constant 0 : index
      %c40 = arith.constant 40 : index
      %c0_59 = arith.constant 0 : index
      %70 = vector.load %arg7[%c0_58, %c40, %c0_59] : memref<1x648x4xbf16, #tpu.memory_space<vmem>>, vector<1x8x4xbf16>
      %71 = vector.shape_cast %70 : vector<1x8x4xbf16> to vector<8x4xbf16>
      %72 = vector.shape_cast %69 : vector<8x4xbf16> to vector<1x8x4xbf16>
      tpu.vector_store %arg7[%c0_58, %c40, %c0_59], %72 {strides = array<i32>} : memref<1x648x4xbf16, #tpu.memory_space<vmem>>, vector<1x8x4xbf16>,
      %c0_60 = arith.constant 0 : index
      %c6 = arith.constant 6 : index
      %c0_61 = arith.constant 0 : index
      %c0_62 = arith.constant 0 : index
      %73 = vector.load %arg6[%c0_60, %c6, %c0_61, %c0_62] : memref<4x9x4x4xbf16, #tpu.memory_space<vmem>>, vector<1x1x4x4xbf16>
      %74 = vector.shape_cast %73 : vector<1x1x4x4xbf16> to vector<4x4xbf16>
      %cst_63 = arith.constant dense<0.000000e+00> : vector<8x4xf32>
      %75 = tpu.matmul %30, %74, %cst_63 {dimension_numbers = #tpu.dot_dimension_numbers<[1], [0], [0], [1], [0, 0, 1, 1], [], []>} : vector<8x4xbf16>, vector<4x4xbf16>, vector<8x4xf32> -> vector<8x4xf32>
      %76 = arith.truncf %75 : vector<8x4xf32> to vector<8x4xbf16>
      %c0_64 = arith.constant 0 : index
      %c48 = arith.constant 48 : index
      %c0_65 = arith.constant 0 : index
      %77 = vector.load %arg7[%c0_64, %c48, %c0_65] : memref<1x648x4xbf16, #tpu.memory_space<vmem>>, vector<1x8x4xbf16>
      %78 = vector.shape_cast %77 : vector<1x8x4xbf16> to vector<8x4xbf16>
      %79 = vector.shape_cast %76 : vector<8x4xbf16> to vector<1x8x4xbf16>
      tpu.vector_store %arg7[%c0_64, %c48, %c0_65], %79 {strides = array<i32>} : memref<1x648x4xbf16, #tpu.memory_space<vmem>>, vector<1x8x4xbf16>,
      %c0_66 = arith.constant 0 : index
      %c7 = arith.constant 7 : index
      %c0_67 = arith.constant 0 : index
      %c0_68 = arith.constant 0 : index
      %80 = vector.load %arg6[%c0_66, %c7, %c0_67, %c0_68] : memref<4x9x4x4xbf16, #tpu.memory_space<vmem>>, vector<1x1x4x4xbf16>
      %81 = vector.shape_cast %80 : vector<1x1x4x4xbf16> to vector<4x4xbf16>
      %cst_69 = arith.constant dense<0.000000e+00> : vector<8x4xf32>
      %82 = tpu.matmul %30, %81, %cst_69 {dimension_numbers = #tpu.dot_dimension_numbers<[1], [0], [0], [1], [0, 0, 1, 1], [], []>} : vector<8x4xbf16>, vector<4x4xbf16>, vector<8x4xf32> -> vector<8x4xf32>
      %83 = arith.truncf %82 : vector<8x4xf32> to vector<8x4xbf16>
      %c0_70 = arith.constant 0 : index
      %c56 = arith.constant 56 : index
      %c0_71 = arith.constant 0 : index
      %84 = vector.load %arg7[%c0_70, %c56, %c0_71] : memref<1x648x4xbf16, #tpu.memory_space<vmem>>, vector<1x8x4xbf16>
      %85 = vector.shape_cast %84 : vector<1x8x4xbf16> to vector<8x4xbf16>
      %86 = vector.shape_cast %83 : vector<8x4xbf16> to vector<1x8x4xbf16>
      tpu.vector_store %arg7[%c0_70, %c56, %c0_71], %86 {strides = array<i32>} : memref<1x648x4xbf16, #tpu.memory_space<vmem>>, vector<1x8x4xbf16>,
      %c0_72 = arith.constant 0 : index
      %c8_73 = arith.constant 8 : index
      %c0_74 = arith.constant 0 : index
      %c0_75 = arith.constant 0 : index
      %87 = vector.load %arg6[%c0_72, %c8_73, %c0_74, %c0_75] : memref<4x9x4x4xbf16, #tpu.memory_space<vmem>>, vector<1x1x4x4xbf16>
      %88 = vector.shape_cast %87 : vector<1x1x4x4xbf16> to vector<4x4xbf16>
      %cst_76 = arith.constant dense<0.000000e+00> : vector<8x4xf32>
      %89 = tpu.matmul %30, %88, %cst_76 {dimension_numbers = #tpu.dot_dimension_numbers<[1], [0], [0], [1], [0, 0, 1, 1], [], []>} : vector<8x4xbf16>, vector<4x4xbf16>, vector<8x4xf32> -> vector<8x4xf32>
      %90 = arith.truncf %89 : vector<8x4xf32> to vector<8x4xbf16>
      %c0_77 = arith.constant 0 : index
      %c64 = arith.constant 64 : index
      %c0_78 = arith.constant 0 : index
      %91 = vector.load %arg7[%c0_77, %c64, %c0_78] : memref<1x648x4xbf16, #tpu.memory_space<vmem>>, vector<1x8x4xbf16>
      %92 = vector.shape_cast %91 : vector<1x8x4xbf16> to vector<8x4xbf16>
      %93 = vector.shape_cast %90 : vector<8x4xbf16> to vector<1x8x4xbf16>
      tpu.vector_store %arg7[%c0_77, %c64, %c0_78], %93 {strides = array<i32>} : memref<1x648x4xbf16, #tpu.memory_space<vmem>>, vector<1x8x4xbf16>,
      %94 = vector.extract_strided_slice %14 {offsets = [8, 0], sizes = [8, 8], strides = [1, 1]} : vector<72x8xbf16> to vector<8x8xbf16>
      %c1_79 = arith.constant 1 : index
      %c0_80 = arith.constant 0 : index
      %c0_81 = arith.constant 0 : index
      %95 = vector.load %arg4[%c1_79, %c0_80, %c0_81] : memref<4x8x4xbf16, #tpu.memory_space<vmem>>, vector<1x8x4xbf16>
      %96 = vector.shape_cast %95 : vector<1x8x4xbf16> to vector<8x4xbf16>
      %cst_82 = arith.constant dense<0.000000e+00> : vector<8x4xf32>
      %97 = tpu.matmul %94, %96, %cst_82 {dimension_numbers = #tpu.dot_dimension_numbers<[1], [0], [0], [1], [0, 0, 1, 1], [], []>} : vector<8x8xbf16>, vector<8x4xbf16>, vector<8x4xf32> -> vector<8x4xf32>
      %c1_83 = arith.constant 1 : index
      %c0_84 = arith.constant 0 : index
      %c0_85 = arith.constant 0 : index
      %98 = vector.load %arg5[%c1_83, %c0_84, %c0_85] : memref<4x1x4xf32, #tpu.memory_space<vmem>>, vector<1x1x4xf32>
      %99 = vector.shape_cast %98 : vector<1x1x4xf32> to vector<1x4xf32>
      %100 = vector.broadcast %99 : vector<1x4xf32> to vector<8x4xf32>
      %101 = arith.addf %97, %100 : vector<8x4xf32>
      %cst_86 = arith.constant 0.000000e+00 : f32
      %102 = vector.broadcast %cst_86 : f32 to vector<8x4xf32>
      %103 = arith.maximumf %101, %102 : vector<8x4xf32>
      %104 = tpu.iota {dimensions = array<i32: 0>} : vector<8x4xi32>
      %c4_i32 = arith.constant 4 : i32
      %105 = vector.broadcast %c4_i32 : i32 to vector<8x4xi32>
      %106 = arith.cmpi slt, %104, %105 : vector<8x4xi32>
      %cst_87 = arith.constant 0.000000e+00 : f32
      %107 = vector.broadcast %cst_87 : f32 to vector<8x4xf32>
      %108 = arith.select %106, %103, %107 : vector<8x4xi1>, vector<8x4xf32>
      %109 = arith.truncf %108 : vector<8x4xf32> to vector<8x4xbf16>
      %c1_88 = arith.constant 1 : index
      %c0_89 = arith.constant 0 : index
      %c0_90 = arith.constant 0 : index
      %c0_91 = arith.constant 0 : index
      %110 = vector.load %arg6[%c1_88, %c0_89, %c0_90, %c0_91] : memref<4x9x4x4xbf16, #tpu.memory_space<vmem>>, vector<1x1x4x4xbf16>
      %111 = vector.shape_cast %110 : vector<1x1x4x4xbf16> to vector<4x4xbf16>
      %cst_92 = arith.constant dense<0.000000e+00> : vector<8x4xf32>
      %112 = tpu.matmul %109, %111, %cst_92 {dimension_numbers = #tpu.dot_dimension_numbers<[1], [0], [0], [1], [0, 0, 1, 1], [], []>} : vector<8x4xbf16>, vector<4x4xbf16>, vector<8x4xf32> -> vector<8x4xf32>
      %113 = arith.truncf %112 : vector<8x4xf32> to vector<8x4xbf16>
      %c0_93 = arith.constant 0 : index
      %c72 = arith.constant 72 : index
      %c0_94 = arith.constant 0 : index
      %114 = vector.load %arg7[%c0_93, %c72, %c0_94] : memref<1x648x4xbf16, #tpu.memory_space<vmem>>, vector<1x8x4xbf16>
      %115 = vector.shape_cast %114 : vector<1x8x4xbf16> to vector<8x4xbf16>
      %116 = vector.shape_cast %113 : vector<8x4xbf16> to vector<1x8x4xbf16>
      tpu.vector_store %arg7[%c0_93, %c72, %c0_94], %116 {strides = array<i32>} : memref<1x648x4xbf16, #tpu.memory_space<vmem>>, vector<1x8x4xbf16>,
      %c1_95 = arith.constant 1 : index
      %c1_96 = arith.constant 1 : index
      %c0_97 = arith.constant 0 : index
      %c0_98 = arith.constant 0 : index
      %117 = vector.load %arg6[%c1_95, %c1_96, %c0_97, %c0_98] : memref<4x9x4x4xbf16, #tpu.memory_space<vmem>>, vector<1x1x4x4xbf16>
      %118 = vector.shape_cast %117 : vector<1x1x4x4xbf16> to vector<4x4xbf16>
      %cst_99 = arith.constant dense<0.000000e+00> : vector<8x4xf32>
      %119 = tpu.matmul %109, %118, %cst_99 {dimension_numbers = #tpu.dot_dimension_numbers<[1], [0], [0], [1], [0, 0, 1, 1], [], []>} : vector<8x4xbf16>, vector<4x4xbf16>, vector<8x4xf32> -> vector<8x4xf32>
      %120 = arith.truncf %119 : vector<8x4xf32> to vector<8x4xbf16>
      %c0_100 = arith.constant 0 : index
      %c80 = arith.constant 80 : index
      %c0_101 = arith.constant 0 : index
      %121 = vector.load %arg7[%c0_100, %c80, %c0_101] : memref<1x648x4xbf16, #tpu.memory_space<vmem>>, vector<1x8x4xbf16>
      %122 = vector.shape_cast %121 : vector<1x8x4xbf16> to vector<8x4xbf16>
      %123 = vector.shape_cast %120 : vector<8x4xbf16> to vector<1x8x4xbf16>
      tpu.vector_store %arg7[%c0_100, %c80, %c0_101], %123 {strides = array<i32>} : memref<1x648x4xbf16, #tpu.memory_space<vmem>>, vector<1x8x4xbf16>,
      %c1_102 = arith.constant 1 : index
      %c2_103 = arith.constant 2 : index
      %c0_104 = arith.constant 0 : index
      %c0_105 = arith.constant 0 : index
      %124 = vector.load %arg6[%c1_102, %c2_103, %c0_104, %c0_105] : memref<4x9x4x4xbf16, #tpu.memory_space<vmem>>, vector<1x1x4x4xbf16>
      %125 = vector.shape_cast %124 : vector<1x1x4x4xbf16> to vector<4x4xbf16>
      %cst_106 = arith.constant dense<0.000000e+00> : vector<8x4xf32>
      %126 = tpu.matmul %109, %125, %cst_106 {dimension_numbers = #tpu.dot_dimension_numbers<[1], [0], [0], [1], [0, 0, 1, 1], [], []>} : vector<8x4xbf16>, vector<4x4xbf16>, vector<8x4xf32> -> vector<8x4xf32>
      %127 = arith.truncf %126 : vector<8x4xf32> to vector<8x4xbf16>
      %c0_107 = arith.constant 0 : index
      %c88 = arith.constant 88 : index
      %c0_108 = arith.constant 0 : index
      %128 = vector.load %arg7[%c0_107, %c88, %c0_108] : memref<1x648x4xbf16, #tpu.memory_space<vmem>>, vector<1x8x4xbf16>
      %129 = vector.shape_cast %128 : vector<1x8x4xbf16> to vector<8x4xbf16>
      %130 = vector.shape_cast %127 : vector<8x4xbf16> to vector<1x8x4xbf16>
      tpu.vector_store %arg7[%c0_107, %c88, %c0_108], %130 {strides = array<i32>} : memref<1x648x4xbf16, #tpu.memory_space<vmem>>, vector<1x8x4xbf16>,
      %c1_109 = arith.constant 1 : index
      %c3_110 = arith.constant 3 : index
      %c0_111 = arith.constant 0 : index
      %c0_112 = arith.constant 0 : index
      %131 = vector.load %arg6[%c1_109, %c3_110, %c0_111, %c0_112] : memref<4x9x4x4xbf16, #tpu.memory_space<vmem>>, vector<1x1x4x4xbf16>
      %132 = vector.shape_cast %131 : vector<1x1x4x4xbf16> to vector<4x4xbf16>
      %cst_113 = arith.constant dense<0.000000e+00> : vector<8x4xf32>
      %133 = tpu.matmul %109, %132, %cst_113 {dimension_numbers = #tpu.dot_dimension_numbers<[1], [0], [0], [1], [0, 0, 1, 1], [], []>} : vector<8x4xbf16>, vector<4x4xbf16>, vector<8x4xf32> -> vector<8x4xf32>
      %134 = arith.truncf %133 : vector<8x4xf32> to vector<8x4xbf16>
      %c0_114 = arith.constant 0 : index
      %c96 = arith.constant 96 : index
      %c0_115 = arith.constant 0 : index
      %135 = vector.load %arg7[%c0_114, %c96, %c0_115] : memref<1x648x4xbf16, #tpu.memory_space<vmem>>, vector<1x8x4xbf16>
      %136 = vector.shape_cast %135 : vector<1x8x4xbf16> to vector<8x4xbf16>
      %137 = vector.shape_cast %134 : vector<8x4xbf16> to vector<1x8x4xbf16>
      tpu.vector_store %arg7[%c0_114, %c96, %c0_115], %137 {strides = array<i32>} : memref<1x648x4xbf16, #tpu.memory_space<vmem>>, vector<1x8x4xbf16>,
      %c1_116 = arith.constant 1 : index
      %c4_117 = arith.constant 4 : index
      %c0_118 = arith.constant 0 : index
      %c0_119 = arith.constant 0 : index
      %138 = vector.load %arg6[%c1_116, %c4_117, %c0_118, %c0_119] : memref<4x9x4x4xbf16, #tpu.memory_space<vmem>>, vector<1x1x4x4xbf16>
      %139 = vector.shape_cast %138 : vector<1x1x4x4xbf16> to vector<4x4xbf16>
      %cst_120 = arith.constant dense<0.000000e+00> : vector<8x4xf32>
      %140 = tpu.matmul %109, %139, %cst_120 {dimension_numbers = #tpu.dot_dimension_numbers<[1], [0], [0], [1], [0, 0, 1, 1], [], []>} : vector<8x4xbf16>, vector<4x4xbf16>, vector<8x4xf32> -> vector<8x4xf32>
      %141 = arith.truncf %140 : vector<8x4xf32> to vector<8x4xbf16>
      %c0_121 = arith.constant 0 : index
      %c104 = arith.constant 104 : index
      %c0_122 = arith.constant 0 : index
      %142 = vector.load %arg7[%c0_121, %c104, %c0_122] : memref<1x648x4xbf16, #tpu.memory_space<vmem>>, vector<1x8x4xbf16>
      %143 = vector.shape_cast %142 : vector<1x8x4xbf16> to vector<8x4xbf16>
      %144 = vector.shape_cast %141 : vector<8x4xbf16> to vector<1x8x4xbf16>
      tpu.vector_store %arg7[%c0_121, %c104, %c0_122], %144 {strides = array<i32>} : memref<1x648x4xbf16, #tpu.memory_space<vmem>>, vector<1x8x4xbf16>,
      %c1_123 = arith.constant 1 : index
      %c5_124 = arith.constant 5 : index
      %c0_125 = arith.constant 0 : index
      %c0_126 = arith.constant 0 : index
      %145 = vector.load %arg6[%c1_123, %c5_124, %c0_125, %c0_126] : memref<4x9x4x4xbf16, #tpu.memory_space<vmem>>, vector<1x1x4x4xbf16>
      %146 = vector.shape_cast %145 : vector<1x1x4x4xbf16> to vector<4x4xbf16>
      %cst_127 = arith.constant dense<0.000000e+00> : vector<8x4xf32>
      %147 = tpu.matmul %109, %146, %cst_127 {dimension_numbers = #tpu.dot_dimension_numbers<[1], [0], [0], [1], [0, 0, 1, 1], [], []>} : vector<8x4xbf16>, vector<4x4xbf16>, vector<8x4xf32> -> vector<8x4xf32>
      %148 = arith.truncf %147 : vector<8x4xf32> to vector<8x4xbf16>
      %c0_128 = arith.constant 0 : index
      %c112 = arith.constant 112 : index
      %c0_129 = arith.constant 0 : index
      %149 = vector.load %arg7[%c0_128, %c112, %c0_129] : memref<1x648x4xbf16, #tpu.memory_space<vmem>>, vector<1x8x4xbf16>
      %150 = vector.shape_cast %149 : vector<1x8x4xbf16> to vector<8x4xbf16>
      %151 = vector.shape_cast %148 : vector<8x4xbf16> to vector<1x8x4xbf16>
      tpu.vector_store %arg7[%c0_128, %c112, %c0_129], %151 {strides = array<i32>} : memref<1x648x4xbf16, #tpu.memory_space<vmem>>, vector<1x8x4xbf16>,
      %c1_130 = arith.constant 1 : index
      %c6_131 = arith.constant 6 : index
      %c0_132 = arith.constant 0 : index
      %c0_133 = arith.constant 0 : index
      %152 = vector.load %arg6[%c1_130, %c6_131, %c0_132, %c0_133] : memref<4x9x4x4xbf16, #tpu.memory_space<vmem>>, vector<1x1x4x4xbf16>
      %153 = vector.shape_cast %152 : vector<1x1x4x4xbf16> to vector<4x4xbf16>
      %cst_134 = arith.constant dense<0.000000e+00> : vector<8x4xf32>
      %154 = tpu.matmul %109, %153, %cst_134 {dimension_numbers = #tpu.dot_dimension_numbers<[1], [0], [0], [1], [0, 0, 1, 1], [], []>} : vector<8x4xbf16>, vector<4x4xbf16>, vector<8x4xf32> -> vector<8x4xf32>
      %155 = arith.truncf %154 : vector<8x4xf32> to vector<8x4xbf16>
      %c0_135 = arith.constant 0 : index
      %c120 = arith.constant 120 : index
      %c0_136 = arith.constant 0 : index
      %156 = vector.load %arg7[%c0_135, %c120, %c0_136] : memref<1x648x4xbf16, #tpu.memory_space<vmem>>, vector<1x8x4xbf16>
      %157 = vector.shape_cast %156 : vector<1x8x4xbf16> to vector<8x4xbf16>
      %158 = vector.shape_cast %155 : vector<8x4xbf16> to vector<1x8x4xbf16>
      tpu.vector_store %arg7[%c0_135, %c120, %c0_136], %158 {strides = array<i32>} : memref<1x648x4xbf16, #tpu.memory_space<vmem>>, vector<1x8x4xbf16>,
      %c1_137 = arith.constant 1 : index
      %c7_138 = arith.constant 7 : index
      %c0_139 = arith.constant 0 : index
      %c0_140 = arith.constant 0 : index
      %159 = vector.load %arg6[%c1_137, %c7_138, %c0_139, %c0_140] : memref<4x9x4x4xbf16, #tpu.memory_space<vmem>>, vector<1x1x4x4xbf16>
      %160 = vector.shape_cast %159 : vector<1x1x4x4xbf16> to vector<4x4xbf16>
      %cst_141 = arith.constant dense<0.000000e+00> : vector<8x4xf32>
      %161 = tpu.matmul %109, %160, %cst_141 {dimension_numbers = #tpu.dot_dimension_numbers<[1], [0], [0], [1], [0, 0, 1, 1], [], []>} : vector<8x4xbf16>, vector<4x4xbf16>, vector<8x4xf32> -> vector<8x4xf32>
      %162 = arith.truncf %161 : vector<8x4xf32> to vector<8x4xbf16>
      %c0_142 = arith.constant 0 : index
      %c128 = arith.constant 128 : index
      %c0_143 = arith.constant 0 : index
      %163 = vector.load %arg7[%c0_142, %c128, %c0_143] : memref<1x648x4xbf16, #tpu.memory_space<vmem>>, vector<1x8x4xbf16>
      %164 = vector.shape_cast %163 : vector<1x8x4xbf16> to vector<8x4xbf16>
      %165 = vector.shape_cast %162 : vector<8x4xbf16> to vector<1x8x4xbf16>
      tpu.vector_store %arg7[%c0_142, %c128, %c0_143], %165 {strides = array<i32>} : memref<1x648x4xbf16, #tpu.memory_space<vmem>>, vector<1x8x4xbf16>,
      %c1_144 = arith.constant 1 : index
      %c8_145 = arith.constant 8 : index
      %c0_146 = arith.constant 0 : index
      %c0_147 = arith.constant 0 : index
      %166 = vector.load %arg6[%c1_144, %c8_145, %c0_146, %c0_147] : memref<4x9x4x4xbf16, #tpu.memory_space<vmem>>, vector<1x1x4x4xbf16>
      %167 = vector.shape_cast %166 : vector<1x1x4x4xbf16> to vector<4x4xbf16>
      %cst_148 = arith.constant dense<0.000000e+00> : vector<8x4xf32>
      %168 = tpu.matmul %109, %167, %cst_148 {dimension_numbers = #tpu.dot_dimension_numbers<[1], [0], [0], [1], [0, 0, 1, 1], [], []>} : vector<8x4xbf16>, vector<4x4xbf16>, vector<8x4xf32> -> vector<8x4xf32>
      %169 = arith.truncf %168 : vector<8x4xf32> to vector<8x4xbf16>
      %c0_149 = arith.constant 0 : index
      %c136 = arith.constant 136 : index
      %c0_150 = arith.constant 0 : index
      %170 = vector.load %arg7[%c0_149, %c136, %c0_150] : memref<1x648x4xbf16, #tpu.memory_space<vmem>>, vector<1x8x4xbf16>
      %171 = vector.shape_cast %170 : vector<1x8x4xbf16> to vector<8x4xbf16>
      %172 = vector.shape_cast %169 : vector<8x4xbf16> to vector<1x8x4xbf16>
      tpu.vector_store %arg7[%c0_149, %c136, %c0_150], %172 {strides = array<i32>} : memref<1x648x4xbf16, #tpu.memory_space<vmem>>, vector<1x8x4xbf16>,
      %173 = vector.extract_strided_slice %14 {offsets = [16, 0], sizes = [16, 8], strides = [1, 1]} : vector<72x8xbf16> to vector<16x8xbf16>
      %c2_151 = arith.constant 2 : index
      %c0_152 = arith.constant 0 : index
      %c0_153 = arith.constant 0 : index
      %174 = vector.load %arg4[%c2_151, %c0_152, %c0_153] : memref<4x8x4xbf16, #tpu.memory_space<vmem>>, vector<1x8x4xbf16>
      %175 = vector.shape_cast %174 : vector<1x8x4xbf16> to vector<8x4xbf16>
      %cst_154 = arith.constant dense<0.000000e+00> : vector<16x4xf32>
      %176 = tpu.matmul %173, %175, %cst_154 {dimension_numbers = #tpu.dot_dimension_numbers<[1], [0], [0], [1], [0, 0, 1, 1], [], []>} : vector<16x8xbf16>, vector<8x4xbf16>, vector<16x4xf32> -> vector<16x4xf32>
      %c2_155 = arith.constant 2 : index
      %c0_156 = arith.constant 0 : index
      %c0_157 = arith.constant 0 : index
      %177 = vector.load %arg5[%c2_155, %c0_156, %c0_157] : memref<4x1x4xf32, #tpu.memory_space<vmem>>, vector<1x1x4xf32>
      %178 = vector.shape_cast %177 : vector<1x1x4xf32> to vector<1x4xf32>
      %179 = vector.broadcast %178 : vector<1x4xf32> to vector<16x4xf32>
      %180 = arith.addf %176, %179 : vector<16x4xf32>
      %cst_158 = arith.constant 0.000000e+00 : f32
      %181 = vector.broadcast %cst_158 : f32 to vector<16x4xf32>
      %182 = arith.maximumf %180, %181 : vector<16x4xf32>
      %183 = tpu.iota {dimensions = array<i32: 0>} : vector<16x4xi32>
      %c9_i32 = arith.constant 9 : i32
      %184 = vector.broadcast %c9_i32 : i32 to vector<16x4xi32>
      %185 = arith.cmpi slt, %183, %184 : vector<16x4xi32>
      %cst_159 = arith.constant 0.000000e+00 : f32
      %186 = vector.broadcast %cst_159 : f32 to vector<16x4xf32>
      %187 = arith.select %185, %182, %186 : vector<16x4xi1>, vector<16x4xf32>
      %188 = arith.truncf %187 : vector<16x4xf32> to vector<16x4xbf16>
      %c2_160 = arith.constant 2 : index
      %c0_161 = arith.constant 0 : index
      %c0_162 = arith.constant 0 : index
      %c0_163 = arith.constant 0 : index
      %189 = vector.load %arg6[%c2_160, %c0_161, %c0_162, %c0_163] : memref<4x9x4x4xbf16, #tpu.memory_space<vmem>>, vector<1x1x4x4xbf16>
      %190 = vector.shape_cast %189 : vector<1x1x4x4xbf16> to vector<4x4xbf16>
      %cst_164 = arith.constant dense<0.000000e+00> : vector<16x4xf32>
      %191 = tpu.matmul %188, %190, %cst_164 {dimension_numbers = #tpu.dot_dimension_numbers<[1], [0], [0], [1], [0, 0, 1, 1], [], []>} : vector<16x4xbf16>, vector<4x4xbf16>, vector<16x4xf32> -> vector<16x4xf32>
      %192 = arith.truncf %191 : vector<16x4xf32> to vector<16x4xbf16>
      %c0_165 = arith.constant 0 : index
      %c144 = arith.constant 144 : index
      %c0_166 = arith.constant 0 : index
      %193 = vector.load %arg7[%c0_165, %c144, %c0_166] : memref<1x648x4xbf16, #tpu.memory_space<vmem>>, vector<1x16x4xbf16>
      %194 = vector.shape_cast %193 : vector<1x16x4xbf16> to vector<16x4xbf16>
      %195 = vector.shape_cast %192 : vector<16x4xbf16> to vector<1x16x4xbf16>
      tpu.vector_store %arg7[%c0_165, %c144, %c0_166], %195 {strides = array<i32>} : memref<1x648x4xbf16, #tpu.memory_space<vmem>>, vector<1x16x4xbf16>,
      %c2_167 = arith.constant 2 : index
      %c1_168 = arith.constant 1 : index
      %c0_169 = arith.constant 0 : index
      %c0_170 = arith.constant 0 : index
      %196 = vector.load %arg6[%c2_167, %c1_168, %c0_169, %c0_170] : memref<4x9x4x4xbf16, #tpu.memory_space<vmem>>, vector<1x1x4x4xbf16>
      %197 = vector.shape_cast %196 : vector<1x1x4x4xbf16> to vector<4x4xbf16>
      %cst_171 = arith.constant dense<0.000000e+00> : vector<16x4xf32>
      %198 = tpu.matmul %188, %197, %cst_171 {dimension_numbers = #tpu.dot_dimension_numbers<[1], [0], [0], [1], [0, 0, 1, 1], [], []>} : vector<16x4xbf16>, vector<4x4xbf16>, vector<16x4xf32> -> vector<16x4xf32>
      %199 = arith.truncf %198 : vector<16x4xf32> to vector<16x4xbf16>
      %c0_172 = arith.constant 0 : index
      %c160 = arith.constant 160 : index
      %c0_173 = arith.constant 0 : index
      %200 = vector.load %arg7[%c0_172, %c160, %c0_173] : memref<1x648x4xbf16, #tpu.memory_space<vmem>>, vector<1x16x4xbf16>
      %201 = vector.shape_cast %200 : vector<1x16x4xbf16> to vector<16x4xbf16>
      %202 = vector.shape_cast %199 : vector<16x4xbf16> to vector<1x16x4xbf16>
      tpu.vector_store %arg7[%c0_172, %c160, %c0_173], %202 {strides = array<i32>} : memref<1x648x4xbf16, #tpu.memory_space<vmem>>, vector<1x16x4xbf16>,
      %c2_174 = arith.constant 2 : index
      %c2_175 = arith.constant 2 : index
      %c0_176 = arith.constant 0 : index
      %c0_177 = arith.constant 0 : index
      %203 = vector.load %arg6[%c2_174, %c2_175, %c0_176, %c0_177] : memref<4x9x4x4xbf16, #tpu.memory_space<vmem>>, vector<1x1x4x4xbf16>
      %204 = vector.shape_cast %203 : vector<1x1x4x4xbf16> to vector<4x4xbf16>
      %cst_178 = arith.constant dense<0.000000e+00> : vector<16x4xf32>
      %205 = tpu.matmul %188, %204, %cst_178 {dimension_numbers = #tpu.dot_dimension_numbers<[1], [0], [0], [1], [0, 0, 1, 1], [], []>} : vector<16x4xbf16>, vector<4x4xbf16>, vector<16x4xf32> -> vector<16x4xf32>
      %206 = arith.truncf %205 : vector<16x4xf32> to vector<16x4xbf16>
      %c0_179 = arith.constant 0 : index
      %c176 = arith.constant 176 : index
      %c0_180 = arith.constant 0 : index
      %207 = vector.load %arg7[%c0_179, %c176, %c0_180] : memref<1x648x4xbf16, #tpu.memory_space<vmem>>, vector<1x16x4xbf16>
      %208 = vector.shape_cast %207 : vector<1x16x4xbf16> to vector<16x4xbf16>
      %209 = vector.shape_cast %206 : vector<16x4xbf16> to vector<1x16x4xbf16>
      tpu.vector_store %arg7[%c0_179, %c176, %c0_180], %209 {strides = array<i32>} : memref<1x648x4xbf16, #tpu.memory_space<vmem>>, vector<1x16x4xbf16>,
      %c2_181 = arith.constant 2 : index
      %c3_182 = arith.constant 3 : index
      %c0_183 = arith.constant 0 : index
      %c0_184 = arith.constant 0 : index
      %210 = vector.load %arg6[%c2_181, %c3_182, %c0_183, %c0_184] : memref<4x9x4x4xbf16, #tpu.memory_space<vmem>>, vector<1x1x4x4xbf16>
      %211 = vector.shape_cast %210 : vector<1x1x4x4xbf16> to vector<4x4xbf16>
      %cst_185 = arith.constant dense<0.000000e+00> : vector<16x4xf32>
      %212 = tpu.matmul %188, %211, %cst_185 {dimension_numbers = #tpu.dot_dimension_numbers<[1], [0], [0], [1], [0, 0, 1, 1], [], []>} : vector<16x4xbf16>, vector<4x4xbf16>, vector<16x4xf32> -> vector<16x4xf32>
      %213 = arith.truncf %212 : vector<16x4xf32> to vector<16x4xbf16>
      %c0_186 = arith.constant 0 : index
      %c192 = arith.constant 192 : index
      %c0_187 = arith.constant 0 : index
      %214 = vector.load %arg7[%c0_186, %c192, %c0_187] : memref<1x648x4xbf16, #tpu.memory_space<vmem>>, vector<1x16x4xbf16>
      %215 = vector.shape_cast %214 : vector<1x16x4xbf16> to vector<16x4xbf16>
      %216 = vector.shape_cast %213 : vector<16x4xbf16> to vector<1x16x4xbf16>
      tpu.vector_store %arg7[%c0_186, %c192, %c0_187], %216 {strides = array<i32>} : memref<1x648x4xbf16, #tpu.memory_space<vmem>>, vector<1x16x4xbf16>,
      %c2_188 = arith.constant 2 : index
      %c4_189 = arith.constant 4 : index
      %c0_190 = arith.constant 0 : index
      %c0_191 = arith.constant 0 : index
      %217 = vector.load %arg6[%c2_188, %c4_189, %c0_190, %c0_191] : memref<4x9x4x4xbf16, #tpu.memory_space<vmem>>, vector<1x1x4x4xbf16>
      %218 = vector.shape_cast %217 : vector<1x1x4x4xbf16> to vector<4x4xbf16>
      %cst_192 = arith.constant dense<0.000000e+00> : vector<16x4xf32>
      %219 = tpu.matmul %188, %218, %cst_192 {dimension_numbers = #tpu.dot_dimension_numbers<[1], [0], [0], [1], [0, 0, 1, 1], [], []>} : vector<16x4xbf16>, vector<4x4xbf16>, vector<16x4xf32> -> vector<16x4xf32>
      %220 = arith.truncf %219 : vector<16x4xf32> to vector<16x4xbf16>
      %c0_193 = arith.constant 0 : index
      %c208 = arith.constant 208 : index
      %c0_194 = arith.constant 0 : index
      %221 = vector.load %arg7[%c0_193, %c208, %c0_194] : memref<1x648x4xbf16, #tpu.memory_space<vmem>>, vector<1x16x4xbf16>
      %222 = vector.shape_cast %221 : vector<1x16x4xbf16> to vector<16x4xbf16>
      %223 = vector.shape_cast %220 : vector<16x4xbf16> to vector<1x16x4xbf16>
      tpu.vector_store %arg7[%c0_193, %c208, %c0_194], %223 {strides = array<i32>} : memref<1x648x4xbf16, #tpu.memory_space<vmem>>, vector<1x16x4xbf16>,
      %c2_195 = arith.constant 2 : index
      %c5_196 = arith.constant 5 : index
      %c0_197 = arith.constant 0 : index
      %c0_198 = arith.constant 0 : index
      %224 = vector.load %arg6[%c2_195, %c5_196, %c0_197, %c0_198] : memref<4x9x4x4xbf16, #tpu.memory_space<vmem>>, vector<1x1x4x4xbf16>
      %225 = vector.shape_cast %224 : vector<1x1x4x4xbf16> to vector<4x4xbf16>
      %cst_199 = arith.constant dense<0.000000e+00> : vector<16x4xf32>
      %226 = tpu.matmul %188, %225, %cst_199 {dimension_numbers = #tpu.dot_dimension_numbers<[1], [0], [0], [1], [0, 0, 1, 1], [], []>} : vector<16x4xbf16>, vector<4x4xbf16>, vector<16x4xf32> -> vector<16x4xf32>
      %227 = arith.truncf %226 : vector<16x4xf32> to vector<16x4xbf16>
      %c0_200 = arith.constant 0 : index
      %c224 = arith.constant 224 : index
      %c0_201 = arith.constant 0 : index
      %228 = vector.load %arg7[%c0_200, %c224, %c0_201] : memref<1x648x4xbf16, #tpu.memory_space<vmem>>, vector<1x16x4xbf16>
      %229 = vector.shape_cast %228 : vector<1x16x4xbf16> to vector<16x4xbf16>
      %230 = vector.shape_cast %227 : vector<16x4xbf16> to vector<1x16x4xbf16>
      tpu.vector_store %arg7[%c0_200, %c224, %c0_201], %230 {strides = array<i32>} : memref<1x648x4xbf16, #tpu.memory_space<vmem>>, vector<1x16x4xbf16>,
      %c2_202 = arith.constant 2 : index
      %c6_203 = arith.constant 6 : index
      %c0_204 = arith.constant 0 : index
      %c0_205 = arith.constant 0 : index
      %231 = vector.load %arg6[%c2_202, %c6_203, %c0_204, %c0_205] : memref<4x9x4x4xbf16, #tpu.memory_space<vmem>>, vector<1x1x4x4xbf16>
      %232 = vector.shape_cast %231 : vector<1x1x4x4xbf16> to vector<4x4xbf16>
      %cst_206 = arith.constant dense<0.000000e+00> : vector<16x4xf32>
      %233 = tpu.matmul %188, %232, %cst_206 {dimension_numbers = #tpu.dot_dimension_numbers<[1], [0], [0], [1], [0, 0, 1, 1], [], []>} : vector<16x4xbf16>, vector<4x4xbf16>, vector<16x4xf32> -> vector<16x4xf32>
      %234 = arith.truncf %233 : vector<16x4xf32> to vector<16x4xbf16>
      %c0_207 = arith.constant 0 : index
      %c240 = arith.constant 240 : index
      %c0_208 = arith.constant 0 : index
      %235 = vector.load %arg7[%c0_207, %c240, %c0_208] : memref<1x648x4xbf16, #tpu.memory_space<vmem>>, vector<1x16x4xbf16>
      %236 = vector.shape_cast %235 : vector<1x16x4xbf16> to vector<16x4xbf16>
      %237 = vector.shape_cast %234 : vector<16x4xbf16> to vector<1x16x4xbf16>
      tpu.vector_store %arg7[%c0_207, %c240, %c0_208], %237 {strides = array<i32>} : memref<1x648x4xbf16, #tpu.memory_space<vmem>>, vector<1x16x4xbf16>,
      %c2_209 = arith.constant 2 : index
      %c7_210 = arith.constant 7 : index
      %c0_211 = arith.constant 0 : index
      %c0_212 = arith.constant 0 : index
      %238 = vector.load %arg6[%c2_209, %c7_210, %c0_211, %c0_212] : memref<4x9x4x4xbf16, #tpu.memory_space<vmem>>, vector<1x1x4x4xbf16>
      %239 = vector.shape_cast %238 : vector<1x1x4x4xbf16> to vector<4x4xbf16>
      %cst_213 = arith.constant dense<0.000000e+00> : vector<16x4xf32>
      %240 = tpu.matmul %188, %239, %cst_213 {dimension_numbers = #tpu.dot_dimension_numbers<[1], [0], [0], [1], [0, 0, 1, 1], [], []>} : vector<16x4xbf16>, vector<4x4xbf16>, vector<16x4xf32> -> vector<16x4xf32>
      %241 = arith.truncf %240 : vector<16x4xf32> to vector<16x4xbf16>
      %c0_214 = arith.constant 0 : index
      %c256 = arith.constant 256 : index
      %c0_215 = arith.constant 0 : index
      %242 = vector.load %arg7[%c0_214, %c256, %c0_215] : memref<1x648x4xbf16, #tpu.memory_space<vmem>>, vector<1x16x4xbf16>
      %243 = vector.shape_cast %242 : vector<1x16x4xbf16> to vector<16x4xbf16>
      %244 = vector.shape_cast %241 : vector<16x4xbf16> to vector<1x16x4xbf16>
      tpu.vector_store %arg7[%c0_214, %c256, %c0_215], %244 {strides = array<i32>} : memref<1x648x4xbf16, #tpu.memory_space<vmem>>, vector<1x16x4xbf16>,
      %c2_216 = arith.constant 2 : index
      %c8_217 = arith.constant 8 : index
      %c0_218 = arith.constant 0 : index
      %c0_219 = arith.constant 0 : index
      %245 = vector.load %arg6[%c2_216, %c8_217, %c0_218, %c0_219] : memref<4x9x4x4xbf16, #tpu.memory_space<vmem>>, vector<1x1x4x4xbf16>
      %246 = vector.shape_cast %245 : vector<1x1x4x4xbf16> to vector<4x4xbf16>
      %cst_220 = arith.constant dense<0.000000e+00> : vector<16x4xf32>
      %247 = tpu.matmul %188, %246, %cst_220 {dimension_numbers = #tpu.dot_dimension_numbers<[1], [0], [0], [1], [0, 0, 1, 1], [], []>} : vector<16x4xbf16>, vector<4x4xbf16>, vector<16x4xf32> -> vector<16x4xf32>
      %248 = arith.truncf %247 : vector<16x4xf32> to vector<16x4xbf16>
      %c0_221 = arith.constant 0 : index
      %c272 = arith.constant 272 : index
      %c0_222 = arith.constant 0 : index
      %249 = vector.load %arg7[%c0_221, %c272, %c0_222] : memref<1x648x4xbf16, #tpu.memory_space<vmem>>, vector<1x16x4xbf16>
      %250 = vector.shape_cast %249 : vector<1x16x4xbf16> to vector<16x4xbf16>
      %251 = vector.shape_cast %248 : vector<16x4xbf16> to vector<1x16x4xbf16>
      tpu.vector_store %arg7[%c0_221, %c272, %c0_222], %251 {strides = array<i32>} : memref<1x648x4xbf16, #tpu.memory_space<vmem>>, vector<1x16x4xbf16>,
      %252 = vector.extract_strided_slice %14 {offsets = [32, 0], sizes = [40, 8], strides = [1, 1]} : vector<72x8xbf16> to vector<40x8xbf16>
      %c3_223 = arith.constant 3 : index
      %c0_224 = arith.constant 0 : index
      %c0_225 = arith.constant 0 : index
      %253 = vector.load %arg4[%c3_223, %c0_224, %c0_225] : memref<4x8x4xbf16, #tpu.memory_space<vmem>>, vector<1x8x4xbf16>
      %254 = vector.shape_cast %253 : vector<1x8x4xbf16> to vector<8x4xbf16>
      %cst_226 = arith.constant dense<0.000000e+00> : vector<40x4xf32>
      %255 = tpu.matmul %252, %254, %cst_226 {dimension_numbers = #tpu.dot_dimension_numbers<[1], [0], [0], [1], [0, 0, 1, 1], [], []>} : vector<40x8xbf16>, vector<8x4xbf16>, vector<40x4xf32> -> vector<40x4xf32>
      %c3_227 = arith.constant 3 : index
      %c0_228 = arith.constant 0 : index
      %c0_229 = arith.constant 0 : index
      %256 = vector.load %arg5[%c3_227, %c0_228, %c0_229] : memref<4x1x4xf32, #tpu.memory_space<vmem>>, vector<1x1x4xf32>
      %257 = vector.shape_cast %256 : vector<1x1x4xf32> to vector<1x4xf32>
      %258 = vector.broadcast %257 : vector<1x4xf32> to vector<40x4xf32>
      %259 = arith.addf %255, %258 : vector<40x4xf32>
      %cst_230 = arith.constant 0.000000e+00 : f32
      %260 = vector.broadcast %cst_230 : f32 to vector<40x4xf32>
      %261 = arith.maximumf %259, %260 : vector<40x4xf32>
      %262 = tpu.iota {dimensions = array<i32: 0>} : vector<40x4xi32>
      %c36_i32 = arith.constant 36 : i32
      %263 = vector.broadcast %c36_i32 : i32 to vector<40x4xi32>
      %264 = arith.cmpi slt, %262, %263 : vector<40x4xi32>
      %cst_231 = arith.constant 0.000000e+00 : f32
      %265 = vector.broadcast %cst_231 : f32 to vector<40x4xf32>
      %266 = arith.select %264, %261, %265 : vector<40x4xi1>, vector<40x4xf32>
      %267 = arith.truncf %266 : vector<40x4xf32> to vector<40x4xbf16>
      %c3_232 = arith.constant 3 : index
      %c0_233 = arith.constant 0 : index
      %c0_234 = arith.constant 0 : index
      %c0_235 = arith.constant 0 : index
      %268 = vector.load %arg6[%c3_232, %c0_233, %c0_234, %c0_235] : memref<4x9x4x4xbf16, #tpu.memory_space<vmem>>, vector<1x1x4x4xbf16>
      %269 = vector.shape_cast %268 : vector<1x1x4x4xbf16> to vector<4x4xbf16>
      %cst_236 = arith.constant dense<0.000000e+00> : vector<40x4xf32>
      %270 = tpu.matmul %267, %269, %cst_236 {dimension_numbers = #tpu.dot_dimension_numbers<[1], [0], [0], [1], [0, 0, 1, 1], [], []>} : vector<40x4xbf16>, vector<4x4xbf16>, vector<40x4xf32> -> vector<40x4xf32>
      %271 = arith.truncf %270 : vector<40x4xf32> to vector<40x4xbf16>
      %c0_237 = arith.constant 0 : index
      %c288 = arith.constant 288 : index
      %c0_238 = arith.constant 0 : index
      %272 = vector.load %arg7[%c0_237, %c288, %c0_238] : memref<1x648x4xbf16, #tpu.memory_space<vmem>>, vector<1x40x4xbf16>
      %273 = vector.shape_cast %272 : vector<1x40x4xbf16> to vector<40x4xbf16>
      %274 = vector.shape_cast %271 : vector<40x4xbf16> to vector<1x40x4xbf16>
      tpu.vector_store %arg7[%c0_237, %c288, %c0_238], %274 {strides = array<i32>} : memref<1x648x4xbf16, #tpu.memory_space<vmem>>, vector<1x40x4xbf16>,
      %c3_239 = arith.constant 3 : index
      %c1_240 = arith.constant 1 : index
      %c0_241 = arith.constant 0 : index
      %c0_242 = arith.constant 0 : index
      %275 = vector.load %arg6[%c3_239, %c1_240, %c0_241, %c0_242] : memref<4x9x4x4xbf16, #tpu.memory_space<vmem>>, vector<1x1x4x4xbf16>
      %276 = vector.shape_cast %275 : vector<1x1x4x4xbf16> to vector<4x4xbf16>
      %cst_243 = arith.constant dense<0.000000e+00> : vector<40x4xf32>
      %277 = tpu.matmul %267, %276, %cst_243 {dimension_numbers = #tpu.dot_dimension_numbers<[1], [0], [0], [1], [0, 0, 1, 1], [], []>} : vector<40x4xbf16>, vector<4x4xbf16>, vector<40x4xf32> -> vector<40x4xf32>
      %278 = arith.truncf %277 : vector<40x4xf32> to vector<40x4xbf16>
      %c0_244 = arith.constant 0 : index
      %c328 = arith.constant 328 : index
      %c0_245 = arith.constant 0 : index
      %279 = vector.load %arg7[%c0_244, %c328, %c0_245] : memref<1x648x4xbf16, #tpu.memory_space<vmem>>, vector<1x40x4xbf16>
      %280 = vector.shape_cast %279 : vector<1x40x4xbf16> to vector<40x4xbf16>
      %281 = vector.shape_cast %278 : vector<40x4xbf16> to vector<1x40x4xbf16>
      tpu.vector_store %arg7[%c0_244, %c328, %c0_245], %281 {strides = array<i32>} : memref<1x648x4xbf16, #tpu.memory_space<vmem>>, vector<1x40x4xbf16>,
      %c3_246 = arith.constant 3 : index
      %c2_247 = arith.constant 2 : index
      %c0_248 = arith.constant 0 : index
      %c0_249 = arith.constant 0 : index
      %282 = vector.load %arg6[%c3_246, %c2_247, %c0_248, %c0_249] : memref<4x9x4x4xbf16, #tpu.memory_space<vmem>>, vector<1x1x4x4xbf16>
      %283 = vector.shape_cast %282 : vector<1x1x4x4xbf16> to vector<4x4xbf16>
      %cst_250 = arith.constant dense<0.000000e+00> : vector<40x4xf32>
      %284 = tpu.matmul %267, %283, %cst_250 {dimension_numbers = #tpu.dot_dimension_numbers<[1], [0], [0], [1], [0, 0, 1, 1], [], []>} : vector<40x4xbf16>, vector<4x4xbf16>, vector<40x4xf32> -> vector<40x4xf32>
      %285 = arith.truncf %284 : vector<40x4xf32> to vector<40x4xbf16>
      %c0_251 = arith.constant 0 : index
      %c368 = arith.constant 368 : index
      %c0_252 = arith.constant 0 : index
      %286 = vector.load %arg7[%c0_251, %c368, %c0_252] : memref<1x648x4xbf16, #tpu.memory_space<vmem>>, vector<1x40x4xbf16>
      %287 = vector.shape_cast %286 : vector<1x40x4xbf16> to vector<40x4xbf16>
      %288 = vector.shape_cast %285 : vector<40x4xbf16> to vector<1x40x4xbf16>
      tpu.vector_store %arg7[%c0_251, %c368, %c0_252], %288 {strides = array<i32>} : memref<1x648x4xbf16, #tpu.memory_space<vmem>>, vector<1x40x4xbf16>,
      %c3_253 = arith.constant 3 : index
      %c3_254 = arith.constant 3 : index
      %c0_255 = arith.constant 0 : index
      %c0_256 = arith.constant 0 : index
      %289 = vector.load %arg6[%c3_253, %c3_254, %c0_255, %c0_256] : memref<4x9x4x4xbf16, #tpu.memory_space<vmem>>, vector<1x1x4x4xbf16>
      %290 = vector.shape_cast %289 : vector<1x1x4x4xbf16> to vector<4x4xbf16>
      %cst_257 = arith.constant dense<0.000000e+00> : vector<40x4xf32>
      %291 = tpu.matmul %267, %290, %cst_257 {dimension_numbers = #tpu.dot_dimension_numbers<[1], [0], [0], [1], [0, 0, 1, 1], [], []>} : vector<40x4xbf16>, vector<4x4xbf16>, vector<40x4xf32> -> vector<40x4xf32>
      %292 = arith.truncf %291 : vector<40x4xf32> to vector<40x4xbf16>
      %c0_258 = arith.constant 0 : index
      %c408 = arith.constant 408 : index
      %c0_259 = arith.constant 0 : index
      %293 = vector.load %arg7[%c0_258, %c408, %c0_259] : memref<1x648x4xbf16, #tpu.memory_space<vmem>>, vector<1x40x4xbf16>
      %294 = vector.shape_cast %293 : vector<1x40x4xbf16> to vector<40x4xbf16>
      %295 = vector.shape_cast %292 : vector<40x4xbf16> to vector<1x40x4xbf16>
      tpu.vector_store %arg7[%c0_258, %c408, %c0_259], %295 {strides = array<i32>} : memref<1x648x4xbf16, #tpu.memory_space<vmem>>, vector<1x40x4xbf16>,
      %c3_260 = arith.constant 3 : index
      %c4_261 = arith.constant 4 : index
      %c0_262 = arith.constant 0 : index
      %c0_263 = arith.constant 0 : index
      %296 = vector.load %arg6[%c3_260, %c4_261, %c0_262, %c0_263] : memref<4x9x4x4xbf16, #tpu.memory_space<vmem>>, vector<1x1x4x4xbf16>
      %297 = vector.shape_cast %296 : vector<1x1x4x4xbf16> to vector<4x4xbf16>
      %cst_264 = arith.constant dense<0.000000e+00> : vector<40x4xf32>
      %298 = tpu.matmul %267, %297, %cst_264 {dimension_numbers = #tpu.dot_dimension_numbers<[1], [0], [0], [1], [0, 0, 1, 1], [], []>} : vector<40x4xbf16>, vector<4x4xbf16>, vector<40x4xf32> -> vector<40x4xf32>
      %299 = arith.truncf %298 : vector<40x4xf32> to vector<40x4xbf16>
      %c0_265 = arith.constant 0 : index
      %c448 = arith.constant 448 : index
      %c0_266 = arith.constant 0 : index
      %300 = vector.load %arg7[%c0_265, %c448, %c0_266] : memref<1x648x4xbf16, #tpu.memory_space<vmem>>, vector<1x40x4xbf16>
      %301 = vector.shape_cast %300 : vector<1x40x4xbf16> to vector<40x4xbf16>
      %302 = vector.shape_cast %299 : vector<40x4xbf16> to vector<1x40x4xbf16>
      tpu.vector_store %arg7[%c0_265, %c448, %c0_266], %302 {strides = array<i32>} : memref<1x648x4xbf16, #tpu.memory_space<vmem>>, vector<1x40x4xbf16>,
      %c3_267 = arith.constant 3 : index
      %c5_268 = arith.constant 5 : index
      %c0_269 = arith.constant 0 : index
      %c0_270 = arith.constant 0 : index
      %303 = vector.load %arg6[%c3_267, %c5_268, %c0_269, %c0_270] : memref<4x9x4x4xbf16, #tpu.memory_space<vmem>>, vector<1x1x4x4xbf16>
      %304 = vector.shape_cast %303 : vector<1x1x4x4xbf16> to vector<4x4xbf16>
      %cst_271 = arith.constant dense<0.000000e+00> : vector<40x4xf32>
      %305 = tpu.matmul %267, %304, %cst_271 {dimension_numbers = #tpu.dot_dimension_numbers<[1], [0], [0], [1], [0, 0, 1, 1], [], []>} : vector<40x4xbf16>, vector<4x4xbf16>, vector<40x4xf32> -> vector<40x4xf32>
      %306 = arith.truncf %305 : vector<40x4xf32> to vector<40x4xbf16>
      %c0_272 = arith.constant 0 : index
      %c488 = arith.constant 488 : index
      %c0_273 = arith.constant 0 : index
      %307 = vector.load %arg7[%c0_272, %c488, %c0_273] : memref<1x648x4xbf16, #tpu.memory_space<vmem>>, vector<1x40x4xbf16>
      %308 = vector.shape_cast %307 : vector<1x40x4xbf16> to vector<40x4xbf16>
      %309 = vector.shape_cast %306 : vector<40x4xbf16> to vector<1x40x4xbf16>
      tpu.vector_store %arg7[%c0_272, %c488, %c0_273], %309 {strides = array<i32>} : memref<1x648x4xbf16, #tpu.memory_space<vmem>>, vector<1x40x4xbf16>,
      %c3_274 = arith.constant 3 : index
      %c6_275 = arith.constant 6 : index
      %c0_276 = arith.constant 0 : index
      %c0_277 = arith.constant 0 : index
      %310 = vector.load %arg6[%c3_274, %c6_275, %c0_276, %c0_277] : memref<4x9x4x4xbf16, #tpu.memory_space<vmem>>, vector<1x1x4x4xbf16>
      %311 = vector.shape_cast %310 : vector<1x1x4x4xbf16> to vector<4x4xbf16>
      %cst_278 = arith.constant dense<0.000000e+00> : vector<40x4xf32>
      %312 = tpu.matmul %267, %311, %cst_278 {dimension_numbers = #tpu.dot_dimension_numbers<[1], [0], [0], [1], [0, 0, 1, 1], [], []>} : vector<40x4xbf16>, vector<4x4xbf16>, vector<40x4xf32> -> vector<40x4xf32>
      %313 = arith.truncf %312 : vector<40x4xf32> to vector<40x4xbf16>
      %c0_279 = arith.constant 0 : index
      %c528 = arith.constant 528 : index
      %c0_280 = arith.constant 0 : index
      %314 = vector.load %arg7[%c0_279, %c528, %c0_280] : memref<1x648x4xbf16, #tpu.memory_space<vmem>>, vector<1x40x4xbf16>
      %315 = vector.shape_cast %314 : vector<1x40x4xbf16> to vector<40x4xbf16>
      %316 = vector.shape_cast %313 : vector<40x4xbf16> to vector<1x40x4xbf16>
      tpu.vector_store %arg7[%c0_279, %c528, %c0_280], %316 {strides = array<i32>} : memref<1x648x4xbf16, #tpu.memory_space<vmem>>, vector<1x40x4xbf16>,
      %c3_281 = arith.constant 3 : index
      %c7_282 = arith.constant 7 : index
      %c0_283 = arith.constant 0 : index
      %c0_284 = arith.constant 0 : index
      %317 = vector.load %arg6[%c3_281, %c7_282, %c0_283, %c0_284] : memref<4x9x4x4xbf16, #tpu.memory_space<vmem>>, vector<1x1x4x4xbf16>
      %318 = vector.shape_cast %317 : vector<1x1x4x4xbf16> to vector<4x4xbf16>
      %cst_285 = arith.constant dense<0.000000e+00> : vector<40x4xf32>
      %319 = tpu.matmul %267, %318, %cst_285 {dimension_numbers = #tpu.dot_dimension_numbers<[1], [0], [0], [1], [0, 0, 1, 1], [], []>} : vector<40x4xbf16>, vector<4x4xbf16>, vector<40x4xf32> -> vector<40x4xf32>
      %320 = arith.truncf %319 : vector<40x4xf32> to vector<40x4xbf16>
      %c0_286 = arith.constant 0 : index
      %c568 = arith.constant 568 : index
      %c0_287 = arith.constant 0 : index
      %321 = vector.load %arg7[%c0_286, %c568, %c0_287] : memref<1x648x4xbf16, #tpu.memory_space<vmem>>, vector<1x40x4xbf16>
      %322 = vector.shape_cast %321 : vector<1x40x4xbf16> to vector<40x4xbf16>
      %323 = vector.shape_cast %320 : vector<40x4xbf16> to vector<1x40x4xbf16>
      tpu.vector_store %arg7[%c0_286, %c568, %c0_287], %323 {strides = array<i32>} : memref<1x648x4xbf16, #tpu.memory_space<vmem>>, vector<1x40x4xbf16>,
      %c3_288 = arith.constant 3 : index
      %c8_289 = arith.constant 8 : index
      %c0_290 = arith.constant 0 : index
      %c0_291 = arith.constant 0 : index
      %324 = vector.load %arg6[%c3_288, %c8_289, %c0_290, %c0_291] : memref<4x9x4x4xbf16, #tpu.memory_space<vmem>>, vector<1x1x4x4xbf16>
      %325 = vector.shape_cast %324 : vector<1x1x4x4xbf16> to vector<4x4xbf16>
      %cst_292 = arith.constant dense<0.000000e+00> : vector<40x4xf32>
      %326 = tpu.matmul %267, %325, %cst_292 {dimension_numbers = #tpu.dot_dimension_numbers<[1], [0], [0], [1], [0, 0, 1, 1], [], []>} : vector<40x4xbf16>, vector<4x4xbf16>, vector<40x4xf32> -> vector<40x4xf32>
      %327 = arith.truncf %326 : vector<40x4xf32> to vector<40x4xbf16>
      %c0_293 = arith.constant 0 : index
      %c608 = arith.constant 608 : index
      %c0_294 = arith.constant 0 : index
      %328 = vector.load %arg7[%c0_293, %c608, %c0_294] : memref<1x648x4xbf16, #tpu.memory_space<vmem>>, vector<1x40x4xbf16>
      %329 = vector.shape_cast %328 : vector<1x40x4xbf16> to vector<40x4xbf16>
      %330 = vector.shape_cast %327 : vector<40x4xbf16> to vector<1x40x4xbf16>
      tpu.vector_store %arg7[%c0_293, %c608, %c0_294], %330 {strides = array<i32>} : memref<1x648x4xbf16, #tpu.memory_space<vmem>>, vector<1x40x4xbf16>,
    } else {
    }
    return
  }
  func.func @transform_0(%arg0: i32, %arg1: i32) -> (i32, i32) {
    %c0_i32 = arith.constant 0 : i32
    %c0_i32_0 = arith.constant 0 : i32
    return %c0_i32, %arg1 : i32, i32
  }
  func.func @transform_1(%arg0: i32, %arg1: i32) -> (i32, i32, i32) {
    %c0_i32 = arith.constant 0 : i32
    %c0_i32_0 = arith.constant 0 : i32
    return %arg0, %arg1, %c0_i32 : i32, i32, i32
  }
  func.func @transform_2(%arg0: i32, %arg1: i32) -> (i32, i32, i32) {
    %c0_i32 = arith.constant 0 : i32
    %c0_i32_0 = arith.constant 0 : i32
    %c0_i32_1 = arith.constant 0 : i32
    %c0_i32_2 = arith.constant 0 : i32
    return %c0_i32, %c0_i32_0, %c0_i32_1 : i32, i32, i32
  }
  func.func @transform_3(%arg0: i32, %arg1: i32) -> (i32, i32, i32) {
    %c0_i32 = arith.constant 0 : i32
    %c0_i32_0 = arith.constant 0 : i32
    %c0_i32_1 = arith.constant 0 : i32
    %c0_i32_2 = arith.constant 0 : i32
    return %c0_i32, %c0_i32_0, %c0_i32_1 : i32, i32, i32
  }
  func.func @transform_4(%arg0: i32, %arg1: i32) -> (i32, i32, i32, i32) {
    %c0_i32 = arith.constant 0 : i32
    %c0_i32_0 = arith.constant 0 : i32
    %c0_i32_1 = arith.constant 0 : i32
    %c0_i32_2 = arith.constant 0 : i32
    %c0_i32_3 = arith.constant 0 : i32
    return %c0_i32, %c0_i32_0, %c0_i32_1, %c0_i32_2 : i32, i32, i32, i32
  }
  func.func @transform_5(%arg0: i32, %arg1: i32) -> (i32, i32, i32) {
    %c0_i32 = arith.constant 0 : i32
    %c0_i32_0 = arith.constant 0 : i32
    %c0_i32_1 = arith.constant 0 : i32
    return %arg0, %c0_i32, %c0_i32_0 : i32, i32, i32
  }
}

module attributes {stable_mosaic.version = 11 : i64} {
  func.func @_bottleneck_kernel(%arg0: i32, %arg1: i32, %arg2: i32, %arg3: memref<1x332x8xbf16, #tpu.memory_space<vmem>>, %arg4: memref<3x3x8x4xbf16, #tpu.memory_space<vmem>>, %arg5: memref<288x648xbf16, #tpu.memory_space<vmem>>, %arg6: memref<1x648x4xbf16, #tpu.memory_space<vmem>>, %arg7: memref<1x4xf32, #tpu.memory_space<vmem>>, %arg8: memref<1x288x4xbf16, #tpu.memory_space<vmem>>, %arg9: memref<288x4xf32, #tpu.memory_space<vmem>>) attributes {dimension_semantics = [#tpu.dimension_semantics<parallel>, #tpu.dimension_semantics<parallel>, #tpu.dimension_semantics<arbitrary>], iteration_bounds = array<i64: 2, 1, 2>, scalar_prefetch = 0 : i64, scratch_operands = 1 : i64, tpu.core_type = #tpu.core_type<tc>, window_params = [{transform_indices = @transform_0, window_bounds = array<i64: 1, 332, 8>}, {transform_indices = @transform_1, window_bounds = array<i64: 3, 3, 8, 4>}, {pipeline_mode = #tpu.pipeline_mode<synchronous>, transform_indices = @transform_2, window_bounds = array<i64: 288, 648>}, {transform_indices = @transform_3, window_bounds = array<i64: 1, 648, 4>}, {transform_indices = @transform_4, window_bounds = array<i64: 1, 4>}, {transform_indices = @transform_5, window_bounds = array<i64: 1, 288, 4>}]} {
    %c0_i32 = arith.constant 0 : i32
    %0 = arith.cmpi eq, %arg2, %c0_i32 : i32
    %1 = arith.extui %0 : i1 to i32
    %c0_i32_0 = arith.constant 0 : i32
    %2 = arith.cmpi ne, %1, %c0_i32_0 : i32
    scf.if %2 {
      %cst = arith.constant 0.000000e+00 : f32
      %9 = vector.broadcast %cst : f32 to vector<288x4xf32>
      %c0 = arith.constant 0 : index
      %c0_4 = arith.constant 0 : index
      %10 = vector.load %arg9[%c0, %c0_4] : memref<288x4xf32, #tpu.memory_space<vmem>>, vector<288x4xf32>
      tpu.vector_store %arg9[%c0, %c0_4], %9 {strides = array<i32>} : memref<288x4xf32, #tpu.memory_space<vmem>>, vector<288x4xf32>,
    } else {
    }
    %c1_i32 = arith.constant 1 : i32
    %3 = arith.cmpi slt, %arg2, %c1_i32 : i32
    %4 = arith.extui %3 : i1 to i32
    %c0_i32_1 = arith.constant 0 : i32
    %5 = arith.cmpi ne, %4, %c0_i32_1 : i32
    scf.if %5 {
      %c0 = arith.constant 0 : index
      %c0_4 = arith.constant 0 : index
      %9 = vector.load %arg9[%c0, %c0_4] : memref<288x4xf32, #tpu.memory_space<vmem>>, vector<288x4xf32>
      %c0_5 = arith.constant 0 : index
      %c0_6 = arith.constant 0 : index
      %c0_7 = arith.constant 0 : index
      %10 = vector.load %arg3[%c0_5, %c0_6, %c0_7] : memref<1x332x8xbf16, #tpu.memory_space<vmem>>, vector<1x288x8xbf16>
      %11 = vector.shape_cast %10 : vector<1x288x8xbf16> to vector<288x8xbf16>
      %c0_8 = arith.constant 0 : index
      %c0_9 = arith.constant 0 : index
      %c0_10 = arith.constant 0 : index
      %c0_11 = arith.constant 0 : index
      %12 = vector.load %arg4[%c0_8, %c0_9, %c0_10, %c0_11] : memref<3x3x8x4xbf16, #tpu.memory_space<vmem>>, vector<1x1x8x4xbf16>
      %13 = vector.shape_cast %12 : vector<1x1x8x4xbf16> to vector<8x4xbf16>
      %cst = arith.constant dense<0.000000e+00> : vector<288x4xf32>
      %14 = tpu.matmul %11, %13, %cst {dimension_numbers = #tpu.dot_dimension_numbers<[1], [0], [0], [1], [0, 0, 1, 1], [], []>} : vector<288x8xbf16>, vector<8x4xbf16>, vector<288x4xf32> -> vector<288x4xf32>
      %15 = arith.addf %9, %14 : vector<288x4xf32>
      %c0_12 = arith.constant 0 : index
      %c1 = arith.constant 1 : index
      %c0_13 = arith.constant 0 : index
      %16 = vector.load %arg3[%c0_12, %c1, %c0_13] : memref<1x332x8xbf16, #tpu.memory_space<vmem>>, vector<1x288x8xbf16>
      %17 = vector.shape_cast %16 : vector<1x288x8xbf16> to vector<288x8xbf16>
      %c0_14 = arith.constant 0 : index
      %c1_15 = arith.constant 1 : index
      %c0_16 = arith.constant 0 : index
      %c0_17 = arith.constant 0 : index
      %18 = vector.load %arg4[%c0_14, %c1_15, %c0_16, %c0_17] : memref<3x3x8x4xbf16, #tpu.memory_space<vmem>>, vector<1x1x8x4xbf16>
      %19 = vector.shape_cast %18 : vector<1x1x8x4xbf16> to vector<8x4xbf16>
      %cst_18 = arith.constant dense<0.000000e+00> : vector<288x4xf32>
      %20 = tpu.matmul %17, %19, %cst_18 {dimension_numbers = #tpu.dot_dimension_numbers<[1], [0], [0], [1], [0, 0, 1, 1], [], []>} : vector<288x8xbf16>, vector<8x4xbf16>, vector<288x4xf32> -> vector<288x4xf32>
      %21 = arith.addf %15, %20 : vector<288x4xf32>
      %c0_19 = arith.constant 0 : index
      %c2 = arith.constant 2 : index
      %c0_20 = arith.constant 0 : index
      %22 = vector.load %arg3[%c0_19, %c2, %c0_20] : memref<1x332x8xbf16, #tpu.memory_space<vmem>>, vector<1x288x8xbf16>
      %23 = vector.shape_cast %22 : vector<1x288x8xbf16> to vector<288x8xbf16>
      %c0_21 = arith.constant 0 : index
      %c2_22 = arith.constant 2 : index
      %c0_23 = arith.constant 0 : index
      %c0_24 = arith.constant 0 : index
      %24 = vector.load %arg4[%c0_21, %c2_22, %c0_23, %c0_24] : memref<3x3x8x4xbf16, #tpu.memory_space<vmem>>, vector<1x1x8x4xbf16>
      %25 = vector.shape_cast %24 : vector<1x1x8x4xbf16> to vector<8x4xbf16>
      %cst_25 = arith.constant dense<0.000000e+00> : vector<288x4xf32>
      %26 = tpu.matmul %23, %25, %cst_25 {dimension_numbers = #tpu.dot_dimension_numbers<[1], [0], [0], [1], [0, 0, 1, 1], [], []>} : vector<288x8xbf16>, vector<8x4xbf16>, vector<288x4xf32> -> vector<288x4xf32>
      %27 = arith.addf %21, %26 : vector<288x4xf32>
      %c0_26 = arith.constant 0 : index
      %c18 = arith.constant 18 : index
      %c0_27 = arith.constant 0 : index
      %28 = vector.load %arg3[%c0_26, %c18, %c0_27] : memref<1x332x8xbf16, #tpu.memory_space<vmem>>, vector<1x288x8xbf16>
      %29 = vector.shape_cast %28 : vector<1x288x8xbf16> to vector<288x8xbf16>
      %c1_28 = arith.constant 1 : index
      %c0_29 = arith.constant 0 : index
      %c0_30 = arith.constant 0 : index
      %c0_31 = arith.constant 0 : index
      %30 = vector.load %arg4[%c1_28, %c0_29, %c0_30, %c0_31] : memref<3x3x8x4xbf16, #tpu.memory_space<vmem>>, vector<1x1x8x4xbf16>
      %31 = vector.shape_cast %30 : vector<1x1x8x4xbf16> to vector<8x4xbf16>
      %cst_32 = arith.constant dense<0.000000e+00> : vector<288x4xf32>
      %32 = tpu.matmul %29, %31, %cst_32 {dimension_numbers = #tpu.dot_dimension_numbers<[1], [0], [0], [1], [0, 0, 1, 1], [], []>} : vector<288x8xbf16>, vector<8x4xbf16>, vector<288x4xf32> -> vector<288x4xf32>
      %33 = arith.addf %27, %32 : vector<288x4xf32>
      %c0_33 = arith.constant 0 : index
      %c19 = arith.constant 19 : index
      %c0_34 = arith.constant 0 : index
      %34 = vector.load %arg3[%c0_33, %c19, %c0_34] : memref<1x332x8xbf16, #tpu.memory_space<vmem>>, vector<1x288x8xbf16>
      %35 = vector.shape_cast %34 : vector<1x288x8xbf16> to vector<288x8xbf16>
      %c1_35 = arith.constant 1 : index
      %c1_36 = arith.constant 1 : index
      %c0_37 = arith.constant 0 : index
      %c0_38 = arith.constant 0 : index
      %36 = vector.load %arg4[%c1_35, %c1_36, %c0_37, %c0_38] : memref<3x3x8x4xbf16, #tpu.memory_space<vmem>>, vector<1x1x8x4xbf16>
      %37 = vector.shape_cast %36 : vector<1x1x8x4xbf16> to vector<8x4xbf16>
      %cst_39 = arith.constant dense<0.000000e+00> : vector<288x4xf32>
      %38 = tpu.matmul %35, %37, %cst_39 {dimension_numbers = #tpu.dot_dimension_numbers<[1], [0], [0], [1], [0, 0, 1, 1], [], []>} : vector<288x8xbf16>, vector<8x4xbf16>, vector<288x4xf32> -> vector<288x4xf32>
      %39 = arith.addf %33, %38 : vector<288x4xf32>
      %c0_40 = arith.constant 0 : index
      %c20 = arith.constant 20 : index
      %c0_41 = arith.constant 0 : index
      %40 = vector.load %arg3[%c0_40, %c20, %c0_41] : memref<1x332x8xbf16, #tpu.memory_space<vmem>>, vector<1x288x8xbf16>
      %41 = vector.shape_cast %40 : vector<1x288x8xbf16> to vector<288x8xbf16>
      %c1_42 = arith.constant 1 : index
      %c2_43 = arith.constant 2 : index
      %c0_44 = arith.constant 0 : index
      %c0_45 = arith.constant 0 : index
      %42 = vector.load %arg4[%c1_42, %c2_43, %c0_44, %c0_45] : memref<3x3x8x4xbf16, #tpu.memory_space<vmem>>, vector<1x1x8x4xbf16>
      %43 = vector.shape_cast %42 : vector<1x1x8x4xbf16> to vector<8x4xbf16>
      %cst_46 = arith.constant dense<0.000000e+00> : vector<288x4xf32>
      %44 = tpu.matmul %41, %43, %cst_46 {dimension_numbers = #tpu.dot_dimension_numbers<[1], [0], [0], [1], [0, 0, 1, 1], [], []>} : vector<288x8xbf16>, vector<8x4xbf16>, vector<288x4xf32> -> vector<288x4xf32>
      %45 = arith.addf %39, %44 : vector<288x4xf32>
      %c0_47 = arith.constant 0 : index
      %c36 = arith.constant 36 : index
      %c0_48 = arith.constant 0 : index
      %46 = vector.load %arg3[%c0_47, %c36, %c0_48] : memref<1x332x8xbf16, #tpu.memory_space<vmem>>, vector<1x288x8xbf16>
      %47 = vector.shape_cast %46 : vector<1x288x8xbf16> to vector<288x8xbf16>
      %c2_49 = arith.constant 2 : index
      %c0_50 = arith.constant 0 : index
      %c0_51 = arith.constant 0 : index
      %c0_52 = arith.constant 0 : index
      %48 = vector.load %arg4[%c2_49, %c0_50, %c0_51, %c0_52] : memref<3x3x8x4xbf16, #tpu.memory_space<vmem>>, vector<1x1x8x4xbf16>
      %49 = vector.shape_cast %48 : vector<1x1x8x4xbf16> to vector<8x4xbf16>
      %cst_53 = arith.constant dense<0.000000e+00> : vector<288x4xf32>
      %50 = tpu.matmul %47, %49, %cst_53 {dimension_numbers = #tpu.dot_dimension_numbers<[1], [0], [0], [1], [0, 0, 1, 1], [], []>} : vector<288x8xbf16>, vector<8x4xbf16>, vector<288x4xf32> -> vector<288x4xf32>
      %51 = arith.addf %45, %50 : vector<288x4xf32>
      %c0_54 = arith.constant 0 : index
      %c37 = arith.constant 37 : index
      %c0_55 = arith.constant 0 : index
      %52 = vector.load %arg3[%c0_54, %c37, %c0_55] : memref<1x332x8xbf16, #tpu.memory_space<vmem>>, vector<1x288x8xbf16>
      %53 = vector.shape_cast %52 : vector<1x288x8xbf16> to vector<288x8xbf16>
      %c2_56 = arith.constant 2 : index
      %c1_57 = arith.constant 1 : index
      %c0_58 = arith.constant 0 : index
      %c0_59 = arith.constant 0 : index
      %54 = vector.load %arg4[%c2_56, %c1_57, %c0_58, %c0_59] : memref<3x3x8x4xbf16, #tpu.memory_space<vmem>>, vector<1x1x8x4xbf16>
      %55 = vector.shape_cast %54 : vector<1x1x8x4xbf16> to vector<8x4xbf16>
      %cst_60 = arith.constant dense<0.000000e+00> : vector<288x4xf32>
      %56 = tpu.matmul %53, %55, %cst_60 {dimension_numbers = #tpu.dot_dimension_numbers<[1], [0], [0], [1], [0, 0, 1, 1], [], []>} : vector<288x8xbf16>, vector<8x4xbf16>, vector<288x4xf32> -> vector<288x4xf32>
      %57 = arith.addf %51, %56 : vector<288x4xf32>
      %c0_61 = arith.constant 0 : index
      %c38 = arith.constant 38 : index
      %c0_62 = arith.constant 0 : index
      %58 = vector.load %arg3[%c0_61, %c38, %c0_62] : memref<1x332x8xbf16, #tpu.memory_space<vmem>>, vector<1x288x8xbf16>
      %59 = vector.shape_cast %58 : vector<1x288x8xbf16> to vector<288x8xbf16>
      %c2_63 = arith.constant 2 : index
      %c2_64 = arith.constant 2 : index
      %c0_65 = arith.constant 0 : index
      %c0_66 = arith.constant 0 : index
      %60 = vector.load %arg4[%c2_63, %c2_64, %c0_65, %c0_66] : memref<3x3x8x4xbf16, #tpu.memory_space<vmem>>, vector<1x1x8x4xbf16>
      %61 = vector.shape_cast %60 : vector<1x1x8x4xbf16> to vector<8x4xbf16>
      %cst_67 = arith.constant dense<0.000000e+00> : vector<288x4xf32>
      %62 = tpu.matmul %59, %61, %cst_67 {dimension_numbers = #tpu.dot_dimension_numbers<[1], [0], [0], [1], [0, 0, 1, 1], [], []>} : vector<288x8xbf16>, vector<8x4xbf16>, vector<288x4xf32> -> vector<288x4xf32>
      %63 = arith.addf %57, %62 : vector<288x4xf32>
      %c0_68 = arith.constant 0 : index
      %c0_69 = arith.constant 0 : index
      %64 = vector.load %arg9[%c0_68, %c0_69] : memref<288x4xf32, #tpu.memory_space<vmem>>, vector<288x4xf32>
      tpu.vector_store %arg9[%c0_68, %c0_69], %63 {strides = array<i32>} : memref<288x4xf32, #tpu.memory_space<vmem>>, vector<288x4xf32>,
    } else {
    }
    %c1_i32_2 = arith.constant 1 : i32
    %6 = arith.cmpi eq, %arg2, %c1_i32_2 : i32
    %7 = arith.extui %6 : i1 to i32
    %c0_i32_3 = arith.constant 0 : i32
    %8 = arith.cmpi ne, %7, %c0_i32_3 : i32
    scf.if %8 {
      %c0 = arith.constant 0 : index
      %c0_4 = arith.constant 0 : index
      %9 = vector.load %arg9[%c0, %c0_4] : memref<288x4xf32, #tpu.memory_space<vmem>>, vector<288x4xf32>
      %c0_5 = arith.constant 0 : index
      %c0_6 = arith.constant 0 : index
      %10 = vector.load %arg5[%c0_5, %c0_6] : memref<288x648xbf16, #tpu.memory_space<vmem>>, vector<288x648xbf16>
      %c0_7 = arith.constant 0 : index
      %c0_8 = arith.constant 0 : index
      %c0_9 = arith.constant 0 : index
      %11 = vector.load %arg6[%c0_7, %c0_8, %c0_9] : memref<1x648x4xbf16, #tpu.memory_space<vmem>>, vector<1x648x4xbf16>
      %12 = vector.shape_cast %11 : vector<1x648x4xbf16> to vector<648x4xbf16>
      %cst = arith.constant dense<0.000000e+00> : vector<288x4xf32>
      %13 = tpu.matmul %10, %12, %cst {dimension_numbers = #tpu.dot_dimension_numbers<[1], [0], [0], [1], [0, 0, 1, 1], [], []>} : vector<288x648xbf16>, vector<648x4xbf16>, vector<288x4xf32> -> vector<288x4xf32>
      %14 = arith.addf %9, %13 : vector<288x4xf32>
      %c0_10 = arith.constant 0 : index
      %c0_11 = arith.constant 0 : index
      %15 = vector.load %arg7[%c0_10, %c0_11] : memref<1x4xf32, #tpu.memory_space<vmem>>, vector<1x4xf32>
      %16 = vector.broadcast %15 : vector<1x4xf32> to vector<288x4xf32>
      %17 = arith.addf %14, %16 : vector<288x4xf32>
      %cst_12 = arith.constant 0.000000e+00 : f32
      %18 = vector.broadcast %cst_12 : f32 to vector<288x4xf32>
      %19 = arith.maximumf %17, %18 : vector<288x4xf32>
      %20 = arith.truncf %19 : vector<288x4xf32> to vector<288x4xbf16>
      %c0_13 = arith.constant 0 : index
      %c0_14 = arith.constant 0 : index
      %c0_15 = arith.constant 0 : index
      %21 = vector.load %arg8[%c0_13, %c0_14, %c0_15] : memref<1x288x4xbf16, #tpu.memory_space<vmem>>, vector<1x288x4xbf16>
      %22 = vector.shape_cast %21 : vector<1x288x4xbf16> to vector<288x4xbf16>
      %23 = vector.shape_cast %20 : vector<288x4xbf16> to vector<1x288x4xbf16>
      tpu.vector_store %arg8[%c0_13, %c0_14, %c0_15], %23 {strides = array<i32>} : memref<1x288x4xbf16, #tpu.memory_space<vmem>>, vector<1x288x4xbf16>,
    } else {
    }
    return
  }
  func.func @transform_0(%arg0: i32, %arg1: i32, %arg2: i32) -> (i32, i32, i32) {
    %c0_i32 = arith.constant 0 : i32
    %0 = arith.minsi %arg2, %c0_i32 : i32
    %c0_i32_0 = arith.constant 0 : i32
    %c0_i32_1 = arith.constant 0 : i32
    return %arg0, %c0_i32_0, %0 : i32, i32, i32
  }
  func.func @transform_1(%arg0: i32, %arg1: i32, %arg2: i32) -> (i32, i32, i32, i32) {
    %c0_i32 = arith.constant 0 : i32
    %0 = arith.minsi %arg2, %c0_i32 : i32
    %c0_i32_0 = arith.constant 0 : i32
    %c0_i32_1 = arith.constant 0 : i32
    %c0_i32_2 = arith.constant 0 : i32
    return %c0_i32_0, %c0_i32_1, %0, %arg1 : i32, i32, i32, i32
  }
  func.func @transform_2(%arg0: i32, %arg1: i32, %arg2: i32) -> (i32, i32) {
    %c0_i32 = arith.constant 0 : i32
    %c0_i32_0 = arith.constant 0 : i32
    %c0_i32_1 = arith.constant 0 : i32
    return %c0_i32, %c0_i32_0 : i32, i32
  }
  func.func @transform_3(%arg0: i32, %arg1: i32, %arg2: i32) -> (i32, i32, i32) {
    %c0_i32 = arith.constant 0 : i32
    %c0_i32_0 = arith.constant 0 : i32
    return %arg0, %c0_i32, %arg1 : i32, i32, i32
  }
  func.func @transform_4(%arg0: i32, %arg1: i32, %arg2: i32) -> (i32, i32) {
    %c0_i32 = arith.constant 0 : i32
    %c0_i32_0 = arith.constant 0 : i32
    return %c0_i32, %arg1 : i32, i32
  }
  func.func @transform_5(%arg0: i32, %arg1: i32, %arg2: i32) -> (i32, i32, i32) {
    %c0_i32 = arith.constant 0 : i32
    %c0_i32_0 = arith.constant 0 : i32
    return %arg0, %c0_i32, %arg1 : i32, i32, i32
  }
}

</mosaic_0001>

<llo_original>
// kernel: pyramid_pooling_module.2
$region0: #{pyramid_pooling_module.2}
  #allocation0 [shape = 'u32[]', space=smem, size = 0x4, offset = 0x4, fixed_abs, tag = 'smem constant byte address 0x4 - core index']
  #allocation1 [shape = 'u32[144,128]{1,0:T(1,128)}', space=vmem, size = 0x12000, scoped, tag = 'internal scratch']
  #allocation2 [shape = 'f32[72,8]{1,0:T(8,128)}', space=vmem, size = 0x9000, scoped, tag = 'scratch operand']
  %s0 = inlined_call_operand.vmem [shape: bf16[72,256], index: 0, kind: input, shape index: {}]
  %s1 = inlined_call_operand.vmem [shape: bf16[2,256,8], index: 1, kind: input, shape index: {}]
  %s2 = inlined_call_operand.vmem [shape: bf16[4,8,4], index: 2, kind: input, shape index: {}]
  %s3 = inlined_call_operand.vmem [shape: f32[4,1,4], index: 3, kind: input, shape index: {}]
  %s4 = inlined_call_operand.vmem [shape: bf16[4,9,4,4], index: 4, kind: input, shape index: {}]
  %s5 = inlined_call_operand.vmem [shape: bf16[2,648,4], index: 5, kind: output, shape index: {}]
  %s6 = sld [smem:[#allocation0]]
  $region61: #{pyramid_pooling_module.2} parent=0
    _
  %s8 = ssub.s32 1, %s6
  %s9 = scalar_select 0, %s8, %s6
  loop: start=0, step=1, limit=4
  $region2: #{pyramid_pooling_module.2} parent=0 // loop_pre_header
    _
  $region3: #{pyramid_pooling_module.2} parent=0 // loop_header
    %s11 = sphi 0, %s15
    %p12 = scmp.ge.s32.totalorder %s11, 4
    %s18 = sphi 0, %s30
    %s19 = sphi 0, %s26
    %s20 = sphi 0, %s18
    %s21 = sphi 0, %s19
    %s22 = sphi 0, %s20
    %s23 = sphi 0, %s21
    %s33 = sphi 0, %s35
    %s36 = sphi 0, %s33
    %s37 = sphi 0, %s36
    %s53 = sphi 0, %s37
    %s61 = sphi 0, %s63
    %s64 = sphi 0, %s61
    %s65 = sphi 0, %s64
    %s81 = sphi 0, %s65
    %s85 = sphi 0, %s85
    %s87 = sphi 0, %s85
    %s88 = sphi 0, %s87
    %s102 = sphi 0, %s88
    %s106 = sphi 0, %s106
    %s108 = sphi 0, %s106
    %s109 = sphi 0, %s108
    %s123 = sphi 0, %s109
    %s127 = sphi 0, %s127
    %s129 = sphi 0, %s127
    %s130 = sphi 0, %s129
    %s144 = sphi 0, %s130
    %s150 = sphi 0, %s152
    %s153 = sphi 0, %s150
    %s154 = sphi 0, %s153
    %s170 = sphi 0, %s154
  $region4: #{pyramid_pooling_module.2} parent=0 // loop_header_branch
    %14 = sbr.rel (%p12) target = $region8
  $region5: #{pyramid_pooling_module.2} parent=0 // loop_body
    %s16 = ssub.s32 %s11, 1
    %s17 = ssub.s32 %s11, 2
    %s24 = sadd.s32 1, %s19
    %p25 = scmp.ge.s32.totalorder %s24, 1
    %s26 = scalar_select %p25, 0, %s24
    %s27 = sadd.s32 1, %s18
    %s28 = scalar_select %p25, %s27, %s18
    %p29 = scmp.ge.s32.totalorder %s28, 2
    %s30 = scalar_select %p29, 0, %s28
    %s31 = ssub.s32 %s19, %s26
    %p32 = scmp.eq.s32.totalorder %s31, 0
    %s34 = sadd.s32 %s33, 1
    %s35 = scalar_select %p32, %s33, %s34
    %p38 = pneg %p32
    %p39 = scmp.eq.s32.totalorder %s11, 1
    %p40 = por %p38, %p39
    %p41 = scmp.ne.s32.totalorder %s33, %s36
    %p42 = scmp.eq.s32.totalorder %s11, 0
    %p43 = por %p41, %p42
    %p44 = scmp.ne.s32.totalorder %s33, %s36
    %p45 = scmp.eq.s32.totalorder %s16, 1
    %p46 = por %p44, %p45
    %p47 = scmp.ne.s32.totalorder %s36, %s37
    %p48 = scmp.eq.s32.totalorder %s16, 0
    %p49 = por %p47, %p48
    %p50 = scmp.ne.s32.totalorder %s36, %s37
    %p51 = scmp.eq.s32.totalorder %s17, 1
    %p52 = por %p50, %p51
    %p54 = scmp.ne.s32.totalorder %s37, %s53
    %p55 = scmp.eq.s32.totalorder %s17, 0
    %p56 = por %p54, %p55
    %s57 = ssub.s32 %s18, %s30
    %s58 = ssub.s32 %s19, %s26
    %s59 = sor.u32 %s57, %s58
    %p60 = scmp.eq.s32.totalorder %s59, 0
    %s62 = sadd.s32 %s61, 1
    %s63 = scalar_select %p60, %s61, %s62
    %p66 = pneg %p60
    %p67 = scmp.eq.s32.totalorder %s11, 1
    %p68 = por %p66, %p67
    %p69 = scmp.ne.s32.totalorder %s61, %s64
    %p70 = scmp.eq.s32.totalorder %s11, 0
    %p71 = por %p69, %p70
    %p72 = scmp.ne.s32.totalorder %s61, %s64
    %p73 = scmp.eq.s32.totalorder %s16, 1
    %p74 = por %p72, %p73
    %p75 = scmp.ne.s32.totalorder %s64, %s65
    %p76 = scmp.eq.s32.totalorder %s16, 0
    %p77 = por %p75, %p76
    %p78 = scmp.ne.s32.totalorder %s64, %s65
    %p79 = scmp.eq.s32.totalorder %s17, 1
    %p80 = por %p78, %p79
    %p82 = scmp.ne.s32.totalorder %s65, %s81
    %p83 = scmp.eq.s32.totalorder %s17, 0
    %p84 = por %p82, %p83
    %s86 = sadd.s32 %s85, 1
    %p89 = scmp.eq.s32.totalorder %s11, 1
    %p90 = scmp.ne.s32.totalorder %s85, %s87
    %p91 = scmp.eq.s32.totalorder %s11, 0
    %p92 = por %p90, %p91
    %p93 = scmp.ne.s32.totalorder %s85, %s87
    %p94 = scmp.eq.s32.totalorder %s16, 1
    %p95 = por %p93, %p94
    %p96 = scmp.ne.s32.totalorder %s87, %s88
    %p97 = scmp.eq.s32.totalorder %s16, 0
    %p98 = por %p96, %p97
    %p99 = scmp.ne.s32.totalorder %s87, %s88
    %p100 = scmp.eq.s32.totalorder %s17, 1
    %p101 = por %p99, %p100
    %p103 = scmp.ne.s32.totalorder %s88, %s102
    %p104 = scmp.eq.s32.totalorder %s17, 0
    %p105 = por %p103, %p104
    %s107 = sadd.s32 %s106, 1
    %p110 = scmp.eq.s32.totalorder %s11, 1
    %p111 = scmp.ne.s32.totalorder %s106, %s108
    %p112 = scmp.eq.s32.totalorder %s11, 0
    %p113 = por %p111, %p112
    %p114 = scmp.ne.s32.totalorder %s106, %s108
    %p115 = scmp.eq.s32.totalorder %s16, 1
    %p116 = por %p114, %p115
    %p117 = scmp.ne.s32.totalorder %s108, %s109
    %p118 = scmp.eq.s32.totalorder %s16, 0
    %p119 = por %p117, %p118
    %p120 = scmp.ne.s32.totalorder %s108, %s109
    %p121 = scmp.eq.s32.totalorder %s17, 1
    %p122 = por %p120, %p121
    %p124 = scmp.ne.s32.totalorder %s109, %s123
    %p125 = scmp.eq.s32.totalorder %s17, 0
    %p126 = por %p124, %p125
    %s128 = sadd.s32 %s127, 1
    %p131 = scmp.eq.s32.totalorder %s11, 1
    %p132 = scmp.ne.s32.totalorder %s127, %s129
    %p133 = scmp.eq.s32.totalorder %s11, 0
    %p134 = por %p132, %p133
    %p135 = scmp.ne.s32.totalorder %s127, %s129
    %p136 = scmp.eq.s32.totalorder %s16, 1
    %p137 = por %p135, %p136
    %p138 = scmp.ne.s32.totalorder %s129, %s130
    %p139 = scmp.eq.s32.totalorder %s16, 0
    %p140 = por %p138, %p139
    %p141 = scmp.ne.s32.totalorder %s129, %s130
    %p142 = scmp.eq.s32.totalorder %s17, 1
    %p143 = por %p141, %p142
    %p145 = scmp.ne.s32.totalorder %s130, %s144
    %p146 = scmp.eq.s32.totalorder %s17, 0
    %p147 = por %p145, %p146
    %s148 = ssub.s32 %s18, %s30
    %p149 = scmp.eq.s32.totalorder %s148, 0
    %s151 = sadd.s32 %s150, 1
    %s152 = scalar_select %p149, %s150, %s151
    %p155 = pneg %p149
    %p156 = scmp.eq.s32.totalorder %s11, 1
    %p157 = por %p155, %p156
    %p158 = scmp.ne.s32.totalorder %s150, %s153
    %p159 = scmp.eq.s32.totalorder %s11, 0
    %p160 = por %p158, %p159
    %p161 = scmp.ne.s32.totalorder %s150, %s153
    %p162 = scmp.eq.s32.totalorder %s16, 1
    %p163 = por %p161, %p162
    %p164 = scmp.ne.s32.totalorder %s153, %s154
    %p165 = scmp.eq.s32.totalorder %s16, 0
    %p166 = por %p164, %p165
    %p167 = scmp.ne.s32.totalorder %s153, %s154
    %p168 = scmp.eq.s32.totalorder %s17, 1
    %p169 = por %p167, %p168
    %p171 = scmp.ne.s32.totalorder %s154, %s170
    %p172 = scmp.eq.s32.totalorder %s17, 0
    %p173 = por %p171, %p172
    %p174 = scmp.le.s32.totalorder 1, %s11
    %p175 = scmp.lt.s32.totalorder %s11, 3
    %p176 = pnand %p174, %p175
    %p177 = pneg %p176
    // Predicated region
    $region9: #{pyramid_pooling_module.2} parent=5 // pred_check
      _
    $region10: #{pyramid_pooling_module.2} parent=5 // pred_check_branch
      %179 = sbr.rel (%p176) target = $region12
    $region11: #{pyramid_pooling_module.2} parent=5 // pred_region
      %s180 = ssub.s32 %s11, 1
      // Predicated region
      $region13: #{pyramid_pooling_module.2} parent=11 // pred_check
        %p181 = pneg %p49
      $region14: #{pyramid_pooling_module.2} parent=11 // pred_check_branch
        %183 = sbr.rel (%p181) target = $region16
      $region15: #{pyramid_pooling_module.2} parent=11 // pred_region
        %s184 = smul.u32 2, %s21
        %p185 = scmp.lt.s32.totalorder %s184, 1
        %s186 = scalar_select %p185, %s184, 1
        %s187 = smul.addr %s186, 4
        %s188 = scalar_lea.vmem %s0, %s187
        %s189 = smul.u32 2, %s21
      $region16: #{pyramid_pooling_module.2} parent=11 // pred_fallthru
        _
      // Predicated region
      $region17: #{pyramid_pooling_module.2} parent=11 // pred_check
        %p190 = pneg %p98
      $region18: #{pyramid_pooling_module.2} parent=11 // pred_check_branch
        %192 = sbr.rel (%p190) target = $region20
      $region19: #{pyramid_pooling_module.2} parent=11 // pred_region
        _
      $region20: #{pyramid_pooling_module.2} parent=11 // pred_fallthru
        _
      // Predicated region
      $region21: #{pyramid_pooling_module.2} parent=11 // pred_check
        %p193 = pneg %p119
      $region22: #{pyramid_pooling_module.2} parent=11 // pred_check_branch
        %195 = sbr.rel (%p193) target = $region24
      $region23: #{pyramid_pooling_module.2} parent=11 // pred_region
        _
      $region24: #{pyramid_pooling_module.2} parent=11 // pred_fallthru
        _
      // Predicated region
      $region25: #{pyramid_pooling_module.2} parent=11 // pred_check
        %p196 = pneg %p140
      $region26: #{pyramid_pooling_module.2} parent=11 // pred_check_branch
        %198 = sbr.rel (%p196) target = $region28
      $region27: #{pyramid_pooling_module.2} parent=11 // pred_region
        _
      $region28: #{pyramid_pooling_module.2} parent=11 // pred_fallthru
        _
    $region12: #{pyramid_pooling_module.2} parent=5 // pred_fallthru
      _
    %p199 = scmp.lt.s32.totalorder %s11, 2
    // Predicated region
    $region29: #{pyramid_pooling_module.2} parent=5 // pred_check
      %p200 = pneg %p199
    $region30: #{pyramid_pooling_module.2} parent=5 // pred_check_branch
      %202 = sbr.rel (%p200) target = $region32
    $region31: #{pyramid_pooling_module.2} parent=5 // pred_region
      // Predicated region
      $region33: #{pyramid_pooling_module.2} parent=31 // pred_check
        %p203 = pneg %p71
      $region34: #{pyramid_pooling_module.2} parent=31 // pred_check_branch
        %205 = sbr.rel (%p203) target = $region36
      $region35: #{pyramid_pooling_module.2} parent=31 // pred_region
        %s206 = smul.u32 32, %s19
        %p207 = scmp.lt.s32.totalorder %s18, 1
        %s208 = scalar_select %p207, %s18, 1
        %p209 = scmp.lt.s32.totalorder %s206, 31
        %s210 = scalar_select %p209, %s206, 31
        %s211 = smul.addr %s208, 32
        %s212 = sadd.s32 %s210, %s211
        %s213 = smul.addr %s212, 4
        %s214 = scalar_lea.vmem %s1, %s213
        %s215 = smul.u32 32, %s19
      $region36: #{pyramid_pooling_module.2} parent=31 // pred_fallthru
        _
    $region32: #{pyramid_pooling_module.2} parent=5 // pred_fallthru
      _
    %p216 = scmp.le.s32.totalorder 1, %s11
    %p217 = scmp.lt.s32.totalorder %s11, 3
    %p218 = pnand %p216, %p217
    %p219 = pneg %p218
    // Predicated region
    $region37: #{pyramid_pooling_module.2} parent=5 // pred_check
      _
    $region38: #{pyramid_pooling_module.2} parent=5 // pred_check_branch
      %221 = sbr.rel (%p218) target = $region40
    $region39: #{pyramid_pooling_module.2} parent=5 // pred_region
      %s222 = ssub.s32 %s11, 1
      %s223 = smul.u32 2, %s21
      %p224 = scmp.lt.s32.totalorder %s223, 1
      %s225 = scalar_select %p224, %s223, 1
      %s226 = smul.addr %s225, 4
      %s227 = scalar_lea.vmem %s0, %s226
      %p228 = pneg %p49
      %p229 = pneg %p46
      %s230 = smul.u32 32, %s21
      %p231 = scmp.lt.s32.totalorder %s20, 1
      %s232 = scalar_select %p231, %s20, 1
      %p233 = scmp.lt.s32.totalorder %s230, 31
      %s234 = scalar_select %p233, %s230, 31
      %s235 = smul.addr %s232, 32
      %s236 = sadd.s32 %s234, %s235
      %s237 = smul.addr %s236, 4
      %s238 = scalar_lea.vmem %s1, %s237
      %p239 = pneg %p77
      %p240 = pneg %p74
      %p241 = pneg %p98
      %p242 = pneg %p95
      %p243 = pneg %p119
      %p244 = pneg %p116
      %p245 = pneg %p140
      %p246 = pneg %p137
      %p247 = pneg %p166
      %p248 = pneg %p163
      %p249 = scmp.lt.s32.totalorder %s20, 1
      %s250 = scalar_select %p249, %s20, 1
      %s251 = smul.addr %s250, 81
      %s252 = smul.addr %s251, 4
      %s253 = scalar_lea.vmem %s5, %s252
      %s254 = smul.u32 2, %s21
      %p255 = scmp.lt.s32.totalorder %s254, 1
      %s256 = scalar_select %p255, %s254, 1
      %s257 = smul.addr %s256, 4
      %s258 = scalar_lea.vmem %s0, %s257
      %s259 = smul.u32 2, %s21
      %s260 = smul.u32 32, %s21
      %p261 = scmp.lt.s32.totalorder %s20, 1
      %s262 = scalar_select %p261, %s20, 1
      %p263 = scmp.lt.s32.totalorder %s260, 31
      %s264 = scalar_select %p263, %s260, 31
      %s265 = smul.addr %s262, 32
      %s266 = sadd.s32 %s264, %s265
      %s267 = smul.addr %s266, 4
      %s268 = scalar_lea.vmem %s1, %s267
      %s269 = smul.u32 32, %s21
      %p270 = scmp.lt.s32.totalorder %s20, 1
      %s271 = scalar_select %p270, %s20, 1
      %s272 = smul.addr %s271, 81
      %s273 = smul.addr %s272, 4
      %s274 = scalar_lea.vmem %s5, %s273
      %p276 = scmp.eq.s32.totalorder %s21, 0
      // Predicated region
      $region41: #{pyramid_pooling_module.2} parent=39 // pred_check
        %p277 = pneg %p276
      $region42: #{pyramid_pooling_module.2} parent=39 // pred_check_branch
        %279 = sbr.rel (%p277) target = $region44
      $region43: #{pyramid_pooling_module.2} parent=39 // pred_region
        %vm280 = vcmask 64512
        %281 = vst.msk [vmem:[#allocation2] sm:$0xff] %vm280, 0.0
        %282 = vst.msk [vmem:[#allocation2 + $0x8] sm:$0xff] %vm280, 0.0
        %283 = vst.msk [vmem:[#allocation2 + $0x10] sm:$0xff] %vm280, 0.0
        %284 = vst.msk [vmem:[#allocation2 + $0x18] sm:$0xff] %vm280, 0.0
        %285 = vst.msk [vmem:[#allocation2 + $0x20] sm:$0xff] %vm280, 0.0
        %286 = vst.msk [vmem:[#allocation2 + $0x28] sm:$0xff] %vm280, 0.0
        %287 = vst.msk [vmem:[#allocation2 + $0x30] sm:$0xff] %vm280, 0.0
        %288 = vst.msk [vmem:[#allocation2 + $0x38] sm:$0xff] %vm280, 0.0
        %289 = vst.msk [vmem:[#allocation2 + $0x40] sm:$0xff] %vm280, 0.0
      $region44: #{pyramid_pooling_module.2} parent=39 // pred_fallthru
        _
      %v290 = vld [vmem:[#allocation2] sm:$0xff]
      %v291 = vld [vmem:[#allocation2 + $0x8] sm:$0xff]
      %v292 = vld [vmem:[#allocation2 + $0x10] sm:$0xff]
      %v293 = vld [vmem:[#allocation2 + $0x18] sm:$0xff]
      %v294 = vld [vmem:[#allocation2 + $0x20] sm:$0xff]
      %v295 = vld [vmem:[#allocation2 + $0x28] sm:$0xff]
      %v296 = vld [vmem:[#allocation2 + $0x30] sm:$0xff]
      %v297 = vld [vmem:[#allocation2 + $0x38] sm:$0xff]
      %v298 = vld [vmem:[#allocation2 + $0x40] sm:$0xff]
      %v299 = vld [vmem:[%s258] sm:$0xff]
      %v300 = vld [vmem:[%s258 + $0x8] sm:$0xff]
      %v301 = vld [vmem:[%s258 + $0x10] sm:$0xff]
      %v302 = vld [vmem:[%s258 + $0x18] sm:$0xff]
      %v303 = vld [vmem:[%s258 + $0x20] sm:$0xff]
      %v304 = vld [vmem:[%s258 + $0x28] sm:$0xff]
      %v305 = vld [vmem:[%s258 + $0x30] sm:$0xff]
      %v306 = vld [vmem:[%s258 + $0x38] sm:$0xff]
      %v307 = vld [vmem:[%s258 + $0x40] sm:$0xff]
      %v308 = vld [vmem:[%s268] sm:$0xf]
      %v309 = vld [vmem:[%s268 + $0x4] sm:$0xf]
      %v310 = vld [vmem:[%s268 + $0x8] sm:$0xf]
      %v311 = vld [vmem:[%s268 + $0xc] sm:$0xf]
      %v312 = vld [vmem:[%s268 + $0x10] sm:$0xf]
      %v313 = vld [vmem:[%s268 + $0x14] sm:$0xf]
      %v314 = vld [vmem:[%s268 + $0x18] sm:$0xf]
      %v315 = vld [vmem:[%s268 + $0x1c] sm:$0xf]
      %v316 = vld [vmem:[%s268 + $0x20] sm:$0xf]
      %v317 = vld [vmem:[%s268 + $0x24] sm:$0xf]
      %v318 = vld [vmem:[%s268 + $0x28] sm:$0xf]
      %v319 = vld [vmem:[%s268 + $0x2c] sm:$0xf]
      %v320 = vld [vmem:[%s268 + $0x30] sm:$0xf]
      %v321 = vld [vmem:[%s268 + $0x34] sm:$0xf]
      %v322 = vld [vmem:[%s268 + $0x38] sm:$0xf]
      %v323 = vld [vmem:[%s268 + $0x3c] sm:$0xf]
      %v324 = vld [vmem:[%s268 + $0x40] sm:$0xf]
      %v325 = vld [vmem:[%s268 + $0x44] sm:$0xf]
      %v326 = vld [vmem:[%s268 + $0x48] sm:$0xf]
      %v327 = vld [vmem:[%s268 + $0x4c] sm:$0xf]
      %v328 = vld [vmem:[%s268 + $0x50] sm:$0xf]
      %v329 = vld [vmem:[%s268 + $0x54] sm:$0xf]
      %v330 = vld [vmem:[%s268 + $0x58] sm:$0xf]
      %v331 = vld [vmem:[%s268 + $0x5c] sm:$0xf]
      %v332 = vld [vmem:[%s268 + $0x60] sm:$0xf]
      %v333 = vld [vmem:[%s268 + $0x64] sm:$0xf]
      %v334 = vld [vmem:[%s268 + $0x68] sm:$0xf]
      %v335 = vld [vmem:[%s268 + $0x6c] sm:$0xf]
      %v336 = vld [vmem:[%s268 + $0x70] sm:$0xf]
      %v337 = vld [vmem:[%s268 + $0x74] sm:$0xf]
      %v338 = vld [vmem:[%s268 + $0x78] sm:$0xf]
      %v339 = vld [vmem:[%s268 + $0x7c] sm:$0xf]
      %v349 = vunpack.c.l.b16 %v299
      %v350 = vunpack.c.h.b16 %v299
      %v351 = vunpack.c.l.b16 %v300
      %v352 = vunpack.c.h.b16 %v300
      %v353 = vunpack.c.l.b16 %v301
      %v354 = vunpack.c.h.b16 %v301
      %v355 = vunpack.c.l.b16 %v302
      %v356 = vunpack.c.h.b16 %v302
      %v357 = vunpack.c.l.b16 %v303
      %v358 = vunpack.c.h.b16 %v303
      %v359 = vunpack.c.l.b16 %v304
      %v360 = vunpack.c.h.b16 %v304
      %v361 = vunpack.c.l.b16 %v305
      %v362 = vunpack.c.h.b16 %v305
      %v363 = vunpack.c.l.b16 %v306
      %v364 = vunpack.c.h.b16 %v306
      %v365 = vunpack.c.l.b16 %v307
      %v366 = vunpack.c.h.b16 %v307
      %v367 = vpack.c.b16 %v351, %v349
      %v368 = vpack.c.b16 %v352, %v350
      %v369 = vpack.c.b16 %v355, %v353
      %v370 = vpack.c.b16 %v356, %v354
      %v371 = vpack.c.b16 %v359, %v357
      %v372 = vpack.c.b16 %v360, %v358
      %v373 = vpack.c.b16 %v363, %v361
      %v374 = vpack.c.b16 %v364, %v362
      %v375 = vpack.c.b16 %v365, %v365
      %v376 = vpack.c.b16 %v366, %v366
      %v419 = vunpack.c.l.b16 %v308
      %v420 = vunpack.c.l.b16 %v309
      %v421 = vunpack.c.l.b16 %v310
      %v422 = vunpack.c.l.b16 %v311
      %v423 = vunpack.c.l.b16 %v312
      %v424 = vunpack.c.l.b16 %v313
      %v425 = vunpack.c.l.b16 %v314
      %v426 = vunpack.c.l.b16 %v315
      %v427 = vunpack.c.l.b16 %v316
      %v428 = vunpack.c.l.b16 %v317
      %v429 = vunpack.c.l.b16 %v318
      %v430 = vunpack.c.l.b16 %v319
      %v431 = vunpack.c.l.b16 %v320
      %v432 = vunpack.c.l.b16 %v321
      %v433 = vunpack.c.l.b16 %v322
      %v434 = vunpack.c.l.b16 %v323
      %v435 = vunpack.c.l.b16 %v324
      %v436 = vunpack.c.l.b16 %v325
      %v437 = vunpack.c.l.b16 %v326
      %v438 = vunpack.c.l.b16 %v327
      %v439 = vunpack.c.l.b16 %v328
      %v440 = vunpack.c.l.b16 %v329
      %v441 = vunpack.c.l.b16 %v330
      %v442 = vunpack.c.l.b16 %v331
      %v443 = vunpack.c.l.b16 %v332
      %v444 = vunpack.c.l.b16 %v333
      %v445 = vunpack.c.l.b16 %v334
      %v446 = vunpack.c.l.b16 %v335
      %v447 = vunpack.c.l.b16 %v336
      %v448 = vunpack.c.l.b16 %v337
      %v449 = vunpack.c.l.b16 %v338
      %v450 = vunpack.c.l.b16 %v339
      %v451 = vpack.c.b16 %v420, %v419
      %v452 = vpack.c.b16 %v422, %v421
      %v453 = vpack.c.b16 %v424, %v423
      %v454 = vpack.c.b16 %v426, %v425
      %v455 = vpack.c.b16 %v428, %v427
      %v456 = vpack.c.b16 %v430, %v429
      %v457 = vpack.c.b16 %v432, %v431
      %v458 = vpack.c.b16 %v434, %v433
      %v459 = vpack.c.b16 %v436, %v435
      %v460 = vpack.c.b16 %v438, %v437
      %v461 = vpack.c.b16 %v440, %v439
      %v462 = vpack.c.b16 %v442, %v441
      %v463 = vpack.c.b16 %v444, %v443
      %v464 = vpack.c.b16 %v446, %v445
      %v465 = vpack.c.b16 %v448, %v447
      %v466 = vpack.c.b16 %v450, %v449
      %483 = vmatprep.subr.bf16.mxu0 0
      %484 = vmatpush1.bf16.msra.mxu0 %v451
      %485 = vmatprep.subr.bf16.mxu0 0
      %486 = vmatpush1.bf16.msra.mxu0 %v452
      %487 = vmatprep.subr.bf16.mxu0 0
      %488 = vmatpush1.bf16.msra.mxu0 %v453
      %489 = vmatprep.subr.bf16.mxu0 0
      %490 = vmatpush1.bf16.msra.mxu0 %v454
      %491 = vmatprep.subr.bf16.mxu0 0
      %492 = vmatpush1.bf16.msra.mxu0 %v455
      %493 = vmatprep.subr.bf16.mxu0 0
      %494 = vmatpush1.bf16.msra.mxu0 %v456
      %495 = vmatprep.subr.bf16.mxu0 0
      %496 = vmatpush1.bf16.msra.mxu0 %v457
      %497 = vmatprep.subr.bf16.mxu0 0
      %498 = vmatpush1.bf16.msra.mxu0 %v458
      %499 = vmatprep.subr.bf16.mxu0 0
      %500 = vmatpush1.bf16.msra.mxu0 %v459
      %501 = vmatprep.subr.bf16.mxu0 0
      %502 = vmatpush1.bf16.msra.mxu0 %v460
      %503 = vmatprep.subr.bf16.mxu0 0
      %504 = vmatpush1.bf16.msra.mxu0 %v461
      %505 = vmatprep.subr.bf16.mxu0 0
      %506 = vmatpush1.bf16.msra.mxu0 %v462
      %507 = vmatprep.subr.bf16.mxu0 0
      %508 = vmatpush1.bf16.msra.mxu0 %v463
      %509 = vmatprep.subr.bf16.mxu0 0
      %510 = vmatpush1.bf16.msra.mxu0 %v464
      %511 = vmatprep.subr.bf16.mxu0 0
      %512 = vmatpush1.bf16.msra.mxu0 %v465
      %513 = vmatprep.subr.bf16.mxu0 0
      %514 = vmatpush1.bf16.msra.mxu0 %v466
      %515 = vmatprep.mubr.bf16.mxu0 %v368
      %516 = vmatmul.mubr.bf16.gmra.mrb[0].mxu0 %v367
      %v517 = vpop.f32.mrb[0].mxu0
      %v518 = vadd.f32 0.0, %v517
      %v519 = vpop.f32.mrb[0].mxu0
      %v520 = vpop.f32.mrb[0].mxu0
      %v521 = vadd.f32 0.0, %v520
      %v522 = vpop.f32.mrb[0].mxu0
      %523 = vmatprep.mubr.bf16.mxu0 %v370
      %524 = vmatmul.mubr.bf16.gmra.mrb[0].mxu0 %v369
      %v525 = vpop.f32.mrb[0].mxu0
      %v526 = vadd.f32 0.0, %v525
      %v527 = vpop.f32.mrb[0].mxu0
      %v528 = vpop.f32.mrb[0].mxu0
      %v529 = vadd.f32 0.0, %v528
      %v530 = vpop.f32.mrb[0].mxu0
      %531 = vmatprep.mubr.bf16.mxu0 %v372
      %532 = vmatmul.mubr.bf16.gmra.mrb[0].mxu0 %v371
      %v533 = vpop.f32.mrb[0].mxu0
      %v534 = vadd.f32 0.0, %v533
      %v535 = vpop.f32.mrb[0].mxu0
      %v536 = vpop.f32.mrb[0].mxu0
      %v537 = vadd.f32 0.0, %v536
      %v538 = vpop.f32.mrb[0].mxu0
      %539 = vmatprep.mubr.bf16.mxu0 %v374
      %540 = vmatmul.mubr.bf16.gmra.mrb[0].mxu0 %v373
      %v541 = vpop.f32.mrb[0].mxu0
      %v542 = vadd.f32 0.0, %v541
      %v543 = vpop.f32.mrb[0].mxu0
      %v544 = vpop.f32.mrb[0].mxu0
      %v545 = vadd.f32 0.0, %v544
      %v546 = vpop.f32.mrb[0].mxu0
      %547 = vmatprep.mubr.bf16.mxu0 %v376
      %548 = vmatmul.mubr.bf16.gmra.mrb[0].mxu0 %v375
      %v549 = vpop.f32.mrb[0].mxu0
      %v550 = vadd.f32 0.0, %v549
      %v551 = vpop.f32.mrb[0].mxu0
      %v552 = vpop.f32.mrb[0].mxu0
      %v553 = vpop.f32.mrb[0].mxu0
      %554 = vdwg.mxu0
      %v555 = vadd.f32 %v290, %v518
      %v556 = vadd.f32 %v291, %v521
      %v557 = vadd.f32 %v292, %v526
      %v558 = vadd.f32 %v293, %v529
      %v559 = vadd.f32 %v294, %v534
      %v560 = vadd.f32 %v295, %v537
      %v561 = vadd.f32 %v296, %v542
      %v562 = vadd.f32 %v297, %v545
      %v563 = vadd.f32 %v298, %v550
      %vm564 = vcmask 64512
      %565 = vst.msk [vmem:[#allocation2] sm:$0xff] %vm564, %v555
      %566 = vst.msk [vmem:[#allocation2 + $0x8] sm:$0xff] %vm564, %v556
      %567 = vst.msk [vmem:[#allocation2 + $0x10] sm:$0xff] %vm564, %v557
      %568 = vst.msk [vmem:[#allocation2 + $0x18] sm:$0xff] %vm564, %v558
      %569 = vst.msk [vmem:[#allocation2 + $0x20] sm:$0xff] %vm564, %v559
      %570 = vst.msk [vmem:[#allocation2 + $0x28] sm:$0xff] %vm564, %v560
      %571 = vst.msk [vmem:[#allocation2 + $0x30] sm:$0xff] %vm564, %v561
      %572 = vst.msk [vmem:[#allocation2 + $0x38] sm:$0xff] %vm564, %v562
      %573 = vst.msk [vmem:[#allocation2 + $0x40] sm:$0xff] %vm564, %v563
      // Predicated region
      $region45: #{pyramid_pooling_module.2} parent=39 // pred_check
        %p574 = pneg %p276
      $region46: #{pyramid_pooling_module.2} parent=39 // pred_check_branch
        %576 = sbr.rel (%p574) target = $region48
      $region47: #{pyramid_pooling_module.2} parent=39 // pred_region
        %v577 = vld [vmem:[#allocation2] sm:$0xff]
        %v578 = vld [vmem:[#allocation2 + $0x8] sm:$0xff]
        %v579 = vld [vmem:[#allocation2 + $0x10] sm:$0xff]
        %v580 = vld [vmem:[#allocation2 + $0x18] sm:$0xff]
        %v581 = vld [vmem:[#allocation2 + $0x20] sm:$0xff]
        %v582 = vld [vmem:[#allocation2 + $0x28] sm:$0xff]
        %v583 = vld [vmem:[#allocation2 + $0x30] sm:$0xff]
        %v584 = vld [vmem:[#allocation2 + $0x38] sm:$0xff]
        %v585 = vld [vmem:[#allocation2 + $0x40] sm:$0xff]
        %v586 = vpack.c.bf16 %v578, %v577
        %v587 = vpack.c.bf16 %v580, %v579
        %v588 = vpack.c.bf16 %v582, %v581
        %v589 = vpack.c.bf16 %v584, %v583
        %v590 = vpack.c.bf16 %v585, %v585
        %v591 = vld [vmem:[%s2] sm:$0xf]
        %v592 = vld [vmem:[%s3] sm:$0x1]
        %v594 = vlaneseq
        %v595 = vshrl.u32 %v594, 7
        %v596 = vsub.s32 0, %v595
        %v597 = vrot.slane %v592, %v596
        %v600 = vsel %vm564, %v586, 0
        %vm602 = vcmask 1043456
        %v604 = vsel %vm602, %v591, 0
        %606 = vmatprep.subr.bf16.mxu0 0
        %607 = vmatpush1.bf16.msra.mxu0 %v604
        %608 = vmatprep.subr.bf16.mxu0 0
        %609 = vmatpush1.bf16.msra.mxu0 0
        %610 = vmatprep.subr.bf16.mxu0 0
        %611 = vmatpush1.bf16.msra.mxu0 0
        %612 = vmatprep.subr.bf16.mxu0 0
        %613 = vmatpush1.bf16.msra.mxu0 0
        %614 = vmatprep.subr.bf16.mxu0 0
        %615 = vmatpush1.bf16.msra.mxu0 0
        %616 = vmatprep.subr.bf16.mxu0 0
        %617 = vmatpush1.bf16.msra.mxu0 0
        %618 = vmatprep.subr.bf16.mxu0 0
        %619 = vmatpush1.bf16.msra.mxu0 0
        %620 = vmatprep.subr.bf16.mxu0 0
        %621 = vmatpush1.bf16.msra.mxu0 0
        %622 = vmatprep.subr.bf16.mxu0 0
        %623 = vmatpush1.bf16.msra.mxu0 0
        %624 = vmatprep.subr.bf16.mxu0 0
        %625 = vmatpush1.bf16.msra.mxu0 0
        %626 = vmatprep.subr.bf16.mxu0 0
        %627 = vmatpush1.bf16.msra.mxu0 0
        %628 = vmatprep.subr.bf16.mxu0 0
        %629 = vmatpush1.bf16.msra.mxu0 0
        %630 = vmatprep.subr.bf16.mxu0 0
        %631 = vmatpush1.bf16.msra.mxu0 0
        %632 = vmatprep.subr.bf16.mxu0 0
        %633 = vmatpush1.bf16.msra.mxu0 0
        %634 = vmatprep.subr.bf16.mxu0 0
        %635 = vmatpush1.bf16.msra.mxu0 0
        %636 = vmatprep.subr.bf16.mxu0 0
        %637 = vmatpush1.bf16.msra.mxu0 0
        %638 = vmatprep.mubr.bf16.mxu0 0
        %639 = vmatmul.mubr.bf16.gmra.mrb[0].mxu0 %v600
        %v640 = vpop.f32.mrb[0].mxu0
        %v641 = vadd.f32 %v597, %v640
        %v642 = vpop.f32.mrb[0].mxu0
        %v643 = vpop.f32.mrb[0].mxu0
        %v644 = vpop.f32.mrb[0].mxu0
        %645 = vdwg.mxu0
        %v646 = vmax.f32 %v641, 0.0
        %v647 = vlaneseq
        %v648 = vshrl.u32 %v647, 7
        %vm649 = vcmp.lt.s32.totalorder %v648, 1
        %v650 = vsel %vm649, %v646, 0.0
        %v651 = vpack.c.bf16 %v650, %v650
        %v652 = vld [vmem:[%s4] sm:$0x3]
        %vm653 = vcmask 31744
        %v655 = vsel %vm653, %v651, 0
        %vm657 = vcmask 1041408
        %v659 = vsel %vm657, %v652, 0
        %661 = vmatprep.subr.bf16.mxu0 0
        %662 = vmatpush1.bf16.msra.mxu0 %v659
        %663 = vmatprep.subr.bf16.mxu0 0
        %664 = vmatpush1.bf16.msra.mxu0 0
        %665 = vmatprep.subr.bf16.mxu0 0
        %666 = vmatpush1.bf16.msra.mxu0 0
        %667 = vmatprep.subr.bf16.mxu0 0
        %668 = vmatpush1.bf16.msra.mxu0 0
        %669 = vmatprep.subr.bf16.mxu0 0
        %670 = vmatpush1.bf16.msra.mxu0 0
        %671 = vmatprep.subr.bf16.mxu0 0
        %672 = vmatpush1.bf16.msra.mxu0 0
        %673 = vmatprep.subr.bf16.mxu0 0
        %674 = vmatpush1.bf16.msra.mxu0 0
        %675 = vmatprep.subr.bf16.mxu0 0
        %676 = vmatpush1.bf16.msra.mxu0 0
        %677 = vmatprep.subr.bf16.mxu0 0
        %678 = vmatpush1.bf16.msra.mxu0 0
        %679 = vmatprep.subr.bf16.mxu0 0
        %680 = vmatpush1.bf16.msra.mxu0 0
        %681 = vmatprep.subr.bf16.mxu0 0
        %682 = vmatpush1.bf16.msra.mxu0 0
        %683 = vmatprep.subr.bf16.mxu0 0
        %684 = vmatpush1.bf16.msra.mxu0 0
        %685 = vmatprep.subr.bf16.mxu0 0
        %686 = vmatpush1.bf16.msra.mxu0 0
        %687 = vmatprep.subr.bf16.mxu0 0
        %688 = vmatpush1.bf16.msra.mxu0 0
        %689 = vmatprep.subr.bf16.mxu0 0
        %690 = vmatpush1.bf16.msra.mxu0 0
        %691 = vmatprep.subr.bf16.mxu0 0
        %692 = vmatpush1.bf16.msra.mxu0 0
        %693 = vmatprep.mubr.bf16.mxu0 0
        %694 = vmatmul.mubr.bf16.gmra.mrb[0].mxu0 %v655
        %v695 = vpop.f32.mrb[0].mxu0
        %v696 = vadd.f32 0.0, %v695
        %v697 = vpop.f32.mrb[0].mxu0
        %v698 = vpop.f32.mrb[0].mxu0
        %v699 = vpop.f32.mrb[0].mxu0
        %700 = vdwg.mxu0
        %v701 = vpack.c.bf16 %v696, %v696
        %vm702 = vcmask 27648
        %703 = vst.msk [vmem:[%s274] sm:$0xf] %vm702, %v701
        %s704 = scalar_lea.vmem %s4, 2
        %v705 = vld [vmem:[%s704] sm:$0x3]
        %v707 = vsel %vm657, %v705, 0
        %709 = vmatprep.subr.bf16.mxu0 0
        %710 = vmatpush1.bf16.msra.mxu0 %v707
        %711 = vmatprep.subr.bf16.mxu0 0
        %712 = vmatpush1.bf16.msra.mxu0 0
        %713 = vmatprep.subr.bf16.mxu0 0
        %714 = vmatpush1.bf16.msra.mxu0 0
        %715 = vmatprep.subr.bf16.mxu0 0
        %716 = vmatpush1.bf16.msra.mxu0 0
        %717 = vmatprep.subr.bf16.mxu0 0
        %718 = vmatpush1.bf16.msra.mxu0 0
        %719 = vmatprep.subr.bf16.mxu0 0
        %720 = vmatpush1.bf16.msra.mxu0 0
        %721 = vmatprep.subr.bf16.mxu0 0
        %722 = vmatpush1.bf16.msra.mxu0 0
        %723 = vmatprep.subr.bf16.mxu0 0
        %724 = vmatpush1.bf16.msra.mxu0 0
        %725 = vmatprep.subr.bf16.mxu0 0
        %726 = vmatpush1.bf16.msra.mxu0 0
        %727 = vmatprep.subr.bf16.mxu0 0
        %728 = vmatpush1.bf16.msra.mxu0 0
        %729 = vmatprep.subr.bf16.mxu0 0
        %730 = vmatpush1.bf16.msra.mxu0 0
        %731 = vmatprep.subr.bf16.mxu0 0
        %732 = vmatpush1.bf16.msra.mxu0 0
        %733 = vmatprep.subr.bf16.mxu0 0
        %734 = vmatpush1.bf16.msra.mxu0 0
        %735 = vmatprep.subr.bf16.mxu0 0
        %736 = vmatpush1.bf16.msra.mxu0 0
        %737 = vmatprep.subr.bf16.mxu0 0
        %738 = vmatpush1.bf16.msra.mxu0 0
        %739 = vmatprep.subr.bf16.mxu0 0
        %740 = vmatpush1.bf16.msra.mxu0 0
        %741 = vmatprep.mubr.bf16.mxu0 0
        %742 = vmatmul.mubr.bf16.gmra.mrb[0].mxu0 %v655
        %v743 = vpop.f32.mrb[0].mxu0
        %v744 = vadd.f32 0.0, %v743
        %v745 = vpop.f32.mrb[0].mxu0
        %v746 = vpop.f32.mrb[0].mxu0
        %v747 = vpop.f32.mrb[0].mxu0
        %748 = vdwg.mxu0
        %v749 = vpack.c.bf16 %v744, %v744
        %750 = vst.msk [vmem:[%s274 + $0x4] sm:$0xf] %vm702, %v749
        %s751 = scalar_lea.vmem %s4, 4
        %v752 = vld [vmem:[%s751] sm:$0x3]
        %v754 = vsel %vm657, %v752, 0
        %756 = vmatprep.subr.bf16.mxu0 0
        %757 = vmatpush1.bf16.msra.mxu0 %v754
        %758 = vmatprep.subr.bf16.mxu0 0
        %759 = vmatpush1.bf16.msra.mxu0 0
        %760 = vmatprep.subr.bf16.mxu0 0
        %761 = vmatpush1.bf16.msra.mxu0 0
        %762 = vmatprep.subr.bf16.mxu0 0
        %763 = vmatpush1.bf16.msra.mxu0 0
        %764 = vmatprep.subr.bf16.mxu0 0
        %765 = vmatpush1.bf16.msra.mxu0 0
        %766 = vmatprep.subr.bf16.mxu0 0
        %767 = vmatpush1.bf16.msra.mxu0 0
        %768 = vmatprep.subr.bf16.mxu0 0
        %769 = vmatpush1.bf16.msra.mxu0 0
        %770 = vmatprep.subr.bf16.mxu0 0
        %771 = vmatpush1.bf16.msra.mxu0 0
        %772 = vmatprep.subr.bf16.mxu0 0
        %773 = vmatpush1.bf16.msra.mxu0 0
        %774 = vmatprep.subr.bf16.mxu0 0
        %775 = vmatpush1.bf16.msra.mxu0 0
        %776 = vmatprep.subr.bf16.mxu0 0
        %777 = vmatpush1.bf16.msra.mxu0 0
        %778 = vmatprep.subr.bf16.mxu0 0
        %779 = vmatpush1.bf16.msra.mxu0 0
        %780 = vmatprep.subr.bf16.mxu0 0
        %781 = vmatpush1.bf16.msra.mxu0 0
        %782 = vmatprep.subr.bf16.mxu0 0
        %783 = vmatpush1.bf16.msra.mxu0 0
        %784 = vmatprep.subr.bf16.mxu0 0
        %785 = vmatpush1.bf16.msra.mxu0 0
        %786 = vmatprep.subr.bf16.mxu0 0
        %787 = vmatpush1.bf16.msra.mxu0 0
        %788 = vmatprep.mubr.bf16.mxu0 0
        %789 = vmatmul.mubr.bf16.gmra.mrb[0].mxu0 %v655
        %v790 = vpop.f32.mrb[0].mxu0
        %v791 = vadd.f32 0.0, %v790
        %v792 = vpop.f32.mrb[0].mxu0
        %v793 = vpop.f32.mrb[0].mxu0
        %v794 = vpop.f32.mrb[0].mxu0
        %795 = vdwg.mxu0
        %v796 = vpack.c.bf16 %v791, %v791
        %797 = vst.msk [vmem:[%s274 + $0x8] sm:$0xf] %vm702, %v796
        %s798 = scalar_lea.vmem %s4, 6
        %v799 = vld [vmem:[%s798] sm:$0x3]
        %v801 = vsel %vm657, %v799, 0
        %803 = vmatprep.subr.bf16.mxu0 0
        %804 = vmatpush1.bf16.msra.mxu0 %v801
        %805 = vmatprep.subr.bf16.mxu0 0
        %806 = vmatpush1.bf16.msra.mxu0 0
        %807 = vmatprep.subr.bf16.mxu0 0
        %808 = vmatpush1.bf16.msra.mxu0 0
        %809 = vmatprep.subr.bf16.mxu0 0
        %810 = vmatpush1.bf16.msra.mxu0 0
        %811 = vmatprep.subr.bf16.mxu0 0
        %812 = vmatpush1.bf16.msra.mxu0 0
        %813 = vmatprep.subr.bf16.mxu0 0
        %814 = vmatpush1.bf16.msra.mxu0 0
        %815 = vmatprep.subr.bf16.mxu0 0
        %816 = vmatpush1.bf16.msra.mxu0 0
        %817 = vmatprep.subr.bf16.mxu0 0
        %818 = vmatpush1.bf16.msra.mxu0 0
        %819 = vmatprep.subr.bf16.mxu0 0
        %820 = vmatpush1.bf16.msra.mxu0 0
        %821 = vmatprep.subr.bf16.mxu0 0
        %822 = vmatpush1.bf16.msra.mxu0 0
        %823 = vmatprep.subr.bf16.mxu0 0
        %824 = vmatpush1.bf16.msra.mxu0 0
        %825 = vmatprep.subr.bf16.mxu0 0
        %826 = vmatpush1.bf16.msra.mxu0 0
        %827 = vmatprep.subr.bf16.mxu0 0
        %828 = vmatpush1.bf16.msra.mxu0 0
        %829 = vmatprep.subr.bf16.mxu0 0
        %830 = vmatpush1.bf16.msra.mxu0 0
        %831 = vmatprep.subr.bf16.mxu0 0
        %832 = vmatpush1.bf16.msra.mxu0 0
        %833 = vmatprep.subr.bf16.mxu0 0
        %834 = vmatpush1.bf16.msra.mxu0 0
        %835 = vmatprep.mubr.bf16.mxu0 0
        %836 = vmatmul.mubr.bf16.gmra.mrb[0].mxu0 %v655
        %v837 = vpop.f32.mrb[0].mxu0
        %v838 = vadd.f32 0.0, %v837
        %v839 = vpop.f32.mrb[0].mxu0
        %v840 = vpop.f32.mrb[0].mxu0
        %v841 = vpop.f32.mrb[0].mxu0
        %842 = vdwg.mxu0
        %v843 = vpack.c.bf16 %v838, %v838
        %844 = vst.msk [vmem:[%s274 + $0xc] sm:$0xf] %vm702, %v843
        %s845 = scalar_lea.vmem %s4, 8
        %v846 = vld [vmem:[%s845] sm:$0x3]
        %v848 = vsel %vm657, %v846, 0
        %850 = vmatprep.subr.bf16.mxu0 0
        %851 = vmatpush1.bf16.msra.mxu0 %v848
        %852 = vmatprep.subr.bf16.mxu0 0
        %853 = vmatpush1.bf16.msra.mxu0 0
        %854 = vmatprep.subr.bf16.mxu0 0
        %855 = vmatpush1.bf16.msra.mxu0 0
        %856 = vmatprep.subr.bf16.mxu0 0
        %857 = vmatpush1.bf16.msra.mxu0 0
        %858 = vmatprep.subr.bf16.mxu0 0
        %859 = vmatpush1.bf16.msra.mxu0 0
        %860 = vmatprep.subr.bf16.mxu0 0
        %861 = vmatpush1.bf16.msra.mxu0 0
        %862 = vmatprep.subr.bf16.mxu0 0
        %863 = vmatpush1.bf16.msra.mxu0 0
        %864 = vmatprep.subr.bf16.mxu0 0
        %865 = vmatpush1.bf16.msra.mxu0 0
        %866 = vmatprep.subr.bf16.mxu0 0
        %867 = vmatpush1.bf16.msra.mxu0 0
        %868 = vmatprep.subr.bf16.mxu0 0
        %869 = vmatpush1.bf16.msra.mxu0 0
        %870 = vmatprep.subr.bf16.mxu0 0
        %871 = vmatpush1.bf16.msra.mxu0 0
        %872 = vmatprep.subr.bf16.mxu0 0
        %873 = vmatpush1.bf16.msra.mxu0 0
        %874 = vmatprep.subr.bf16.mxu0 0
        %875 = vmatpush1.bf16.msra.mxu0 0
        %876 = vmatprep.subr.bf16.mxu0 0
        %877 = vmatpush1.bf16.msra.mxu0 0
        %878 = vmatprep.subr.bf16.mxu0 0
        %879 = vmatpush1.bf16.msra.mxu0 0
        %880 = vmatprep.subr.bf16.mxu0 0
        %881 = vmatpush1.bf16.msra.mxu0 0
        %882 = vmatprep.mubr.bf16.mxu0 0
        %883 = vmatmul.mubr.bf16.gmra.mrb[0].mxu0 %v655
        %v884 = vpop.f32.mrb[0].mxu0
        %v885 = vadd.f32 0.0, %v884
        %v886 = vpop.f32.mrb[0].mxu0
        %v887 = vpop.f32.mrb[0].mxu0
        %v888 = vpop.f32.mrb[0].mxu0
        %889 = vdwg.mxu0
        %v890 = vpack.c.bf16 %v885, %v885
        %891 = vst.msk [vmem:[%s274 + $0x10] sm:$0xf] %vm702, %v890
        %s892 = scalar_lea.vmem %s4, 10
        %v893 = vld [vmem:[%s892] sm:$0x3]
        %v895 = vsel %vm657, %v893, 0
        %897 = vmatprep.subr.bf16.mxu0 0
        %898 = vmatpush1.bf16.msra.mxu0 %v895
        %899 = vmatprep.subr.bf16.mxu0 0
        %900 = vmatpush1.bf16.msra.mxu0 0
        %901 = vmatprep.subr.bf16.mxu0 0
        %902 = vmatpush1.bf16.msra.mxu0 0
        %903 = vmatprep.subr.bf16.mxu0 0
        %904 = vmatpush1.bf16.msra.mxu0 0
        %905 = vmatprep.subr.bf16.mxu0 0
        %906 = vmatpush1.bf16.msra.mxu0 0
        %907 = vmatprep.subr.bf16.mxu0 0
        %908 = vmatpush1.bf16.msra.mxu0 0
        %909 = vmatprep.subr.bf16.mxu0 0
        %910 = vmatpush1.bf16.msra.mxu0 0
        %911 = vmatprep.subr.bf16.mxu0 0
        %912 = vmatpush1.bf16.msra.mxu0 0
        %913 = vmatprep.subr.bf16.mxu0 0
        %914 = vmatpush1.bf16.msra.mxu0 0
        %915 = vmatprep.subr.bf16.mxu0 0
        %916 = vmatpush1.bf16.msra.mxu0 0
        %917 = vmatprep.subr.bf16.mxu0 0
        %918 = vmatpush1.bf16.msra.mxu0 0
        %919 = vmatprep.subr.bf16.mxu0 0
        %920 = vmatpush1.bf16.msra.mxu0 0
        %921 = vmatprep.subr.bf16.mxu0 0
        %922 = vmatpush1.bf16.msra.mxu0 0
        %923 = vmatprep.subr.bf16.mxu0 0
        %924 = vmatpush1.bf16.msra.mxu0 0
        %925 = vmatprep.subr.bf16.mxu0 0
        %926 = vmatpush1.bf16.msra.mxu0 0
        %927 = vmatprep.subr.bf16.mxu0 0
        %928 = vmatpush1.bf16.msra.mxu0 0
        %929 = vmatprep.mubr.bf16.mxu0 0
        %930 = vmatmul.mubr.bf16.gmra.mrb[0].mxu0 %v655
        %v931 = vpop.f32.mrb[0].mxu0
        %v932 = vadd.f32 0.0, %v931
        %v933 = vpop.f32.mrb[0].mxu0
        %v934 = vpop.f32.mrb[0].mxu0
        %v935 = vpop.f32.mrb[0].mxu0
        %936 = vdwg.mxu0
        %v937 = vpack.c.bf16 %v932, %v932
        %938 = vst.msk [vmem:[%s274 + $0x14] sm:$0xf] %vm702, %v937
        %s939 = scalar_lea.vmem %s4, 12
        %v940 = vld [vmem:[%s939] sm:$0x3]
        %v942 = vsel %vm657, %v940, 0
        %944 = vmatprep.subr.bf16.mxu0 0
        %945 = vmatpush1.bf16.msra.mxu0 %v942
        %946 = vmatprep.subr.bf16.mxu0 0
        %947 = vmatpush1.bf16.msra.mxu0 0
        %948 = vmatprep.subr.bf16.mxu0 0
        %949 = vmatpush1.bf16.msra.mxu0 0
        %950 = vmatprep.subr.bf16.mxu0 0
        %951 = vmatpush1.bf16.msra.mxu0 0
        %952 = vmatprep.subr.bf16.mxu0 0
        %953 = vmatpush1.bf16.msra.mxu0 0
        %954 = vmatprep.subr.bf16.mxu0 0
        %955 = vmatpush1.bf16.msra.mxu0 0
        %956 = vmatprep.subr.bf16.mxu0 0
        %957 = vmatpush1.bf16.msra.mxu0 0
        %958 = vmatprep.subr.bf16.mxu0 0
        %959 = vmatpush1.bf16.msra.mxu0 0
        %960 = vmatprep.subr.bf16.mxu0 0
        %961 = vmatpush1.bf16.msra.mxu0 0
        %962 = vmatprep.subr.bf16.mxu0 0
        %963 = vmatpush1.bf16.msra.mxu0 0
        %964 = vmatprep.subr.bf16.mxu0 0
        %965 = vmatpush1.bf16.msra.mxu0 0
        %966 = vmatprep.subr.bf16.mxu0 0
        %967 = vmatpush1.bf16.msra.mxu0 0
        %968 = vmatprep.subr.bf16.mxu0 0
        %969 = vmatpush1.bf16.msra.mxu0 0
        %970 = vmatprep.subr.bf16.mxu0 0
        %971 = vmatpush1.bf16.msra.mxu0 0
        %972 = vmatprep.subr.bf16.mxu0 0
        %973 = vmatpush1.bf16.msra.mxu0 0
        %974 = vmatprep.subr.bf16.mxu0 0
        %975 = vmatpush1.bf16.msra.mxu0 0
        %976 = vmatprep.mubr.bf16.mxu0 0
        %977 = vmatmul.mubr.bf16.gmra.mrb[0].mxu0 %v655
        %v978 = vpop.f32.mrb[0].mxu0
        %v979 = vadd.f32 0.0, %v978
        %v980 = vpop.f32.mrb[0].mxu0
        %v981 = vpop.f32.mrb[0].mxu0
        %v982 = vpop.f32.mrb[0].mxu0
        %983 = vdwg.mxu0
        %v984 = vpack.c.bf16 %v979, %v979
        %985 = vst.msk [vmem:[%s274 + $0x18] sm:$0xf] %vm702, %v984
        %s986 = scalar_lea.vmem %s4, 14
        %v987 = vld [vmem:[%s986] sm:$0x3]
        %v989 = vsel %vm657, %v987, 0
        %991 = vmatprep.subr.bf16.mxu0 0
        %992 = vmatpush1.bf16.msra.mxu0 %v989
        %993 = vmatprep.subr.bf16.mxu0 0
        %994 = vmatpush1.bf16.msra.mxu0 0
        %995 = vmatprep.subr.bf16.mxu0 0
        %996 = vmatpush1.bf16.msra.mxu0 0
        %997 = vmatprep.subr.bf16.mxu0 0
        %998 = vmatpush1.bf16.msra.mxu0 0
        %999 = vmatprep.subr.bf16.mxu0 0
        %1000 = vmatpush1.bf16.msra.mxu0 0
        %1001 = vmatprep.subr.bf16.mxu0 0
        %1002 = vmatpush1.bf16.msra.mxu0 0
        %1003 = vmatprep.subr.bf16.mxu0 0
        %1004 = vmatpush1.bf16.msra.mxu0 0
        %1005 = vmatprep.subr.bf16.mxu0 0
        %1006 = vmatpush1.bf16.msra.mxu0 0
        %1007 = vmatprep.subr.bf16.mxu0 0
        %1008 = vmatpush1.bf16.msra.mxu0 0
        %1009 = vmatprep.subr.bf16.mxu0 0
        %1010 = vmatpush1.bf16.msra.mxu0 0
        %1011 = vmatprep.subr.bf16.mxu0 0
        %1012 = vmatpush1.bf16.msra.mxu0 0
        %1013 = vmatprep.subr.bf16.mxu0 0
        %1014 = vmatpush1.bf16.msra.mxu0 0
        %1015 = vmatprep.subr.bf16.mxu0 0
        %1016 = vmatpush1.bf16.msra.mxu0 0
        %1017 = vmatprep.subr.bf16.mxu0 0
        %1018 = vmatpush1.bf16.msra.mxu0 0
        %1019 = vmatprep.subr.bf16.mxu0 0
        %1020 = vmatpush1.bf16.msra.mxu0 0
        %1021 = vmatprep.subr.bf16.mxu0 0
        %1022 = vmatpush1.bf16.msra.mxu0 0
        %1023 = vmatprep.mubr.bf16.mxu0 0
        %1024 = vmatmul.mubr.bf16.gmra.mrb[0].mxu0 %v655
        %v1025 = vpop.f32.mrb[0].mxu0
        %v1026 = vadd.f32 0.0, %v1025
        %v1027 = vpop.f32.mrb[0].mxu0
        %v1028 = vpop.f32.mrb[0].mxu0
        %v1029 = vpop.f32.mrb[0].mxu0
        %1030 = vdwg.mxu0
        %v1031 = vpack.c.bf16 %v1026, %v1026
        %1032 = vst.msk [vmem:[%s274 + $0x1c] sm:$0xf] %vm702, %v1031
        %s1033 = scalar_lea.vmem %s4, 16
        %v1034 = vld [vmem:[%s1033] sm:$0x3]
        %v1036 = vsel %vm657, %v1034, 0
        %1038 = vmatprep.subr.bf16.mxu0 0
        %1039 = vmatpush1.bf16.msra.mxu0 %v1036
        %1040 = vmatprep.subr.bf16.mxu0 0
        %1041 = vmatpush1.bf16.msra.mxu0 0
        %1042 = vmatprep.subr.bf16.mxu0 0
        %1043 = vmatpush1.bf16.msra.mxu0 0
        %1044 = vmatprep.subr.bf16.mxu0 0
        %1045 = vmatpush1.bf16.msra.mxu0 0
        %1046 = vmatprep.subr.bf16.mxu0 0
        %1047 = vmatpush1.bf16.msra.mxu0 0
        %1048 = vmatprep.subr.bf16.mxu0 0
        %1049 = vmatpush1.bf16.msra.mxu0 0
        %1050 = vmatprep.subr.bf16.mxu0 0
        %1051 = vmatpush1.bf16.msra.mxu0 0
        %1052 = vmatprep.subr.bf16.mxu0 0
        %1053 = vmatpush1.bf16.msra.mxu0 0
        %1054 = vmatprep.subr.bf16.mxu0 0
        %1055 = vmatpush1.bf16.msra.mxu0 0
        %1056 = vmatprep.subr.bf16.mxu0 0
        %1057 = vmatpush1.bf16.msra.mxu0 0
        %1058 = vmatprep.subr.bf16.mxu0 0
        %1059 = vmatpush1.bf16.msra.mxu0 0
        %1060 = vmatprep.subr.bf16.mxu0 0
        %1061 = vmatpush1.bf16.msra.mxu0 0
        %1062 = vmatprep.subr.bf16.mxu0 0
        %1063 = vmatpush1.bf16.msra.mxu0 0
        %1064 = vmatprep.subr.bf16.mxu0 0
        %1065 = vmatpush1.bf16.msra.mxu0 0
        %1066 = vmatprep.subr.bf16.mxu0 0
        %1067 = vmatpush1.bf16.msra.mxu0 0
        %1068 = vmatprep.subr.bf16.mxu0 0
        %1069 = vmatpush1.bf16.msra.mxu0 0
        %1070 = vmatprep.mubr.bf16.mxu0 0
        %1071 = vmatmul.mubr.bf16.gmra.mrb[0].mxu0 %v655
        %v1072 = vpop.f32.mrb[0].mxu0
        %v1073 = vadd.f32 0.0, %v1072
        %v1074 = vpop.f32.mrb[0].mxu0
        %v1075 = vpop.f32.mrb[0].mxu0
        %v1076 = vpop.f32.mrb[0].mxu0
        %1077 = vdwg.mxu0
        %v1078 = vpack.c.bf16 %v1073, %v1073
        %1079 = vst.msk [vmem:[%s274 + $0x20] sm:$0xf] %vm702, %v1078
        %s1080 = scalar_lea.vmem %s2, 4
        %v1081 = vld [vmem:[%s1080] sm:$0xf]
        %s1082 = scalar_lea.vmem %s3, 1
        %v1083 = vld [vmem:[%s1082] sm:$0x1]
        %v1085 = vlaneseq
        %v1086 = vshrl.u32 %v1085, 7
        %v1087 = vsub.s32 0, %v1086
        %v1088 = vrot.slane %v1083, %v1087
        %v1091 = vrot.slane %v586, 4
        %v1093 = vsel %vm564, %v1091, 0
        %v1096 = vsel %vm602, %v1081, 0
        %1098 = vmatprep.subr.bf16.mxu0 0
        %1099 = vmatpush1.bf16.msra.mxu0 %v1096
        %1100 = vmatprep.subr.bf16.mxu0 0
        %1101 = vmatpush1.bf16.msra.mxu0 0
        %1102 = vmatprep.subr.bf16.mxu0 0
        %1103 = vmatpush1.bf16.msra.mxu0 0
        %1104 = vmatprep.subr.bf16.mxu0 0
        %1105 = vmatpush1.bf16.msra.mxu0 0
        %1106 = vmatprep.subr.bf16.mxu0 0
        %1107 = vmatpush1.bf16.msra.mxu0 0
        %1108 = vmatprep.subr.bf16.mxu0 0
        %1109 = vmatpush1.bf16.msra.mxu0 0
        %1110 = vmatprep.subr.bf16.mxu0 0
        %1111 = vmatpush1.bf16.msra.mxu0 0
        %1112 = vmatprep.subr.bf16.mxu0 0
        %1113 = vmatpush1.bf16.msra.mxu0 0
        %1114 = vmatprep.subr.bf16.mxu0 0
        %1115 = vmatpush1.bf16.msra.mxu0 0
        %1116 = vmatprep.subr.bf16.mxu0 0
        %1117 = vmatpush1.bf16.msra.mxu0 0
        %1118 = vmatprep.subr.bf16.mxu0 0
        %1119 = vmatpush1.bf16.msra.mxu0 0
        %1120 = vmatprep.subr.bf16.mxu0 0
        %1121 = vmatpush1.bf16.msra.mxu0 0
        %1122 = vmatprep.subr.bf16.mxu0 0
        %1123 = vmatpush1.bf16.msra.mxu0 0
        %1124 = vmatprep.subr.bf16.mxu0 0
        %1125 = vmatpush1.bf16.msra.mxu0 0
        %1126 = vmatprep.subr.bf16.mxu0 0
        %1127 = vmatpush1.bf16.msra.mxu0 0
        %1128 = vmatprep.subr.bf16.mxu0 0
        %1129 = vmatpush1.bf16.msra.mxu0 0
        %1130 = vmatprep.mubr.bf16.mxu0 0
        %1131 = vmatmul.mubr.bf16.gmra.mrb[0].mxu0 %v1093
        %v1132 = vpop.f32.mrb[0].mxu0
        %v1133 = vadd.f32 %v1088, %v1132
        %v1134 = vpop.f32.mrb[0].mxu0
        %v1135 = vpop.f32.mrb[0].mxu0
        %v1136 = vpop.f32.mrb[0].mxu0
        %1137 = vdwg.mxu0
        %v1138 = vmax.f32 %v1133, 0.0
        %vm1139 = vcmp.lt.s32.totalorder %v648, 4
        %v1140 = vsel %vm1139, %v1138, 0.0
        %v1141 = vpack.c.bf16 %v1140, %v1140
        %s1142 = scalar_lea.vmem %s4, 18
        %v1143 = vld [vmem:[%s1142] sm:$0x3]
        %v1145 = vsel %vm653, %v1141, 0
        %v1148 = vsel %vm657, %v1143, 0
        %1150 = vmatprep.subr.bf16.mxu0 0
        %1151 = vmatpush1.bf16.msra.mxu0 %v1148
        %1152 = vmatprep.subr.bf16.mxu0 0
        %1153 = vmatpush1.bf16.msra.mxu0 0
        %1154 = vmatprep.subr.bf16.mxu0 0
        %1155 = vmatpush1.bf16.msra.mxu0 0
        %1156 = vmatprep.subr.bf16.mxu0 0
        %1157 = vmatpush1.bf16.msra.mxu0 0
        %1158 = vmatprep.subr.bf16.mxu0 0
        %1159 = vmatpush1.bf16.msra.mxu0 0
        %1160 = vmatprep.subr.bf16.mxu0 0
        %1161 = vmatpush1.bf16.msra.mxu0 0
        %1162 = vmatprep.subr.bf16.mxu0 0
        %1163 = vmatpush1.bf16.msra.mxu0 0
        %1164 = vmatprep.subr.bf16.mxu0 0
        %1165 = vmatpush1.bf16.msra.mxu0 0
        %1166 = vmatprep.subr.bf16.mxu0 0
        %1167 = vmatpush1.bf16.msra.mxu0 0
        %1168 = vmatprep.subr.bf16.mxu0 0
        %1169 = vmatpush1.bf16.msra.mxu0 0
        %1170 = vmatprep.subr.bf16.mxu0 0
        %1171 = vmatpush1.bf16.msra.mxu0 0
        %1172 = vmatprep.subr.bf16.mxu0 0
        %1173 = vmatpush1.bf16.msra.mxu0 0
        %1174 = vmatprep.subr.bf16.mxu0 0
        %1175 = vmatpush1.bf16.msra.mxu0 0
        %1176 = vmatprep.subr.bf16.mxu0 0
        %1177 = vmatpush1.bf16.msra.mxu0 0
        %1178 = vmatprep.subr.bf16.mxu0 0
        %1179 = vmatpush1.bf16.msra.mxu0 0
        %1180 = vmatprep.subr.bf16.mxu0 0
        %1181 = vmatpush1.bf16.msra.mxu0 0
        %1182 = vmatprep.mubr.bf16.mxu0 0
        %1183 = vmatmul.mubr.bf16.gmra.mrb[0].mxu0 %v1145
        %v1184 = vpop.f32.mrb[0].mxu0
        %v1185 = vadd.f32 0.0, %v1184
        %v1186 = vpop.f32.mrb[0].mxu0
        %v1187 = vpop.f32.mrb[0].mxu0
        %v1188 = vpop.f32.mrb[0].mxu0
        %1189 = vdwg.mxu0
        %v1190 = vpack.c.bf16 %v1185, %v1185
        %1191 = vst.msk [vmem:[%s274 + $0x24] sm:$0xf] %vm702, %v1190
        %s1192 = scalar_lea.vmem %s4, 20
        %v1193 = vld [vmem:[%s1192] sm:$0x3]
        %v1195 = vsel %vm657, %v1193, 0
        %1197 = vmatprep.subr.bf16.mxu0 0
        %1198 = vmatpush1.bf16.msra.mxu0 %v1195
        %1199 = vmatprep.subr.bf16.mxu0 0
        %1200 = vmatpush1.bf16.msra.mxu0 0
        %1201 = vmatprep.subr.bf16.mxu0 0
        %1202 = vmatpush1.bf16.msra.mxu0 0
        %1203 = vmatprep.subr.bf16.mxu0 0
        %1204 = vmatpush1.bf16.msra.mxu0 0
        %1205 = vmatprep.subr.bf16.mxu0 0
        %1206 = vmatpush1.bf16.msra.mxu0 0
        %1207 = vmatprep.subr.bf16.mxu0 0
        %1208 = vmatpush1.bf16.msra.mxu0 0
        %1209 = vmatprep.subr.bf16.mxu0 0
        %1210 = vmatpush1.bf16.msra.mxu0 0
        %1211 = vmatprep.subr.bf16.mxu0 0
        %1212 = vmatpush1.bf16.msra.mxu0 0
        %1213 = vmatprep.subr.bf16.mxu0 0
        %1214 = vmatpush1.bf16.msra.mxu0 0
        %1215 = vmatprep.subr.bf16.mxu0 0
        %1216 = vmatpush1.bf16.msra.mxu0 0
        %1217 = vmatprep.subr.bf16.mxu0 0
        %1218 = vmatpush1.bf16.msra.mxu0 0
        %1219 = vmatprep.subr.bf16.mxu0 0
        %1220 = vmatpush1.bf16.msra.mxu0 0
        %1221 = vmatprep.subr.bf16.mxu0 0
        %1222 = vmatpush1.bf16.msra.mxu0 0
        %1223 = vmatprep.subr.bf16.mxu0 0
        %1224 = vmatpush1.bf16.msra.mxu0 0
        %1225 = vmatprep.subr.bf16.mxu0 0
        %1226 = vmatpush1.bf16.msra.mxu0 0
        %1227 = vmatprep.subr.bf16.mxu0 0
        %1228 = vmatpush1.bf16.msra.mxu0 0
        %1229 = vmatprep.mubr.bf16.mxu0 0
        %1230 = vmatmul.mubr.bf16.gmra.mrb[0].mxu0 %v1145
        %v1231 = vpop.f32.mrb[0].mxu0
        %v1232 = vadd.f32 0.0, %v1231
        %v1233 = vpop.f32.mrb[0].mxu0
        %v1234 = vpop.f32.mrb[0].mxu0
        %v1235 = vpop.f32.mrb[0].mxu0
        %1236 = vdwg.mxu0
        %v1237 = vpack.c.bf16 %v1232, %v1232
        %1238 = vst.msk [vmem:[%s274 + $0x28] sm:$0xf] %vm702, %v1237
        %s1239 = scalar_lea.vmem %s4, 22
        %v1240 = vld [vmem:[%s1239] sm:$0x3]
        %v1242 = vsel %vm657, %v1240, 0
        %1244 = vmatprep.subr.bf16.mxu0 0
        %1245 = vmatpush1.bf16.msra.mxu0 %v1242
        %1246 = vmatprep.subr.bf16.mxu0 0
        %1247 = vmatpush1.bf16.msra.mxu0 0
        %1248 = vmatprep.subr.bf16.mxu0 0
        %1249 = vmatpush1.bf16.msra.mxu0 0
        %1250 = vmatprep.subr.bf16.mxu0 0
        %1251 = vmatpush1.bf16.msra.mxu0 0
        %1252 = vmatprep.subr.bf16.mxu0 0
        %1253 = vmatpush1.bf16.msra.mxu0 0
        %1254 = vmatprep.subr.bf16.mxu0 0
        %1255 = vmatpush1.bf16.msra.mxu0 0
        %1256 = vmatprep.subr.bf16.mxu0 0
        %1257 = vmatpush1.bf16.msra.mxu0 0
        %1258 = vmatprep.subr.bf16.mxu0 0
        %1259 = vmatpush1.bf16.msra.mxu0 0
        %1260 = vmatprep.subr.bf16.mxu0 0
        %1261 = vmatpush1.bf16.msra.mxu0 0
        %1262 = vmatprep.subr.bf16.mxu0 0
        %1263 = vmatpush1.bf16.msra.mxu0 0
        %1264 = vmatprep.subr.bf16.mxu0 0
        %1265 = vmatpush1.bf16.msra.mxu0 0
        %1266 = vmatprep.subr.bf16.mxu0 0
        %1267 = vmatpush1.bf16.msra.mxu0 0
        %1268 = vmatprep.subr.bf16.mxu0 0
        %1269 = vmatpush1.bf16.msra.mxu0 0
        %1270 = vmatprep.subr.bf16.mxu0 0
        %1271 = vmatpush1.bf16.msra.mxu0 0
        %1272 = vmatprep.subr.bf16.mxu0 0
        %1273 = vmatpush1.bf16.msra.mxu0 0
        %1274 = vmatprep.subr.bf16.mxu0 0
        %1275 = vmatpush1.bf16.msra.mxu0 0
        %1276 = vmatprep.mubr.bf16.mxu0 0
        %1277 = vmatmul.mubr.bf16.gmra.mrb[0].mxu0 %v1145
        %v1278 = vpop.f32.mrb[0].mxu0
        %v1279 = vadd.f32 0.0, %v1278
        %v1280 = vpop.f32.mrb[0].mxu0
        %v1281 = vpop.f32.mrb[0].mxu0
        %v1282 = vpop.f32.mrb[0].mxu0
        %1283 = vdwg.mxu0
        %v1284 = vpack.c.bf16 %v1279, %v1279
        %1285 = vst.msk [vmem:[%s274 + $0x2c] sm:$0xf] %vm702, %v1284
        %s1286 = scalar_lea.vmem %s4, 24
        %v1287 = vld [vmem:[%s1286] sm:$0x3]
        %v1289 = vsel %vm657, %v1287, 0
        %1291 = vmatprep.subr.bf16.mxu0 0
        %1292 = vmatpush1.bf16.msra.mxu0 %v1289
        %1293 = vmatprep.subr.bf16.mxu0 0
        %1294 = vmatpush1.bf16.msra.mxu0 0
        %1295 = vmatprep.subr.bf16.mxu0 0
        %1296 = vmatpush1.bf16.msra.mxu0 0
        %1297 = vmatprep.subr.bf16.mxu0 0
        %1298 = vmatpush1.bf16.msra.mxu0 0
        %1299 = vmatprep.subr.bf16.mxu0 0
        %1300 = vmatpush1.bf16.msra.mxu0 0
        %1301 = vmatprep.subr.bf16.mxu0 0
        %1302 = vmatpush1.bf16.msra.mxu0 0
        %1303 = vmatprep.subr.bf16.mxu0 0
        %1304 = vmatpush1.bf16.msra.mxu0 0
        %1305 = vmatprep.subr.bf16.mxu0 0
        %1306 = vmatpush1.bf16.msra.mxu0 0
        %1307 = vmatprep.subr.bf16.mxu0 0
        %1308 = vmatpush1.bf16.msra.mxu0 0
        %1309 = vmatprep.subr.bf16.mxu0 0
        %1310 = vmatpush1.bf16.msra.mxu0 0
        %1311 = vmatprep.subr.bf16.mxu0 0
        %1312 = vmatpush1.bf16.msra.mxu0 0
        %1313 = vmatprep.subr.bf16.mxu0 0
        %1314 = vmatpush1.bf16.msra.mxu0 0
        %1315 = vmatprep.subr.bf16.mxu0 0
        %1316 = vmatpush1.bf16.msra.mxu0 0
        %1317 = vmatprep.subr.bf16.mxu0 0
        %1318 = vmatpush1.bf16.msra.mxu0 0
        %1319 = vmatprep.subr.bf16.mxu0 0
        %1320 = vmatpush1.bf16.msra.mxu0 0
        %1321 = vmatprep.subr.bf16.mxu0 0
        %1322 = vmatpush1.bf16.msra.mxu0 0
        %1323 = vmatprep.mubr.bf16.mxu0 0
        %1324 = vmatmul.mubr.bf16.gmra.mrb[0].mxu0 %v1145
        %v1325 = vpop.f32.mrb[0].mxu0
        %v1326 = vadd.f32 0.0, %v1325
        %v1327 = vpop.f32.mrb[0].mxu0
        %v1328 = vpop.f32.mrb[0].mxu0
        %v1329 = vpop.f32.mrb[0].mxu0
        %1330 = vdwg.mxu0
        %v1331 = vpack.c.bf16 %v1326, %v1326
        %1332 = vst.msk [vmem:[%s274 + $0x30] sm:$0xf] %vm702, %v1331
        %s1333 = scalar_lea.vmem %s4, 26
        %v1334 = vld [vmem:[%s1333] sm:$0x3]
        %v1336 = vsel %vm657, %v1334, 0
        %1338 = vmatprep.subr.bf16.mxu0 0
        %1339 = vmatpush1.bf16.msra.mxu0 %v1336
        %1340 = vmatprep.subr.bf16.mxu0 0
        %1341 = vmatpush1.bf16.msra.mxu0 0
        %1342 = vmatprep.subr.bf16.mxu0 0
        %1343 = vmatpush1.bf16.msra.mxu0 0
        %1344 = vmatprep.subr.bf16.mxu0 0
        %1345 = vmatpush1.bf16.msra.mxu0 0
        %1346 = vmatprep.subr.bf16.mxu0 0
        %1347 = vmatpush1.bf16.msra.mxu0 0
        %1348 = vmatprep.subr.bf16.mxu0 0
        %1349 = vmatpush1.bf16.msra.mxu0 0
        %1350 = vmatprep.subr.bf16.mxu0 0
        %1351 = vmatpush1.bf16.msra.mxu0 0
        %1352 = vmatprep.subr.bf16.mxu0 0
        %1353 = vmatpush1.bf16.msra.mxu0 0
        %1354 = vmatprep.subr.bf16.mxu0 0
        %1355 = vmatpush1.bf16.msra.mxu0 0
        %1356 = vmatprep.subr.bf16.mxu0 0
        %1357 = vmatpush1.bf16.msra.mxu0 0
        %1358 = vmatprep.subr.bf16.mxu0 0
        %1359 = vmatpush1.bf16.msra.mxu0 0
        %1360 = vmatprep.subr.bf16.mxu0 0
        %1361 = vmatpush1.bf16.msra.mxu0 0
        %1362 = vmatprep.subr.bf16.mxu0 0
        %1363 = vmatpush1.bf16.msra.mxu0 0
        %1364 = vmatprep.subr.bf16.mxu0 0
        %1365 = vmatpush1.bf16.msra.mxu0 0
        %1366 = vmatprep.subr.bf16.mxu0 0
        %1367 = vmatpush1.bf16.msra.mxu0 0
        %1368 = vmatprep.subr.bf16.mxu0 0
        %1369 = vmatpush1.bf16.msra.mxu0 0
        %1370 = vmatprep.mubr.bf16.mxu0 0
        %1371 = vmatmul.mubr.bf16.gmra.mrb[0].mxu0 %v1145
        %v1372 = vpop.f32.mrb[0].mxu0
        %v1373 = vadd.f32 0.0, %v1372
        %v1374 = vpop.f32.mrb[0].mxu0
        %v1375 = vpop.f32.mrb[0].mxu0
        %v1376 = vpop.f32.mrb[0].mxu0
        %1377 = vdwg.mxu0
        %v1378 = vpack.c.bf16 %v1373, %v1373
        %1379 = vst.msk [vmem:[%s274 + $0x34] sm:$0xf] %vm702, %v1378
        %s1380 = scalar_lea.vmem %s4, 28
        %v1381 = vld [vmem:[%s1380] sm:$0x3]
        %v1383 = vsel %vm657, %v1381, 0
        %1385 = vmatprep.subr.bf16.mxu0 0
        %1386 = vmatpush1.bf16.msra.mxu0 %v1383
        %1387 = vmatprep.subr.bf16.mxu0 0
        %1388 = vmatpush1.bf16.msra.mxu0 0
        %1389 = vmatprep.subr.bf16.mxu0 0
        %1390 = vmatpush1.bf16.msra.mxu0 0
        %1391 = vmatprep.subr.bf16.mxu0 0
        %1392 = vmatpush1.bf16.msra.mxu0 0
        %1393 = vmatprep.subr.bf16.mxu0 0
        %1394 = vmatpush1.bf16.msra.mxu0 0
        %1395 = vmatprep.subr.bf16.mxu0 0
        %1396 = vmatpush1.bf16.msra.mxu0 0
        %1397 = vmatprep.subr.bf16.mxu0 0
        %1398 = vmatpush1.bf16.msra.mxu0 0
        %1399 = vmatprep.subr.bf16.mxu0 0
        %1400 = vmatpush1.bf16.msra.mxu0 0
        %1401 = vmatprep.subr.bf16.mxu0 0
        %1402 = vmatpush1.bf16.msra.mxu0 0
        %1403 = vmatprep.subr.bf16.mxu0 0
        %1404 = vmatpush1.bf16.msra.mxu0 0
        %1405 = vmatprep.subr.bf16.mxu0 0
        %1406 = vmatpush1.bf16.msra.mxu0 0
        %1407 = vmatprep.subr.bf16.mxu0 0
        %1408 = vmatpush1.bf16.msra.mxu0 0
        %1409 = vmatprep.subr.bf16.mxu0 0
        %1410 = vmatpush1.bf16.msra.mxu0 0
        %1411 = vmatprep.subr.bf16.mxu0 0
        %1412 = vmatpush1.bf16.msra.mxu0 0
        %1413 = vmatprep.subr.bf16.mxu0 0
        %1414 = vmatpush1.bf16.msra.mxu0 0
        %1415 = vmatprep.subr.bf16.mxu0 0
        %1416 = vmatpush1.bf16.msra.mxu0 0
        %1417 = vmatprep.mubr.bf16.mxu0 0
        %1418 = vmatmul.mubr.bf16.gmra.mrb[0].mxu0 %v1145
        %v1419 = vpop.f32.mrb[0].mxu0
        %v1420 = vadd.f32 0.0, %v1419
        %v1421 = vpop.f32.mrb[0].mxu0
        %v1422 = vpop.f32.mrb[0].mxu0
        %v1423 = vpop.f32.mrb[0].mxu0
        %1424 = vdwg.mxu0
        %v1425 = vpack.c.bf16 %v1420, %v1420
        %1426 = vst.msk [vmem:[%s274 + $0x38] sm:$0xf] %vm702, %v1425
        %s1427 = scalar_lea.vmem %s4, 30
        %v1428 = vld [vmem:[%s1427] sm:$0x3]
        %v1430 = vsel %vm657, %v1428, 0
        %1432 = vmatprep.subr.bf16.mxu0 0
        %1433 = vmatpush1.bf16.msra.mxu0 %v1430
        %1434 = vmatprep.subr.bf16.mxu0 0
        %1435 = vmatpush1.bf16.msra.mxu0 0
        %1436 = vmatprep.subr.bf16.mxu0 0
        %1437 = vmatpush1.bf16.msra.mxu0 0
        %1438 = vmatprep.subr.bf16.mxu0 0
        %1439 = vmatpush1.bf16.msra.mxu0 0
        %1440 = vmatprep.subr.bf16.mxu0 0
        %1441 = vmatpush1.bf16.msra.mxu0 0
        %1442 = vmatprep.subr.bf16.mxu0 0
        %1443 = vmatpush1.bf16.msra.mxu0 0
        %1444 = vmatprep.subr.bf16.mxu0 0
        %1445 = vmatpush1.bf16.msra.mxu0 0
        %1446 = vmatprep.subr.bf16.mxu0 0
        %1447 = vmatpush1.bf16.msra.mxu0 0
        %1448 = vmatprep.subr.bf16.mxu0 0
        %1449 = vmatpush1.bf16.msra.mxu0 0
        %1450 = vmatprep.subr.bf16.mxu0 0
        %1451 = vmatpush1.bf16.msra.mxu0 0
        %1452 = vmatprep.subr.bf16.mxu0 0
        %1453 = vmatpush1.bf16.msra.mxu0 0
        %1454 = vmatprep.subr.bf16.mxu0 0
        %1455 = vmatpush1.bf16.msra.mxu0 0
        %1456 = vmatprep.subr.bf16.mxu0 0
        %1457 = vmatpush1.bf16.msra.mxu0 0
        %1458 = vmatprep.subr.bf16.mxu0 0
        %1459 = vmatpush1.bf16.msra.mxu0 0
        %1460 = vmatprep.subr.bf16.mxu0 0
        %1461 = vmatpush1.bf16.msra.mxu0 0
        %1462 = vmatprep.subr.bf16.mxu0 0
        %1463 = vmatpush1.bf16.msra.mxu0 0
        %1464 = vmatprep.mubr.bf16.mxu0 0
        %1465 = vmatmul.mubr.bf16.gmra.mrb[0].mxu0 %v1145
        %v1466 = vpop.f32.mrb[0].mxu0
        %v1467 = vadd.f32 0.0, %v1466
        %v1468 = vpop.f32.mrb[0].mxu0
        %v1469 = vpop.f32.mrb[0].mxu0
        %v1470 = vpop.f32.mrb[0].mxu0
        %1471 = vdwg.mxu0
        %v1472 = vpack.c.bf16 %v1467, %v1467
        %1473 = vst.msk [vmem:[%s274 + $0x3c] sm:$0xf] %vm702, %v1472
        %s1474 = scalar_lea.vmem %s4, 32
        %v1475 = vld [vmem:[%s1474] sm:$0x3]
        %v1477 = vsel %vm657, %v1475, 0
        %1479 = vmatprep.subr.bf16.mxu0 0
        %1480 = vmatpush1.bf16.msra.mxu0 %v1477
        %1481 = vmatprep.subr.bf16.mxu0 0
        %1482 = vmatpush1.bf16.msra.mxu0 0
        %1483 = vmatprep.subr.bf16.mxu0 0
        %1484 = vmatpush1.bf16.msra.mxu0 0
        %1485 = vmatprep.subr.bf16.mxu0 0
        %1486 = vmatpush1.bf16.msra.mxu0 0
        %1487 = vmatprep.subr.bf16.mxu0 0
        %1488 = vmatpush1.bf16.msra.mxu0 0
        %1489 = vmatprep.subr.bf16.mxu0 0
        %1490 = vmatpush1.bf16.msra.mxu0 0
        %1491 = vmatprep.subr.bf16.mxu0 0
        %1492 = vmatpush1.bf16.msra.mxu0 0
        %1493 = vmatprep.subr.bf16.mxu0 0
        %1494 = vmatpush1.bf16.msra.mxu0 0
        %1495 = vmatprep.subr.bf16.mxu0 0
        %1496 = vmatpush1.bf16.msra.mxu0 0
        %1497 = vmatprep.subr.bf16.mxu0 0
        %1498 = vmatpush1.bf16.msra.mxu0 0
        %1499 = vmatprep.subr.bf16.mxu0 0
        %1500 = vmatpush1.bf16.msra.mxu0 0
        %1501 = vmatprep.subr.bf16.mxu0 0
        %1502 = vmatpush1.bf16.msra.mxu0 0
        %1503 = vmatprep.subr.bf16.mxu0 0
        %1504 = vmatpush1.bf16.msra.mxu0 0
        %1505 = vmatprep.subr.bf16.mxu0 0
        %1506 = vmatpush1.bf16.msra.mxu0 0
        %1507 = vmatprep.subr.bf16.mxu0 0
        %1508 = vmatpush1.bf16.msra.mxu0 0
        %1509 = vmatprep.subr.bf16.mxu0 0
        %1510 = vmatpush1.bf16.msra.mxu0 0
        %1511 = vmatprep.mubr.bf16.mxu0 0
        %1512 = vmatmul.mubr.bf16.gmra.mrb[0].mxu0 %v1145
        %v1513 = vpop.f32.mrb[0].mxu0
        %v1514 = vadd.f32 0.0, %v1513
        %v1515 = vpop.f32.mrb[0].mxu0
        %v1516 = vpop.f32.mrb[0].mxu0
        %v1517 = vpop.f32.mrb[0].mxu0
        %1518 = vdwg.mxu0
        %v1519 = vpack.c.bf16 %v1514, %v1514
        %1520 = vst.msk [vmem:[%s274 + $0x40] sm:$0xf] %vm702, %v1519
        %s1521 = scalar_lea.vmem %s4, 34
        %v1522 = vld [vmem:[%s1521] sm:$0x3]
        %v1524 = vsel %vm657, %v1522, 0
        %1526 = vmatprep.subr.bf16.mxu0 0
        %1527 = vmatpush1.bf16.msra.mxu0 %v1524
        %1528 = vmatprep.subr.bf16.mxu0 0
        %1529 = vmatpush1.bf16.msra.mxu0 0
        %1530 = vmatprep.subr.bf16.mxu0 0
        %1531 = vmatpush1.bf16.msra.mxu0 0
        %1532 = vmatprep.subr.bf16.mxu0 0
        %1533 = vmatpush1.bf16.msra.mxu0 0
        %1534 = vmatprep.subr.bf16.mxu0 0
        %1535 = vmatpush1.bf16.msra.mxu0 0
        %1536 = vmatprep.subr.bf16.mxu0 0
        %1537 = vmatpush1.bf16.msra.mxu0 0
        %1538 = vmatprep.subr.bf16.mxu0 0
        %1539 = vmatpush1.bf16.msra.mxu0 0
        %1540 = vmatprep.subr.bf16.mxu0 0
        %1541 = vmatpush1.bf16.msra.mxu0 0
        %1542 = vmatprep.subr.bf16.mxu0 0
        %1543 = vmatpush1.bf16.msra.mxu0 0
        %1544 = vmatprep.subr.bf16.mxu0 0
        %1545 = vmatpush1.bf16.msra.mxu0 0
        %1546 = vmatprep.subr.bf16.mxu0 0
        %1547 = vmatpush1.bf16.msra.mxu0 0
        %1548 = vmatprep.subr.bf16.mxu0 0
        %1549 = vmatpush1.bf16.msra.mxu0 0
        %1550 = vmatprep.subr.bf16.mxu0 0
        %1551 = vmatpush1.bf16.msra.mxu0 0
        %1552 = vmatprep.subr.bf16.mxu0 0
        %1553 = vmatpush1.bf16.msra.mxu0 0
        %1554 = vmatprep.subr.bf16.mxu0 0
        %1555 = vmatpush1.bf16.msra.mxu0 0
        %1556 = vmatprep.subr.bf16.mxu0 0
        %1557 = vmatpush1.bf16.msra.mxu0 0
        %1558 = vmatprep.mubr.bf16.mxu0 0
        %1559 = vmatmul.mubr.bf16.gmra.mrb[0].mxu0 %v1145
        %v1560 = vpop.f32.mrb[0].mxu0
        %v1561 = vadd.f32 0.0, %v1560
        %v1562 = vpop.f32.mrb[0].mxu0
        %v1563 = vpop.f32.mrb[0].mxu0
        %v1564 = vpop.f32.mrb[0].mxu0
        %1565 = vdwg.mxu0
        %v1566 = vpack.c.bf16 %v1561, %v1561
        %1567 = vst.msk [vmem:[%s274 + $0x44] sm:$0xf] %vm702, %v1566
        %s1568 = scalar_lea.vmem %s2, 8
        %v1569 = vld [vmem:[%s1568] sm:$0xf]
        %s1570 = scalar_lea.vmem %s3, 2
        %v1571 = vld [vmem:[%s1570] sm:$0x1]
        %v1573 = vlaneseq
        %v1574 = vshrl.u32 %v1573, 7
        %v1575 = vsub.s32 0, %v1574
        %v1576 = vrot.slane %v1571, %v1575
        %v1579 = vsel %vm564, %v587, 0
        %v1582 = vsel %vm602, %v1569, 0
        %1584 = vmatprep.subr.bf16.mxu0 0
        %1585 = vmatpush1.bf16.msra.mxu0 %v1582
        %1586 = vmatprep.subr.bf16.mxu0 0
        %1587 = vmatpush1.bf16.msra.mxu0 0
        %1588 = vmatprep.subr.bf16.mxu0 0
        %1589 = vmatpush1.bf16.msra.mxu0 0
        %1590 = vmatprep.subr.bf16.mxu0 0
        %1591 = vmatpush1.bf16.msra.mxu0 0
        %1592 = vmatprep.subr.bf16.mxu0 0
        %1593 = vmatpush1.bf16.msra.mxu0 0
        %1594 = vmatprep.subr.bf16.mxu0 0
        %1595 = vmatpush1.bf16.msra.mxu0 0
        %1596 = vmatprep.subr.bf16.mxu0 0
        %1597 = vmatpush1.bf16.msra.mxu0 0
        %1598 = vmatprep.subr.bf16.mxu0 0
        %1599 = vmatpush1.bf16.msra.mxu0 0
        %1600 = vmatprep.subr.bf16.mxu0 0
        %1601 = vmatpush1.bf16.msra.mxu0 0
        %1602 = vmatprep.subr.bf16.mxu0 0
        %1603 = vmatpush1.bf16.msra.mxu0 0
        %1604 = vmatprep.subr.bf16.mxu0 0
        %1605 = vmatpush1.bf16.msra.mxu0 0
        %1606 = vmatprep.subr.bf16.mxu0 0
        %1607 = vmatpush1.bf16.msra.mxu0 0
        %1608 = vmatprep.subr.bf16.mxu0 0
        %1609 = vmatpush1.bf16.msra.mxu0 0
        %1610 = vmatprep.subr.bf16.mxu0 0
        %1611 = vmatpush1.bf16.msra.mxu0 0
        %1612 = vmatprep.subr.bf16.mxu0 0
        %1613 = vmatpush1.bf16.msra.mxu0 0
        %1614 = vmatprep.subr.bf16.mxu0 0
        %1615 = vmatpush1.bf16.msra.mxu0 0
        %1616 = vmatprep.mubr.bf16.mxu0 0
        %1617 = vmatmul.mubr.bf16.gmra.mrb[0].mxu0 %v1579
        %v1618 = vpop.f32.mrb[0].mxu0
        %v1619 = vadd.f32 %v1576, %v1618
        %v1620 = vpop.f32.mrb[0].mxu0
        %v1621 = vpop.f32.mrb[0].mxu0
        %v1622 = vadd.f32 %v1576, %v1621
        %v1623 = vpop.f32.mrb[0].mxu0
        %1624 = vdwg.mxu0
        %v1625 = vmax.f32 %v1619, 0.0
        %v1626 = vmax.f32 %v1622, 0.0
        %v1627 = vadd.s32 %v648, 8
        %vm1628 = vcmp.lt.s32.totalorder %v648, 9
        %vm1629 = vcmp.lt.s32.totalorder %v1627, 9
        %v1630 = vsel %vm1628, %v1625, 0.0
        %v1631 = vsel %vm1629, %v1626, 0.0
        %v1632 = vpack.c.bf16 %v1631, %v1630
        %s1633 = scalar_lea.vmem %s4, 36
        %v1634 = vld [vmem:[%s1633] sm:$0x3]
        %v1636 = vsel %vm653, %v1632, 0
        %v1639 = vsel %vm657, %v1634, 0
        %1641 = vmatprep.subr.bf16.mxu0 0
        %1642 = vmatpush1.bf16.msra.mxu0 %v1639
        %1643 = vmatprep.subr.bf16.mxu0 0
        %1644 = vmatpush1.bf16.msra.mxu0 0
        %1645 = vmatprep.subr.bf16.mxu0 0
        %1646 = vmatpush1.bf16.msra.mxu0 0
        %1647 = vmatprep.subr.bf16.mxu0 0
        %1648 = vmatpush1.bf16.msra.mxu0 0
        %1649 = vmatprep.subr.bf16.mxu0 0
        %1650 = vmatpush1.bf16.msra.mxu0 0
        %1651 = vmatprep.subr.bf16.mxu0 0
        %1652 = vmatpush1.bf16.msra.mxu0 0
        %1653 = vmatprep.subr.bf16.mxu0 0
        %1654 = vmatpush1.bf16.msra.mxu0 0
        %1655 = vmatprep.subr.bf16.mxu0 0
        %1656 = vmatpush1.bf16.msra.mxu0 0
        %1657 = vmatprep.subr.bf16.mxu0 0
        %1658 = vmatpush1.bf16.msra.mxu0 0
        %1659 = vmatprep.subr.bf16.mxu0 0
        %1660 = vmatpush1.bf16.msra.mxu0 0
        %1661 = vmatprep.subr.bf16.mxu0 0
        %1662 = vmatpush1.bf16.msra.mxu0 0
        %1663 = vmatprep.subr.bf16.mxu0 0
        %1664 = vmatpush1.bf16.msra.mxu0 0
        %1665 = vmatprep.subr.bf16.mxu0 0
        %1666 = vmatpush1.bf16.msra.mxu0 0
        %1667 = vmatprep.subr.bf16.mxu0 0
        %1668 = vmatpush1.bf16.msra.mxu0 0
        %1669 = vmatprep.subr.bf16.mxu0 0
        %1670 = vmatpush1.bf16.msra.mxu0 0
        %1671 = vmatprep.subr.bf16.mxu0 0
        %1672 = vmatpush1.bf16.msra.mxu0 0
        %1673 = vmatprep.mubr.bf16.mxu0 0
        %1674 = vmatmul.mubr.bf16.gmra.mrb[0].mxu0 %v1636
        %v1675 = vpop.f32.mrb[0].mxu0
        %v1676 = vadd.f32 0.0, %v1675
        %v1677 = vpop.f32.mrb[0].mxu0
        %v1678 = vpop.f32.mrb[0].mxu0
        %v1679 = vadd.f32 0.0, %v1678
        %v1680 = vpop.f32.mrb[0].mxu0
        %1681 = vdwg.mxu0
        %v1682 = vpack.c.bf16 %v1679, %v1676
        %v1684 = vunpack.c.l.b16 %v1682
        %v1685 = vunpack.c.h.b16 %v1682
        %v1686 = vpack.c.b16 %v1684, %v1684
        %v1687 = vpack.c.b16 %v1685, %v1685
        %1690 = vst.msk [vmem:[%s274 + $0x48] sm:$0xf] %vm702, %v1686
        %1691 = vst.msk [vmem:[%s274 + $0x4c] sm:$0xf] %vm702, %v1687
        %s1692 = scalar_lea.vmem %s4, 38
        %v1693 = vld [vmem:[%s1692] sm:$0x3]
        %v1695 = vsel %vm657, %v1693, 0
        %1697 = vmatprep.subr.bf16.mxu0 0
        %1698 = vmatpush1.bf16.msra.mxu0 %v1695
        %1699 = vmatprep.subr.bf16.mxu0 0
        %1700 = vmatpush1.bf16.msra.mxu0 0
        %1701 = vmatprep.subr.bf16.mxu0 0
        %1702 = vmatpush1.bf16.msra.mxu0 0
        %1703 = vmatprep.subr.bf16.mxu0 0
        %1704 = vmatpush1.bf16.msra.mxu0 0
        %1705 = vmatprep.subr.bf16.mxu0 0
        %1706 = vmatpush1.bf16.msra.mxu0 0
        %1707 = vmatprep.subr.bf16.mxu0 0
        %1708 = vmatpush1.bf16.msra.mxu0 0
        %1709 = vmatprep.subr.bf16.mxu0 0
        %1710 = vmatpush1.bf16.msra.mxu0 0
        %1711 = vmatprep.subr.bf16.mxu0 0
        %1712 = vmatpush1.bf16.msra.mxu0 0
        %1713 = vmatprep.subr.bf16.mxu0 0
        %1714 = vmatpush1.bf16.msra.mxu0 0
        %1715 = vmatprep.subr.bf16.mxu0 0
        %1716 = vmatpush1.bf16.msra.mxu0 0
        %1717 = vmatprep.subr.bf16.mxu0 0
        %1718 = vmatpush1.bf16.msra.mxu0 0
        %1719 = vmatprep.subr.bf16.mxu0 0
        %1720 = vmatpush1.bf16.msra.mxu0 0
        %1721 = vmatprep.subr.bf16.mxu0 0
        %1722 = vmatpush1.bf16.msra.mxu0 0
        %1723 = vmatprep.subr.bf16.mxu0 0
        %1724 = vmatpush1.bf16.msra.mxu0 0
        %1725 = vmatprep.subr.bf16.mxu0 0
        %1726 = vmatpush1.bf16.msra.mxu0 0
        %1727 = vmatprep.subr.bf16.mxu0 0
        %1728 = vmatpush1.bf16.msra.mxu0 0
        %1729 = vmatprep.mubr.bf16.mxu0 0
        %1730 = vmatmul.mubr.bf16.gmra.mrb[0].mxu0 %v1636
        %v1731 = vpop.f32.mrb[0].mxu0
        %v1732 = vadd.f32 0.0, %v1731
        %v1733 = vpop.f32.mrb[0].mxu0
        %v1734 = vpop.f32.mrb[0].mxu0
        %v1735 = vadd.f32 0.0, %v1734
        %v1736 = vpop.f32.mrb[0].mxu0
        %1737 = vdwg.mxu0
        %v1738 = vpack.c.bf16 %v1735, %v1732
        %v1740 = vunpack.c.l.b16 %v1738
        %v1741 = vunpack.c.h.b16 %v1738
        %v1742 = vpack.c.b16 %v1740, %v1740
        %v1743 = vpack.c.b16 %v1741, %v1741
        %1746 = vst.msk [vmem:[%s274 + $0x50] sm:$0xf] %vm702, %v1742
        %1747 = vst.msk [vmem:[%s274 + $0x54] sm:$0xf] %vm702, %v1743
        %s1748 = scalar_lea.vmem %s4, 40
        %v1749 = vld [vmem:[%s1748] sm:$0x3]
        %v1751 = vsel %vm657, %v1749, 0
        %1753 = vmatprep.subr.bf16.mxu0 0
        %1754 = vmatpush1.bf16.msra.mxu0 %v1751
        %1755 = vmatprep.subr.bf16.mxu0 0
        %1756 = vmatpush1.bf16.msra.mxu0 0
        %1757 = vmatprep.subr.bf16.mxu0 0
        %1758 = vmatpush1.bf16.msra.mxu0 0
        %1759 = vmatprep.subr.bf16.mxu0 0
        %1760 = vmatpush1.bf16.msra.mxu0 0
        %1761 = vmatprep.subr.bf16.mxu0 0
        %1762 = vmatpush1.bf16.msra.mxu0 0
        %1763 = vmatprep.subr.bf16.mxu0 0
        %1764 = vmatpush1.bf16.msra.mxu0 0
        %1765 = vmatprep.subr.bf16.mxu0 0
        %1766 = vmatpush1.bf16.msra.mxu0 0
        %1767 = vmatprep.subr.bf16.mxu0 0
        %1768 = vmatpush1.bf16.msra.mxu0 0
        %1769 = vmatprep.subr.bf16.mxu0 0
        %1770 = vmatpush1.bf16.msra.mxu0 0
        %1771 = vmatprep.subr.bf16.mxu0 0
        %1772 = vmatpush1.bf16.msra.mxu0 0
        %1773 = vmatprep.subr.bf16.mxu0 0
        %1774 = vmatpush1.bf16.msra.mxu0 0
        %1775 = vmatprep.subr.bf16.mxu0 0
        %1776 = vmatpush1.bf16.msra.mxu0 0
        %1777 = vmatprep.subr.bf16.mxu0 0
        %1778 = vmatpush1.bf16.msra.mxu0 0
        %1779 = vmatprep.subr.bf16.mxu0 0
        %1780 = vmatpush1.bf16.msra.mxu0 0
        %1781 = vmatprep.subr.bf16.mxu0 0
        %1782 = vmatpush1.bf16.msra.mxu0 0
        %1783 = vmatprep.subr.bf16.mxu0 0
        %1784 = vmatpush1.bf16.msra.mxu0 0
        %1785 = vmatprep.mubr.bf16.mxu0 0
        %1786 = vmatmul.mubr.bf16.gmra.mrb[0].mxu0 %v1636
        %v1787 = vpop.f32.mrb[0].mxu0
        %v1788 = vadd.f32 0.0, %v1787
        %v1789 = vpop.f32.mrb[0].mxu0
        %v1790 = vpop.f32.mrb[0].mxu0
        %v1791 = vadd.f32 0.0, %v1790
        %v1792 = vpop.f32.mrb[0].mxu0
        %1793 = vdwg.mxu0
        %v1794 = vpack.c.bf16 %v1791, %v1788
        %v1796 = vunpack.c.l.b16 %v1794
        %v1797 = vunpack.c.h.b16 %v1794
        %v1798 = vpack.c.b16 %v1796, %v1796
        %v1799 = vpack.c.b16 %v1797, %v1797
        %1802 = vst.msk [vmem:[%s274 + $0x58] sm:$0xf] %vm702, %v1798
        %1803 = vst.msk [vmem:[%s274 + $0x5c] sm:$0xf] %vm702, %v1799
        %s1804 = scalar_lea.vmem %s4, 42
        %v1805 = vld [vmem:[%s1804] sm:$0x3]
        %v1807 = vsel %vm657, %v1805, 0
        %1809 = vmatprep.subr.bf16.mxu0 0
        %1810 = vmatpush1.bf16.msra.mxu0 %v1807
        %1811 = vmatprep.subr.bf16.mxu0 0
        %1812 = vmatpush1.bf16.msra.mxu0 0
        %1813 = vmatprep.subr.bf16.mxu0 0
        %1814 = vmatpush1.bf16.msra.mxu0 0
        %1815 = vmatprep.subr.bf16.mxu0 0
        %1816 = vmatpush1.bf16.msra.mxu0 0
        %1817 = vmatprep.subr.bf16.mxu0 0
        %1818 = vmatpush1.bf16.msra.mxu0 0
        %1819 = vmatprep.subr.bf16.mxu0 0
        %1820 = vmatpush1.bf16.msra.mxu0 0
        %1821 = vmatprep.subr.bf16.mxu0 0
        %1822 = vmatpush1.bf16.msra.mxu0 0
        %1823 = vmatprep.subr.bf16.mxu0 0
        %1824 = vmatpush1.bf16.msra.mxu0 0
        %1825 = vmatprep.subr.bf16.mxu0 0
        %1826 = vmatpush1.bf16.msra.mxu0 0
        %1827 = vmatprep.subr.bf16.mxu0 0
        %1828 = vmatpush1.bf16.msra.mxu0 0
        %1829 = vmatprep.subr.bf16.mxu0 0
        %1830 = vmatpush1.bf16.msra.mxu0 0
        %1831 = vmatprep.subr.bf16.mxu0 0
        %1832 = vmatpush1.bf16.msra.mxu0 0
        %1833 = vmatprep.subr.bf16.mxu0 0
        %1834 = vmatpush1.bf16.msra.mxu0 0
        %1835 = vmatprep.subr.bf16.mxu0 0
        %1836 = vmatpush1.bf16.msra.mxu0 0
        %1837 = vmatprep.subr.bf16.mxu0 0
        %1838 = vmatpush1.bf16.msra.mxu0 0
        %1839 = vmatprep.subr.bf16.mxu0 0
        %1840 = vmatpush1.bf16.msra.mxu0 0
        %1841 = vmatprep.mubr.bf16.mxu0 0
        %1842 = vmatmul.mubr.bf16.gmra.mrb[0].mxu0 %v1636
        %v1843 = vpop.f32.mrb[0].mxu0
        %v1844 = vadd.f32 0.0, %v1843
        %v1845 = vpop.f32.mrb[0].mxu0
        %v1846 = vpop.f32.mrb[0].mxu0
        %v1847 = vadd.f32 0.0, %v1846
        %v1848 = vpop.f32.mrb[0].mxu0
        %1849 = vdwg.mxu0
        %v1850 = vpack.c.bf16 %v1847, %v1844
        %v1852 = vunpack.c.l.b16 %v1850
        %v1853 = vunpack.c.h.b16 %v1850
        %v1854 = vpack.c.b16 %v1852, %v1852
        %v1855 = vpack.c.b16 %v1853, %v1853
        %1858 = vst.msk [vmem:[%s274 + $0x60] sm:$0xf] %vm702, %v1854
        %1859 = vst.msk [vmem:[%s274 + $0x64] sm:$0xf] %vm702, %v1855
        %s1860 = scalar_lea.vmem %s4, 44
        %v1861 = vld [vmem:[%s1860] sm:$0x3]
        %v1863 = vsel %vm657, %v1861, 0
        %1865 = vmatprep.subr.bf16.mxu0 0
        %1866 = vmatpush1.bf16.msra.mxu0 %v1863
        %1867 = vmatprep.subr.bf16.mxu0 0
        %1868 = vmatpush1.bf16.msra.mxu0 0
        %1869 = vmatprep.subr.bf16.mxu0 0
        %1870 = vmatpush1.bf16.msra.mxu0 0
        %1871 = vmatprep.subr.bf16.mxu0 0
        %1872 = vmatpush1.bf16.msra.mxu0 0
        %1873 = vmatprep.subr.bf16.mxu0 0
        %1874 = vmatpush1.bf16.msra.mxu0 0
        %1875 = vmatprep.subr.bf16.mxu0 0
        %1876 = vmatpush1.bf16.msra.mxu0 0
        %1877 = vmatprep.subr.bf16.mxu0 0
        %1878 = vmatpush1.bf16.msra.mxu0 0
        %1879 = vmatprep.subr.bf16.mxu0 0
        %1880 = vmatpush1.bf16.msra.mxu0 0
        %1881 = vmatprep.subr.bf16.mxu0 0
        %1882 = vmatpush1.bf16.msra.mxu0 0
        %1883 = vmatprep.subr.bf16.mxu0 0
        %1884 = vmatpush1.bf16.msra.mxu0 0
        %1885 = vmatprep.subr.bf16.mxu0 0
        %1886 = vmatpush1.bf16.msra.mxu0 0
        %1887 = vmatprep.subr.bf16.mxu0 0
        %1888 = vmatpush1.bf16.msra.mxu0 0
        %1889 = vmatprep.subr.bf16.mxu0 0
        %1890 = vmatpush1.bf16.msra.mxu0 0
        %1891 = vmatprep.subr.bf16.mxu0 0
        %1892 = vmatpush1.bf16.msra.mxu0 0
        %1893 = vmatprep.subr.bf16.mxu0 0
        %1894 = vmatpush1.bf16.msra.mxu0 0
        %1895 = vmatprep.subr.bf16.mxu0 0
        %1896 = vmatpush1.bf16.msra.mxu0 0
        %1897 = vmatprep.mubr.bf16.mxu0 0
        %1898 = vmatmul.mubr.bf16.gmra.mrb[0].mxu0 %v1636
        %v1899 = vpop.f32.mrb[0].mxu0
        %v1900 = vadd.f32 0.0, %v1899
        %v1901 = vpop.f32.mrb[0].mxu0
        %v1902 = vpop.f32.mrb[0].mxu0
        %v1903 = vadd.f32 0.0, %v1902
        %v1904 = vpop.f32.mrb[0].mxu0
        %1905 = vdwg.mxu0
        %v1906 = vpack.c.bf16 %v1903, %v1900
        %v1908 = vunpack.c.l.b16 %v1906
        %v1909 = vunpack.c.h.b16 %v1906
        %v1910 = vpack.c.b16 %v1908, %v1908
        %v1911 = vpack.c.b16 %v1909, %v1909
        %1914 = vst.msk [vmem:[%s274 + $0x68] sm:$0xf] %vm702, %v1910
        %1915 = vst.msk [vmem:[%s274 + $0x6c] sm:$0xf] %vm702, %v1911
        %s1916 = scalar_lea.vmem %s4, 46
        %v1917 = vld [vmem:[%s1916] sm:$0x3]
        %v1919 = vsel %vm657, %v1917, 0
        %1921 = vmatprep.subr.bf16.mxu0 0
        %1922 = vmatpush1.bf16.msra.mxu0 %v1919
        %1923 = vmatprep.subr.bf16.mxu0 0
        %1924 = vmatpush1.bf16.msra.mxu0 0
        %1925 = vmatprep.subr.bf16.mxu0 0
        %1926 = vmatpush1.bf16.msra.mxu0 0
        %1927 = vmatprep.subr.bf16.mxu0 0
        %1928 = vmatpush1.bf16.msra.mxu0 0
        %1929 = vmatprep.subr.bf16.mxu0 0
        %1930 = vmatpush1.bf16.msra.mxu0 0
        %1931 = vmatprep.subr.bf16.mxu0 0
        %1932 = vmatpush1.bf16.msra.mxu0 0
        %1933 = vmatprep.subr.bf16.mxu0 0
        %1934 = vmatpush1.bf16.msra.mxu0 0
        %1935 = vmatprep.subr.bf16.mxu0 0
        %1936 = vmatpush1.bf16.msra.mxu0 0
        %1937 = vmatprep.subr.bf16.mxu0 0
        %1938 = vmatpush1.bf16.msra.mxu0 0
        %1939 = vmatprep.subr.bf16.mxu0 0
        %1940 = vmatpush1.bf16.msra.mxu0 0
        %1941 = vmatprep.subr.bf16.mxu0 0
        %1942 = vmatpush1.bf16.msra.mxu0 0
        %1943 = vmatprep.subr.bf16.mxu0 0
        %1944 = vmatpush1.bf16.msra.mxu0 0
        %1945 = vmatprep.subr.bf16.mxu0 0
        %1946 = vmatpush1.bf16.msra.mxu0 0
        %1947 = vmatprep.subr.bf16.mxu0 0
        %1948 = vmatpush1.bf16.msra.mxu0 0
        %1949 = vmatprep.subr.bf16.mxu0 0
        %1950 = vmatpush1.bf16.msra.mxu0 0
        %1951 = vmatprep.subr.bf16.mxu0 0
        %1952 = vmatpush1.bf16.msra.mxu0 0
        %1953 = vmatprep.mubr.bf16.mxu0 0
        %1954 = vmatmul.mubr.bf16.gmra.mrb[0].mxu0 %v1636
        %v1955 = vpop.f32.mrb[0].mxu0
        %v1956 = vadd.f32 0.0, %v1955
        %v1957 = vpop.f32.mrb[0].mxu0
        %v1958 = vpop.f32.mrb[0].mxu0
        %v1959 = vadd.f32 0.0, %v1958
        %v1960 = vpop.f32.mrb[0].mxu0
        %1961 = vdwg.mxu0
        %v1962 = vpack.c.bf16 %v1959, %v1956
        %v1964 = vunpack.c.l.b16 %v1962
        %v1965 = vunpack.c.h.b16 %v1962
        %v1966 = vpack.c.b16 %v1964, %v1964
        %v1967 = vpack.c.b16 %v1965, %v1965
        %1970 = vst.msk [vmem:[%s274 + $0x70] sm:$0xf] %vm702, %v1966
        %1971 = vst.msk [vmem:[%s274 + $0x74] sm:$0xf] %vm702, %v1967
        %s1972 = scalar_lea.vmem %s4, 48
        %v1973 = vld [vmem:[%s1972] sm:$0x3]
        %v1975 = vsel %vm657, %v1973, 0
        %1977 = vmatprep.subr.bf16.mxu0 0
        %1978 = vmatpush1.bf16.msra.mxu0 %v1975
        %1979 = vmatprep.subr.bf16.mxu0 0
        %1980 = vmatpush1.bf16.msra.mxu0 0
        %1981 = vmatprep.subr.bf16.mxu0 0
        %1982 = vmatpush1.bf16.msra.mxu0 0
        %1983 = vmatprep.subr.bf16.mxu0 0
        %1984 = vmatpush1.bf16.msra.mxu0 0
        %1985 = vmatprep.subr.bf16.mxu0 0
        %1986 = vmatpush1.bf16.msra.mxu0 0
        %1987 = vmatprep.subr.bf16.mxu0 0
        %1988 = vmatpush1.bf16.msra.mxu0 0
        %1989 = vmatprep.subr.bf16.mxu0 0
        %1990 = vmatpush1.bf16.msra.mxu0 0
        %1991 = vmatprep.subr.bf16.mxu0 0
        %1992 = vmatpush1.bf16.msra.mxu0 0
        %1993 = vmatprep.subr.bf16.mxu0 0
        %1994 = vmatpush1.bf16.msra.mxu0 0
        %1995 = vmatprep.subr.bf16.mxu0 0
        %1996 = vmatpush1.bf16.msra.mxu0 0
        %1997 = vmatprep.subr.bf16.mxu0 0
        %1998 = vmatpush1.bf16.msra.mxu0 0
        %1999 = vmatprep.subr.bf16.mxu0 0
        %2000 = vmatpush1.bf16.msra.mxu0 0
        %2001 = vmatprep.subr.bf16.mxu0 0
        %2002 = vmatpush1.bf16.msra.mxu0 0
        %2003 = vmatprep.subr.bf16.mxu0 0
        %2004 = vmatpush1.bf16.msra.mxu0 0
        %2005 = vmatprep.subr.bf16.mxu0 0
        %2006 = vmatpush1.bf16.msra.mxu0 0
        %2007 = vmatprep.subr.bf16.mxu0 0
        %2008 = vmatpush1.bf16.msra.mxu0 0
        %2009 = vmatprep.mubr.bf16.mxu0 0
        %2010 = vmatmul.mubr.bf16.gmra.mrb[0].mxu0 %v1636
        %v2011 = vpop.f32.mrb[0].mxu0
        %v2012 = vadd.f32 0.0, %v2011
        %v2013 = vpop.f32.mrb[0].mxu0
        %v2014 = vpop.f32.mrb[0].mxu0
        %v2015 = vadd.f32 0.0, %v2014
        %v2016 = vpop.f32.mrb[0].mxu0
        %2017 = vdwg.mxu0
        %v2018 = vpack.c.bf16 %v2015, %v2012
        %v2020 = vunpack.c.l.b16 %v2018
        %v2021 = vunpack.c.h.b16 %v2018
        %v2022 = vpack.c.b16 %v2020, %v2020
        %v2023 = vpack.c.b16 %v2021, %v2021
        %2026 = vst.msk [vmem:[%s274 + $0x78] sm:$0xf] %vm702, %v2022
        %2027 = vst.msk [vmem:[%s274 + $0x7c] sm:$0xf] %vm702, %v2023
        %s2028 = scalar_lea.vmem %s4, 50
        %v2029 = vld [vmem:[%s2028] sm:$0x3]
        %v2031 = vsel %vm657, %v2029, 0
        %2033 = vmatprep.subr.bf16.mxu0 0
        %2034 = vmatpush1.bf16.msra.mxu0 %v2031
        %2035 = vmatprep.subr.bf16.mxu0 0
        %2036 = vmatpush1.bf16.msra.mxu0 0
        %2037 = vmatprep.subr.bf16.mxu0 0
        %2038 = vmatpush1.bf16.msra.mxu0 0
        %2039 = vmatprep.subr.bf16.mxu0 0
        %2040 = vmatpush1.bf16.msra.mxu0 0
        %2041 = vmatprep.subr.bf16.mxu0 0
        %2042 = vmatpush1.bf16.msra.mxu0 0
        %2043 = vmatprep.subr.bf16.mxu0 0
        %2044 = vmatpush1.bf16.msra.mxu0 0
        %2045 = vmatprep.subr.bf16.mxu0 0
        %2046 = vmatpush1.bf16.msra.mxu0 0
        %2047 = vmatprep.subr.bf16.mxu0 0
        %2048 = vmatpush1.bf16.msra.mxu0 0
        %2049 = vmatprep.subr.bf16.mxu0 0
        %2050 = vmatpush1.bf16.msra.mxu0 0
        %2051 = vmatprep.subr.bf16.mxu0 0
        %2052 = vmatpush1.bf16.msra.mxu0 0
        %2053 = vmatprep.subr.bf16.mxu0 0
        %2054 = vmatpush1.bf16.msra.mxu0 0
        %2055 = vmatprep.subr.bf16.mxu0 0
        %2056 = vmatpush1.bf16.msra.mxu0 0
        %2057 = vmatprep.subr.bf16.mxu0 0
        %2058 = vmatpush1.bf16.msra.mxu0 0
        %2059 = vmatprep.subr.bf16.mxu0 0
        %2060 = vmatpush1.bf16.msra.mxu0 0
        %2061 = vmatprep.subr.bf16.mxu0 0
        %2062 = vmatpush1.bf16.msra.mxu0 0
        %2063 = vmatprep.subr.bf16.mxu0 0
        %2064 = vmatpush1.bf16.msra.mxu0 0
        %2065 = vmatprep.mubr.bf16.mxu0 0
        %2066 = vmatmul.mubr.bf16.gmra.mrb[0].mxu0 %v1636
        %v2067 = vpop.f32.mrb[0].mxu0
        %v2068 = vadd.f32 0.0, %v2067
        %v2069 = vpop.f32.mrb[0].mxu0
        %v2070 = vpop.f32.mrb[0].mxu0
        %v2071 = vadd.f32 0.0, %v2070
        %v2072 = vpop.f32.mrb[0].mxu0
        %2073 = vdwg.mxu0
        %v2074 = vpack.c.bf16 %v2071, %v2068
        %v2076 = vunpack.c.l.b16 %v2074
        %v2077 = vunpack.c.h.b16 %v2074
        %v2078 = vpack.c.b16 %v2076, %v2076
        %v2079 = vpack.c.b16 %v2077, %v2077
        %2082 = vst.msk [vmem:[%s274 + $0x80] sm:$0xf] %vm702, %v2078
        %2083 = vst.msk [vmem:[%s274 + $0x84] sm:$0xf] %vm702, %v2079
        %s2084 = scalar_lea.vmem %s4, 52
        %v2085 = vld [vmem:[%s2084] sm:$0x3]
        %v2087 = vsel %vm657, %v2085, 0
        %2089 = vmatprep.subr.bf16.mxu0 0
        %2090 = vmatpush1.bf16.msra.mxu0 %v2087
        %2091 = vmatprep.subr.bf16.mxu0 0
        %2092 = vmatpush1.bf16.msra.mxu0 0
        %2093 = vmatprep.subr.bf16.mxu0 0
        %2094 = vmatpush1.bf16.msra.mxu0 0
        %2095 = vmatprep.subr.bf16.mxu0 0
        %2096 = vmatpush1.bf16.msra.mxu0 0
        %2097 = vmatprep.subr.bf16.mxu0 0
        %2098 = vmatpush1.bf16.msra.mxu0 0
        %2099 = vmatprep.subr.bf16.mxu0 0
        %2100 = vmatpush1.bf16.msra.mxu0 0
        %2101 = vmatprep.subr.bf16.mxu0 0
        %2102 = vmatpush1.bf16.msra.mxu0 0
        %2103 = vmatprep.subr.bf16.mxu0 0
        %2104 = vmatpush1.bf16.msra.mxu0 0
        %2105 = vmatprep.subr.bf16.mxu0 0
        %2106 = vmatpush1.bf16.msra.mxu0 0
        %2107 = vmatprep.subr.bf16.mxu0 0
        %2108 = vmatpush1.bf16.msra.mxu0 0
        %2109 = vmatprep.subr.bf16.mxu0 0
        %2110 = vmatpush1.bf16.msra.mxu0 0
        %2111 = vmatprep.subr.bf16.mxu0 0
        %2112 = vmatpush1.bf16.msra.mxu0 0
        %2113 = vmatprep.subr.bf16.mxu0 0
        %2114 = vmatpush1.bf16.msra.mxu0 0
        %2115 = vmatprep.subr.bf16.mxu0 0
        %2116 = vmatpush1.bf16.msra.mxu0 0
        %2117 = vmatprep.subr.bf16.mxu0 0
        %2118 = vmatpush1.bf16.msra.mxu0 0
        %2119 = vmatprep.subr.bf16.mxu0 0
        %2120 = vmatpush1.bf16.msra.mxu0 0
        %2121 = vmatprep.mubr.bf16.mxu0 0
        %2122 = vmatmul.mubr.bf16.gmra.mrb[0].mxu0 %v1636
        %v2123 = vpop.f32.mrb[0].mxu0
        %v2124 = vadd.f32 0.0, %v2123
        %v2125 = vpop.f32.mrb[0].mxu0
        %v2126 = vpop.f32.mrb[0].mxu0
        %v2127 = vadd.f32 0.0, %v2126
        %v2128 = vpop.f32.mrb[0].mxu0
        %2129 = vdwg.mxu0
        %v2130 = vpack.c.bf16 %v2127, %v2124
        %v2132 = vunpack.c.l.b16 %v2130
        %v2133 = vunpack.c.h.b16 %v2130
        %v2134 = vpack.c.b16 %v2132, %v2132
        %v2135 = vpack.c.b16 %v2133, %v2133
        %2138 = vst.msk [vmem:[%s274 + $0x88] sm:$0xf] %vm702, %v2134
        %2139 = vst.msk [vmem:[%s274 + $0x8c] sm:$0xf] %vm702, %v2135
        %s2140 = scalar_lea.vmem %s2, 12
        %v2141 = vld [vmem:[%s2140] sm:$0xf]
        %s2142 = scalar_lea.vmem %s3, 3
        %v2143 = vld [vmem:[%s2142] sm:$0x1]
        %v2145 = vlaneseq
        %v2146 = vshrl.u32 %v2145, 7
        %v2147 = vsub.s32 0, %v2146
        %v2148 = vrot.slane %v2143, %v2147
        %v2151 = vsel %vm564, %v588, 0
        %v2154 = vsel %vm564, %v589, 0
        %v2157 = vsel %vm564, %v590, 0
        %v2160 = vsel %vm602, %v2141, 0
        %2162 = vmatprep.subr.bf16.mxu0 0
        %2163 = vmatpush1.bf16.msra.mxu0 %v2160
        %2164 = vmatprep.subr.bf16.mxu0 0
        %2165 = vmatpush1.bf16.msra.mxu0 0
        %2166 = vmatprep.subr.bf16.mxu0 0
        %2167 = vmatpush1.bf16.msra.mxu0 0
        %2168 = vmatprep.subr.bf16.mxu0 0
        %2169 = vmatpush1.bf16.msra.mxu0 0
        %2170 = vmatprep.subr.bf16.mxu0 0
        %2171 = vmatpush1.bf16.msra.mxu0 0
        %2172 = vmatprep.subr.bf16.mxu0 0
        %2173 = vmatpush1.bf16.msra.mxu0 0
        %2174 = vmatprep.subr.bf16.mxu0 0
        %2175 = vmatpush1.bf16.msra.mxu0 0
        %2176 = vmatprep.subr.bf16.mxu0 0
        %2177 = vmatpush1.bf16.msra.mxu0 0
        %2178 = vmatprep.subr.bf16.mxu0 0
        %2179 = vmatpush1.bf16.msra.mxu0 0
        %2180 = vmatprep.subr.bf16.mxu0 0
        %2181 = vmatpush1.bf16.msra.mxu0 0
        %2182 = vmatprep.subr.bf16.mxu0 0
        %2183 = vmatpush1.bf16.msra.mxu0 0
        %2184 = vmatprep.subr.bf16.mxu0 0
        %2185 = vmatpush1.bf16.msra.mxu0 0
        %2186 = vmatprep.subr.bf16.mxu0 0
        %2187 = vmatpush1.bf16.msra.mxu0 0
        %2188 = vmatprep.subr.bf16.mxu0 0
        %2189 = vmatpush1.bf16.msra.mxu0 0
        %2190 = vmatprep.subr.bf16.mxu0 0
        %2191 = vmatpush1.bf16.msra.mxu0 0
        %2192 = vmatprep.subr.bf16.mxu0 0
        %2193 = vmatpush1.bf16.msra.mxu0 0
        %2194 = vmatprep.mubr.bf16.mxu0 0
        %2195 = vmatmul.mubr.bf16.gmra.mrb[0].mxu0 %v2151
        %v2196 = vpop.f32.mrb[0].mxu0
        %v2197 = vadd.f32 %v2148, %v2196
        %v2198 = vpop.f32.mrb[0].mxu0
        %v2199 = vpop.f32.mrb[0].mxu0
        %v2200 = vadd.f32 %v2148, %v2199
        %v2201 = vpop.f32.mrb[0].mxu0
        %2202 = vmatprep.mubr.bf16.mxu0 0
        %2203 = vmatmul.mubr.bf16.gmra.mrb[0].mxu0 %v2154
        %v2204 = vpop.f32.mrb[0].mxu0
        %v2205 = vadd.f32 %v2148, %v2204
        %v2206 = vpop.f32.mrb[0].mxu0
        %v2207 = vpop.f32.mrb[0].mxu0
        %v2208 = vadd.f32 %v2148, %v2207
        %v2209 = vpop.f32.mrb[0].mxu0
        %2210 = vmatprep.mubr.bf16.mxu0 0
        %2211 = vmatmul.mubr.bf16.gmra.mrb[0].mxu0 %v2157
        %v2212 = vpop.f32.mrb[0].mxu0
        %v2213 = vadd.f32 %v2148, %v2212
        %v2214 = vpop.f32.mrb[0].mxu0
        %v2215 = vpop.f32.mrb[0].mxu0
        %v2216 = vpop.f32.mrb[0].mxu0
        %2217 = vdwg.mxu0
        %v2218 = vmax.f32 %v2197, 0.0
        %v2219 = vmax.f32 %v2200, 0.0
        %v2220 = vmax.f32 %v2205, 0.0
        %v2221 = vmax.f32 %v2208, 0.0
        %v2222 = vmax.f32 %v2213, 0.0
        %v2223 = vadd.s32 %v648, 16
        %v2224 = vadd.s32 %v648, 24
        %v2225 = vadd.s32 %v648, 32
        %vm2226 = vcmp.lt.s32.totalorder %v648, 36
        %vm2227 = vcmp.lt.s32.totalorder %v1627, 36
        %vm2228 = vcmp.lt.s32.totalorder %v2223, 36
        %vm2229 = vcmp.lt.s32.totalorder %v2224, 36
        %vm2230 = vcmp.lt.s32.totalorder %v2225, 36
        %v2231 = vsel %vm2226, %v2218, 0.0
        %v2232 = vsel %vm2227, %v2219, 0.0
        %v2233 = vsel %vm2228, %v2220, 0.0
        %v2234 = vsel %vm2229, %v2221, 0.0
        %v2235 = vsel %vm2230, %v2222, 0.0
        %v2236 = vpack.c.bf16 %v2232, %v2231
        %v2237 = vpack.c.bf16 %v2234, %v2233
        %v2238 = vpack.c.bf16 %v2235, %v2235
        %s2239 = scalar_lea.vmem %s4, 54
        %v2240 = vld [vmem:[%s2239] sm:$0x3]
        %v2242 = vsel %vm653, %v2236, 0
        %v2245 = vsel %vm653, %v2237, 0
        %v2248 = vsel %vm653, %v2238, 0
        %v2251 = vsel %vm657, %v2240, 0
        %2253 = vmatprep.subr.bf16.mxu0 0
        %2254 = vmatpush1.bf16.msra.mxu0 %v2251
        %2255 = vmatprep.subr.bf16.mxu0 0
        %2256 = vmatpush1.bf16.msra.mxu0 0
        %2257 = vmatprep.subr.bf16.mxu0 0
        %2258 = vmatpush1.bf16.msra.mxu0 0
        %2259 = vmatprep.subr.bf16.mxu0 0
        %2260 = vmatpush1.bf16.msra.mxu0 0
        %2261 = vmatprep.subr.bf16.mxu0 0
        %2262 = vmatpush1.bf16.msra.mxu0 0
        %2263 = vmatprep.subr.bf16.mxu0 0
        %2264 = vmatpush1.bf16.msra.mxu0 0
        %2265 = vmatprep.subr.bf16.mxu0 0
        %2266 = vmatpush1.bf16.msra.mxu0 0
        %2267 = vmatprep.subr.bf16.mxu0 0
        %2268 = vmatpush1.bf16.msra.mxu0 0
        %2269 = vmatprep.subr.bf16.mxu0 0
        %2270 = vmatpush1.bf16.msra.mxu0 0
        %2271 = vmatprep.subr.bf16.mxu0 0
        %2272 = vmatpush1.bf16.msra.mxu0 0
        %2273 = vmatprep.subr.bf16.mxu0 0
        %2274 = vmatpush1.bf16.msra.mxu0 0
        %2275 = vmatprep.subr.bf16.mxu0 0
        %2276 = vmatpush1.bf16.msra.mxu0 0
        %2277 = vmatprep.subr.bf16.mxu0 0
        %2278 = vmatpush1.bf16.msra.mxu0 0
        %2279 = vmatprep.subr.bf16.mxu0 0
        %2280 = vmatpush1.bf16.msra.mxu0 0
        %2281 = vmatprep.subr.bf16.mxu0 0
        %2282 = vmatpush1.bf16.msra.mxu0 0
        %2283 = vmatprep.subr.bf16.mxu0 0
        %2284 = vmatpush1.bf16.msra.mxu0 0
        %2285 = vmatprep.mubr.bf16.mxu0 0
        %2286 = vmatmul.mubr.bf16.gmra.mrb[0].mxu0 %v2242
        %v2287 = vpop.f32.mrb[0].mxu0
        %v2288 = vadd.f32 0.0, %v2287
        %v2289 = vpop.f32.mrb[0].mxu0
        %v2290 = vpop.f32.mrb[0].mxu0
        %v2291 = vadd.f32 0.0, %v2290
        %v2292 = vpop.f32.mrb[0].mxu0
        %2293 = vmatprep.mubr.bf16.mxu0 0
        %2294 = vmatmul.mubr.bf16.gmra.mrb[0].mxu0 %v2245
        %v2295 = vpop.f32.mrb[0].mxu0
        %v2296 = vadd.f32 0.0, %v2295
        %v2297 = vpop.f32.mrb[0].mxu0
        %v2298 = vpop.f32.mrb[0].mxu0
        %v2299 = vadd.f32 0.0, %v2298
        %v2300 = vpop.f32.mrb[0].mxu0
        %2301 = vmatprep.mubr.bf16.mxu0 0
        %2302 = vmatmul.mubr.bf16.gmra.mrb[0].mxu0 %v2248
        %v2303 = vpop.f32.mrb[0].mxu0
        %v2304 = vadd.f32 0.0, %v2303
        %v2305 = vpop.f32.mrb[0].mxu0
        %v2306 = vpop.f32.mrb[0].mxu0
        %v2307 = vpop.f32.mrb[0].mxu0
        %2308 = vdwg.mxu0
        %v2309 = vpack.c.bf16 %v2291, %v2288
        %v2310 = vpack.c.bf16 %v2299, %v2296
        %v2311 = vpack.c.bf16 %v2304, %v2304
        %v2315 = vunpack.c.l.b16 %v2309
        %v2316 = vunpack.c.h.b16 %v2309
        %v2317 = vunpack.c.l.b16 %v2310
        %v2318 = vunpack.c.h.b16 %v2310
        %v2319 = vunpack.c.l.b16 %v2311
        %v2320 = vpack.c.b16 %v2315, %v2315
        %v2321 = vpack.c.b16 %v2316, %v2316
        %v2322 = vpack.c.b16 %v2317, %v2317
        %v2323 = vpack.c.b16 %v2318, %v2318
        %v2324 = vpack.c.b16 %v2319, %v2319
        %2330 = vst.msk [vmem:[%s274 + $0x90] sm:$0xf] %vm702, %v2320
        %2331 = vst.msk [vmem:[%s274 + $0x94] sm:$0xf] %vm702, %v2321
        %2332 = vst.msk [vmem:[%s274 + $0x98] sm:$0xf] %vm702, %v2322
        %2333 = vst.msk [vmem:[%s274 + $0x9c] sm:$0xf] %vm702, %v2323
        %2334 = vst.msk [vmem:[%s274 + $0xa0] sm:$0xf] %vm702, %v2324
        %s2335 = scalar_lea.vmem %s4, 56
        %v2336 = vld [vmem:[%s2335] sm:$0x3]
        %v2338 = vsel %vm657, %v2336, 0
        %2340 = vmatprep.subr.bf16.mxu0 0
        %2341 = vmatpush1.bf16.msra.mxu0 %v2338
        %2342 = vmatprep.subr.bf16.mxu0 0
        %2343 = vmatpush1.bf16.msra.mxu0 0
        %2344 = vmatprep.subr.bf16.mxu0 0
        %2345 = vmatpush1.bf16.msra.mxu0 0
        %2346 = vmatprep.subr.bf16.mxu0 0
        %2347 = vmatpush1.bf16.msra.mxu0 0
        %2348 = vmatprep.subr.bf16.mxu0 0
        %2349 = vmatpush1.bf16.msra.mxu0 0
        %2350 = vmatprep.subr.bf16.mxu0 0
        %2351 = vmatpush1.bf16.msra.mxu0 0
        %2352 = vmatprep.subr.bf16.mxu0 0
        %2353 = vmatpush1.bf16.msra.mxu0 0
        %2354 = vmatprep.subr.bf16.mxu0 0
        %2355 = vmatpush1.bf16.msra.mxu0 0
        %2356 = vmatprep.subr.bf16.mxu0 0
        %2357 = vmatpush1.bf16.msra.mxu0 0
        %2358 = vmatprep.subr.bf16.mxu0 0
        %2359 = vmatpush1.bf16.msra.mxu0 0
        %2360 = vmatprep.subr.bf16.mxu0 0
        %2361 = vmatpush1.bf16.msra.mxu0 0
        %2362 = vmatprep.subr.bf16.mxu0 0
        %2363 = vmatpush1.bf16.msra.mxu0 0
        %2364 = vmatprep.subr.bf16.mxu0 0
        %2365 = vmatpush1.bf16.msra.mxu0 0
        %2366 = vmatprep.subr.bf16.mxu0 0
        %2367 = vmatpush1.bf16.msra.mxu0 0
        %2368 = vmatprep.subr.bf16.mxu0 0
        %2369 = vmatpush1.bf16.msra.mxu0 0
        %2370 = vmatprep.subr.bf16.mxu0 0
        %2371 = vmatpush1.bf16.msra.mxu0 0
        %2372 = vmatprep.mubr.bf16.mxu0 0
        %2373 = vmatmul.mubr.bf16.gmra.mrb[0].mxu0 %v2242
        %v2374 = vpop.f32.mrb[0].mxu0
        %v2375 = vadd.f32 0.0, %v2374
        %v2376 = vpop.f32.mrb[0].mxu0
        %v2377 = vpop.f32.mrb[0].mxu0
        %v2378 = vadd.f32 0.0, %v2377
        %v2379 = vpop.f32.mrb[0].mxu0
        %2380 = vmatprep.mubr.bf16.mxu0 0
        %2381 = vmatmul.mubr.bf16.gmra.mrb[0].mxu0 %v2245
        %v2382 = vpop.f32.mrb[0].mxu0
        %v2383 = vadd.f32 0.0, %v2382
        %v2384 = vpop.f32.mrb[0].mxu0
        %v2385 = vpop.f32.mrb[0].mxu0
        %v2386 = vadd.f32 0.0, %v2385
        %v2387 = vpop.f32.mrb[0].mxu0
        %2388 = vmatprep.mubr.bf16.mxu0 0
        %2389 = vmatmul.mubr.bf16.gmra.mrb[0].mxu0 %v2248
        %v2390 = vpop.f32.mrb[0].mxu0
        %v2391 = vadd.f32 0.0, %v2390
        %v2392 = vpop.f32.mrb[0].mxu0
        %v2393 = vpop.f32.mrb[0].mxu0
        %v2394 = vpop.f32.mrb[0].mxu0
        %2395 = vdwg.mxu0
        %v2396 = vpack.c.bf16 %v2378, %v2375
        %v2397 = vpack.c.bf16 %v2386, %v2383
        %v2398 = vpack.c.bf16 %v2391, %v2391
        %v2402 = vunpack.c.l.b16 %v2396
        %v2403 = vunpack.c.h.b16 %v2396
        %v2404 = vunpack.c.l.b16 %v2397
        %v2405 = vunpack.c.h.b16 %v2397
        %v2406 = vunpack.c.l.b16 %v2398
        %v2407 = vpack.c.b16 %v2402, %v2402
        %v2408 = vpack.c.b16 %v2403, %v2403
        %v2409 = vpack.c.b16 %v2404, %v2404
        %v2410 = vpack.c.b16 %v2405, %v2405
        %v2411 = vpack.c.b16 %v2406, %v2406
        %2417 = vst.msk [vmem:[%s274 + $0xa4] sm:$0xf] %vm702, %v2407
        %2418 = vst.msk [vmem:[%s274 + $0xa8] sm:$0xf] %vm702, %v2408
        %2419 = vst.msk [vmem:[%s274 + $0xac] sm:$0xf] %vm702, %v2409
        %2420 = vst.msk [vmem:[%s274 + $0xb0] sm:$0xf] %vm702, %v2410
        %2421 = vst.msk [vmem:[%s274 + $0xb4] sm:$0xf] %vm702, %v2411
        %s2422 = scalar_lea.vmem %s4, 58
        %v2423 = vld [vmem:[%s2422] sm:$0x3]
        %v2425 = vsel %vm657, %v2423, 0
        %2427 = vmatprep.subr.bf16.mxu0 0
        %2428 = vmatpush1.bf16.msra.mxu0 %v2425
        %2429 = vmatprep.subr.bf16.mxu0 0
        %2430 = vmatpush1.bf16.msra.mxu0 0
        %2431 = vmatprep.subr.bf16.mxu0 0
        %2432 = vmatpush1.bf16.msra.mxu0 0
        %2433 = vmatprep.subr.bf16.mxu0 0
        %2434 = vmatpush1.bf16.msra.mxu0 0
        %2435 = vmatprep.subr.bf16.mxu0 0
        %2436 = vmatpush1.bf16.msra.mxu0 0
        %2437 = vmatprep.subr.bf16.mxu0 0
        %2438 = vmatpush1.bf16.msra.mxu0 0
        %2439 = vmatprep.subr.bf16.mxu0 0
        %2440 = vmatpush1.bf16.msra.mxu0 0
        %2441 = vmatprep.subr.bf16.mxu0 0
        %2442 = vmatpush1.bf16.msra.mxu0 0
        %2443 = vmatprep.subr.bf16.mxu0 0
        %2444 = vmatpush1.bf16.msra.mxu0 0
        %2445 = vmatprep.subr.bf16.mxu0 0
        %2446 = vmatpush1.bf16.msra.mxu0 0
        %2447 = vmatprep.subr.bf16.mxu0 0
        %2448 = vmatpush1.bf16.msra.mxu0 0
        %2449 = vmatprep.subr.bf16.mxu0 0
        %2450 = vmatpush1.bf16.msra.mxu0 0
        %2451 = vmatprep.subr.bf16.mxu0 0
        %2452 = vmatpush1.bf16.msra.mxu0 0
        %2453 = vmatprep.subr.bf16.mxu0 0
        %2454 = vmatpush1.bf16.msra.mxu0 0
        %2455 = vmatprep.subr.bf16.mxu0 0
        %2456 = vmatpush1.bf16.msra.mxu0 0
        %2457 = vmatprep.subr.bf16.mxu0 0
        %2458 = vmatpush1.bf16.msra.mxu0 0
        %2459 = vmatprep.mubr.bf16.mxu0 0
        %2460 = vmatmul.mubr.bf16.gmra.mrb[0].mxu0 %v2242
        %v2461 = vpop.f32.mrb[0].mxu0
        %v2462 = vadd.f32 0.0, %v2461
        %v2463 = vpop.f32.mrb[0].mxu0
        %v2464 = vpop.f32.mrb[0].mxu0
        %v2465 = vadd.f32 0.0, %v2464
        %v2466 = vpop.f32.mrb[0].mxu0
        %2467 = vmatprep.mubr.bf16.mxu0 0
        %2468 = vmatmul.mubr.bf16.gmra.mrb[0].mxu0 %v2245
        %v2469 = vpop.f32.mrb[0].mxu0
        %v2470 = vadd.f32 0.0, %v2469
        %v2471 = vpop.f32.mrb[0].mxu0
        %v2472 = vpop.f32.mrb[0].mxu0
        %v2473 = vadd.f32 0.0, %v2472
        %v2474 = vpop.f32.mrb[0].mxu0
        %2475 = vmatprep.mubr.bf16.mxu0 0
        %2476 = vmatmul.mubr.bf16.gmra.mrb[0].mxu0 %v2248
        %v2477 = vpop.f32.mrb[0].mxu0
        %v2478 = vadd.f32 0.0, %v2477
        %v2479 = vpop.f32.mrb[0].mxu0
        %v2480 = vpop.f32.mrb[0].mxu0
        %v2481 = vpop.f32.mrb[0].mxu0
        %2482 = vdwg.mxu0
        %v2483 = vpack.c.bf16 %v2465, %v2462
        %v2484 = vpack.c.bf16 %v2473, %v2470
        %v2485 = vpack.c.bf16 %v2478, %v2478
        %v2489 = vunpack.c.l.b16 %v2483
        %v2490 = vunpack.c.h.b16 %v2483
        %v2491 = vunpack.c.l.b16 %v2484
        %v2492 = vunpack.c.h.b16 %v2484
        %v2493 = vunpack.c.l.b16 %v2485
        %v2494 = vpack.c.b16 %v2489, %v2489
        %v2495 = vpack.c.b16 %v2490, %v2490
        %v2496 = vpack.c.b16 %v2491, %v2491
        %v2497 = vpack.c.b16 %v2492, %v2492
        %v2498 = vpack.c.b16 %v2493, %v2493
        %2504 = vst.msk [vmem:[%s274 + $0xb8] sm:$0xf] %vm702, %v2494
        %2505 = vst.msk [vmem:[%s274 + $0xbc] sm:$0xf] %vm702, %v2495
        %2506 = vst.msk [vmem:[%s274 + $0xc0] sm:$0xf] %vm702, %v2496
        %2507 = vst.msk [vmem:[%s274 + $0xc4] sm:$0xf] %vm702, %v2497
        %2508 = vst.msk [vmem:[%s274 + $0xc8] sm:$0xf] %vm702, %v2498
        %s2509 = scalar_lea.vmem %s4, 60
        %v2510 = vld [vmem:[%s2509] sm:$0x3]
        %v2512 = vsel %vm657, %v2510, 0
        %2514 = vmatprep.subr.bf16.mxu0 0
        %2515 = vmatpush1.bf16.msra.mxu0 %v2512
        %2516 = vmatprep.subr.bf16.mxu0 0
        %2517 = vmatpush1.bf16.msra.mxu0 0
        %2518 = vmatprep.subr.bf16.mxu0 0
        %2519 = vmatpush1.bf16.msra.mxu0 0
        %2520 = vmatprep.subr.bf16.mxu0 0
        %2521 = vmatpush1.bf16.msra.mxu0 0
        %2522 = vmatprep.subr.bf16.mxu0 0
        %2523 = vmatpush1.bf16.msra.mxu0 0
        %2524 = vmatprep.subr.bf16.mxu0 0
        %2525 = vmatpush1.bf16.msra.mxu0 0
        %2526 = vmatprep.subr.bf16.mxu0 0
        %2527 = vmatpush1.bf16.msra.mxu0 0
        %2528 = vmatprep.subr.bf16.mxu0 0
        %2529 = vmatpush1.bf16.msra.mxu0 0
        %2530 = vmatprep.subr.bf16.mxu0 0
        %2531 = vmatpush1.bf16.msra.mxu0 0
        %2532 = vmatprep.subr.bf16.mxu0 0
        %2533 = vmatpush1.bf16.msra.mxu0 0
        %2534 = vmatprep.subr.bf16.mxu0 0
        %2535 = vmatpush1.bf16.msra.mxu0 0
        %2536 = vmatprep.subr.bf16.mxu0 0
        %2537 = vmatpush1.bf16.msra.mxu0 0
        %2538 = vmatprep.subr.bf16.mxu0 0
        %2539 = vmatpush1.bf16.msra.mxu0 0
        %2540 = vmatprep.subr.bf16.mxu0 0
        %2541 = vmatpush1.bf16.msra.mxu0 0
        %2542 = vmatprep.subr.bf16.mxu0 0
        %2543 = vmatpush1.bf16.msra.mxu0 0
        %2544 = vmatprep.subr.bf16.mxu0 0
        %2545 = vmatpush1.bf16.msra.mxu0 0
        %2546 = vmatprep.mubr.bf16.mxu0 0
        %2547 = vmatmul.mubr.bf16.gmra.mrb[0].mxu0 %v2242
        %v2548 = vpop.f32.mrb[0].mxu0
        %v2549 = vadd.f32 0.0, %v2548
        %v2550 = vpop.f32.mrb[0].mxu0
        %v2551 = vpop.f32.mrb[0].mxu0
        %v2552 = vadd.f32 0.0, %v2551
        %v2553 = vpop.f32.mrb[0].mxu0
        %2554 = vmatprep.mubr.bf16.mxu0 0
        %2555 = vmatmul.mubr.bf16.gmra.mrb[0].mxu0 %v2245
        %v2556 = vpop.f32.mrb[0].mxu0
        %v2557 = vadd.f32 0.0, %v2556
        %v2558 = vpop.f32.mrb[0].mxu0
        %v2559 = vpop.f32.mrb[0].mxu0
        %v2560 = vadd.f32 0.0, %v2559
        %v2561 = vpop.f32.mrb[0].mxu0
        %2562 = vmatprep.mubr.bf16.mxu0 0
        %2563 = vmatmul.mubr.bf16.gmra.mrb[0].mxu0 %v2248
        %v2564 = vpop.f32.mrb[0].mxu0
        %v2565 = vadd.f32 0.0, %v2564
        %v2566 = vpop.f32.mrb[0].mxu0
        %v2567 = vpop.f32.mrb[0].mxu0
        %v2568 = vpop.f32.mrb[0].mxu0
        %2569 = vdwg.mxu0
        %v2570 = vpack.c.bf16 %v2552, %v2549
        %v2571 = vpack.c.bf16 %v2560, %v2557
        %v2572 = vpack.c.bf16 %v2565, %v2565
        %v2576 = vunpack.c.l.b16 %v2570
        %v2577 = vunpack.c.h.b16 %v2570
        %v2578 = vunpack.c.l.b16 %v2571
        %v2579 = vunpack.c.h.b16 %v2571
        %v2580 = vunpack.c.l.b16 %v2572
        %v2581 = vpack.c.b16 %v2576, %v2576
        %v2582 = vpack.c.b16 %v2577, %v2577
        %v2583 = vpack.c.b16 %v2578, %v2578
        %v2584 = vpack.c.b16 %v2579, %v2579
        %v2585 = vpack.c.b16 %v2580, %v2580
        %2591 = vst.msk [vmem:[%s274 + $0xcc] sm:$0xf] %vm702, %v2581
        %2592 = vst.msk [vmem:[%s274 + $0xd0] sm:$0xf] %vm702, %v2582
        %2593 = vst.msk [vmem:[%s274 + $0xd4] sm:$0xf] %vm702, %v2583
        %2594 = vst.msk [vmem:[%s274 + $0xd8] sm:$0xf] %vm702, %v2584
        %2595 = vst.msk [vmem:[%s274 + $0xdc] sm:$0xf] %vm702, %v2585
        %s2596 = scalar_lea.vmem %s4, 62
        %v2597 = vld [vmem:[%s2596] sm:$0x3]
        %v2599 = vsel %vm657, %v2597, 0
        %2601 = vmatprep.subr.bf16.mxu0 0
        %2602 = vmatpush1.bf16.msra.mxu0 %v2599
        %2603 = vmatprep.subr.bf16.mxu0 0
        %2604 = vmatpush1.bf16.msra.mxu0 0
        %2605 = vmatprep.subr.bf16.mxu0 0
        %2606 = vmatpush1.bf16.msra.mxu0 0
        %2607 = vmatprep.subr.bf16.mxu0 0
        %2608 = vmatpush1.bf16.msra.mxu0 0
        %2609 = vmatprep.subr.bf16.mxu0 0
        %2610 = vmatpush1.bf16.msra.mxu0 0
        %2611 = vmatprep.subr.bf16.mxu0 0
        %2612 = vmatpush1.bf16.msra.mxu0 0
        %2613 = vmatprep.subr.bf16.mxu0 0
        %2614 = vmatpush1.bf16.msra.mxu0 0
        %2615 = vmatprep.subr.bf16.mxu0 0
        %2616 = vmatpush1.bf16.msra.mxu0 0
        %2617 = vmatprep.subr.bf16.mxu0 0
        %2618 = vmatpush1.bf16.msra.mxu0 0
        %2619 = vmatprep.subr.bf16.mxu0 0
        %2620 = vmatpush1.bf16.msra.mxu0 0
        %2621 = vmatprep.subr.bf16.mxu0 0
        %2622 = vmatpush1.bf16.msra.mxu0 0
        %2623 = vmatprep.subr.bf16.mxu0 0
        %2624 = vmatpush1.bf16.msra.mxu0 0
        %2625 = vmatprep.subr.bf16.mxu0 0
        %2626 = vmatpush1.bf16.msra.mxu0 0
        %2627 = vmatprep.subr.bf16.mxu0 0
        %2628 = vmatpush1.bf16.msra.mxu0 0
        %2629 = vmatprep.subr.bf16.mxu0 0
        %2630 = vmatpush1.bf16.msra.mxu0 0
        %2631 = vmatprep.subr.bf16.mxu0 0
        %2632 = vmatpush1.bf16.msra.mxu0 0
        %2633 = vmatprep.mubr.bf16.mxu0 0
        %2634 = vmatmul.mubr.bf16.gmra.mrb[0].mxu0 %v2242
        %v2635 = vpop.f32.mrb[0].mxu0
        %v2636 = vadd.f32 0.0, %v2635
        %v2637 = vpop.f32.mrb[0].mxu0
        %v2638 = vpop.f32.mrb[0].mxu0
        %v2639 = vadd.f32 0.0, %v2638
        %v2640 = vpop.f32.mrb[0].mxu0
        %2641 = vmatprep.mubr.bf16.mxu0 0
        %2642 = vmatmul.mubr.bf16.gmra.mrb[0].mxu0 %v2245
        %v2643 = vpop.f32.mrb[0].mxu0
        %v2644 = vadd.f32 0.0, %v2643
        %v2645 = vpop.f32.mrb[0].mxu0
        %v2646 = vpop.f32.mrb[0].mxu0
        %v2647 = vadd.f32 0.0, %v2646
        %v2648 = vpop.f32.mrb[0].mxu0
        %2649 = vmatprep.mubr.bf16.mxu0 0
        %2650 = vmatmul.mubr.bf16.gmra.mrb[0].mxu0 %v2248
        %v2651 = vpop.f32.mrb[0].mxu0
        %v2652 = vadd.f32 0.0, %v2651
        %v2653 = vpop.f32.mrb[0].mxu0
        %v2654 = vpop.f32.mrb[0].mxu0
        %v2655 = vpop.f32.mrb[0].mxu0
        %2656 = vdwg.mxu0
        %v2657 = vpack.c.bf16 %v2639, %v2636
        %v2658 = vpack.c.bf16 %v2647, %v2644
        %v2659 = vpack.c.bf16 %v2652, %v2652
        %v2663 = vunpack.c.l.b16 %v2657
        %v2664 = vunpack.c.h.b16 %v2657
        %v2665 = vunpack.c.l.b16 %v2658
        %v2666 = vunpack.c.h.b16 %v2658
        %v2667 = vunpack.c.l.b16 %v2659
        %v2668 = vpack.c.b16 %v2663, %v2663
        %v2669 = vpack.c.b16 %v2664, %v2664
        %v2670 = vpack.c.b16 %v2665, %v2665
        %v2671 = vpack.c.b16 %v2666, %v2666
        %v2672 = vpack.c.b16 %v2667, %v2667
        %2678 = vst.msk [vmem:[%s274 + $0xe0] sm:$0xf] %vm702, %v2668
        %2679 = vst.msk [vmem:[%s274 + $0xe4] sm:$0xf] %vm702, %v2669
        %2680 = vst.msk [vmem:[%s274 + $0xe8] sm:$0xf] %vm702, %v2670
        %2681 = vst.msk [vmem:[%s274 + $0xec] sm:$0xf] %vm702, %v2671
        %2682 = vst.msk [vmem:[%s274 + $0xf0] sm:$0xf] %vm702, %v2672
        %s2683 = scalar_lea.vmem %s4, 64
        %v2684 = vld [vmem:[%s2683] sm:$0x3]
        %v2686 = vsel %vm657, %v2684, 0
        %2688 = vmatprep.subr.bf16.mxu0 0
        %2689 = vmatpush1.bf16.msra.mxu0 %v2686
        %2690 = vmatprep.subr.bf16.mxu0 0
        %2691 = vmatpush1.bf16.msra.mxu0 0
        %2692 = vmatprep.subr.bf16.mxu0 0
        %2693 = vmatpush1.bf16.msra.mxu0 0
        %2694 = vmatprep.subr.bf16.mxu0 0
        %2695 = vmatpush1.bf16.msra.mxu0 0
        %2696 = vmatprep.subr.bf16.mxu0 0
        %2697 = vmatpush1.bf16.msra.mxu0 0
        %2698 = vmatprep.subr.bf16.mxu0 0
        %2699 = vmatpush1.bf16.msra.mxu0 0
        %2700 = vmatprep.subr.bf16.mxu0 0
        %2701 = vmatpush1.bf16.msra.mxu0 0
        %2702 = vmatprep.subr.bf16.mxu0 0
        %2703 = vmatpush1.bf16.msra.mxu0 0
        %2704 = vmatprep.subr.bf16.mxu0 0
        %2705 = vmatpush1.bf16.msra.mxu0 0
        %2706 = vmatprep.subr.bf16.mxu0 0
        %2707 = vmatpush1.bf16.msra.mxu0 0
        %2708 = vmatprep.subr.bf16.mxu0 0
        %2709 = vmatpush1.bf16.msra.mxu0 0
        %2710 = vmatprep.subr.bf16.mxu0 0
        %2711 = vmatpush1.bf16.msra.mxu0 0
        %2712 = vmatprep.subr.bf16.mxu0 0
        %2713 = vmatpush1.bf16.msra.mxu0 0
        %2714 = vmatprep.subr.bf16.mxu0 0
        %2715 = vmatpush1.bf16.msra.mxu0 0
        %2716 = vmatprep.subr.bf16.mxu0 0
        %2717 = vmatpush1.bf16.msra.mxu0 0
        %2718 = vmatprep.subr.bf16.mxu0 0
        %2719 = vmatpush1.bf16.msra.mxu0 0
        %2720 = vmatprep.mubr.bf16.mxu0 0
        %2721 = vmatmul.mubr.bf16.gmra.mrb[0].mxu0 %v2242
        %v2722 = vpop.f32.mrb[0].mxu0
        %v2723 = vadd.f32 0.0, %v2722
        %v2724 = vpop.f32.mrb[0].mxu0
        %v2725 = vpop.f32.mrb[0].mxu0
        %v2726 = vadd.f32 0.0, %v2725
        %v2727 = vpop.f32.mrb[0].mxu0
        %2728 = vmatprep.mubr.bf16.mxu0 0
        %2729 = vmatmul.mubr.bf16.gmra.mrb[0].mxu0 %v2245
        %v2730 = vpop.f32.mrb[0].mxu0
        %v2731 = vadd.f32 0.0, %v2730
        %v2732 = vpop.f32.mrb[0].mxu0
        %v2733 = vpop.f32.mrb[0].mxu0
        %v2734 = vadd.f32 0.0, %v2733
        %v2735 = vpop.f32.mrb[0].mxu0
        %2736 = vmatprep.mubr.bf16.mxu0 0
        %2737 = vmatmul.mubr.bf16.gmra.mrb[0].mxu0 %v2248
        %v2738 = vpop.f32.mrb[0].mxu0
        %v2739 = vadd.f32 0.0, %v2738
        %v2740 = vpop.f32.mrb[0].mxu0
        %v2741 = vpop.f32.mrb[0].mxu0
        %v2742 = vpop.f32.mrb[0].mxu0
        %2743 = vdwg.mxu0
        %v2744 = vpack.c.bf16 %v2726, %v2723
        %v2745 = vpack.c.bf16 %v2734, %v2731
        %v2746 = vpack.c.bf16 %v2739, %v2739
        %v2750 = vunpack.c.l.b16 %v2744
        %v2751 = vunpack.c.h.b16 %v2744
        %v2752 = vunpack.c.l.b16 %v2745
        %v2753 = vunpack.c.h.b16 %v2745
        %v2754 = vunpack.c.l.b16 %v2746
        %v2755 = vpack.c.b16 %v2750, %v2750
        %v2756 = vpack.c.b16 %v2751, %v2751
        %v2757 = vpack.c.b16 %v2752, %v2752
        %v2758 = vpack.c.b16 %v2753, %v2753
        %v2759 = vpack.c.b16 %v2754, %v2754
        %2765 = vst.msk [vmem:[%s274 + $0xf4] sm:$0xf] %vm702, %v2755
        %2766 = vst.msk [vmem:[%s274 + $0xf8] sm:$0xf] %vm702, %v2756
        %2767 = vst.msk [vmem:[%s274 + $0xfc] sm:$0xf] %vm702, %v2757
        %2768 = vst.msk [vmem:[%s274 + $0x100] sm:$0xf] %vm702, %v2758
        %2769 = vst.msk [vmem:[%s274 + $0x104] sm:$0xf] %vm702, %v2759
        %s2770 = scalar_lea.vmem %s4, 66
        %v2771 = vld [vmem:[%s2770] sm:$0x3]
        %v2773 = vsel %vm657, %v2771, 0
        %2775 = vmatprep.subr.bf16.mxu0 0
        %2776 = vmatpush1.bf16.msra.mxu0 %v2773
        %2777 = vmatprep.subr.bf16.mxu0 0
        %2778 = vmatpush1.bf16.msra.mxu0 0
        %2779 = vmatprep.subr.bf16.mxu0 0
        %2780 = vmatpush1.bf16.msra.mxu0 0
        %2781 = vmatprep.subr.bf16.mxu0 0
        %2782 = vmatpush1.bf16.msra.mxu0 0
        %2783 = vmatprep.subr.bf16.mxu0 0
        %2784 = vmatpush1.bf16.msra.mxu0 0
        %2785 = vmatprep.subr.bf16.mxu0 0
        %2786 = vmatpush1.bf16.msra.mxu0 0
        %2787 = vmatprep.subr.bf16.mxu0 0
        %2788 = vmatpush1.bf16.msra.mxu0 0
        %2789 = vmatprep.subr.bf16.mxu0 0
        %2790 = vmatpush1.bf16.msra.mxu0 0
        %2791 = vmatprep.subr.bf16.mxu0 0
        %2792 = vmatpush1.bf16.msra.mxu0 0
        %2793 = vmatprep.subr.bf16.mxu0 0
        %2794 = vmatpush1.bf16.msra.mxu0 0
        %2795 = vmatprep.subr.bf16.mxu0 0
        %2796 = vmatpush1.bf16.msra.mxu0 0
        %2797 = vmatprep.subr.bf16.mxu0 0
        %2798 = vmatpush1.bf16.msra.mxu0 0
        %2799 = vmatprep.subr.bf16.mxu0 0
        %2800 = vmatpush1.bf16.msra.mxu0 0
        %2801 = vmatprep.subr.bf16.mxu0 0
        %2802 = vmatpush1.bf16.msra.mxu0 0
        %2803 = vmatprep.subr.bf16.mxu0 0
        %2804 = vmatpush1.bf16.msra.mxu0 0
        %2805 = vmatprep.subr.bf16.mxu0 0
        %2806 = vmatpush1.bf16.msra.mxu0 0
        %2807 = vmatprep.mubr.bf16.mxu0 0
        %2808 = vmatmul.mubr.bf16.gmra.mrb[0].mxu0 %v2242
        %v2809 = vpop.f32.mrb[0].mxu0
        %v2810 = vadd.f32 0.0, %v2809
        %v2811 = vpop.f32.mrb[0].mxu0
        %v2812 = vpop.f32.mrb[0].mxu0
        %v2813 = vadd.f32 0.0, %v2812
        %v2814 = vpop.f32.mrb[0].mxu0
        %2815 = vmatprep.mubr.bf16.mxu0 0
        %2816 = vmatmul.mubr.bf16.gmra.mrb[0].mxu0 %v2245
        %v2817 = vpop.f32.mrb[0].mxu0
        %v2818 = vadd.f32 0.0, %v2817
        %v2819 = vpop.f32.mrb[0].mxu0
        %v2820 = vpop.f32.mrb[0].mxu0
        %v2821 = vadd.f32 0.0, %v2820
        %v2822 = vpop.f32.mrb[0].mxu0
        %2823 = vmatprep.mubr.bf16.mxu0 0
        %2824 = vmatmul.mubr.bf16.gmra.mrb[0].mxu0 %v2248
        %v2825 = vpop.f32.mrb[0].mxu0
        %v2826 = vadd.f32 0.0, %v2825
        %v2827 = vpop.f32.mrb[0].mxu0
        %v2828 = vpop.f32.mrb[0].mxu0
        %v2829 = vpop.f32.mrb[0].mxu0
        %2830 = vdwg.mxu0
        %v2831 = vpack.c.bf16 %v2813, %v2810
        %v2832 = vpack.c.bf16 %v2821, %v2818
        %v2833 = vpack.c.bf16 %v2826, %v2826
        %v2837 = vunpack.c.l.b16 %v2831
        %v2838 = vunpack.c.h.b16 %v2831
        %v2839 = vunpack.c.l.b16 %v2832
        %v2840 = vunpack.c.h.b16 %v2832
        %v2841 = vunpack.c.l.b16 %v2833
        %v2842 = vpack.c.b16 %v2837, %v2837
        %v2843 = vpack.c.b16 %v2838, %v2838
        %v2844 = vpack.c.b16 %v2839, %v2839
        %v2845 = vpack.c.b16 %v2840, %v2840
        %v2846 = vpack.c.b16 %v2841, %v2841
        %2852 = vst.msk [vmem:[%s274 + $0x108] sm:$0xf] %vm702, %v2842
        %2853 = vst.msk [vmem:[%s274 + $0x10c] sm:$0xf] %vm702, %v2843
        %2854 = vst.msk [vmem:[%s274 + $0x110] sm:$0xf] %vm702, %v2844
        %2855 = vst.msk [vmem:[%s274 + $0x114] sm:$0xf] %vm702, %v2845
        %2856 = vst.msk [vmem:[%s274 + $0x118] sm:$0xf] %vm702, %v2846
        %s2857 = scalar_lea.vmem %s4, 68
        %v2858 = vld [vmem:[%s2857] sm:$0x3]
        %v2860 = vsel %vm657, %v2858, 0
        %2862 = vmatprep.subr.bf16.mxu0 0
        %2863 = vmatpush1.bf16.msra.mxu0 %v2860
        %2864 = vmatprep.subr.bf16.mxu0 0
        %2865 = vmatpush1.bf16.msra.mxu0 0
        %2866 = vmatprep.subr.bf16.mxu0 0
        %2867 = vmatpush1.bf16.msra.mxu0 0
        %2868 = vmatprep.subr.bf16.mxu0 0
        %2869 = vmatpush1.bf16.msra.mxu0 0
        %2870 = vmatprep.subr.bf16.mxu0 0
        %2871 = vmatpush1.bf16.msra.mxu0 0
        %2872 = vmatprep.subr.bf16.mxu0 0
        %2873 = vmatpush1.bf16.msra.mxu0 0
        %2874 = vmatprep.subr.bf16.mxu0 0
        %2875 = vmatpush1.bf16.msra.mxu0 0
        %2876 = vmatprep.subr.bf16.mxu0 0
        %2877 = vmatpush1.bf16.msra.mxu0 0
        %2878 = vmatprep.subr.bf16.mxu0 0
        %2879 = vmatpush1.bf16.msra.mxu0 0
        %2880 = vmatprep.subr.bf16.mxu0 0
        %2881 = vmatpush1.bf16.msra.mxu0 0
        %2882 = vmatprep.subr.bf16.mxu0 0
        %2883 = vmatpush1.bf16.msra.mxu0 0
        %2884 = vmatprep.subr.bf16.mxu0 0
        %2885 = vmatpush1.bf16.msra.mxu0 0
        %2886 = vmatprep.subr.bf16.mxu0 0
        %2887 = vmatpush1.bf16.msra.mxu0 0
        %2888 = vmatprep.subr.bf16.mxu0 0
        %2889 = vmatpush1.bf16.msra.mxu0 0
        %2890 = vmatprep.subr.bf16.mxu0 0
        %2891 = vmatpush1.bf16.msra.mxu0 0
        %2892 = vmatprep.subr.bf16.mxu0 0
        %2893 = vmatpush1.bf16.msra.mxu0 0
        %2894 = vmatprep.mubr.bf16.mxu0 0
        %2895 = vmatmul.mubr.bf16.gmra.mrb[0].mxu0 %v2242
        %v2896 = vpop.f32.mrb[0].mxu0
        %v2897 = vadd.f32 0.0, %v2896
        %v2898 = vpop.f32.mrb[0].mxu0
        %v2899 = vpop.f32.mrb[0].mxu0
        %v2900 = vadd.f32 0.0, %v2899
        %v2901 = vpop.f32.mrb[0].mxu0
        %2902 = vmatprep.mubr.bf16.mxu0 0
        %2903 = vmatmul.mubr.bf16.gmra.mrb[0].mxu0 %v2245
        %v2904 = vpop.f32.mrb[0].mxu0
        %v2905 = vadd.f32 0.0, %v2904
        %v2906 = vpop.f32.mrb[0].mxu0
        %v2907 = vpop.f32.mrb[0].mxu0
        %v2908 = vadd.f32 0.0, %v2907
        %v2909 = vpop.f32.mrb[0].mxu0
        %2910 = vmatprep.mubr.bf16.mxu0 0
        %2911 = vmatmul.mubr.bf16.gmra.mrb[0].mxu0 %v2248
        %v2912 = vpop.f32.mrb[0].mxu0
        %v2913 = vadd.f32 0.0, %v2912
        %v2914 = vpop.f32.mrb[0].mxu0
        %v2915 = vpop.f32.mrb[0].mxu0
        %v2916 = vpop.f32.mrb[0].mxu0
        %2917 = vdwg.mxu0
        %v2918 = vpack.c.bf16 %v2900, %v2897
        %v2919 = vpack.c.bf16 %v2908, %v2905
        %v2920 = vpack.c.bf16 %v2913, %v2913
        %v2924 = vunpack.c.l.b16 %v2918
        %v2925 = vunpack.c.h.b16 %v2918
        %v2926 = vunpack.c.l.b16 %v2919
        %v2927 = vunpack.c.h.b16 %v2919
        %v2928 = vunpack.c.l.b16 %v2920
        %v2929 = vpack.c.b16 %v2924, %v2924
        %v2930 = vpack.c.b16 %v2925, %v2925
        %v2931 = vpack.c.b16 %v2926, %v2926
        %v2932 = vpack.c.b16 %v2927, %v2927
        %v2933 = vpack.c.b16 %v2928, %v2928
        %2939 = vst.msk [vmem:[%s274 + $0x11c] sm:$0xf] %vm702, %v2929
        %2940 = vst.msk [vmem:[%s274 + $0x120] sm:$0xf] %vm702, %v2930
        %2941 = vst.msk [vmem:[%s274 + $0x124] sm:$0xf] %vm702, %v2931
        %2942 = vst.msk [vmem:[%s274 + $0x128] sm:$0xf] %vm702, %v2932
        %2943 = vst.msk [vmem:[%s274 + $0x12c] sm:$0xf] %vm702, %v2933
        %s2944 = scalar_lea.vmem %s4, 70
        %v2945 = vld [vmem:[%s2944] sm:$0x3]
        %v2947 = vsel %vm657, %v2945, 0
        %2949 = vmatprep.subr.bf16.mxu0 0
        %2950 = vmatpush1.bf16.msra.mxu0 %v2947
        %2951 = vmatprep.subr.bf16.mxu0 0
        %2952 = vmatpush1.bf16.msra.mxu0 0
        %2953 = vmatprep.subr.bf16.mxu0 0
        %2954 = vmatpush1.bf16.msra.mxu0 0
        %2955 = vmatprep.subr.bf16.mxu0 0
        %2956 = vmatpush1.bf16.msra.mxu0 0
        %2957 = vmatprep.subr.bf16.mxu0 0
        %2958 = vmatpush1.bf16.msra.mxu0 0
        %2959 = vmatprep.subr.bf16.mxu0 0
        %2960 = vmatpush1.bf16.msra.mxu0 0
        %2961 = vmatprep.subr.bf16.mxu0 0
        %2962 = vmatpush1.bf16.msra.mxu0 0
        %2963 = vmatprep.subr.bf16.mxu0 0
        %2964 = vmatpush1.bf16.msra.mxu0 0
        %2965 = vmatprep.subr.bf16.mxu0 0
        %2966 = vmatpush1.bf16.msra.mxu0 0
        %2967 = vmatprep.subr.bf16.mxu0 0
        %2968 = vmatpush1.bf16.msra.mxu0 0
        %2969 = vmatprep.subr.bf16.mxu0 0
        %2970 = vmatpush1.bf16.msra.mxu0 0
        %2971 = vmatprep.subr.bf16.mxu0 0
        %2972 = vmatpush1.bf16.msra.mxu0 0
        %2973 = vmatprep.subr.bf16.mxu0 0
        %2974 = vmatpush1.bf16.msra.mxu0 0
        %2975 = vmatprep.subr.bf16.mxu0 0
        %2976 = vmatpush1.bf16.msra.mxu0 0
        %2977 = vmatprep.subr.bf16.mxu0 0
        %2978 = vmatpush1.bf16.msra.mxu0 0
        %2979 = vmatprep.subr.bf16.mxu0 0
        %2980 = vmatpush1.bf16.msra.mxu0 0
        %2981 = vmatprep.mubr.bf16.mxu0 0
        %2982 = vmatmul.mubr.bf16.gmra.mrb[0].mxu0 %v2242
        %v2983 = vpop.f32.mrb[0].mxu0
        %v2984 = vadd.f32 0.0, %v2983
        %v2985 = vpop.f32.mrb[0].mxu0
        %v2986 = vpop.f32.mrb[0].mxu0
        %v2987 = vadd.f32 0.0, %v2986
        %v2988 = vpop.f32.mrb[0].mxu0
        %2989 = vmatprep.mubr.bf16.mxu0 0
        %2990 = vmatmul.mubr.bf16.gmra.mrb[0].mxu0 %v2245
        %v2991 = vpop.f32.mrb[0].mxu0
        %v2992 = vadd.f32 0.0, %v2991
        %v2993 = vpop.f32.mrb[0].mxu0
        %v2994 = vpop.f32.mrb[0].mxu0
        %v2995 = vadd.f32 0.0, %v2994
        %v2996 = vpop.f32.mrb[0].mxu0
        %2997 = vmatprep.mubr.bf16.mxu0 0
        %2998 = vmatmul.mubr.bf16.gmra.mrb[0].mxu0 %v2248
        %v2999 = vpop.f32.mrb[0].mxu0
        %v3000 = vadd.f32 0.0, %v2999
        %v3001 = vpop.f32.mrb[0].mxu0
        %v3002 = vpop.f32.mrb[0].mxu0
        %v3003 = vpop.f32.mrb[0].mxu0
        %3004 = vdwg.mxu0
        %v3005 = vpack.c.bf16 %v2987, %v2984
        %v3006 = vpack.c.bf16 %v2995, %v2992
        %v3007 = vpack.c.bf16 %v3000, %v3000
        %v3011 = vunpack.c.l.b16 %v3005
        %v3012 = vunpack.c.h.b16 %v3005
        %v3013 = vunpack.c.l.b16 %v3006
        %v3014 = vunpack.c.h.b16 %v3006
        %v3015 = vunpack.c.l.b16 %v3007
        %v3016 = vpack.c.b16 %v3011, %v3011
        %v3017 = vpack.c.b16 %v3012, %v3012
        %v3018 = vpack.c.b16 %v3013, %v3013
        %v3019 = vpack.c.b16 %v3014, %v3014
        %v3020 = vpack.c.b16 %v3015, %v3015
        %3026 = vst.msk [vmem:[%s274 + $0x130] sm:$0xf] %vm702, %v3016
        %3027 = vst.msk [vmem:[%s274 + $0x134] sm:$0xf] %vm702, %v3017
        %3028 = vst.msk [vmem:[%s274 + $0x138] sm:$0xf] %vm702, %v3018
        %3029 = vst.msk [vmem:[%s274 + $0x13c] sm:$0xf] %vm702, %v3019
        %3030 = vst.msk [vmem:[%s274 + $0x140] sm:$0xf] %vm702, %v3020
      $region48: #{pyramid_pooling_module.2} parent=39 // pred_fallthru
        _
      %p3031 = scmp.lt.s32.totalorder %s20, 1
      %s3032 = scalar_select %p3031, %s20, 1
      %s3033 = smul.addr %s3032, 81
      %s3034 = smul.addr %s3033, 4
      %s3035 = scalar_lea.vmem %s5, %s3034
      // Predicated region
      $region49: #{pyramid_pooling_module.2} parent=39 // pred_check
        %p3036 = pneg %p163
      $region50: #{pyramid_pooling_module.2} parent=39 // pred_check_branch
        %3038 = sbr.rel (%p3036) target = $region52
      $region51: #{pyramid_pooling_module.2} parent=39 // pred_region
        _
      $region52: #{pyramid_pooling_module.2} parent=39 // pred_fallthru
        _
    $region40: #{pyramid_pooling_module.2} parent=5 // pred_fallthru
      _
    %p3039 = scmp.le.s32.totalorder 2, %s11
    // Predicated region
    $region53: #{pyramid_pooling_module.2} parent=5 // pred_check
      %p3040 = pneg %p3039
    $region54: #{pyramid_pooling_module.2} parent=5 // pred_check_branch
      %3042 = sbr.rel (%p3040) target = $region56
    $region55: #{pyramid_pooling_module.2} parent=5 // pred_region
      %s3043 = ssub.s32 %s11, 2
      // Predicated region
      $region57: #{pyramid_pooling_module.2} parent=55 // pred_check
        %p3044 = pneg %p169
      $region58: #{pyramid_pooling_module.2} parent=55 // pred_check_branch
        %3046 = sbr.rel (%p3044) target = $region60
      $region59: #{pyramid_pooling_module.2} parent=55 // pred_region
        %p3047 = scmp.lt.s32.totalorder %s22, 1
        %s3048 = scalar_select %p3047, %s22, 1
        %s3049 = smul.addr %s3048, 81
        %s3050 = smul.addr %s3049, 4
        %s3051 = scalar_lea.vmem %s5, %s3050
      $region60: #{pyramid_pooling_module.2} parent=55 // pred_fallthru
        _
    $region56: #{pyramid_pooling_module.2} parent=5 // pred_fallthru
      _
  $region6: #{pyramid_pooling_module.2} parent=0 // loop_footer
    %s15 = sadd.s32 1, %s11
  $region7: #{pyramid_pooling_module.2} parent=0 // loop_footer_branch
    %10 = sbr.rel target = $region3
  $region8: #{pyramid_pooling_module.2} parent=0 // loop_exit
    _

// kernel: pyramid_pooling_module.3
$region0: #{pyramid_pooling_module.3}
  #allocation0 [shape = 'u32[]', space=smem, size = 0x4, offset = 0x4, fixed_abs, tag = 'smem constant byte address 0x4 - core index']
  #allocation1 [shape = 'u32[144,128]{1,0:T(1,128)}', space=vmem, size = 0x12000, scoped, tag = 'internal scratch']
  #allocation2 [shape = 'f32[288,4]{1,0:T(8,128)}', space=vmem, size = 0x24000, scoped, tag = 'scratch operand']
  %s0 = inlined_call_operand.vmem [shape: bf16[2,332,8], index: 0, kind: input, shape index: {}]
  %s1 = inlined_call_operand.vmem [shape: bf16[3,3,8,4], index: 1, kind: input, shape index: {}]
  %s2 = inlined_call_operand.vmem [shape: bf16[288,648], index: 2, kind: input, shape index: {}]
  %s3 = inlined_call_operand.vmem [shape: bf16[2,648,4], index: 3, kind: input, shape index: {}]
  %s4 = inlined_call_operand.vmem [shape: f32[1,4], index: 4, kind: input, shape index: {}]
  %s5 = inlined_call_operand.vmem [shape: bf16[2,288,4], index: 5, kind: output, shape index: {}]
  %s6 = sld [smem:[#allocation0]]
  $region65: #{pyramid_pooling_module.3} parent=0
    _
  %s8 = ssub.s32 1, %s6
  %s9 = scalar_select 0, %s8, %s6
  loop: start=0, step=1, limit=6
  $region2: #{pyramid_pooling_module.3} parent=0 // loop_pre_header
    _
  $region3: #{pyramid_pooling_module.3} parent=0 // loop_header
    %s11 = sphi 0, %s15
    %p12 = scmp.ge.s32.totalorder %s11, 6
    %s18 = sphi 0, %s37
    %s19 = sphi 0, %s33
    %s20 = sphi 0, %s29
    %s21 = sphi 0, %s18
    %s22 = sphi 0, %s19
    %s23 = sphi 0, %s20
    %s24 = sphi 0, %s21
    %s25 = sphi 0, %s22
    %s26 = sphi 0, %s23
    %s46 = sphi 0, %s48
    %s49 = sphi 0, %s46
    %s50 = sphi 0, %s49
    %s66 = sphi 0, %s50
    %s78 = sphi 0, %s80
    %s81 = sphi 0, %s78
    %s82 = sphi 0, %s81
    %s98 = sphi 0, %s82
    %s102 = sphi 0, %s102
    %s104 = sphi 0, %s102
    %s105 = sphi 0, %s104
    %s119 = sphi 0, %s105
    %s127 = sphi 0, %s129
    %s130 = sphi 0, %s127
    %s131 = sphi 0, %s130
    %s147 = sphi 0, %s131
    %s153 = sphi 0, %s155
    %s156 = sphi 0, %s153
    %s157 = sphi 0, %s156
    %s173 = sphi 0, %s157
    %s181 = sphi 0, %s183
    %s184 = sphi 0, %s181
    %s185 = sphi 0, %s184
    %s201 = sphi 0, %s185
  $region4: #{pyramid_pooling_module.3} parent=0 // loop_header_branch
    %14 = sbr.rel (%p12) target = $region8
  $region5: #{pyramid_pooling_module.3} parent=0 // loop_body
    %s16 = ssub.s32 %s11, 1
    %s17 = ssub.s32 %s11, 2
    %s27 = sadd.s32 1, %s20
    %p28 = scmp.ge.s32.totalorder %s27, 2
    %s29 = scalar_select %p28, 0, %s27
    %s30 = sadd.s32 1, %s19
    %s31 = scalar_select %p28, %s30, %s19
    %p32 = scmp.ge.s32.totalorder %s31, 1
    %s33 = scalar_select %p32, 0, %s31
    %s34 = sadd.s32 1, %s18
    %s35 = scalar_select %p32, %s34, %s18
    %p36 = scmp.ge.s32.totalorder %s35, 2
    %s37 = scalar_select %p36, 0, %s35
    %p38 = scmp.lt.s32.totalorder %s20, 0
    %s39 = scalar_select %p38, %s20, 0
    %p40 = scmp.lt.s32.totalorder %s29, 0
    %s41 = scalar_select %p40, %s29, 0
    %s42 = ssub.s32 %s18, %s37
    %s43 = ssub.s32 %s39, %s41
    %s44 = sor.u32 %s42, %s43
    %p45 = scmp.eq.s32.totalorder %s44, 0
    %s47 = sadd.s32 %s46, 1
    %s48 = scalar_select %p45, %s46, %s47
    %p51 = pneg %p45
    %p52 = scmp.eq.s32.totalorder %s11, 3
    %p53 = por %p51, %p52
    %p54 = scmp.ne.s32.totalorder %s46, %s49
    %p55 = scmp.eq.s32.totalorder %s11, 0
    %p56 = por %p54, %p55
    %p57 = scmp.ne.s32.totalorder %s46, %s49
    %p58 = scmp.eq.s32.totalorder %s16, 3
    %p59 = por %p57, %p58
    %p60 = scmp.ne.s32.totalorder %s49, %s50
    %p61 = scmp.eq.s32.totalorder %s16, 0
    %p62 = por %p60, %p61
    %p63 = scmp.ne.s32.totalorder %s49, %s50
    %p64 = scmp.eq.s32.totalorder %s17, 3
    %p65 = por %p63, %p64
    %p67 = scmp.ne.s32.totalorder %s50, %s66
    %p68 = scmp.eq.s32.totalorder %s17, 0
    %p69 = por %p67, %p68
    %p70 = scmp.lt.s32.totalorder %s20, 0
    %s71 = scalar_select %p70, %s20, 0
    %p72 = scmp.lt.s32.totalorder %s29, 0
    %s73 = scalar_select %p72, %s29, 0
    %s74 = ssub.s32 %s71, %s73
    %s75 = ssub.s32 %s19, %s33
    %s76 = sor.u32 %s74, %s75
    %p77 = scmp.eq.s32.totalorder %s76, 0
    %s79 = sadd.s32 %s78, 1
    %s80 = scalar_select %p77, %s78, %s79
    %p83 = pneg %p77
    %p84 = scmp.eq.s32.totalorder %s11, 3
    %p85 = por %p83, %p84
    %p86 = scmp.ne.s32.totalorder %s78, %s81
    %p87 = scmp.eq.s32.totalorder %s11, 0
    %p88 = por %p86, %p87
    %p89 = scmp.ne.s32.totalorder %s78, %s81
    %p90 = scmp.eq.s32.totalorder %s16, 3
    %p91 = por %p89, %p90
    %p92 = scmp.ne.s32.totalorder %s81, %s82
    %p93 = scmp.eq.s32.totalorder %s16, 0
    %p94 = por %p92, %p93
    %p95 = scmp.ne.s32.totalorder %s81, %s82
    %p96 = scmp.eq.s32.totalorder %s17, 3
    %p97 = por %p95, %p96
    %p99 = scmp.ne.s32.totalorder %s82, %s98
    %p100 = scmp.eq.s32.totalorder %s17, 0
    %p101 = por %p99, %p100
    %s103 = sadd.s32 %s102, 1
    %p106 = scmp.eq.s32.totalorder %s11, 3
    %p107 = scmp.ne.s32.totalorder %s102, %s104
    %p108 = scmp.eq.s32.totalorder %s11, 0
    %p109 = por %p107, %p108
    %p110 = scmp.ne.s32.totalorder %s102, %s104
    %p111 = scmp.eq.s32.totalorder %s16, 3
    %p112 = por %p110, %p111
    %p113 = scmp.ne.s32.totalorder %s104, %s105
    %p114 = scmp.eq.s32.totalorder %s16, 0
    %p115 = por %p113, %p114
    %p116 = scmp.ne.s32.totalorder %s104, %s105
    %p117 = scmp.eq.s32.totalorder %s17, 3
    %p118 = por %p116, %p117
    %p120 = scmp.ne.s32.totalorder %s105, %s119
    %p121 = scmp.eq.s32.totalorder %s17, 0
    %p122 = por %p120, %p121
    %s123 = ssub.s32 %s18, %s37
    %s124 = ssub.s32 %s19, %s33
    %s125 = sor.u32 %s123, %s124
    %p126 = scmp.eq.s32.totalorder %s125, 0
    %s128 = sadd.s32 %s127, 1
    %s129 = scalar_select %p126, %s127, %s128
    %p132 = pneg %p126
    %p133 = scmp.eq.s32.totalorder %s11, 3
    %p134 = por %p132, %p133
    %p135 = scmp.ne.s32.totalorder %s127, %s130
    %p136 = scmp.eq.s32.totalorder %s11, 0
    %p137 = por %p135, %p136
    %p138 = scmp.ne.s32.totalorder %s127, %s130
    %p139 = scmp.eq.s32.totalorder %s16, 3
    %p140 = por %p138, %p139
    %p141 = scmp.ne.s32.totalorder %s130, %s131
    %p142 = scmp.eq.s32.totalorder %s16, 0
    %p143 = por %p141, %p142
    %p144 = scmp.ne.s32.totalorder %s130, %s131
    %p145 = scmp.eq.s32.totalorder %s17, 3
    %p146 = por %p144, %p145
    %p148 = scmp.ne.s32.totalorder %s131, %s147
    %p149 = scmp.eq.s32.totalorder %s17, 0
    %p150 = por %p148, %p149
    %s151 = ssub.s32 %s19, %s33
    %p152 = scmp.eq.s32.totalorder %s151, 0
    %s154 = sadd.s32 %s153, 1
    %s155 = scalar_select %p152, %s153, %s154
    %p158 = pneg %p152
    %p159 = scmp.eq.s32.totalorder %s11, 3
    %p160 = por %p158, %p159
    %p161 = scmp.ne.s32.totalorder %s153, %s156
    %p162 = scmp.eq.s32.totalorder %s11, 0
    %p163 = por %p161, %p162
    %p164 = scmp.ne.s32.totalorder %s153, %s156
    %p165 = scmp.eq.s32.totalorder %s16, 3
    %p166 = por %p164, %p165
    %p167 = scmp.ne.s32.totalorder %s156, %s157
    %p168 = scmp.eq.s32.totalorder %s16, 0
    %p169 = por %p167, %p168
    %p170 = scmp.ne.s32.totalorder %s156, %s157
    %p171 = scmp.eq.s32.totalorder %s17, 3
    %p172 = por %p170, %p171
    %p174 = scmp.ne.s32.totalorder %s157, %s173
    %p175 = scmp.eq.s32.totalorder %s17, 0
    %p176 = por %p174, %p175
    %s177 = ssub.s32 %s18, %s37
    %s178 = ssub.s32 %s19, %s33
    %s179 = sor.u32 %s177, %s178
    %p180 = scmp.eq.s32.totalorder %s179, 0
    %s182 = sadd.s32 %s181, 1
    %s183 = scalar_select %p180, %s181, %s182
    %p186 = pneg %p180
    %p187 = scmp.eq.s32.totalorder %s11, 3
    %p188 = por %p186, %p187
    %p189 = scmp.ne.s32.totalorder %s181, %s184
    %p190 = scmp.eq.s32.totalorder %s11, 0
    %p191 = por %p189, %p190
    %p192 = scmp.ne.s32.totalorder %s181, %s184
    %p193 = scmp.eq.s32.totalorder %s16, 3
    %p194 = por %p192, %p193
    %p195 = scmp.ne.s32.totalorder %s184, %s185
    %p196 = scmp.eq.s32.totalorder %s16, 0
    %p197 = por %p195, %p196
    %p198 = scmp.ne.s32.totalorder %s184, %s185
    %p199 = scmp.eq.s32.totalorder %s17, 3
    %p200 = por %p198, %p199
    %p202 = scmp.ne.s32.totalorder %s185, %s201
    %p203 = scmp.eq.s32.totalorder %s17, 0
    %p204 = por %p202, %p203
    %p205 = scmp.le.s32.totalorder 1, %s11
    %p206 = scmp.lt.s32.totalorder %s11, 5
    %p207 = pnand %p205, %p206
    %p208 = pneg %p207
    // Predicated region
    $region9: #{pyramid_pooling_module.3} parent=5 // pred_check
      _
    $region10: #{pyramid_pooling_module.3} parent=5 // pred_check_branch
      %210 = sbr.rel (%p207) target = $region12
    $region11: #{pyramid_pooling_module.3} parent=5 // pred_region
      %s211 = ssub.s32 %s11, 1
      // Predicated region
      $region13: #{pyramid_pooling_module.3} parent=11 // pred_check
        %p212 = pneg %p115
      $region14: #{pyramid_pooling_module.3} parent=11 // pred_check_branch
        %214 = sbr.rel (%p212) target = $region16
      $region15: #{pyramid_pooling_module.3} parent=11 // pred_region
        _
      $region16: #{pyramid_pooling_module.3} parent=11 // pred_fallthru
        _
      // Predicated region
      $region17: #{pyramid_pooling_module.3} parent=11 // pred_check
        %p215 = pneg %p169
      $region18: #{pyramid_pooling_module.3} parent=11 // pred_check_branch
        %217 = sbr.rel (%p215) target = $region20
      $region19: #{pyramid_pooling_module.3} parent=11 // pred_region
        %p218 = scmp.lt.s32.totalorder %s22, 0
        %s219 = scalar_select %p218, %s22, 0
        %s220 = scalar_lea.vmem %s4, %s219
      $region20: #{pyramid_pooling_module.3} parent=11 // pred_fallthru
        _
    $region12: #{pyramid_pooling_module.3} parent=5 // pred_fallthru
      _
    %p221 = scmp.lt.s32.totalorder %s11, 4
    // Predicated region
    $region21: #{pyramid_pooling_module.3} parent=5 // pred_check
      %p222 = pneg %p221
    $region22: #{pyramid_pooling_module.3} parent=5 // pred_check_branch
      %224 = sbr.rel (%p222) target = $region24
    $region23: #{pyramid_pooling_module.3} parent=5 // pred_region
      // Predicated region
      $region25: #{pyramid_pooling_module.3} parent=23 // pred_check
        %p225 = pneg %p56
      $region26: #{pyramid_pooling_module.3} parent=23 // pred_check_branch
        %227 = sbr.rel (%p225) target = $region28
      $region27: #{pyramid_pooling_module.3} parent=23 // pred_region
        %p228 = scmp.lt.s32.totalorder %s20, 0
        %s229 = scalar_select %p228, %s20, 0
        %p230 = scmp.lt.s32.totalorder %s18, 1
        %s231 = scalar_select %p230, %s18, 1
        %p232 = scmp.lt.s32.totalorder %s229, 0
        %s233 = scalar_select %p232, %s229, 0
        %s234 = smul.addr %s231, 42
        %s235 = sadd.s32 %s233, %s234
        %s236 = smul.addr %s235, 4
        %s237 = scalar_lea.vmem %s0, %s236
        %p238 = scmp.lt.s32.totalorder %s20, 0
        %s239 = scalar_select %p238, %s20, 0
      $region28: #{pyramid_pooling_module.3} parent=23 // pred_fallthru
        _
      // Predicated region
      $region29: #{pyramid_pooling_module.3} parent=23 // pred_check
        %p240 = pneg %p88
      $region30: #{pyramid_pooling_module.3} parent=23 // pred_check_branch
        %242 = sbr.rel (%p240) target = $region32
      $region31: #{pyramid_pooling_module.3} parent=23 // pred_region
        %p243 = scmp.lt.s32.totalorder %s20, 0
        %s244 = scalar_select %p243, %s20, 0
        %p245 = scmp.lt.s32.totalorder %s244, 0
        %s246 = scalar_select %p245, %s244, 0
        %p247 = scmp.lt.s32.totalorder %s19, 0
        %s248 = scalar_select %p247, %s19, 0
        %s249 = sadd.s32 %s248, %s246
        %s250 = smul.addr %s249, 4
        %s251 = scalar_lea.vmem %s1, %s250
        %p252 = scmp.lt.s32.totalorder %s20, 0
        %s253 = scalar_select %p252, %s20, 0
      $region32: #{pyramid_pooling_module.3} parent=23 // pred_fallthru
        _
      // Predicated region
      $region33: #{pyramid_pooling_module.3} parent=23 // pred_check
        %p254 = pneg %p137
      $region34: #{pyramid_pooling_module.3} parent=23 // pred_check_branch
        %256 = sbr.rel (%p254) target = $region36
      $region35: #{pyramid_pooling_module.3} parent=23 // pred_region
        %p257 = scmp.lt.s32.totalorder %s18, 1
        %s258 = scalar_select %p257, %s18, 1
        %p259 = scmp.lt.s32.totalorder %s19, 0
        %s260 = scalar_select %p259, %s19, 0
        %s261 = smul.addr %s258, 81
        %s262 = sadd.s32 %s260, %s261
        %s263 = smul.addr %s262, 4
        %s264 = scalar_lea.vmem %s3, %s263
      $region36: #{pyramid_pooling_module.3} parent=23 // pred_fallthru
        _
    $region24: #{pyramid_pooling_module.3} parent=5 // pred_fallthru
      _
    %p265 = scmp.le.s32.totalorder 1, %s11
    %p266 = scmp.lt.s32.totalorder %s11, 5
    %p267 = pnand %p265, %p266
    %p268 = pneg %p267
    // Predicated region
    $region37: #{pyramid_pooling_module.3} parent=5 // pred_check
      _
    $region38: #{pyramid_pooling_module.3} parent=5 // pred_check_branch
      %270 = sbr.rel (%p267) target = $region40
    $region39: #{pyramid_pooling_module.3} parent=5 // pred_region
      %s271 = ssub.s32 %s11, 1
      %p272 = scmp.lt.s32.totalorder %s23, 0
      %s273 = scalar_select %p272, %s23, 0
      %p274 = scmp.lt.s32.totalorder %s21, 1
      %s275 = scalar_select %p274, %s21, 1
      %p276 = scmp.lt.s32.totalorder %s273, 0
      %s277 = scalar_select %p276, %s273, 0
      %s278 = smul.addr %s275, 42
      %s279 = sadd.s32 %s277, %s278
      %s280 = smul.addr %s279, 4
      %s281 = scalar_lea.vmem %s0, %s280
      %p282 = pneg %p62
      %p283 = pneg %p59
      %p284 = scmp.lt.s32.totalorder %s23, 0
      %s285 = scalar_select %p284, %s23, 0
      %p286 = scmp.lt.s32.totalorder %s285, 0
      %s287 = scalar_select %p286, %s285, 0
      %p288 = scmp.lt.s32.totalorder %s22, 0
      %s289 = scalar_select %p288, %s22, 0
      %s290 = sadd.s32 %s289, %s287
      %s291 = smul.addr %s290, 4
      %s292 = scalar_lea.vmem %s1, %s291
      %p293 = pneg %p94
      %p294 = pneg %p91
      %p295 = pneg %p115
      %p296 = pneg %p112
      %p297 = scmp.lt.s32.totalorder %s21, 1
      %s298 = scalar_select %p297, %s21, 1
      %p299 = scmp.lt.s32.totalorder %s22, 0
      %s300 = scalar_select %p299, %s22, 0
      %s301 = smul.addr %s298, 81
      %s302 = sadd.s32 %s300, %s301
      %s303 = smul.addr %s302, 4
      %s304 = scalar_lea.vmem %s3, %s303
      %p305 = pneg %p143
      %p306 = pneg %p140
      %p307 = scmp.lt.s32.totalorder %s22, 0
      %s308 = scalar_select %p307, %s22, 0
      %s309 = scalar_lea.vmem %s4, %s308
      %p310 = pneg %p169
      %p311 = pneg %p166
      %p312 = pneg %p197
      %p313 = pneg %p194
      %p314 = scmp.lt.s32.totalorder %s21, 1
      %s315 = scalar_select %p314, %s21, 1
      %p316 = scmp.lt.s32.totalorder %s22, 0
      %s317 = scalar_select %p316, %s22, 0
      %s318 = smul.addr %s315, 36
      %s319 = sadd.s32 %s317, %s318
      %s320 = smul.addr %s319, 4
      %s321 = scalar_lea.vmem %s5, %s320
      %p322 = scmp.lt.s32.totalorder %s23, 0
      %s323 = scalar_select %p322, %s23, 0
      %p324 = scmp.lt.s32.totalorder %s21, 1
      %s325 = scalar_select %p324, %s21, 1
      %p326 = scmp.lt.s32.totalorder %s323, 0
      %s327 = scalar_select %p326, %s323, 0
      %s328 = smul.addr %s325, 42
      %s329 = sadd.s32 %s327, %s328
      %s330 = smul.addr %s329, 4
      %s331 = scalar_lea.vmem %s0, %s330
      %p332 = scmp.lt.s32.totalorder %s23, 0
      %s333 = scalar_select %p332, %s23, 0
      %p334 = scmp.lt.s32.totalorder %s23, 0
      %s335 = scalar_select %p334, %s23, 0
      %p336 = scmp.lt.s32.totalorder %s335, 0
      %s337 = scalar_select %p336, %s335, 0
      %p338 = scmp.lt.s32.totalorder %s22, 0
      %s339 = scalar_select %p338, %s22, 0
      %s340 = sadd.s32 %s339, %s337
      %s341 = smul.addr %s340, 4
      %s342 = scalar_lea.vmem %s1, %s341
      %p343 = scmp.lt.s32.totalorder %s23, 0
      %s344 = scalar_select %p343, %s23, 0
      %p345 = scmp.lt.s32.totalorder %s21, 1
      %s346 = scalar_select %p345, %s21, 1
      %p347 = scmp.lt.s32.totalorder %s22, 0
      %s348 = scalar_select %p347, %s22, 0
      %s349 = smul.addr %s346, 81
      %s350 = sadd.s32 %s348, %s349
      %s351 = smul.addr %s350, 4
      %s352 = scalar_lea.vmem %s3, %s351
      %p353 = scmp.lt.s32.totalorder %s22, 0
      %s354 = scalar_select %p353, %s22, 0
      %s355 = scalar_lea.vmem %s4, %s354
      %p356 = scmp.lt.s32.totalorder %s21, 1
      %s357 = scalar_select %p356, %s21, 1
      %p358 = scmp.lt.s32.totalorder %s22, 0
      %s359 = scalar_select %p358, %s22, 0
      %s360 = smul.addr %s357, 36
      %s361 = sadd.s32 %s359, %s360
      %s362 = smul.addr %s361, 4
      %s363 = scalar_lea.vmem %s5, %s362
      %p365 = scmp.eq.s32.totalorder %s23, 0
      // Predicated region
      $region41: #{pyramid_pooling_module.3} parent=39 // pred_check
        %p366 = pneg %p365
      $region42: #{pyramid_pooling_module.3} parent=39 // pred_check_branch
        %368 = sbr.rel (%p366) target = $region44
      $region43: #{pyramid_pooling_module.3} parent=39 // pred_region
        %vm369 = vcmask 31744
        %370 = vst.msk [vmem:[#allocation2] sm:$0xff] %vm369, 0.0
        %371 = vst.msk [vmem:[#allocation2 + $0x8] sm:$0xff] %vm369, 0.0
        %372 = vst.msk [vmem:[#allocation2 + $0x10] sm:$0xff] %vm369, 0.0
        %373 = vst.msk [vmem:[#allocation2 + $0x18] sm:$0xff] %vm369, 0.0
        %374 = vst.msk [vmem:[#allocation2 + $0x20] sm:$0xff] %vm369, 0.0
        %375 = vst.msk [vmem:[#allocation2 + $0x28] sm:$0xff] %vm369, 0.0
        %376 = vst.msk [vmem:[#allocation2 + $0x30] sm:$0xff] %vm369, 0.0
        %377 = vst.msk [vmem:[#allocation2 + $0x38] sm:$0xff] %vm369, 0.0
        %378 = vst.msk [vmem:[#allocation2 + $0x40] sm:$0xff] %vm369, 0.0
        %379 = vst.msk [vmem:[#allocation2 + $0x48] sm:$0xff] %vm369, 0.0
        %380 = vst.msk [vmem:[#allocation2 + $0x50] sm:$0xff] %vm369, 0.0
        %381 = vst.msk [vmem:[#allocation2 + $0x58] sm:$0xff] %vm369, 0.0
        %382 = vst.msk [vmem:[#allocation2 + $0x60] sm:$0xff] %vm369, 0.0
        %383 = vst.msk [vmem:[#allocation2 + $0x68] sm:$0xff] %vm369, 0.0
        %384 = vst.msk [vmem:[#allocation2 + $0x70] sm:$0xff] %vm369, 0.0
        %385 = vst.msk [vmem:[#allocation2 + $0x78] sm:$0xff] %vm369, 0.0
        %386 = vst.msk [vmem:[#allocation2 + $0x80] sm:$0xff] %vm369, 0.0
        %387 = vst.msk [vmem:[#allocation2 + $0x88] sm:$0xff] %vm369, 0.0
        %388 = vst.msk [vmem:[#allocation2 + $0x90] sm:$0xff] %vm369, 0.0
        %389 = vst.msk [vmem:[#allocation2 + $0x98] sm:$0xff] %vm369, 0.0
        %390 = vst.msk [vmem:[#allocation2 + $0xa0] sm:$0xff] %vm369, 0.0
        %391 = vst.msk [vmem:[#allocation2 + $0xa8] sm:$0xff] %vm369, 0.0
        %392 = vst.msk [vmem:[#allocation2 + $0xb0] sm:$0xff] %vm369, 0.0
        %393 = vst.msk [vmem:[#allocation2 + $0xb8] sm:$0xff] %vm369, 0.0
        %394 = vst.msk [vmem:[#allocation2 + $0xc0] sm:$0xff] %vm369, 0.0
        %395 = vst.msk [vmem:[#allocation2 + $0xc8] sm:$0xff] %vm369, 0.0
        %396 = vst.msk [vmem:[#allocation2 + $0xd0] sm:$0xff] %vm369, 0.0
        %397 = vst.msk [vmem:[#allocation2 + $0xd8] sm:$0xff] %vm369, 0.0
        %398 = vst.msk [vmem:[#allocation2 + $0xe0] sm:$0xff] %vm369, 0.0
        %399 = vst.msk [vmem:[#allocation2 + $0xe8] sm:$0xff] %vm369, 0.0
        %400 = vst.msk [vmem:[#allocation2 + $0xf0] sm:$0xff] %vm369, 0.0
        %401 = vst.msk [vmem:[#allocation2 + $0xf8] sm:$0xff] %vm369, 0.0
        %402 = vst.msk [vmem:[#allocation2 + $0x100] sm:$0xff] %vm369, 0.0
        %403 = vst.msk [vmem:[#allocation2 + $0x108] sm:$0xff] %vm369, 0.0
        %404 = vst.msk [vmem:[#allocation2 + $0x110] sm:$0xff] %vm369, 0.0
        %405 = vst.msk [vmem:[#allocation2 + $0x118] sm:$0xff] %vm369, 0.0
      $region44: #{pyramid_pooling_module.3} parent=39 // pred_fallthru
        _
      %p406 = scmp.lt.s32.totalorder %s23, 1
      // Predicated region
      $region45: #{pyramid_pooling_module.3} parent=39 // pred_check
        %p407 = pneg %p406
      $region46: #{pyramid_pooling_module.3} parent=39 // pred_check_branch
        %409 = sbr.rel (%p407) target = $region48
      $region47: #{pyramid_pooling_module.3} parent=39 // pred_region
        %v410 = vld [vmem:[#allocation2] sm:$0xff]
        %v411 = vld [vmem:[#allocation2 + $0x8] sm:$0xff]
        %v412 = vld [vmem:[#allocation2 + $0x10] sm:$0xff]
        %v413 = vld [vmem:[#allocation2 + $0x18] sm:$0xff]
        %v414 = vld [vmem:[#allocation2 + $0x20] sm:$0xff]
        %v415 = vld [vmem:[#allocation2 + $0x28] sm:$0xff]
        %v416 = vld [vmem:[#allocation2 + $0x30] sm:$0xff]
        %v417 = vld [vmem:[#allocation2 + $0x38] sm:$0xff]
        %v418 = vld [vmem:[#allocation2 + $0x40] sm:$0xff]
        %v419 = vld [vmem:[#allocation2 + $0x48] sm:$0xff]
        %v420 = vld [vmem:[#allocation2 + $0x50] sm:$0xff]
        %v421 = vld [vmem:[#allocation2 + $0x58] sm:$0xff]
        %v422 = vld [vmem:[#allocation2 + $0x60] sm:$0xff]
        %v423 = vld [vmem:[#allocation2 + $0x68] sm:$0xff]
        %v424 = vld [vmem:[#allocation2 + $0x70] sm:$0xff]
        %v425 = vld [vmem:[#allocation2 + $0x78] sm:$0xff]
        %v426 = vld [vmem:[#allocation2 + $0x80] sm:$0xff]
        %v427 = vld [vmem:[#allocation2 + $0x88] sm:$0xff]
        %v428 = vld [vmem:[#allocation2 + $0x90] sm:$0xff]
        %v429 = vld [vmem:[#allocation2 + $0x98] sm:$0xff]
        %v430 = vld [vmem:[#allocation2 + $0xa0] sm:$0xff]
        %v431 = vld [vmem:[#allocation2 + $0xa8] sm:$0xff]
        %v432 = vld [vmem:[#allocation2 + $0xb0] sm:$0xff]
        %v433 = vld [vmem:[#allocation2 + $0xb8] sm:$0xff]
        %v434 = vld [vmem:[#allocation2 + $0xc0] sm:$0xff]
        %v435 = vld [vmem:[#allocation2 + $0xc8] sm:$0xff]
        %v436 = vld [vmem:[#allocation2 + $0xd0] sm:$0xff]
        %v437 = vld [vmem:[#allocation2 + $0xd8] sm:$0xff]
        %v438 = vld [vmem:[#allocation2 + $0xe0] sm:$0xff]
        %v439 = vld [vmem:[#allocation2 + $0xe8] sm:$0xff]
        %v440 = vld [vmem:[#allocation2 + $0xf0] sm:$0xff]
        %v441 = vld [vmem:[#allocation2 + $0xf8] sm:$0xff]
        %v442 = vld [vmem:[#allocation2 + $0x100] sm:$0xff]
        %v443 = vld [vmem:[#allocation2 + $0x108] sm:$0xff]
        %v444 = vld [vmem:[#allocation2 + $0x110] sm:$0xff]
        %v445 = vld [vmem:[#allocation2 + $0x118] sm:$0xff]
        %v446 = vld [vmem:[%s331] sm:$0xf]
        %v447 = vld [vmem:[%s331 + $0x4] sm:$0xf]
        %v448 = vld [vmem:[%s331 + $0x8] sm:$0xf]
        %v449 = vld [vmem:[%s331 + $0xc] sm:$0xf]
        %v450 = vld [vmem:[%s331 + $0x10] sm:$0xf]
        %v451 = vld [vmem:[%s331 + $0x14] sm:$0xf]
        %v452 = vld [vmem:[%s331 + $0x18] sm:$0xf]
        %v453 = vld [vmem:[%s331 + $0x1c] sm:$0xf]
        %v454 = vld [vmem:[%s331 + $0x20] sm:$0xf]
        %v455 = vld [vmem:[%s331 + $0x24] sm:$0xf]
        %v456 = vld [vmem:[%s331 + $0x28] sm:$0xf]
        %v457 = vld [vmem:[%s331 + $0x2c] sm:$0xf]
        %v458 = vld [vmem:[%s331 + $0x30] sm:$0xf]
        %v459 = vld [vmem:[%s331 + $0x34] sm:$0xf]
        %v460 = vld [vmem:[%s331 + $0x38] sm:$0xf]
        %v461 = vld [vmem:[%s331 + $0x3c] sm:$0xf]
        %v462 = vld [vmem:[%s331 + $0x40] sm:$0xf]
        %v463 = vld [vmem:[%s331 + $0x44] sm:$0xf]
        %v464 = vld [vmem:[%s331 + $0x48] sm:$0xf]
        %v465 = vld [vmem:[%s331 + $0x4c] sm:$0xf]
        %v466 = vld [vmem:[%s331 + $0x50] sm:$0xf]
        %v467 = vld [vmem:[%s331 + $0x54] sm:$0xf]
        %v468 = vld [vmem:[%s331 + $0x58] sm:$0xf]
        %v469 = vld [vmem:[%s331 + $0x5c] sm:$0xf]
        %v470 = vld [vmem:[%s331 + $0x60] sm:$0xf]
        %v471 = vld [vmem:[%s331 + $0x64] sm:$0xf]
        %v472 = vld [vmem:[%s331 + $0x68] sm:$0xf]
        %v473 = vld [vmem:[%s331 + $0x6c] sm:$0xf]
        %v474 = vld [vmem:[%s331 + $0x70] sm:$0xf]
        %v475 = vld [vmem:[%s331 + $0x74] sm:$0xf]
        %v476 = vld [vmem:[%s331 + $0x78] sm:$0xf]
        %v477 = vld [vmem:[%s331 + $0x7c] sm:$0xf]
        %v478 = vld [vmem:[%s331 + $0x80] sm:$0xf]
        %v479 = vld [vmem:[%s331 + $0x84] sm:$0xf]
        %v480 = vld [vmem:[%s331 + $0x88] sm:$0xf]
        %v481 = vld [vmem:[%s331 + $0x8c] sm:$0xf]
        %v482 = vld [vmem:[%s342] sm:$0xf]
        %v519 = vunpack.c.l.b16 %v446
        %v520 = vunpack.c.l.b16 %v447
        %v521 = vunpack.c.l.b16 %v448
        %v522 = vunpack.c.l.b16 %v449
        %v523 = vunpack.c.l.b16 %v450
        %v524 = vunpack.c.l.b16 %v451
        %v525 = vunpack.c.l.b16 %v452
        %v526 = vunpack.c.l.b16 %v453
        %v527 = vunpack.c.l.b16 %v454
        %v528 = vunpack.c.l.b16 %v455
        %v529 = vunpack.c.l.b16 %v456
        %v530 = vunpack.c.l.b16 %v457
        %v531 = vunpack.c.l.b16 %v458
        %v532 = vunpack.c.l.b16 %v459
        %v533 = vunpack.c.l.b16 %v460
        %v534 = vunpack.c.l.b16 %v461
        %v535 = vunpack.c.l.b16 %v462
        %v536 = vunpack.c.l.b16 %v463
        %v537 = vunpack.c.l.b16 %v464
        %v538 = vunpack.c.l.b16 %v465
        %v539 = vunpack.c.l.b16 %v466
        %v540 = vunpack.c.l.b16 %v467
        %v541 = vunpack.c.l.b16 %v468
        %v542 = vunpack.c.l.b16 %v469
        %v543 = vunpack.c.l.b16 %v470
        %v544 = vunpack.c.l.b16 %v471
        %v545 = vunpack.c.l.b16 %v472
        %v546 = vunpack.c.l.b16 %v473
        %v547 = vunpack.c.l.b16 %v474
        %v548 = vunpack.c.l.b16 %v475
        %v549 = vunpack.c.l.b16 %v476
        %v550 = vunpack.c.l.b16 %v477
        %v551 = vunpack.c.l.b16 %v478
        %v552 = vunpack.c.l.b16 %v479
        %v553 = vunpack.c.l.b16 %v480
        %v554 = vunpack.c.l.b16 %v481
        %v555 = vpack.c.b16 %v520, %v519
        %v556 = vpack.c.b16 %v522, %v521
        %v557 = vpack.c.b16 %v524, %v523
        %v558 = vpack.c.b16 %v526, %v525
        %v559 = vpack.c.b16 %v528, %v527
        %v560 = vpack.c.b16 %v530, %v529
        %v561 = vpack.c.b16 %v532, %v531
        %v562 = vpack.c.b16 %v534, %v533
        %v563 = vpack.c.b16 %v536, %v535
        %v564 = vpack.c.b16 %v538, %v537
        %v565 = vpack.c.b16 %v540, %v539
        %v566 = vpack.c.b16 %v542, %v541
        %v567 = vpack.c.b16 %v544, %v543
        %v568 = vpack.c.b16 %v546, %v545
        %v569 = vpack.c.b16 %v548, %v547
        %v570 = vpack.c.b16 %v550, %v549
        %v571 = vpack.c.b16 %v552, %v551
        %v572 = vpack.c.b16 %v554, %v553
        %vm573 = vcmask 64512
        %v575 = vsel %vm573, %v555, 0
        %v578 = vsel %vm573, %v556, 0
        %v581 = vsel %vm573, %v557, 0
        %v584 = vsel %vm573, %v558, 0
        %v587 = vsel %vm573, %v559, 0
        %v590 = vsel %vm573, %v560, 0
        %v593 = vsel %vm573, %v561, 0
        %v596 = vsel %vm573, %v562, 0
        %v599 = vsel %vm573, %v563, 0
        %v602 = vsel %vm573, %v564, 0
        %v605 = vsel %vm573, %v565, 0
        %v608 = vsel %vm573, %v566, 0
        %v611 = vsel %vm573, %v567, 0
        %v614 = vsel %vm573, %v568, 0
        %v617 = vsel %vm573, %v569, 0
        %v620 = vsel %vm573, %v570, 0
        %v623 = vsel %vm573, %v571, 0
        %v626 = vsel %vm573, %v572, 0
        %vm628 = vcmask 1043456
        %v630 = vsel %vm628, %v482, 0
        %632 = vmatprep.subr.bf16.mxu0 0
        %633 = vmatpush1.bf16.msra.mxu0 %v630
        %634 = vmatprep.subr.bf16.mxu0 0
        %635 = vmatpush1.bf16.msra.mxu0 0
        %636 = vmatprep.subr.bf16.mxu0 0
        %637 = vmatpush1.bf16.msra.mxu0 0
        %638 = vmatprep.subr.bf16.mxu0 0
        %639 = vmatpush1.bf16.msra.mxu0 0
        %640 = vmatprep.subr.bf16.mxu0 0
        %641 = vmatpush1.bf16.msra.mxu0 0
        %642 = vmatprep.subr.bf16.mxu0 0
        %643 = vmatpush1.bf16.msra.mxu0 0
        %644 = vmatprep.subr.bf16.mxu0 0
        %645 = vmatpush1.bf16.msra.mxu0 0
        %646 = vmatprep.subr.bf16.mxu0 0
        %647 = vmatpush1.bf16.msra.mxu0 0
        %648 = vmatprep.subr.bf16.mxu0 0
        %649 = vmatpush1.bf16.msra.mxu0 0
        %650 = vmatprep.subr.bf16.mxu0 0
        %651 = vmatpush1.bf16.msra.mxu0 0
        %652 = vmatprep.subr.bf16.mxu0 0
        %653 = vmatpush1.bf16.msra.mxu0 0
        %654 = vmatprep.subr.bf16.mxu0 0
        %655 = vmatpush1.bf16.msra.mxu0 0
        %656 = vmatprep.subr.bf16.mxu0 0
        %657 = vmatpush1.bf16.msra.mxu0 0
        %658 = vmatprep.subr.bf16.mxu0 0
        %659 = vmatpush1.bf16.msra.mxu0 0
        %660 = vmatprep.subr.bf16.mxu0 0
        %661 = vmatpush1.bf16.msra.mxu0 0
        %662 = vmatprep.subr.bf16.mxu0 0
        %663 = vmatpush1.bf16.msra.mxu0 0
        %664 = vmatprep.mubr.bf16.mxu0 0
        %665 = vmatmul.mubr.bf16.gmra.mrb[0].mxu0 %v575
        %v666 = vpop.f32.mrb[0].mxu0
        %v667 = vadd.f32 0.0, %v666
        %v668 = vpop.f32.mrb[0].mxu0
        %v669 = vpop.f32.mrb[0].mxu0
        %v670 = vadd.f32 0.0, %v669
        %v671 = vpop.f32.mrb[0].mxu0
        %672 = vmatprep.mubr.bf16.mxu0 0
        %673 = vmatmul.mubr.bf16.gmra.mrb[0].mxu0 %v578
        %v674 = vpop.f32.mrb[0].mxu0
        %v675 = vadd.f32 0.0, %v674
        %v676 = vpop.f32.mrb[0].mxu0
        %v677 = vpop.f32.mrb[0].mxu0
        %v678 = vadd.f32 0.0, %v677
        %v679 = vpop.f32.mrb[0].mxu0
        %680 = vmatprep.mubr.bf16.mxu0 0
        %681 = vmatmul.mubr.bf16.gmra.mrb[0].mxu0 %v581
        %v682 = vpop.f32.mrb[0].mxu0
        %v683 = vadd.f32 0.0, %v682
        %v684 = vpop.f32.mrb[0].mxu0
        %v685 = vpop.f32.mrb[0].mxu0
        %v686 = vadd.f32 0.0, %v685
        %v687 = vpop.f32.mrb[0].mxu0
        %688 = vmatprep.mubr.bf16.mxu0 0
        %689 = vmatmul.mubr.bf16.gmra.mrb[0].mxu0 %v584
        %v690 = vpop.f32.mrb[0].mxu0
        %v691 = vadd.f32 0.0, %v690
        %v692 = vpop.f32.mrb[0].mxu0
        %v693 = vpop.f32.mrb[0].mxu0
        %v694 = vadd.f32 0.0, %v693
        %v695 = vpop.f32.mrb[0].mxu0
        %696 = vmatprep.mubr.bf16.mxu0 0
        %697 = vmatmul.mubr.bf16.gmra.mrb[0].mxu0 %v587
        %v698 = vpop.f32.mrb[0].mxu0
        %v699 = vadd.f32 0.0, %v698
        %v700 = vpop.f32.mrb[0].mxu0
        %v701 = vpop.f32.mrb[0].mxu0
        %v702 = vadd.f32 0.0, %v701
        %v703 = vpop.f32.mrb[0].mxu0
        %704 = vmatprep.mubr.bf16.mxu0 0
        %705 = vmatmul.mubr.bf16.gmra.mrb[0].mxu0 %v590
        %v706 = vpop.f32.mrb[0].mxu0
        %v707 = vadd.f32 0.0, %v706
        %v708 = vpop.f32.mrb[0].mxu0
        %v709 = vpop.f32.mrb[0].mxu0
        %v710 = vadd.f32 0.0, %v709
        %v711 = vpop.f32.mrb[0].mxu0
        %712 = vmatprep.mubr.bf16.mxu0 0
        %713 = vmatmul.mubr.bf16.gmra.mrb[0].mxu0 %v593
        %v714 = vpop.f32.mrb[0].mxu0
        %v715 = vadd.f32 0.0, %v714
        %v716 = vpop.f32.mrb[0].mxu0
        %v717 = vpop.f32.mrb[0].mxu0
        %v718 = vadd.f32 0.0, %v717
        %v719 = vpop.f32.mrb[0].mxu0
        %720 = vmatprep.mubr.bf16.mxu0 0
        %721 = vmatmul.mubr.bf16.gmra.mrb[0].mxu0 %v596
        %v722 = vpop.f32.mrb[0].mxu0
        %v723 = vadd.f32 0.0, %v722
        %v724 = vpop.f32.mrb[0].mxu0
        %v725 = vpop.f32.mrb[0].mxu0
        %v726 = vadd.f32 0.0, %v725
        %v727 = vpop.f32.mrb[0].mxu0
        %728 = vmatprep.mubr.bf16.mxu0 0
        %729 = vmatmul.mubr.bf16.gmra.mrb[0].mxu0 %v599
        %v730 = vpop.f32.mrb[0].mxu0
        %v731 = vadd.f32 0.0, %v730
        %v732 = vpop.f32.mrb[0].mxu0
        %v733 = vpop.f32.mrb[0].mxu0
        %v734 = vadd.f32 0.0, %v733
        %v735 = vpop.f32.mrb[0].mxu0
        %736 = vmatprep.mubr.bf16.mxu0 0
        %737 = vmatmul.mubr.bf16.gmra.mrb[0].mxu0 %v602
        %v738 = vpop.f32.mrb[0].mxu0
        %v739 = vadd.f32 0.0, %v738
        %v740 = vpop.f32.mrb[0].mxu0
        %v741 = vpop.f32.mrb[0].mxu0
        %v742 = vadd.f32 0.0, %v741
        %v743 = vpop.f32.mrb[0].mxu0
        %744 = vmatprep.mubr.bf16.mxu0 0
        %745 = vmatmul.mubr.bf16.gmra.mrb[0].mxu0 %v605
        %v746 = vpop.f32.mrb[0].mxu0
        %v747 = vadd.f32 0.0, %v746
        %v748 = vpop.f32.mrb[0].mxu0
        %v749 = vpop.f32.mrb[0].mxu0
        %v750 = vadd.f32 0.0, %v749
        %v751 = vpop.f32.mrb[0].mxu0
        %752 = vmatprep.mubr.bf16.mxu0 0
        %753 = vmatmul.mubr.bf16.gmra.mrb[0].mxu0 %v608
        %v754 = vpop.f32.mrb[0].mxu0
        %v755 = vadd.f32 0.0, %v754
        %v756 = vpop.f32.mrb[0].mxu0
        %v757 = vpop.f32.mrb[0].mxu0
        %v758 = vadd.f32 0.0, %v757
        %v759 = vpop.f32.mrb[0].mxu0
        %760 = vmatprep.mubr.bf16.mxu0 0
        %761 = vmatmul.mubr.bf16.gmra.mrb[0].mxu0 %v611
        %v762 = vpop.f32.mrb[0].mxu0
        %v763 = vadd.f32 0.0, %v762
        %v764 = vpop.f32.mrb[0].mxu0
        %v765 = vpop.f32.mrb[0].mxu0
        %v766 = vadd.f32 0.0, %v765
        %v767 = vpop.f32.mrb[0].mxu0
        %768 = vmatprep.mubr.bf16.mxu0 0
        %769 = vmatmul.mubr.bf16.gmra.mrb[0].mxu0 %v614
        %v770 = vpop.f32.mrb[0].mxu0
        %v771 = vadd.f32 0.0, %v770
        %v772 = vpop.f32.mrb[0].mxu0
        %v773 = vpop.f32.mrb[0].mxu0
        %v774 = vadd.f32 0.0, %v773
        %v775 = vpop.f32.mrb[0].mxu0
        %776 = vmatprep.mubr.bf16.mxu0 0
        %777 = vmatmul.mubr.bf16.gmra.mrb[0].mxu0 %v617
        %v778 = vpop.f32.mrb[0].mxu0
        %v779 = vadd.f32 0.0, %v778
        %v780 = vpop.f32.mrb[0].mxu0
        %v781 = vpop.f32.mrb[0].mxu0
        %v782 = vadd.f32 0.0, %v781
        %v783 = vpop.f32.mrb[0].mxu0
        %784 = vmatprep.mubr.bf16.mxu0 0
        %785 = vmatmul.mubr.bf16.gmra.mrb[0].mxu0 %v620
        %v786 = vpop.f32.mrb[0].mxu0
        %v787 = vadd.f32 0.0, %v786
        %v788 = vpop.f32.mrb[0].mxu0
        %v789 = vpop.f32.mrb[0].mxu0
        %v790 = vadd.f32 0.0, %v789
        %v791 = vpop.f32.mrb[0].mxu0
        %792 = vmatprep.mubr.bf16.mxu0 0
        %793 = vmatmul.mubr.bf16.gmra.mrb[0].mxu0 %v623
        %v794 = vpop.f32.mrb[0].mxu0
        %v795 = vadd.f32 0.0, %v794
        %v796 = vpop.f32.mrb[0].mxu0
        %v797 = vpop.f32.mrb[0].mxu0
        %v798 = vadd.f32 0.0, %v797
        %v799 = vpop.f32.mrb[0].mxu0
        %800 = vmatprep.mubr.bf16.mxu0 0
        %801 = vmatmul.mubr.bf16.gmra.mrb[0].mxu0 %v626
        %v802 = vpop.f32.mrb[0].mxu0
        %v803 = vadd.f32 0.0, %v802
        %v804 = vpop.f32.mrb[0].mxu0
        %v805 = vpop.f32.mrb[0].mxu0
        %v806 = vadd.f32 0.0, %v805
        %v807 = vpop.f32.mrb[0].mxu0
        %808 = vdwg.mxu0
        %v809 = vadd.f32 %v410, %v667
        %v810 = vadd.f32 %v411, %v670
        %v811 = vadd.f32 %v412, %v675
        %v812 = vadd.f32 %v413, %v678
        %v813 = vadd.f32 %v414, %v683
        %v814 = vadd.f32 %v415, %v686
        %v815 = vadd.f32 %v416, %v691
        %v816 = vadd.f32 %v417, %v694
        %v817 = vadd.f32 %v418, %v699
        %v818 = vadd.f32 %v419, %v702
        %v819 = vadd.f32 %v420, %v707
        %v820 = vadd.f32 %v421, %v710
        %v821 = vadd.f32 %v422, %v715
        %v822 = vadd.f32 %v423, %v718
        %v823 = vadd.f32 %v424, %v723
        %v824 = vadd.f32 %v425, %v726
        %v825 = vadd.f32 %v426, %v731
        %v826 = vadd.f32 %v427, %v734
        %v827 = vadd.f32 %v428, %v739
        %v828 = vadd.f32 %v429, %v742
        %v829 = vadd.f32 %v430, %v747
        %v830 = vadd.f32 %v431, %v750
        %v831 = vadd.f32 %v432, %v755
        %v832 = vadd.f32 %v433, %v758
        %v833 = vadd.f32 %v434, %v763
        %v834 = vadd.f32 %v435, %v766
        %v835 = vadd.f32 %v436, %v771
        %v836 = vadd.f32 %v437, %v774
        %v837 = vadd.f32 %v438, %v779
        %v838 = vadd.f32 %v439, %v782
        %v839 = vadd.f32 %v440, %v787
        %v840 = vadd.f32 %v441, %v790
        %v841 = vadd.f32 %v442, %v795
        %v842 = vadd.f32 %v443, %v798
        %v843 = vadd.f32 %v444, %v803
        %v844 = vadd.f32 %v445, %v806
        %v845 = vld [vmem:[%s331] sm:$0xf]
        %v846 = vld [vmem:[%s331 + $0x4] sm:$0xf]
        %v847 = vld [vmem:[%s331 + $0x8] sm:$0xf]
        %v848 = vld [vmem:[%s331 + $0xc] sm:$0xf]
        %v849 = vld [vmem:[%s331 + $0x10] sm:$0xf]
        %v850 = vld [vmem:[%s331 + $0x14] sm:$0xf]
        %v851 = vld [vmem:[%s331 + $0x18] sm:$0xf]
        %v852 = vld [vmem:[%s331 + $0x1c] sm:$0xf]
        %v853 = vld [vmem:[%s331 + $0x20] sm:$0xf]
        %v854 = vld [vmem:[%s331 + $0x24] sm:$0xf]
        %v855 = vld [vmem:[%s331 + $0x28] sm:$0xf]
        %v856 = vld [vmem:[%s331 + $0x2c] sm:$0xf]
        %v857 = vld [vmem:[%s331 + $0x30] sm:$0xf]
        %v858 = vld [vmem:[%s331 + $0x34] sm:$0xf]
        %v859 = vld [vmem:[%s331 + $0x38] sm:$0xf]
        %v860 = vld [vmem:[%s331 + $0x3c] sm:$0xf]
        %v861 = vld [vmem:[%s331 + $0x40] sm:$0xf]
        %v862 = vld [vmem:[%s331 + $0x44] sm:$0xf]
        %v863 = vld [vmem:[%s331 + $0x48] sm:$0xf]
        %v864 = vld [vmem:[%s331 + $0x4c] sm:$0xf]
        %v865 = vld [vmem:[%s331 + $0x50] sm:$0xf]
        %v866 = vld [vmem:[%s331 + $0x54] sm:$0xf]
        %v867 = vld [vmem:[%s331 + $0x58] sm:$0xf]
        %v868 = vld [vmem:[%s331 + $0x5c] sm:$0xf]
        %v869 = vld [vmem:[%s331 + $0x60] sm:$0xf]
        %v870 = vld [vmem:[%s331 + $0x64] sm:$0xf]
        %v871 = vld [vmem:[%s331 + $0x68] sm:$0xf]
        %v872 = vld [vmem:[%s331 + $0x6c] sm:$0xf]
        %v873 = vld [vmem:[%s331 + $0x70] sm:$0xf]
        %v874 = vld [vmem:[%s331 + $0x74] sm:$0xf]
        %v875 = vld [vmem:[%s331 + $0x78] sm:$0xf]
        %v876 = vld [vmem:[%s331 + $0x7c] sm:$0xf]
        %v877 = vld [vmem:[%s331 + $0x80] sm:$0xf]
        %v878 = vld [vmem:[%s331 + $0x84] sm:$0xf]
        %v879 = vld [vmem:[%s331 + $0x88] sm:$0xf]
        %v880 = vld [vmem:[%s331 + $0x8c] sm:$0xf]
        %v881 = vld [vmem:[%s331 + $0x90] sm:$0x1]
        %s882 = scalar_lea.vmem %s342, 4
        %v883 = vld [vmem:[%s882] sm:$0xf]
        %v921 = vunpack.c.l.b16 %v845
        %v922 = vunpack.c.l.b16 %v846
        %v923 = vunpack.c.l.b16 %v847
        %v924 = vunpack.c.l.b16 %v848
        %v925 = vunpack.c.l.b16 %v849
        %v926 = vunpack.c.l.b16 %v850
        %v927 = vunpack.c.l.b16 %v851
        %v928 = vunpack.c.l.b16 %v852
        %v929 = vunpack.c.l.b16 %v853
        %v930 = vunpack.c.l.b16 %v854
        %v931 = vunpack.c.l.b16 %v855
        %v932 = vunpack.c.l.b16 %v856
        %v933 = vunpack.c.l.b16 %v857
        %v934 = vunpack.c.l.b16 %v858
        %v935 = vunpack.c.l.b16 %v859
        %v936 = vunpack.c.l.b16 %v860
        %v937 = vunpack.c.l.b16 %v861
        %v938 = vunpack.c.l.b16 %v862
        %v939 = vunpack.c.l.b16 %v863
        %v940 = vunpack.c.l.b16 %v864
        %v941 = vunpack.c.l.b16 %v865
        %v942 = vunpack.c.l.b16 %v866
        %v943 = vunpack.c.l.b16 %v867
        %v944 = vunpack.c.l.b16 %v868
        %v945 = vunpack.c.l.b16 %v869
        %v946 = vunpack.c.l.b16 %v870
        %v947 = vunpack.c.l.b16 %v871
        %v948 = vunpack.c.l.b16 %v872
        %v949 = vunpack.c.l.b16 %v873
        %v950 = vunpack.c.l.b16 %v874
        %v951 = vunpack.c.l.b16 %v875
        %v952 = vunpack.c.l.b16 %v876
        %v953 = vunpack.c.l.b16 %v877
        %v954 = vunpack.c.l.b16 %v878
        %v955 = vunpack.c.l.b16 %v879
        %v956 = vunpack.c.l.b16 %v880
        %v957 = vunpack.c.l.b16 %v881
        %v958 = vpack.c.b16 %v922, %v921
        %v959 = vpack.c.b16 %v924, %v923
        %v960 = vpack.c.b16 %v926, %v925
        %v961 = vpack.c.b16 %v928, %v927
        %v962 = vpack.c.b16 %v930, %v929
        %v963 = vpack.c.b16 %v932, %v931
        %v964 = vpack.c.b16 %v934, %v933
        %v965 = vpack.c.b16 %v936, %v935
        %v966 = vpack.c.b16 %v938, %v937
        %v967 = vpack.c.b16 %v940, %v939
        %v968 = vpack.c.b16 %v942, %v941
        %v969 = vpack.c.b16 %v944, %v943
        %v970 = vpack.c.b16 %v946, %v945
        %v971 = vpack.c.b16 %v948, %v947
        %v972 = vpack.c.b16 %v950, %v949
        %v973 = vpack.c.b16 %v952, %v951
        %v974 = vpack.c.b16 %v954, %v953
        %v975 = vpack.c.b16 %v956, %v955
        %v976 = vpack.c.b16 %v957, %v957
        %vm977 = vsmask.f32 7424
        %v979 = vshrl.u32 %v958, 16
        %v981 = vshll.u32 %v958, 16
        %v983 = vrot.slane %v981, 1
        %v984 = vor.u32 %v979, %v983
        %v986 = vshll.u32 %v959, 16
        %v988 = vrot.slane %v986, 1
        %v989 = vsel %vm977, %v984, %v988
        %v990 = vshrl.u32 %v959, 16
        %v992 = vor.u32 %v990, %v988
        %v994 = vshll.u32 %v960, 16
        %v996 = vrot.slane %v994, 1
        %v997 = vsel %vm977, %v992, %v996
        %v998 = vshrl.u32 %v960, 16
        %v1000 = vor.u32 %v998, %v996
        %v1002 = vshll.u32 %v961, 16
        %v1004 = vrot.slane %v1002, 1
        %v1005 = vsel %vm977, %v1000, %v1004
        %v1006 = vshrl.u32 %v961, 16
        %v1008 = vor.u32 %v1006, %v1004
        %v1010 = vshll.u32 %v962, 16
        %v1012 = vrot.slane %v1010, 1
        %v1013 = vsel %vm977, %v1008, %v1012
        %v1014 = vshrl.u32 %v962, 16
        %v1016 = vor.u32 %v1014, %v1012
        %v1018 = vshll.u32 %v963, 16
        %v1020 = vrot.slane %v1018, 1
        %v1021 = vsel %vm977, %v1016, %v1020
        %v1022 = vshrl.u32 %v963, 16
        %v1024 = vor.u32 %v1022, %v1020
        %v1026 = vshll.u32 %v964, 16
        %v1028 = vrot.slane %v1026, 1
        %v1029 = vsel %vm977, %v1024, %v1028
        %v1030 = vshrl.u32 %v964, 16
        %v1032 = vor.u32 %v1030, %v1028
        %v1034 = vshll.u32 %v965, 16
        %v1036 = vrot.slane %v1034, 1
        %v1037 = vsel %vm977, %v1032, %v1036
        %v1038 = vshrl.u32 %v965, 16
        %v1040 = vor.u32 %v1038, %v1036
        %v1042 = vshll.u32 %v966, 16
        %v1044 = vrot.slane %v1042, 1
        %v1045 = vsel %vm977, %v1040, %v1044
        %v1046 = vshrl.u32 %v966, 16
        %v1048 = vor.u32 %v1046, %v1044
        %v1050 = vshll.u32 %v967, 16
        %v1052 = vrot.slane %v1050, 1
        %v1053 = vsel %vm977, %v1048, %v1052
        %v1054 = vshrl.u32 %v967, 16
        %v1056 = vor.u32 %v1054, %v1052
        %v1058 = vshll.u32 %v968, 16
        %v1060 = vrot.slane %v1058, 1
        %v1061 = vsel %vm977, %v1056, %v1060
        %v1062 = vshrl.u32 %v968, 16
        %v1064 = vor.u32 %v1062, %v1060
        %v1066 = vshll.u32 %v969, 16
        %v1068 = vrot.slane %v1066, 1
        %v1069 = vsel %vm977, %v1064, %v1068
        %v1070 = vshrl.u32 %v969, 16
        %v1072 = vor.u32 %v1070, %v1068
        %v1074 = vshll.u32 %v970, 16
        %v1076 = vrot.slane %v1074, 1
        %v1077 = vsel %vm977, %v1072, %v1076
        %v1078 = vshrl.u32 %v970, 16
        %v1080 = vor.u32 %v1078, %v1076
        %v1082 = vshll.u32 %v971, 16
        %v1084 = vrot.slane %v1082, 1
        %v1085 = vsel %vm977, %v1080, %v1084
        %v1086 = vshrl.u32 %v971, 16
        %v1088 = vor.u32 %v1086, %v1084
        %v1090 = vshll.u32 %v972, 16
        %v1092 = vrot.slane %v1090, 1
        %v1093 = vsel %vm977, %v1088, %v1092
        %v1094 = vshrl.u32 %v972, 16
        %v1096 = vor.u32 %v1094, %v1092
        %v1098 = vshll.u32 %v973, 16
        %v1100 = vrot.slane %v1098, 1
        %v1101 = vsel %vm977, %v1096, %v1100
        %v1102 = vshrl.u32 %v973, 16
        %v1104 = vor.u32 %v1102, %v1100
        %v1106 = vshll.u32 %v974, 16
        %v1108 = vrot.slane %v1106, 1
        %v1109 = vsel %vm977, %v1104, %v1108
        %v1110 = vshrl.u32 %v974, 16
        %v1112 = vor.u32 %v1110, %v1108
        %v1114 = vshll.u32 %v975, 16
        %v1116 = vrot.slane %v1114, 1
        %v1117 = vsel %vm977, %v1112, %v1116
        %v1118 = vshrl.u32 %v975, 16
        %v1120 = vor.u32 %v1118, %v1116
        %v1122 = vshll.u32 %v976, 16
        %v1124 = vrot.slane %v1122, 1
        %v1125 = vsel %vm977, %v1120, %v1124
        %v1127 = vsel %vm573, %v989, 0
        %v1130 = vsel %vm573, %v997, 0
        %v1133 = vsel %vm573, %v1005, 0
        %v1136 = vsel %vm573, %v1013, 0
        %v1139 = vsel %vm573, %v1021, 0
        %v1142 = vsel %vm573, %v1029, 0
        %v1145 = vsel %vm573, %v1037, 0
        %v1148 = vsel %vm573, %v1045, 0
        %v1151 = vsel %vm573, %v1053, 0
        %v1154 = vsel %vm573, %v1061, 0
        %v1157 = vsel %vm573, %v1069, 0
        %v1160 = vsel %vm573, %v1077, 0
        %v1163 = vsel %vm573, %v1085, 0
        %v1166 = vsel %vm573, %v1093, 0
        %v1169 = vsel %vm573, %v1101, 0
        %v1172 = vsel %vm573, %v1109, 0
        %v1175 = vsel %vm573, %v1117, 0
        %v1178 = vsel %vm573, %v1125, 0
        %v1181 = vsel %vm628, %v883, 0
        %1183 = vmatprep.subr.bf16.mxu0 0
        %1184 = vmatpush1.bf16.msra.mxu0 %v1181
        %1185 = vmatprep.subr.bf16.mxu0 0
        %1186 = vmatpush1.bf16.msra.mxu0 0
        %1187 = vmatprep.subr.bf16.mxu0 0
        %1188 = vmatpush1.bf16.msra.mxu0 0
        %1189 = vmatprep.subr.bf16.mxu0 0
        %1190 = vmatpush1.bf16.msra.mxu0 0
        %1191 = vmatprep.subr.bf16.mxu0 0
        %1192 = vmatpush1.bf16.msra.mxu0 0
        %1193 = vmatprep.subr.bf16.mxu0 0
        %1194 = vmatpush1.bf16.msra.mxu0 0
        %1195 = vmatprep.subr.bf16.mxu0 0
        %1196 = vmatpush1.bf16.msra.mxu0 0
        %1197 = vmatprep.subr.bf16.mxu0 0
        %1198 = vmatpush1.bf16.msra.mxu0 0
        %1199 = vmatprep.subr.bf16.mxu0 0
        %1200 = vmatpush1.bf16.msra.mxu0 0
        %1201 = vmatprep.subr.bf16.mxu0 0
        %1202 = vmatpush1.bf16.msra.mxu0 0
        %1203 = vmatprep.subr.bf16.mxu0 0
        %1204 = vmatpush1.bf16.msra.mxu0 0
        %1205 = vmatprep.subr.bf16.mxu0 0
        %1206 = vmatpush1.bf16.msra.mxu0 0
        %1207 = vmatprep.subr.bf16.mxu0 0
        %1208 = vmatpush1.bf16.msra.mxu0 0
        %1209 = vmatprep.subr.bf16.mxu0 0
        %1210 = vmatpush1.bf16.msra.mxu0 0
        %1211 = vmatprep.subr.bf16.mxu0 0
        %1212 = vmatpush1.bf16.msra.mxu0 0
        %1213 = vmatprep.subr.bf16.mxu0 0
        %1214 = vmatpush1.bf16.msra.mxu0 0
        %1215 = vmatprep.mubr.bf16.mxu0 0
        %1216 = vmatmul.mubr.bf16.gmra.mrb[0].mxu0 %v1127
        %v1217 = vpop.f32.mrb[0].mxu0
        %v1218 = vadd.f32 0.0, %v1217
        %v1219 = vpop.f32.mrb[0].mxu0
        %v1220 = vpop.f32.mrb[0].mxu0
        %v1221 = vadd.f32 0.0, %v1220
        %v1222 = vpop.f32.mrb[0].mxu0
        %1223 = vmatprep.mubr.bf16.mxu0 0
        %1224 = vmatmul.mubr.bf16.gmra.mrb[0].mxu0 %v1130
        %v1225 = vpop.f32.mrb[0].mxu0
        %v1226 = vadd.f32 0.0, %v1225
        %v1227 = vpop.f32.mrb[0].mxu0
        %v1228 = vpop.f32.mrb[0].mxu0
        %v1229 = vadd.f32 0.0, %v1228
        %v1230 = vpop.f32.mrb[0].mxu0
        %1231 = vmatprep.mubr.bf16.mxu0 0
        %1232 = vmatmul.mubr.bf16.gmra.mrb[0].mxu0 %v1133
        %v1233 = vpop.f32.mrb[0].mxu0
        %v1234 = vadd.f32 0.0, %v1233
        %v1235 = vpop.f32.mrb[0].mxu0
        %v1236 = vpop.f32.mrb[0].mxu0
        %v1237 = vadd.f32 0.0, %v1236
        %v1238 = vpop.f32.mrb[0].mxu0
        %1239 = vmatprep.mubr.bf16.mxu0 0
        %1240 = vmatmul.mubr.bf16.gmra.mrb[0].mxu0 %v1136
        %v1241 = vpop.f32.mrb[0].mxu0
        %v1242 = vadd.f32 0.0, %v1241
        %v1243 = vpop.f32.mrb[0].mxu0
        %v1244 = vpop.f32.mrb[0].mxu0
        %v1245 = vadd.f32 0.0, %v1244
        %v1246 = vpop.f32.mrb[0].mxu0
        %1247 = vmatprep.mubr.bf16.mxu0 0
        %1248 = vmatmul.mubr.bf16.gmra.mrb[0].mxu0 %v1139
        %v1249 = vpop.f32.mrb[0].mxu0
        %v1250 = vadd.f32 0.0, %v1249
        %v1251 = vpop.f32.mrb[0].mxu0
        %v1252 = vpop.f32.mrb[0].mxu0
        %v1253 = vadd.f32 0.0, %v1252
        %v1254 = vpop.f32.mrb[0].mxu0
        %1255 = vmatprep.mubr.bf16.mxu0 0
        %1256 = vmatmul.mubr.bf16.gmra.mrb[0].mxu0 %v1142
        %v1257 = vpop.f32.mrb[0].mxu0
        %v1258 = vadd.f32 0.0, %v1257
        %v1259 = vpop.f32.mrb[0].mxu0
        %v1260 = vpop.f32.mrb[0].mxu0
        %v1261 = vadd.f32 0.0, %v1260
        %v1262 = vpop.f32.mrb[0].mxu0
        %1263 = vmatprep.mubr.bf16.mxu0 0
        %1264 = vmatmul.mubr.bf16.gmra.mrb[0].mxu0 %v1145
        %v1265 = vpop.f32.mrb[0].mxu0
        %v1266 = vadd.f32 0.0, %v1265
        %v1267 = vpop.f32.mrb[0].mxu0
        %v1268 = vpop.f32.mrb[0].mxu0
        %v1269 = vadd.f32 0.0, %v1268
        %v1270 = vpop.f32.mrb[0].mxu0
        %1271 = vmatprep.mubr.bf16.mxu0 0
        %1272 = vmatmul.mubr.bf16.gmra.mrb[0].mxu0 %v1148
        %v1273 = vpop.f32.mrb[0].mxu0
        %v1274 = vadd.f32 0.0, %v1273
        %v1275 = vpop.f32.mrb[0].mxu0
        %v1276 = vpop.f32.mrb[0].mxu0
        %v1277 = vadd.f32 0.0, %v1276
        %v1278 = vpop.f32.mrb[0].mxu0
        %1279 = vmatprep.mubr.bf16.mxu0 0
        %1280 = vmatmul.mubr.bf16.gmra.mrb[0].mxu0 %v1151
        %v1281 = vpop.f32.mrb[0].mxu0
        %v1282 = vadd.f32 0.0, %v1281
        %v1283 = vpop.f32.mrb[0].mxu0
        %v1284 = vpop.f32.mrb[0].mxu0
        %v1285 = vadd.f32 0.0, %v1284
        %v1286 = vpop.f32.mrb[0].mxu0
        %1287 = vmatprep.mubr.bf16.mxu0 0
        %1288 = vmatmul.mubr.bf16.gmra.mrb[0].mxu0 %v1154
        %v1289 = vpop.f32.mrb[0].mxu0
        %v1290 = vadd.f32 0.0, %v1289
        %v1291 = vpop.f32.mrb[0].mxu0
        %v1292 = vpop.f32.mrb[0].mxu0
        %v1293 = vadd.f32 0.0, %v1292
        %v1294 = vpop.f32.mrb[0].mxu0
        %1295 = vmatprep.mubr.bf16.mxu0 0
        %1296 = vmatmul.mubr.bf16.gmra.mrb[0].mxu0 %v1157
        %v1297 = vpop.f32.mrb[0].mxu0
        %v1298 = vadd.f32 0.0, %v1297
        %v1299 = vpop.f32.mrb[0].mxu0
        %v1300 = vpop.f32.mrb[0].mxu0
        %v1301 = vadd.f32 0.0, %v1300
        %v1302 = vpop.f32.mrb[0].mxu0
        %1303 = vmatprep.mubr.bf16.mxu0 0
        %1304 = vmatmul.mubr.bf16.gmra.mrb[0].mxu0 %v1160
        %v1305 = vpop.f32.mrb[0].mxu0
        %v1306 = vadd.f32 0.0, %v1305
        %v1307 = vpop.f32.mrb[0].mxu0
        %v1308 = vpop.f32.mrb[0].mxu0
        %v1309 = vadd.f32 0.0, %v1308
        %v1310 = vpop.f32.mrb[0].mxu0
        %1311 = vmatprep.mubr.bf16.mxu0 0
        %1312 = vmatmul.mubr.bf16.gmra.mrb[0].mxu0 %v1163
        %v1313 = vpop.f32.mrb[0].mxu0
        %v1314 = vadd.f32 0.0, %v1313
        %v1315 = vpop.f32.mrb[0].mxu0
        %v1316 = vpop.f32.mrb[0].mxu0
        %v1317 = vadd.f32 0.0, %v1316
        %v1318 = vpop.f32.mrb[0].mxu0
        %1319 = vmatprep.mubr.bf16.mxu0 0
        %1320 = vmatmul.mubr.bf16.gmra.mrb[0].mxu0 %v1166
        %v1321 = vpop.f32.mrb[0].mxu0
        %v1322 = vadd.f32 0.0, %v1321
        %v1323 = vpop.f32.mrb[0].mxu0
        %v1324 = vpop.f32.mrb[0].mxu0
        %v1325 = vadd.f32 0.0, %v1324
        %v1326 = vpop.f32.mrb[0].mxu0
        %1327 = vmatprep.mubr.bf16.mxu0 0
        %1328 = vmatmul.mubr.bf16.gmra.mrb[0].mxu0 %v1169
        %v1329 = vpop.f32.mrb[0].mxu0
        %v1330 = vadd.f32 0.0, %v1329
        %v1331 = vpop.f32.mrb[0].mxu0
        %v1332 = vpop.f32.mrb[0].mxu0
        %v1333 = vadd.f32 0.0, %v1332
        %v1334 = vpop.f32.mrb[0].mxu0
        %1335 = vmatprep.mubr.bf16.mxu0 0
        %1336 = vmatmul.mubr.bf16.gmra.mrb[0].mxu0 %v1172
        %v1337 = vpop.f32.mrb[0].mxu0
        %v1338 = vadd.f32 0.0, %v1337
        %v1339 = vpop.f32.mrb[0].mxu0
        %v1340 = vpop.f32.mrb[0].mxu0
        %v1341 = vadd.f32 0.0, %v1340
        %v1342 = vpop.f32.mrb[0].mxu0
        %1343 = vmatprep.mubr.bf16.mxu0 0
        %1344 = vmatmul.mubr.bf16.gmra.mrb[0].mxu0 %v1175
        %v1345 = vpop.f32.mrb[0].mxu0
        %v1346 = vadd.f32 0.0, %v1345
        %v1347 = vpop.f32.mrb[0].mxu0
        %v1348 = vpop.f32.mrb[0].mxu0
        %v1349 = vadd.f32 0.0, %v1348
        %v1350 = vpop.f32.mrb[0].mxu0
        %1351 = vmatprep.mubr.bf16.mxu0 0
        %1352 = vmatmul.mubr.bf16.gmra.mrb[0].mxu0 %v1178
        %v1353 = vpop.f32.mrb[0].mxu0
        %v1354 = vadd.f32 0.0, %v1353
        %v1355 = vpop.f32.mrb[0].mxu0
        %v1356 = vpop.f32.mrb[0].mxu0
        %v1357 = vadd.f32 0.0, %v1356
        %v1358 = vpop.f32.mrb[0].mxu0
        %1359 = vdwg.mxu0
        %v1360 = vadd.f32 %v809, %v1218
        %v1361 = vadd.f32 %v810, %v1221
        %v1362 = vadd.f32 %v811, %v1226
        %v1363 = vadd.f32 %v812, %v1229
        %v1364 = vadd.f32 %v813, %v1234
        %v1365 = vadd.f32 %v814, %v1237
        %v1366 = vadd.f32 %v815, %v1242
        %v1367 = vadd.f32 %v816, %v1245
        %v1368 = vadd.f32 %v817, %v1250
        %v1369 = vadd.f32 %v818, %v1253
        %v1370 = vadd.f32 %v819, %v1258
        %v1371 = vadd.f32 %v820, %v1261
        %v1372 = vadd.f32 %v821, %v1266
        %v1373 = vadd.f32 %v822, %v1269
        %v1374 = vadd.f32 %v823, %v1274
        %v1375 = vadd.f32 %v824, %v1277
        %v1376 = vadd.f32 %v825, %v1282
        %v1377 = vadd.f32 %v826, %v1285
        %v1378 = vadd.f32 %v827, %v1290
        %v1379 = vadd.f32 %v828, %v1293
        %v1380 = vadd.f32 %v829, %v1298
        %v1381 = vadd.f32 %v830, %v1301
        %v1382 = vadd.f32 %v831, %v1306
        %v1383 = vadd.f32 %v832, %v1309
        %v1384 = vadd.f32 %v833, %v1314
        %v1385 = vadd.f32 %v834, %v1317
        %v1386 = vadd.f32 %v835, %v1322
        %v1387 = vadd.f32 %v836, %v1325
        %v1388 = vadd.f32 %v837, %v1330
        %v1389 = vadd.f32 %v838, %v1333
        %v1390 = vadd.f32 %v839, %v1338
        %v1391 = vadd.f32 %v840, %v1341
        %v1392 = vadd.f32 %v841, %v1346
        %v1393 = vadd.f32 %v842, %v1349
        %v1394 = vadd.f32 %v843, %v1354
        %v1395 = vadd.f32 %v844, %v1357
        %v1396 = vld [vmem:[%s331] sm:$0xe]
        %s1397 = scalar_lea.vmem %s342, 8
        %v1398 = vld [vmem:[%s1397] sm:$0xf]
        %v1400 = vunpack.c.l.b16 %v1396
        %v1401 = vpack.c.b16 %v922, %v1400
        %vm1402 = vcmask 1046528
        %v1403 = vrot.slane %v1401, 1
        %v1404 = vrot.slane %v959, 1
        %v1405 = vsel %vm1402, %v1403, %v1404
        %v1406 = vrot.slane %v960, 1
        %v1407 = vsel %vm1402, %v1404, %v1406
        %v1408 = vrot.slane %v961, 1
        %v1409 = vsel %vm1402, %v1406, %v1408
        %v1410 = vrot.slane %v962, 1
        %v1411 = vsel %vm1402, %v1408, %v1410
        %v1412 = vrot.slane %v963, 1
        %v1413 = vsel %vm1402, %v1410, %v1412
        %v1414 = vrot.slane %v964, 1
        %v1415 = vsel %vm1402, %v1412, %v1414
        %v1416 = vrot.slane %v965, 1
        %v1417 = vsel %vm1402, %v1414, %v1416
        %v1418 = vrot.slane %v966, 1
        %v1419 = vsel %vm1402, %v1416, %v1418
        %v1420 = vrot.slane %v967, 1
        %v1421 = vsel %vm1402, %v1418, %v1420
        %v1422 = vrot.slane %v968, 1
        %v1423 = vsel %vm1402, %v1420, %v1422
        %v1424 = vrot.slane %v969, 1
        %v1425 = vsel %vm1402, %v1422, %v1424
        %v1426 = vrot.slane %v970, 1
        %v1427 = vsel %vm1402, %v1424, %v1426
        %v1428 = vrot.slane %v971, 1
        %v1429 = vsel %vm1402, %v1426, %v1428
        %v1430 = vrot.slane %v972, 1
        %v1431 = vsel %vm1402, %v1428, %v1430
        %v1432 = vrot.slane %v973, 1
        %v1433 = vsel %vm1402, %v1430, %v1432
        %v1434 = vrot.slane %v974, 1
        %v1435 = vsel %vm1402, %v1432, %v1434
        %v1436 = vrot.slane %v975, 1
        %v1437 = vsel %vm1402, %v1434, %v1436
        %v1438 = vrot.slane %v976, 1
        %v1439 = vsel %vm1402, %v1436, %v1438
        %v1441 = vsel %vm573, %v1405, 0
        %v1444 = vsel %vm573, %v1407, 0
        %v1447 = vsel %vm573, %v1409, 0
        %v1450 = vsel %vm573, %v1411, 0
        %v1453 = vsel %vm573, %v1413, 0
        %v1456 = vsel %vm573, %v1415, 0
        %v1459 = vsel %vm573, %v1417, 0
        %v1462 = vsel %vm573, %v1419, 0
        %v1465 = vsel %vm573, %v1421, 0
        %v1468 = vsel %vm573, %v1423, 0
        %v1471 = vsel %vm573, %v1425, 0
        %v1474 = vsel %vm573, %v1427, 0
        %v1477 = vsel %vm573, %v1429, 0
        %v1480 = vsel %vm573, %v1431, 0
        %v1483 = vsel %vm573, %v1433, 0
        %v1486 = vsel %vm573, %v1435, 0
        %v1489 = vsel %vm573, %v1437, 0
        %v1492 = vsel %vm573, %v1439, 0
        %v1495 = vsel %vm628, %v1398, 0
        %1497 = vmatprep.subr.bf16.mxu0 0
        %1498 = vmatpush1.bf16.msra.mxu0 %v1495
        %1499 = vmatprep.subr.bf16.mxu0 0
        %1500 = vmatpush1.bf16.msra.mxu0 0
        %1501 = vmatprep.subr.bf16.mxu0 0
        %1502 = vmatpush1.bf16.msra.mxu0 0
        %1503 = vmatprep.subr.bf16.mxu0 0
        %1504 = vmatpush1.bf16.msra.mxu0 0
        %1505 = vmatprep.subr.bf16.mxu0 0
        %1506 = vmatpush1.bf16.msra.mxu0 0
        %1507 = vmatprep.subr.bf16.mxu0 0
        %1508 = vmatpush1.bf16.msra.mxu0 0
        %1509 = vmatprep.subr.bf16.mxu0 0
        %1510 = vmatpush1.bf16.msra.mxu0 0
        %1511 = vmatprep.subr.bf16.mxu0 0
        %1512 = vmatpush1.bf16.msra.mxu0 0
        %1513 = vmatprep.subr.bf16.mxu0 0
        %1514 = vmatpush1.bf16.msra.mxu0 0
        %1515 = vmatprep.subr.bf16.mxu0 0
        %1516 = vmatpush1.bf16.msra.mxu0 0
        %1517 = vmatprep.subr.bf16.mxu0 0
        %1518 = vmatpush1.bf16.msra.mxu0 0
        %1519 = vmatprep.subr.bf16.mxu0 0
        %1520 = vmatpush1.bf16.msra.mxu0 0
        %1521 = vmatprep.subr.bf16.mxu0 0
        %1522 = vmatpush1.bf16.msra.mxu0 0
        %1523 = vmatprep.subr.bf16.mxu0 0
        %1524 = vmatpush1.bf16.msra.mxu0 0
        %1525 = vmatprep.subr.bf16.mxu0 0
        %1526 = vmatpush1.bf16.msra.mxu0 0
        %1527 = vmatprep.subr.bf16.mxu0 0
        %1528 = vmatpush1.bf16.msra.mxu0 0
        %1529 = vmatprep.mubr.bf16.mxu0 0
        %1530 = vmatmul.mubr.bf16.gmra.mrb[0].mxu0 %v1441
        %v1531 = vpop.f32.mrb[0].mxu0
        %v1532 = vadd.f32 0.0, %v1531
        %v1533 = vpop.f32.mrb[0].mxu0
        %v1534 = vpop.f32.mrb[0].mxu0
        %v1535 = vadd.f32 0.0, %v1534
        %v1536 = vpop.f32.mrb[0].mxu0
        %1537 = vmatprep.mubr.bf16.mxu0 0
        %1538 = vmatmul.mubr.bf16.gmra.mrb[0].mxu0 %v1444
        %v1539 = vpop.f32.mrb[0].mxu0
        %v1540 = vadd.f32 0.0, %v1539
        %v1541 = vpop.f32.mrb[0].mxu0
        %v1542 = vpop.f32.mrb[0].mxu0
        %v1543 = vadd.f32 0.0, %v1542
        %v1544 = vpop.f32.mrb[0].mxu0
        %1545 = vmatprep.mubr.bf16.mxu0 0
        %1546 = vmatmul.mubr.bf16.gmra.mrb[0].mxu0 %v1447
        %v1547 = vpop.f32.mrb[0].mxu0
        %v1548 = vadd.f32 0.0, %v1547
        %v1549 = vpop.f32.mrb[0].mxu0
        %v1550 = vpop.f32.mrb[0].mxu0
        %v1551 = vadd.f32 0.0, %v1550
        %v1552 = vpop.f32.mrb[0].mxu0
        %1553 = vmatprep.mubr.bf16.mxu0 0
        %1554 = vmatmul.mubr.bf16.gmra.mrb[0].mxu0 %v1450
        %v1555 = vpop.f32.mrb[0].mxu0
        %v1556 = vadd.f32 0.0, %v1555
        %v1557 = vpop.f32.mrb[0].mxu0
        %v1558 = vpop.f32.mrb[0].mxu0
        %v1559 = vadd.f32 0.0, %v1558
        %v1560 = vpop.f32.mrb[0].mxu0
        %1561 = vmatprep.mubr.bf16.mxu0 0
        %1562 = vmatmul.mubr.bf16.gmra.mrb[0].mxu0 %v1453
        %v1563 = vpop.f32.mrb[0].mxu0
        %v1564 = vadd.f32 0.0, %v1563
        %v1565 = vpop.f32.mrb[0].mxu0
        %v1566 = vpop.f32.mrb[0].mxu0
        %v1567 = vadd.f32 0.0, %v1566
        %v1568 = vpop.f32.mrb[0].mxu0
        %1569 = vmatprep.mubr.bf16.mxu0 0
        %1570 = vmatmul.mubr.bf16.gmra.mrb[0].mxu0 %v1456
        %v1571 = vpop.f32.mrb[0].mxu0
        %v1572 = vadd.f32 0.0, %v1571
        %v1573 = vpop.f32.mrb[0].mxu0
        %v1574 = vpop.f32.mrb[0].mxu0
        %v1575 = vadd.f32 0.0, %v1574
        %v1576 = vpop.f32.mrb[0].mxu0
        %1577 = vmatprep.mubr.bf16.mxu0 0
        %1578 = vmatmul.mubr.bf16.gmra.mrb[0].mxu0 %v1459
        %v1579 = vpop.f32.mrb[0].mxu0
        %v1580 = vadd.f32 0.0, %v1579
        %v1581 = vpop.f32.mrb[0].mxu0
        %v1582 = vpop.f32.mrb[0].mxu0
        %v1583 = vadd.f32 0.0, %v1582
        %v1584 = vpop.f32.mrb[0].mxu0
        %1585 = vmatprep.mubr.bf16.mxu0 0
        %1586 = vmatmul.mubr.bf16.gmra.mrb[0].mxu0 %v1462
        %v1587 = vpop.f32.mrb[0].mxu0
        %v1588 = vadd.f32 0.0, %v1587
        %v1589 = vpop.f32.mrb[0].mxu0
        %v1590 = vpop.f32.mrb[0].mxu0
        %v1591 = vadd.f32 0.0, %v1590
        %v1592 = vpop.f32.mrb[0].mxu0
        %1593 = vmatprep.mubr.bf16.mxu0 0
        %1594 = vmatmul.mubr.bf16.gmra.mrb[0].mxu0 %v1465
        %v1595 = vpop.f32.mrb[0].mxu0
        %v1596 = vadd.f32 0.0, %v1595
        %v1597 = vpop.f32.mrb[0].mxu0
        %v1598 = vpop.f32.mrb[0].mxu0
        %v1599 = vadd.f32 0.0, %v1598
        %v1600 = vpop.f32.mrb[0].mxu0
        %1601 = vmatprep.mubr.bf16.mxu0 0
        %1602 = vmatmul.mubr.bf16.gmra.mrb[0].mxu0 %v1468
        %v1603 = vpop.f32.mrb[0].mxu0
        %v1604 = vadd.f32 0.0, %v1603
        %v1605 = vpop.f32.mrb[0].mxu0
        %v1606 = vpop.f32.mrb[0].mxu0
        %v1607 = vadd.f32 0.0, %v1606
        %v1608 = vpop.f32.mrb[0].mxu0
        %1609 = vmatprep.mubr.bf16.mxu0 0
        %1610 = vmatmul.mubr.bf16.gmra.mrb[0].mxu0 %v1471
        %v1611 = vpop.f32.mrb[0].mxu0
        %v1612 = vadd.f32 0.0, %v1611
        %v1613 = vpop.f32.mrb[0].mxu0
        %v1614 = vpop.f32.mrb[0].mxu0
        %v1615 = vadd.f32 0.0, %v1614
        %v1616 = vpop.f32.mrb[0].mxu0
        %1617 = vmatprep.mubr.bf16.mxu0 0
        %1618 = vmatmul.mubr.bf16.gmra.mrb[0].mxu0 %v1474
        %v1619 = vpop.f32.mrb[0].mxu0
        %v1620 = vadd.f32 0.0, %v1619
        %v1621 = vpop.f32.mrb[0].mxu0
        %v1622 = vpop.f32.mrb[0].mxu0
        %v1623 = vadd.f32 0.0, %v1622
        %v1624 = vpop.f32.mrb[0].mxu0
        %1625 = vmatprep.mubr.bf16.mxu0 0
        %1626 = vmatmul.mubr.bf16.gmra.mrb[0].mxu0 %v1477
        %v1627 = vpop.f32.mrb[0].mxu0
        %v1628 = vadd.f32 0.0, %v1627
        %v1629 = vpop.f32.mrb[0].mxu0
        %v1630 = vpop.f32.mrb[0].mxu0
        %v1631 = vadd.f32 0.0, %v1630
        %v1632 = vpop.f32.mrb[0].mxu0
        %1633 = vmatprep.mubr.bf16.mxu0 0
        %1634 = vmatmul.mubr.bf16.gmra.mrb[0].mxu0 %v1480
        %v1635 = vpop.f32.mrb[0].mxu0
        %v1636 = vadd.f32 0.0, %v1635
        %v1637 = vpop.f32.mrb[0].mxu0
        %v1638 = vpop.f32.mrb[0].mxu0
        %v1639 = vadd.f32 0.0, %v1638
        %v1640 = vpop.f32.mrb[0].mxu0
        %1641 = vmatprep.mubr.bf16.mxu0 0
        %1642 = vmatmul.mubr.bf16.gmra.mrb[0].mxu0 %v1483
        %v1643 = vpop.f32.mrb[0].mxu0
        %v1644 = vadd.f32 0.0, %v1643
        %v1645 = vpop.f32.mrb[0].mxu0
        %v1646 = vpop.f32.mrb[0].mxu0
        %v1647 = vadd.f32 0.0, %v1646
        %v1648 = vpop.f32.mrb[0].mxu0
        %1649 = vmatprep.mubr.bf16.mxu0 0
        %1650 = vmatmul.mubr.bf16.gmra.mrb[0].mxu0 %v1486
        %v1651 = vpop.f32.mrb[0].mxu0
        %v1652 = vadd.f32 0.0, %v1651
        %v1653 = vpop.f32.mrb[0].mxu0
        %v1654 = vpop.f32.mrb[0].mxu0
        %v1655 = vadd.f32 0.0, %v1654
        %v1656 = vpop.f32.mrb[0].mxu0
        %1657 = vmatprep.mubr.bf16.mxu0 0
        %1658 = vmatmul.mubr.bf16.gmra.mrb[0].mxu0 %v1489
        %v1659 = vpop.f32.mrb[0].mxu0
        %v1660 = vadd.f32 0.0, %v1659
        %v1661 = vpop.f32.mrb[0].mxu0
        %v1662 = vpop.f32.mrb[0].mxu0
        %v1663 = vadd.f32 0.0, %v1662
        %v1664 = vpop.f32.mrb[0].mxu0
        %1665 = vmatprep.mubr.bf16.mxu0 0
        %1666 = vmatmul.mubr.bf16.gmra.mrb[0].mxu0 %v1492
        %v1667 = vpop.f32.mrb[0].mxu0
        %v1668 = vadd.f32 0.0, %v1667
        %v1669 = vpop.f32.mrb[0].mxu0
        %v1670 = vpop.f32.mrb[0].mxu0
        %v1671 = vadd.f32 0.0, %v1670
        %v1672 = vpop.f32.mrb[0].mxu0
        %1673 = vdwg.mxu0
        %v1674 = vadd.f32 %v1360, %v1532
        %v1675 = vadd.f32 %v1361, %v1535
        %v1676 = vadd.f32 %v1362, %v1540
        %v1677 = vadd.f32 %v1363, %v1543
        %v1678 = vadd.f32 %v1364, %v1548
        %v1679 = vadd.f32 %v1365, %v1551
        %v1680 = vadd.f32 %v1366, %v1556
        %v1681 = vadd.f32 %v1367, %v1559
        %v1682 = vadd.f32 %v1368, %v1564
        %v1683 = vadd.f32 %v1369, %v1567
        %v1684 = vadd.f32 %v1370, %v1572
        %v1685 = vadd.f32 %v1371, %v1575
        %v1686 = vadd.f32 %v1372, %v1580
        %v1687 = vadd.f32 %v1373, %v1583
        %v1688 = vadd.f32 %v1374, %v1588
        %v1689 = vadd.f32 %v1375, %v1591
        %v1690 = vadd.f32 %v1376, %v1596
        %v1691 = vadd.f32 %v1377, %v1599
        %v1692 = vadd.f32 %v1378, %v1604
        %v1693 = vadd.f32 %v1379, %v1607
        %v1694 = vadd.f32 %v1380, %v1612
        %v1695 = vadd.f32 %v1381, %v1615
        %v1696 = vadd.f32 %v1382, %v1620
        %v1697 = vadd.f32 %v1383, %v1623
        %v1698 = vadd.f32 %v1384, %v1628
        %v1699 = vadd.f32 %v1385, %v1631
        %v1700 = vadd.f32 %v1386, %v1636
        %v1701 = vadd.f32 %v1387, %v1639
        %v1702 = vadd.f32 %v1388, %v1644
        %v1703 = vadd.f32 %v1389, %v1647
        %v1704 = vadd.f32 %v1390, %v1652
        %v1705 = vadd.f32 %v1391, %v1655
        %v1706 = vadd.f32 %v1392, %v1660
        %v1707 = vadd.f32 %v1393, %v1663
        %v1708 = vadd.f32 %v1394, %v1668
        %v1709 = vadd.f32 %v1395, %v1671
        %v1710 = vld [vmem:[%s331 + $0x8] sm:$0xe]
        %v1711 = vld [vmem:[%s331 + $0xc] sm:$0xf]
        %v1712 = vld [vmem:[%s331 + $0x10] sm:$0xf]
        %v1713 = vld [vmem:[%s331 + $0x14] sm:$0xf]
        %v1714 = vld [vmem:[%s331 + $0x18] sm:$0xf]
        %v1715 = vld [vmem:[%s331 + $0x1c] sm:$0xf]
        %v1716 = vld [vmem:[%s331 + $0x20] sm:$0xf]
        %v1717 = vld [vmem:[%s331 + $0x24] sm:$0xf]
        %v1718 = vld [vmem:[%s331 + $0x28] sm:$0xf]
        %v1719 = vld [vmem:[%s331 + $0x2c] sm:$0xf]
        %v1720 = vld [vmem:[%s331 + $0x30] sm:$0xf]
        %v1721 = vld [vmem:[%s331 + $0x34] sm:$0xf]
        %v1722 = vld [vmem:[%s331 + $0x38] sm:$0xf]
        %v1723 = vld [vmem:[%s331 + $0x3c] sm:$0xf]
        %v1724 = vld [vmem:[%s331 + $0x40] sm:$0xf]
        %v1725 = vld [vmem:[%s331 + $0x44] sm:$0xf]
        %v1726 = vld [vmem:[%s331 + $0x48] sm:$0xf]
        %v1727 = vld [vmem:[%s331 + $0x4c] sm:$0xf]
        %v1728 = vld [vmem:[%s331 + $0x50] sm:$0xf]
        %v1729 = vld [vmem:[%s331 + $0x54] sm:$0xf]
        %v1730 = vld [vmem:[%s331 + $0x58] sm:$0xf]
        %v1731 = vld [vmem:[%s331 + $0x5c] sm:$0xf]
        %v1732 = vld [vmem:[%s331 + $0x60] sm:$0xf]
        %v1733 = vld [vmem:[%s331 + $0x64] sm:$0xf]
        %v1734 = vld [vmem:[%s331 + $0x68] sm:$0xf]
        %v1735 = vld [vmem:[%s331 + $0x6c] sm:$0xf]
        %v1736 = vld [vmem:[%s331 + $0x70] sm:$0xf]
        %v1737 = vld [vmem:[%s331 + $0x74] sm:$0xf]
        %v1738 = vld [vmem:[%s331 + $0x78] sm:$0xf]
        %v1739 = vld [vmem:[%s331 + $0x7c] sm:$0xf]
        %v1740 = vld [vmem:[%s331 + $0x80] sm:$0xf]
        %v1741 = vld [vmem:[%s331 + $0x84] sm:$0xf]
        %v1742 = vld [vmem:[%s331 + $0x88] sm:$0xf]
        %v1743 = vld [vmem:[%s331 + $0x8c] sm:$0xf]
        %v1744 = vld [vmem:[%s331 + $0x90] sm:$0xf]
        %v1745 = vld [vmem:[%s331 + $0x94] sm:$0xf]
        %v1746 = vld [vmem:[%s331 + $0x98] sm:$0x1]
        %s1747 = scalar_lea.vmem %s342, 12
        %v1748 = vld [vmem:[%s1747] sm:$0xf]
        %v1786 = vunpack.c.l.b16 %v1710
        %v1787 = vunpack.c.l.b16 %v1711
        %v1788 = vunpack.c.l.b16 %v1712
        %v1789 = vunpack.c.l.b16 %v1713
        %v1790 = vunpack.c.l.b16 %v1714
        %v1791 = vunpack.c.l.b16 %v1715
        %v1792 = vunpack.c.l.b16 %v1716
        %v1793 = vunpack.c.l.b16 %v1717
        %v1794 = vunpack.c.l.b16 %v1718
        %v1795 = vunpack.c.l.b16 %v1719
        %v1796 = vunpack.c.l.b16 %v1720
        %v1797 = vunpack.c.l.b16 %v1721
        %v1798 = vunpack.c.l.b16 %v1722
        %v1799 = vunpack.c.l.b16 %v1723
        %v1800 = vunpack.c.l.b16 %v1724
        %v1801 = vunpack.c.l.b16 %v1725
        %v1802 = vunpack.c.l.b16 %v1726
        %v1803 = vunpack.c.l.b16 %v1727
        %v1804 = vunpack.c.l.b16 %v1728
        %v1805 = vunpack.c.l.b16 %v1729
        %v1806 = vunpack.c.l.b16 %v1730
        %v1807 = vunpack.c.l.b16 %v1731
        %v1808 = vunpack.c.l.b16 %v1732
        %v1809 = vunpack.c.l.b16 %v1733
        %v1810 = vunpack.c.l.b16 %v1734
        %v1811 = vunpack.c.l.b16 %v1735
        %v1812 = vunpack.c.l.b16 %v1736
        %v1813 = vunpack.c.l.b16 %v1737
        %v1814 = vunpack.c.l.b16 %v1738
        %v1815 = vunpack.c.l.b16 %v1739
        %v1816 = vunpack.c.l.b16 %v1740
        %v1817 = vunpack.c.l.b16 %v1741
        %v1818 = vunpack.c.l.b16 %v1742
        %v1819 = vunpack.c.l.b16 %v1743
        %v1820 = vunpack.c.l.b16 %v1744
        %v1821 = vunpack.c.l.b16 %v1745
        %v1822 = vunpack.c.l.b16 %v1746
        %v1823 = vpack.c.b16 %v1787, %v1786
        %v1824 = vpack.c.b16 %v1789, %v1788
        %v1825 = vpack.c.b16 %v1791, %v1790
        %v1826 = vpack.c.b16 %v1793, %v1792
        %v1827 = vpack.c.b16 %v1795, %v1794
        %v1828 = vpack.c.b16 %v1797, %v1796
        %v1829 = vpack.c.b16 %v1799, %v1798
        %v1830 = vpack.c.b16 %v1801, %v1800
        %v1831 = vpack.c.b16 %v1803, %v1802
        %v1832 = vpack.c.b16 %v1805, %v1804
        %v1833 = vpack.c.b16 %v1807, %v1806
        %v1834 = vpack.c.b16 %v1809, %v1808
        %v1835 = vpack.c.b16 %v1811, %v1810
        %v1836 = vpack.c.b16 %v1813, %v1812
        %v1837 = vpack.c.b16 %v1815, %v1814
        %v1838 = vpack.c.b16 %v1817, %v1816
        %v1839 = vpack.c.b16 %v1819, %v1818
        %v1840 = vpack.c.b16 %v1821, %v1820
        %v1841 = vpack.c.b16 %v1822, %v1822
        %v1842 = vrot.slane %v1823, 1
        %v1843 = vrot.slane %v1824, 1
        %v1844 = vsel %vm1402, %v1842, %v1843
        %v1845 = vrot.slane %v1825, 1
        %v1846 = vsel %vm1402, %v1843, %v1845
        %v1847 = vrot.slane %v1826, 1
        %v1848 = vsel %vm1402, %v1845, %v1847
        %v1849 = vrot.slane %v1827, 1
        %v1850 = vsel %vm1402, %v1847, %v1849
        %v1851 = vrot.slane %v1828, 1
        %v1852 = vsel %vm1402, %v1849, %v1851
        %v1853 = vrot.slane %v1829, 1
        %v1854 = vsel %vm1402, %v1851, %v1853
        %v1855 = vrot.slane %v1830, 1
        %v1856 = vsel %vm1402, %v1853, %v1855
        %v1857 = vrot.slane %v1831, 1
        %v1858 = vsel %vm1402, %v1855, %v1857
        %v1859 = vrot.slane %v1832, 1
        %v1860 = vsel %vm1402, %v1857, %v1859
        %v1861 = vrot.slane %v1833, 1
        %v1862 = vsel %vm1402, %v1859, %v1861
        %v1863 = vrot.slane %v1834, 1
        %v1864 = vsel %vm1402, %v1861, %v1863
        %v1865 = vrot.slane %v1835, 1
        %v1866 = vsel %vm1402, %v1863, %v1865
        %v1867 = vrot.slane %v1836, 1
        %v1868 = vsel %vm1402, %v1865, %v1867
        %v1869 = vrot.slane %v1837, 1
        %v1870 = vsel %vm1402, %v1867, %v1869
        %v1871 = vrot.slane %v1838, 1
        %v1872 = vsel %vm1402, %v1869, %v1871
        %v1873 = vrot.slane %v1839, 1
        %v1874 = vsel %vm1402, %v1871, %v1873
        %v1875 = vrot.slane %v1840, 1
        %v1876 = vsel %vm1402, %v1873, %v1875
        %v1877 = vrot.slane %v1841, 1
        %v1878 = vsel %vm1402, %v1875, %v1877
        %v1880 = vsel %vm573, %v1844, 0
        %v1883 = vsel %vm573, %v1846, 0
        %v1886 = vsel %vm573, %v1848, 0
        %v1889 = vsel %vm573, %v1850, 0
        %v1892 = vsel %vm573, %v1852, 0
        %v1895 = vsel %vm573, %v1854, 0
        %v1898 = vsel %vm573, %v1856, 0
        %v1901 = vsel %vm573, %v1858, 0
        %v1904 = vsel %vm573, %v1860, 0
        %v1907 = vsel %vm573, %v1862, 0
        %v1910 = vsel %vm573, %v1864, 0
        %v1913 = vsel %vm573, %v1866, 0
        %v1916 = vsel %vm573, %v1868, 0
        %v1919 = vsel %vm573, %v1870, 0
        %v1922 = vsel %vm573, %v1872, 0
        %v1925 = vsel %vm573, %v1874, 0
        %v1928 = vsel %vm573, %v1876, 0
        %v1931 = vsel %vm573, %v1878, 0
        %v1934 = vsel %vm628, %v1748, 0
        %1936 = vmatprep.subr.bf16.mxu0 0
        %1937 = vmatpush1.bf16.msra.mxu0 %v1934
        %1938 = vmatprep.subr.bf16.mxu0 0
        %1939 = vmatpush1.bf16.msra.mxu0 0
        %1940 = vmatprep.subr.bf16.mxu0 0
        %1941 = vmatpush1.bf16.msra.mxu0 0
        %1942 = vmatprep.subr.bf16.mxu0 0
        %1943 = vmatpush1.bf16.msra.mxu0 0
        %1944 = vmatprep.subr.bf16.mxu0 0
        %1945 = vmatpush1.bf16.msra.mxu0 0
        %1946 = vmatprep.subr.bf16.mxu0 0
        %1947 = vmatpush1.bf16.msra.mxu0 0
        %1948 = vmatprep.subr.bf16.mxu0 0
        %1949 = vmatpush1.bf16.msra.mxu0 0
        %1950 = vmatprep.subr.bf16.mxu0 0
        %1951 = vmatpush1.bf16.msra.mxu0 0
        %1952 = vmatprep.subr.bf16.mxu0 0
        %1953 = vmatpush1.bf16.msra.mxu0 0
        %1954 = vmatprep.subr.bf16.mxu0 0
        %1955 = vmatpush1.bf16.msra.mxu0 0
        %1956 = vmatprep.subr.bf16.mxu0 0
        %1957 = vmatpush1.bf16.msra.mxu0 0
        %1958 = vmatprep.subr.bf16.mxu0 0
        %1959 = vmatpush1.bf16.msra.mxu0 0
        %1960 = vmatprep.subr.bf16.mxu0 0
        %1961 = vmatpush1.bf16.msra.mxu0 0
        %1962 = vmatprep.subr.bf16.mxu0 0
        %1963 = vmatpush1.bf16.msra.mxu0 0
        %1964 = vmatprep.subr.bf16.mxu0 0
        %1965 = vmatpush1.bf16.msra.mxu0 0
        %1966 = vmatprep.subr.bf16.mxu0 0
        %1967 = vmatpush1.bf16.msra.mxu0 0
        %1968 = vmatprep.mubr.bf16.mxu0 0
        %1969 = vmatmul.mubr.bf16.gmra.mrb[0].mxu0 %v1880
        %v1970 = vpop.f32.mrb[0].mxu0
        %v1971 = vadd.f32 0.0, %v1970
        %v1972 = vpop.f32.mrb[0].mxu0
        %v1973 = vpop.f32.mrb[0].mxu0
        %v1974 = vadd.f32 0.0, %v1973
        %v1975 = vpop.f32.mrb[0].mxu0
        %1976 = vmatprep.mubr.bf16.mxu0 0
        %1977 = vmatmul.mubr.bf16.gmra.mrb[0].mxu0 %v1883
        %v1978 = vpop.f32.mrb[0].mxu0
        %v1979 = vadd.f32 0.0, %v1978
        %v1980 = vpop.f32.mrb[0].mxu0
        %v1981 = vpop.f32.mrb[0].mxu0
        %v1982 = vadd.f32 0.0, %v1981
        %v1983 = vpop.f32.mrb[0].mxu0
        %1984 = vmatprep.mubr.bf16.mxu0 0
        %1985 = vmatmul.mubr.bf16.gmra.mrb[0].mxu0 %v1886
        %v1986 = vpop.f32.mrb[0].mxu0
        %v1987 = vadd.f32 0.0, %v1986
        %v1988 = vpop.f32.mrb[0].mxu0
        %v1989 = vpop.f32.mrb[0].mxu0
        %v1990 = vadd.f32 0.0, %v1989
        %v1991 = vpop.f32.mrb[0].mxu0
        %1992 = vmatprep.mubr.bf16.mxu0 0
        %1993 = vmatmul.mubr.bf16.gmra.mrb[0].mxu0 %v1889
        %v1994 = vpop.f32.mrb[0].mxu0
        %v1995 = vadd.f32 0.0, %v1994
        %v1996 = vpop.f32.mrb[0].mxu0
        %v1997 = vpop.f32.mrb[0].mxu0
        %v1998 = vadd.f32 0.0, %v1997
        %v1999 = vpop.f32.mrb[0].mxu0
        %2000 = vmatprep.mubr.bf16.mxu0 0
        %2001 = vmatmul.mubr.bf16.gmra.mrb[0].mxu0 %v1892
        %v2002 = vpop.f32.mrb[0].mxu0
        %v2003 = vadd.f32 0.0, %v2002
        %v2004 = vpop.f32.mrb[0].mxu0
        %v2005 = vpop.f32.mrb[0].mxu0
        %v2006 = vadd.f32 0.0, %v2005
        %v2007 = vpop.f32.mrb[0].mxu0
        %2008 = vmatprep.mubr.bf16.mxu0 0
        %2009 = vmatmul.mubr.bf16.gmra.mrb[0].mxu0 %v1895
        %v2010 = vpop.f32.mrb[0].mxu0
        %v2011 = vadd.f32 0.0, %v2010
        %v2012 = vpop.f32.mrb[0].mxu0
        %v2013 = vpop.f32.mrb[0].mxu0
        %v2014 = vadd.f32 0.0, %v2013
        %v2015 = vpop.f32.mrb[0].mxu0
        %2016 = vmatprep.mubr.bf16.mxu0 0
        %2017 = vmatmul.mubr.bf16.gmra.mrb[0].mxu0 %v1898
        %v2018 = vpop.f32.mrb[0].mxu0
        %v2019 = vadd.f32 0.0, %v2018
        %v2020 = vpop.f32.mrb[0].mxu0
        %v2021 = vpop.f32.mrb[0].mxu0
        %v2022 = vadd.f32 0.0, %v2021
        %v2023 = vpop.f32.mrb[0].mxu0
        %2024 = vmatprep.mubr.bf16.mxu0 0
        %2025 = vmatmul.mubr.bf16.gmra.mrb[0].mxu0 %v1901
        %v2026 = vpop.f32.mrb[0].mxu0
        %v2027 = vadd.f32 0.0, %v2026
        %v2028 = vpop.f32.mrb[0].mxu0
        %v2029 = vpop.f32.mrb[0].mxu0
        %v2030 = vadd.f32 0.0, %v2029
        %v2031 = vpop.f32.mrb[0].mxu0
        %2032 = vmatprep.mubr.bf16.mxu0 0
        %2033 = vmatmul.mubr.bf16.gmra.mrb[0].mxu0 %v1904
        %v2034 = vpop.f32.mrb[0].mxu0
        %v2035 = vadd.f32 0.0, %v2034
        %v2036 = vpop.f32.mrb[0].mxu0
        %v2037 = vpop.f32.mrb[0].mxu0
        %v2038 = vadd.f32 0.0, %v2037
        %v2039 = vpop.f32.mrb[0].mxu0
        %2040 = vmatprep.mubr.bf16.mxu0 0
        %2041 = vmatmul.mubr.bf16.gmra.mrb[0].mxu0 %v1907
        %v2042 = vpop.f32.mrb[0].mxu0
        %v2043 = vadd.f32 0.0, %v2042
        %v2044 = vpop.f32.mrb[0].mxu0
        %v2045 = vpop.f32.mrb[0].mxu0
        %v2046 = vadd.f32 0.0, %v2045
        %v2047 = vpop.f32.mrb[0].mxu0
        %2048 = vmatprep.mubr.bf16.mxu0 0
        %2049 = vmatmul.mubr.bf16.gmra.mrb[0].mxu0 %v1910
        %v2050 = vpop.f32.mrb[0].mxu0
        %v2051 = vadd.f32 0.0, %v2050
        %v2052 = vpop.f32.mrb[0].mxu0
        %v2053 = vpop.f32.mrb[0].mxu0
        %v2054 = vadd.f32 0.0, %v2053
        %v2055 = vpop.f32.mrb[0].mxu0
        %2056 = vmatprep.mubr.bf16.mxu0 0
        %2057 = vmatmul.mubr.bf16.gmra.mrb[0].mxu0 %v1913
        %v2058 = vpop.f32.mrb[0].mxu0
        %v2059 = vadd.f32 0.0, %v2058
        %v2060 = vpop.f32.mrb[0].mxu0
        %v2061 = vpop.f32.mrb[0].mxu0
        %v2062 = vadd.f32 0.0, %v2061
        %v2063 = vpop.f32.mrb[0].mxu0
        %2064 = vmatprep.mubr.bf16.mxu0 0
        %2065 = vmatmul.mubr.bf16.gmra.mrb[0].mxu0 %v1916
        %v2066 = vpop.f32.mrb[0].mxu0
        %v2067 = vadd.f32 0.0, %v2066
        %v2068 = vpop.f32.mrb[0].mxu0
        %v2069 = vpop.f32.mrb[0].mxu0
        %v2070 = vadd.f32 0.0, %v2069
        %v2071 = vpop.f32.mrb[0].mxu0
        %2072 = vmatprep.mubr.bf16.mxu0 0
        %2073 = vmatmul.mubr.bf16.gmra.mrb[0].mxu0 %v1919
        %v2074 = vpop.f32.mrb[0].mxu0
        %v2075 = vadd.f32 0.0, %v2074
        %v2076 = vpop.f32.mrb[0].mxu0
        %v2077 = vpop.f32.mrb[0].mxu0
        %v2078 = vadd.f32 0.0, %v2077
        %v2079 = vpop.f32.mrb[0].mxu0
        %2080 = vmatprep.mubr.bf16.mxu0 0
        %2081 = vmatmul.mubr.bf16.gmra.mrb[0].mxu0 %v1922
        %v2082 = vpop.f32.mrb[0].mxu0
        %v2083 = vadd.f32 0.0, %v2082
        %v2084 = vpop.f32.mrb[0].mxu0
        %v2085 = vpop.f32.mrb[0].mxu0
        %v2086 = vadd.f32 0.0, %v2085
        %v2087 = vpop.f32.mrb[0].mxu0
        %2088 = vmatprep.mubr.bf16.mxu0 0
        %2089 = vmatmul.mubr.bf16.gmra.mrb[0].mxu0 %v1925
        %v2090 = vpop.f32.mrb[0].mxu0
        %v2091 = vadd.f32 0.0, %v2090
        %v2092 = vpop.f32.mrb[0].mxu0
        %v2093 = vpop.f32.mrb[0].mxu0
        %v2094 = vadd.f32 0.0, %v2093
        %v2095 = vpop.f32.mrb[0].mxu0
        %2096 = vmatprep.mubr.bf16.mxu0 0
        %2097 = vmatmul.mubr.bf16.gmra.mrb[0].mxu0 %v1928
        %v2098 = vpop.f32.mrb[0].mxu0
        %v2099 = vadd.f32 0.0, %v2098
        %v2100 = vpop.f32.mrb[0].mxu0
        %v2101 = vpop.f32.mrb[0].mxu0
        %v2102 = vadd.f32 0.0, %v2101
        %v2103 = vpop.f32.mrb[0].mxu0
        %2104 = vmatprep.mubr.bf16.mxu0 0
        %2105 = vmatmul.mubr.bf16.gmra.mrb[0].mxu0 %v1931
        %v2106 = vpop.f32.mrb[0].mxu0
        %v2107 = vadd.f32 0.0, %v2106
        %v2108 = vpop.f32.mrb[0].mxu0
        %v2109 = vpop.f32.mrb[0].mxu0
        %v2110 = vadd.f32 0.0, %v2109
        %v2111 = vpop.f32.mrb[0].mxu0
        %2112 = vdwg.mxu0
        %v2113 = vadd.f32 %v1674, %v1971
        %v2114 = vadd.f32 %v1675, %v1974
        %v2115 = vadd.f32 %v1676, %v1979
        %v2116 = vadd.f32 %v1677, %v1982
        %v2117 = vadd.f32 %v1678, %v1987
        %v2118 = vadd.f32 %v1679, %v1990
        %v2119 = vadd.f32 %v1680, %v1995
        %v2120 = vadd.f32 %v1681, %v1998
        %v2121 = vadd.f32 %v1682, %v2003
        %v2122 = vadd.f32 %v1683, %v2006
        %v2123 = vadd.f32 %v1684, %v2011
        %v2124 = vadd.f32 %v1685, %v2014
        %v2125 = vadd.f32 %v1686, %v2019
        %v2126 = vadd.f32 %v1687, %v2022
        %v2127 = vadd.f32 %v1688, %v2027
        %v2128 = vadd.f32 %v1689, %v2030
        %v2129 = vadd.f32 %v1690, %v2035
        %v2130 = vadd.f32 %v1691, %v2038
        %v2131 = vadd.f32 %v1692, %v2043
        %v2132 = vadd.f32 %v1693, %v2046
        %v2133 = vadd.f32 %v1694, %v2051
        %v2134 = vadd.f32 %v1695, %v2054
        %v2135 = vadd.f32 %v1696, %v2059
        %v2136 = vadd.f32 %v1697, %v2062
        %v2137 = vadd.f32 %v1698, %v2067
        %v2138 = vadd.f32 %v1699, %v2070
        %v2139 = vadd.f32 %v1700, %v2075
        %v2140 = vadd.f32 %v1701, %v2078
        %v2141 = vadd.f32 %v1702, %v2083
        %v2142 = vadd.f32 %v1703, %v2086
        %v2143 = vadd.f32 %v1704, %v2091
        %v2144 = vadd.f32 %v1705, %v2094
        %v2145 = vadd.f32 %v1706, %v2099
        %v2146 = vadd.f32 %v1707, %v2102
        %v2147 = vadd.f32 %v1708, %v2107
        %v2148 = vadd.f32 %v1709, %v2110
        %v2149 = vld [vmem:[%s331 + $0x98] sm:$0x3]
        %s2150 = scalar_lea.vmem %s342, 16
        %v2151 = vld [vmem:[%s2150] sm:$0xf]
        %v2153 = vunpack.c.l.b16 %v2149
        %v2154 = vpack.c.b16 %v2153, %v2153
        %vm2155 = vsmask.f32 6400
        %v2157 = vshrl.u32 %v1823, 16
        %v2159 = vrot.slane %v2157, 1
        %v2160 = vshll.u32 %v1823, 16
        %v2162 = vrot.slane %v2160, 2
        %v2163 = vor.u32 %v2159, %v2162
        %v2165 = vshrl.u32 %v1824, 16
        %v2167 = vrot.slane %v2165, 1
        %v2168 = vshll.u32 %v1824, 16
        %v2170 = vrot.slane %v2168, 2
        %v2171 = vor.u32 %v2167, %v2170
        %v2172 = vsel %vm2155, %v2163, %v2171
        %v2174 = vshrl.u32 %v1825, 16
        %v2176 = vrot.slane %v2174, 1
        %v2177 = vshll.u32 %v1825, 16
        %v2179 = vrot.slane %v2177, 2
        %v2180 = vor.u32 %v2176, %v2179
        %v2181 = vsel %vm2155, %v2171, %v2180
        %v2183 = vshrl.u32 %v1826, 16
        %v2185 = vrot.slane %v2183, 1
        %v2186 = vshll.u32 %v1826, 16
        %v2188 = vrot.slane %v2186, 2
        %v2189 = vor.u32 %v2185, %v2188
        %v2190 = vsel %vm2155, %v2180, %v2189
        %v2192 = vshrl.u32 %v1827, 16
        %v2194 = vrot.slane %v2192, 1
        %v2195 = vshll.u32 %v1827, 16
        %v2197 = vrot.slane %v2195, 2
        %v2198 = vor.u32 %v2194, %v2197
        %v2199 = vsel %vm2155, %v2189, %v2198
        %v2201 = vshrl.u32 %v1828, 16
        %v2203 = vrot.slane %v2201, 1
        %v2204 = vshll.u32 %v1828, 16
        %v2206 = vrot.slane %v2204, 2
        %v2207 = vor.u32 %v2203, %v2206
        %v2208 = vsel %vm2155, %v2198, %v2207
        %v2210 = vshrl.u32 %v1829, 16
        %v2212 = vrot.slane %v2210, 1
        %v2213 = vshll.u32 %v1829, 16
        %v2215 = vrot.slane %v2213, 2
        %v2216 = vor.u32 %v2212, %v2215
        %v2217 = vsel %vm2155, %v2207, %v2216
        %v2219 = vshrl.u32 %v1830, 16
        %v2221 = vrot.slane %v2219, 1
        %v2222 = vshll.u32 %v1830, 16
        %v2224 = vrot.slane %v2222, 2
        %v2225 = vor.u32 %v2221, %v2224
        %v2226 = vsel %vm2155, %v2216, %v2225
        %v2228 = vshrl.u32 %v1831, 16
        %v2230 = vrot.slane %v2228, 1
        %v2231 = vshll.u32 %v1831, 16
        %v2233 = vrot.slane %v2231, 2
        %v2234 = vor.u32 %v2230, %v2233
        %v2235 = vsel %vm2155, %v2225, %v2234
        %v2237 = vshrl.u32 %v1832, 16
        %v2239 = vrot.slane %v2237, 1
        %v2240 = vshll.u32 %v1832, 16
        %v2242 = vrot.slane %v2240, 2
        %v2243 = vor.u32 %v2239, %v2242
        %v2244 = vsel %vm2155, %v2234, %v2243
        %v2246 = vshrl.u32 %v1833, 16
        %v2248 = vrot.slane %v2246, 1
        %v2249 = vshll.u32 %v1833, 16
        %v2251 = vrot.slane %v2249, 2
        %v2252 = vor.u32 %v2248, %v2251
        %v2253 = vsel %vm2155, %v2243, %v2252
        %v2255 = vshrl.u32 %v1834, 16
        %v2257 = vrot.slane %v2255, 1
        %v2258 = vshll.u32 %v1834, 16
        %v2260 = vrot.slane %v2258, 2
        %v2261 = vor.u32 %v2257, %v2260
        %v2262 = vsel %vm2155, %v2252, %v2261
        %v2264 = vshrl.u32 %v1835, 16
        %v2266 = vrot.slane %v2264, 1
        %v2267 = vshll.u32 %v1835, 16
        %v2269 = vrot.slane %v2267, 2
        %v2270 = vor.u32 %v2266, %v2269
        %v2271 = vsel %vm2155, %v2261, %v2270
        %v2273 = vshrl.u32 %v1836, 16
        %v2275 = vrot.slane %v2273, 1
        %v2276 = vshll.u32 %v1836, 16
        %v2278 = vrot.slane %v2276, 2
        %v2279 = vor.u32 %v2275, %v2278
        %v2280 = vsel %vm2155, %v2270, %v2279
        %v2282 = vshrl.u32 %v1837, 16
        %v2284 = vrot.slane %v2282, 1
        %v2285 = vshll.u32 %v1837, 16
        %v2287 = vrot.slane %v2285, 2
        %v2288 = vor.u32 %v2284, %v2287
        %v2289 = vsel %vm2155, %v2279, %v2288
        %v2291 = vshrl.u32 %v1838, 16
        %v2293 = vrot.slane %v2291, 1
        %v2294 = vshll.u32 %v1838, 16
        %v2296 = vrot.slane %v2294, 2
        %v2297 = vor.u32 %v2293, %v2296
        %v2298 = vsel %vm2155, %v2288, %v2297
        %v2300 = vshrl.u32 %v1839, 16
        %v2302 = vrot.slane %v2300, 1
        %v2303 = vshll.u32 %v1839, 16
        %v2305 = vrot.slane %v2303, 2
        %v2306 = vor.u32 %v2302, %v2305
        %v2307 = vsel %vm2155, %v2297, %v2306
        %v2309 = vshrl.u32 %v1840, 16
        %v2311 = vrot.slane %v2309, 1
        %v2312 = vshll.u32 %v1840, 16
        %v2314 = vrot.slane %v2312, 2
        %v2315 = vor.u32 %v2311, %v2314
        %v2316 = vsel %vm2155, %v2306, %v2315
        %v2318 = vshrl.u32 %v2154, 16
        %v2320 = vrot.slane %v2318, 1
        %v2321 = vshll.u32 %v2154, 16
        %v2323 = vrot.slane %v2321, 2
        %v2324 = vor.u32 %v2320, %v2323
        %v2325 = vsel %vm2155, %v2315, %v2324
        %v2327 = vsel %vm573, %v2172, 0
        %v2330 = vsel %vm573, %v2181, 0
        %v2333 = vsel %vm573, %v2190, 0
        %v2336 = vsel %vm573, %v2199, 0
        %v2339 = vsel %vm573, %v2208, 0
        %v2342 = vsel %vm573, %v2217, 0
        %v2345 = vsel %vm573, %v2226, 0
        %v2348 = vsel %vm573, %v2235, 0
        %v2351 = vsel %vm573, %v2244, 0
        %v2354 = vsel %vm573, %v2253, 0
        %v2357 = vsel %vm573, %v2262, 0
        %v2360 = vsel %vm573, %v2271, 0
        %v2363 = vsel %vm573, %v2280, 0
        %v2366 = vsel %vm573, %v2289, 0
        %v2369 = vsel %vm573, %v2298, 0
        %v2372 = vsel %vm573, %v2307, 0
        %v2375 = vsel %vm573, %v2316, 0
        %v2378 = vsel %vm573, %v2325, 0
        %v2381 = vsel %vm628, %v2151, 0
        %2383 = vmatprep.subr.bf16.mxu0 0
        %2384 = vmatpush1.bf16.msra.mxu0 %v2381
        %2385 = vmatprep.subr.bf16.mxu0 0
        %2386 = vmatpush1.bf16.msra.mxu0 0
        %2387 = vmatprep.subr.bf16.mxu0 0
        %2388 = vmatpush1.bf16.msra.mxu0 0
        %2389 = vmatprep.subr.bf16.mxu0 0
        %2390 = vmatpush1.bf16.msra.mxu0 0
        %2391 = vmatprep.subr.bf16.mxu0 0
        %2392 = vmatpush1.bf16.msra.mxu0 0
        %2393 = vmatprep.subr.bf16.mxu0 0
        %2394 = vmatpush1.bf16.msra.mxu0 0
        %2395 = vmatprep.subr.bf16.mxu0 0
        %2396 = vmatpush1.bf16.msra.mxu0 0
        %2397 = vmatprep.subr.bf16.mxu0 0
        %2398 = vmatpush1.bf16.msra.mxu0 0
        %2399 = vmatprep.subr.bf16.mxu0 0
        %2400 = vmatpush1.bf16.msra.mxu0 0
        %2401 = vmatprep.subr.bf16.mxu0 0
        %2402 = vmatpush1.bf16.msra.mxu0 0
        %2403 = vmatprep.subr.bf16.mxu0 0
        %2404 = vmatpush1.bf16.msra.mxu0 0
        %2405 = vmatprep.subr.bf16.mxu0 0
        %2406 = vmatpush1.bf16.msra.mxu0 0
        %2407 = vmatprep.subr.bf16.mxu0 0
        %2408 = vmatpush1.bf16.msra.mxu0 0
        %2409 = vmatprep.subr.bf16.mxu0 0
        %2410 = vmatpush1.bf16.msra.mxu0 0
        %2411 = vmatprep.subr.bf16.mxu0 0
        %2412 = vmatpush1.bf16.msra.mxu0 0
        %2413 = vmatprep.subr.bf16.mxu0 0
        %2414 = vmatpush1.bf16.msra.mxu0 0
        %2415 = vmatprep.mubr.bf16.mxu0 0
        %2416 = vmatmul.mubr.bf16.gmra.mrb[0].mxu0 %v2327
        %v2417 = vpop.f32.mrb[0].mxu0
        %v2418 = vadd.f32 0.0, %v2417
        %v2419 = vpop.f32.mrb[0].mxu0
        %v2420 = vpop.f32.mrb[0].mxu0
        %v2421 = vadd.f32 0.0, %v2420
        %v2422 = vpop.f32.mrb[0].mxu0
        %2423 = vmatprep.mubr.bf16.mxu0 0
        %2424 = vmatmul.mubr.bf16.gmra.mrb[0].mxu0 %v2330
        %v2425 = vpop.f32.mrb[0].mxu0
        %v2426 = vadd.f32 0.0, %v2425
        %v2427 = vpop.f32.mrb[0].mxu0
        %v2428 = vpop.f32.mrb[0].mxu0
        %v2429 = vadd.f32 0.0, %v2428
        %v2430 = vpop.f32.mrb[0].mxu0
        %2431 = vmatprep.mubr.bf16.mxu0 0
        %2432 = vmatmul.mubr.bf16.gmra.mrb[0].mxu0 %v2333
        %v2433 = vpop.f32.mrb[0].mxu0
        %v2434 = vadd.f32 0.0, %v2433
        %v2435 = vpop.f32.mrb[0].mxu0
        %v2436 = vpop.f32.mrb[0].mxu0
        %v2437 = vadd.f32 0.0, %v2436
        %v2438 = vpop.f32.mrb[0].mxu0
        %2439 = vmatprep.mubr.bf16.mxu0 0
        %2440 = vmatmul.mubr.bf16.gmra.mrb[0].mxu0 %v2336
        %v2441 = vpop.f32.mrb[0].mxu0
        %v2442 = vadd.f32 0.0, %v2441
        %v2443 = vpop.f32.mrb[0].mxu0
        %v2444 = vpop.f32.mrb[0].mxu0
        %v2445 = vadd.f32 0.0, %v2444
        %v2446 = vpop.f32.mrb[0].mxu0
        %2447 = vmatprep.mubr.bf16.mxu0 0
        %2448 = vmatmul.mubr.bf16.gmra.mrb[0].mxu0 %v2339
        %v2449 = vpop.f32.mrb[0].mxu0
        %v2450 = vadd.f32 0.0, %v2449
        %v2451 = vpop.f32.mrb[0].mxu0
        %v2452 = vpop.f32.mrb[0].mxu0
        %v2453 = vadd.f32 0.0, %v2452
        %v2454 = vpop.f32.mrb[0].mxu0
        %2455 = vmatprep.mubr.bf16.mxu0 0
        %2456 = vmatmul.mubr.bf16.gmra.mrb[0].mxu0 %v2342
        %v2457 = vpop.f32.mrb[0].mxu0
        %v2458 = vadd.f32 0.0, %v2457
        %v2459 = vpop.f32.mrb[0].mxu0
        %v2460 = vpop.f32.mrb[0].mxu0
        %v2461 = vadd.f32 0.0, %v2460
        %v2462 = vpop.f32.mrb[0].mxu0
        %2463 = vmatprep.mubr.bf16.mxu0 0
        %2464 = vmatmul.mubr.bf16.gmra.mrb[0].mxu0 %v2345
        %v2465 = vpop.f32.mrb[0].mxu0
        %v2466 = vadd.f32 0.0, %v2465
        %v2467 = vpop.f32.mrb[0].mxu0
        %v2468 = vpop.f32.mrb[0].mxu0
        %v2469 = vadd.f32 0.0, %v2468
        %v2470 = vpop.f32.mrb[0].mxu0
        %2471 = vmatprep.mubr.bf16.mxu0 0
        %2472 = vmatmul.mubr.bf16.gmra.mrb[0].mxu0 %v2348
        %v2473 = vpop.f32.mrb[0].mxu0
        %v2474 = vadd.f32 0.0, %v2473
        %v2475 = vpop.f32.mrb[0].mxu0
        %v2476 = vpop.f32.mrb[0].mxu0
        %v2477 = vadd.f32 0.0, %v2476
        %v2478 = vpop.f32.mrb[0].mxu0
        %2479 = vmatprep.mubr.bf16.mxu0 0
        %2480 = vmatmul.mubr.bf16.gmra.mrb[0].mxu0 %v2351
        %v2481 = vpop.f32.mrb[0].mxu0
        %v2482 = vadd.f32 0.0, %v2481
        %v2483 = vpop.f32.mrb[0].mxu0
        %v2484 = vpop.f32.mrb[0].mxu0
        %v2485 = vadd.f32 0.0, %v2484
        %v2486 = vpop.f32.mrb[0].mxu0
        %2487 = vmatprep.mubr.bf16.mxu0 0
        %2488 = vmatmul.mubr.bf16.gmra.mrb[0].mxu0 %v2354
        %v2489 = vpop.f32.mrb[0].mxu0
        %v2490 = vadd.f32 0.0, %v2489
        %v2491 = vpop.f32.mrb[0].mxu0
        %v2492 = vpop.f32.mrb[0].mxu0
        %v2493 = vadd.f32 0.0, %v2492
        %v2494 = vpop.f32.mrb[0].mxu0
        %2495 = vmatprep.mubr.bf16.mxu0 0
        %2496 = vmatmul.mubr.bf16.gmra.mrb[0].mxu0 %v2357
        %v2497 = vpop.f32.mrb[0].mxu0
        %v2498 = vadd.f32 0.0, %v2497
        %v2499 = vpop.f32.mrb[0].mxu0
        %v2500 = vpop.f32.mrb[0].mxu0
        %v2501 = vadd.f32 0.0, %v2500
        %v2502 = vpop.f32.mrb[0].mxu0
        %2503 = vmatprep.mubr.bf16.mxu0 0
        %2504 = vmatmul.mubr.bf16.gmra.mrb[0].mxu0 %v2360
        %v2505 = vpop.f32.mrb[0].mxu0
        %v2506 = vadd.f32 0.0, %v2505
        %v2507 = vpop.f32.mrb[0].mxu0
        %v2508 = vpop.f32.mrb[0].mxu0
        %v2509 = vadd.f32 0.0, %v2508
        %v2510 = vpop.f32.mrb[0].mxu0
        %2511 = vmatprep.mubr.bf16.mxu0 0
        %2512 = vmatmul.mubr.bf16.gmra.mrb[0].mxu0 %v2363
        %v2513 = vpop.f32.mrb[0].mxu0
        %v2514 = vadd.f32 0.0, %v2513
        %v2515 = vpop.f32.mrb[0].mxu0
        %v2516 = vpop.f32.mrb[0].mxu0
        %v2517 = vadd.f32 0.0, %v2516
        %v2518 = vpop.f32.mrb[0].mxu0
        %2519 = vmatprep.mubr.bf16.mxu0 0
        %2520 = vmatmul.mubr.bf16.gmra.mrb[0].mxu0 %v2366
        %v2521 = vpop.f32.mrb[0].mxu0
        %v2522 = vadd.f32 0.0, %v2521
        %v2523 = vpop.f32.mrb[0].mxu0
        %v2524 = vpop.f32.mrb[0].mxu0
        %v2525 = vadd.f32 0.0, %v2524
        %v2526 = vpop.f32.mrb[0].mxu0
        %2527 = vmatprep.mubr.bf16.mxu0 0
        %2528 = vmatmul.mubr.bf16.gmra.mrb[0].mxu0 %v2369
        %v2529 = vpop.f32.mrb[0].mxu0
        %v2530 = vadd.f32 0.0, %v2529
        %v2531 = vpop.f32.mrb[0].mxu0
        %v2532 = vpop.f32.mrb[0].mxu0
        %v2533 = vadd.f32 0.0, %v2532
        %v2534 = vpop.f32.mrb[0].mxu0
        %2535 = vmatprep.mubr.bf16.mxu0 0
        %2536 = vmatmul.mubr.bf16.gmra.mrb[0].mxu0 %v2372
        %v2537 = vpop.f32.mrb[0].mxu0
        %v2538 = vadd.f32 0.0, %v2537
        %v2539 = vpop.f32.mrb[0].mxu0
        %v2540 = vpop.f32.mrb[0].mxu0
        %v2541 = vadd.f32 0.0, %v2540
        %v2542 = vpop.f32.mrb[0].mxu0
        %2543 = vmatprep.mubr.bf16.mxu0 0
        %2544 = vmatmul.mubr.bf16.gmra.mrb[0].mxu0 %v2375
        %v2545 = vpop.f32.mrb[0].mxu0
        %v2546 = vadd.f32 0.0, %v2545
        %v2547 = vpop.f32.mrb[0].mxu0
        %v2548 = vpop.f32.mrb[0].mxu0
        %v2549 = vadd.f32 0.0, %v2548
        %v2550 = vpop.f32.mrb[0].mxu0
        %2551 = vmatprep.mubr.bf16.mxu0 0
        %2552 = vmatmul.mubr.bf16.gmra.mrb[0].mxu0 %v2378
        %v2553 = vpop.f32.mrb[0].mxu0
        %v2554 = vadd.f32 0.0, %v2553
        %v2555 = vpop.f32.mrb[0].mxu0
        %v2556 = vpop.f32.mrb[0].mxu0
        %v2557 = vadd.f32 0.0, %v2556
        %v2558 = vpop.f32.mrb[0].mxu0
        %2559 = vdwg.mxu0
        %v2560 = vadd.f32 %v2113, %v2418
        %v2561 = vadd.f32 %v2114, %v2421
        %v2562 = vadd.f32 %v2115, %v2426
        %v2563 = vadd.f32 %v2116, %v2429
        %v2564 = vadd.f32 %v2117, %v2434
        %v2565 = vadd.f32 %v2118, %v2437
        %v2566 = vadd.f32 %v2119, %v2442
        %v2567 = vadd.f32 %v2120, %v2445
        %v2568 = vadd.f32 %v2121, %v2450
        %v2569 = vadd.f32 %v2122, %v2453
        %v2570 = vadd.f32 %v2123, %v2458
        %v2571 = vadd.f32 %v2124, %v2461
        %v2572 = vadd.f32 %v2125, %v2466
        %v2573 = vadd.f32 %v2126, %v2469
        %v2574 = vadd.f32 %v2127, %v2474
        %v2575 = vadd.f32 %v2128, %v2477
        %v2576 = vadd.f32 %v2129, %v2482
        %v2577 = vadd.f32 %v2130, %v2485
        %v2578 = vadd.f32 %v2131, %v2490
        %v2579 = vadd.f32 %v2132, %v2493
        %v2580 = vadd.f32 %v2133, %v2498
        %v2581 = vadd.f32 %v2134, %v2501
        %v2582 = vadd.f32 %v2135, %v2506
        %v2583 = vadd.f32 %v2136, %v2509
        %v2584 = vadd.f32 %v2137, %v2514
        %v2585 = vadd.f32 %v2138, %v2517
        %v2586 = vadd.f32 %v2139, %v2522
        %v2587 = vadd.f32 %v2140, %v2525
        %v2588 = vadd.f32 %v2141, %v2530
        %v2589 = vadd.f32 %v2142, %v2533
        %v2590 = vadd.f32 %v2143, %v2538
        %v2591 = vadd.f32 %v2144, %v2541
        %v2592 = vadd.f32 %v2145, %v2546
        %v2593 = vadd.f32 %v2146, %v2549
        %v2594 = vadd.f32 %v2147, %v2554
        %v2595 = vadd.f32 %v2148, %v2557
        %v2596 = vld [vmem:[%s331 + $0x8] sm:$0xc]
        %s2597 = scalar_lea.vmem %s342, 20
        %v2598 = vld [vmem:[%s2597] sm:$0xf]
        %v2600 = vunpack.c.l.b16 %v2596
        %v2601 = vpack.c.b16 %v1787, %v2600
        %vm2602 = vcmask 1045504
        %v2603 = vrot.slane %v2601, 2
        %v2604 = vrot.slane %v1824, 2
        %v2605 = vsel %vm2602, %v2603, %v2604
        %v2606 = vrot.slane %v1825, 2
        %v2607 = vsel %vm2602, %v2604, %v2606
        %v2608 = vrot.slane %v1826, 2
        %v2609 = vsel %vm2602, %v2606, %v2608
        %v2610 = vrot.slane %v1827, 2
        %v2611 = vsel %vm2602, %v2608, %v2610
        %v2612 = vrot.slane %v1828, 2
        %v2613 = vsel %vm2602, %v2610, %v2612
        %v2614 = vrot.slane %v1829, 2
        %v2615 = vsel %vm2602, %v2612, %v2614
        %v2616 = vrot.slane %v1830, 2
        %v2617 = vsel %vm2602, %v2614, %v2616
        %v2618 = vrot.slane %v1831, 2
        %v2619 = vsel %vm2602, %v2616, %v2618
        %v2620 = vrot.slane %v1832, 2
        %v2621 = vsel %vm2602, %v2618, %v2620
        %v2622 = vrot.slane %v1833, 2
        %v2623 = vsel %vm2602, %v2620, %v2622
        %v2624 = vrot.slane %v1834, 2
        %v2625 = vsel %vm2602, %v2622, %v2624
        %v2626 = vrot.slane %v1835, 2
        %v2627 = vsel %vm2602, %v2624, %v2626
        %v2628 = vrot.slane %v1836, 2
        %v2629 = vsel %vm2602, %v2626, %v2628
        %v2630 = vrot.slane %v1837, 2
        %v2631 = vsel %vm2602, %v2628, %v2630
        %v2632 = vrot.slane %v1838, 2
        %v2633 = vsel %vm2602, %v2630, %v2632
        %v2634 = vrot.slane %v1839, 2
        %v2635 = vsel %vm2602, %v2632, %v2634
        %v2636 = vrot.slane %v1840, 2
        %v2637 = vsel %vm2602, %v2634, %v2636
        %v2638 = vrot.slane %v2154, 2
        %v2639 = vsel %vm2602, %v2636, %v2638
        %v2641 = vsel %vm573, %v2605, 0
        %v2644 = vsel %vm573, %v2607, 0
        %v2647 = vsel %vm573, %v2609, 0
        %v2650 = vsel %vm573, %v2611, 0
        %v2653 = vsel %vm573, %v2613, 0
        %v2656 = vsel %vm573, %v2615, 0
        %v2659 = vsel %vm573, %v2617, 0
        %v2662 = vsel %vm573, %v2619, 0
        %v2665 = vsel %vm573, %v2621, 0
        %v2668 = vsel %vm573, %v2623, 0
        %v2671 = vsel %vm573, %v2625, 0
        %v2674 = vsel %vm573, %v2627, 0
        %v2677 = vsel %vm573, %v2629, 0
        %v2680 = vsel %vm573, %v2631, 0
        %v2683 = vsel %vm573, %v2633, 0
        %v2686 = vsel %vm573, %v2635, 0
        %v2689 = vsel %vm573, %v2637, 0
        %v2692 = vsel %vm573, %v2639, 0
        %v2695 = vsel %vm628, %v2598, 0
        %2697 = vmatprep.subr.bf16.mxu0 0
        %2698 = vmatpush1.bf16.msra.mxu0 %v2695
        %2699 = vmatprep.subr.bf16.mxu0 0
        %2700 = vmatpush1.bf16.msra.mxu0 0
        %2701 = vmatprep.subr.bf16.mxu0 0
        %2702 = vmatpush1.bf16.msra.mxu0 0
        %2703 = vmatprep.subr.bf16.mxu0 0
        %2704 = vmatpush1.bf16.msra.mxu0 0
        %2705 = vmatprep.subr.bf16.mxu0 0
        %2706 = vmatpush1.bf16.msra.mxu0 0
        %2707 = vmatprep.subr.bf16.mxu0 0
        %2708 = vmatpush1.bf16.msra.mxu0 0
        %2709 = vmatprep.subr.bf16.mxu0 0
        %2710 = vmatpush1.bf16.msra.mxu0 0
        %2711 = vmatprep.subr.bf16.mxu0 0
        %2712 = vmatpush1.bf16.msra.mxu0 0
        %2713 = vmatprep.subr.bf16.mxu0 0
        %2714 = vmatpush1.bf16.msra.mxu0 0
        %2715 = vmatprep.subr.bf16.mxu0 0
        %2716 = vmatpush1.bf16.msra.mxu0 0
        %2717 = vmatprep.subr.bf16.mxu0 0
        %2718 = vmatpush1.bf16.msra.mxu0 0
        %2719 = vmatprep.subr.bf16.mxu0 0
        %2720 = vmatpush1.bf16.msra.mxu0 0
        %2721 = vmatprep.subr.bf16.mxu0 0
        %2722 = vmatpush1.bf16.msra.mxu0 0
        %2723 = vmatprep.subr.bf16.mxu0 0
        %2724 = vmatpush1.bf16.msra.mxu0 0
        %2725 = vmatprep.subr.bf16.mxu0 0
        %2726 = vmatpush1.bf16.msra.mxu0 0
        %2727 = vmatprep.subr.bf16.mxu0 0
        %2728 = vmatpush1.bf16.msra.mxu0 0
        %2729 = vmatprep.mubr.bf16.mxu0 0
        %2730 = vmatmul.mubr.bf16.gmra.mrb[0].mxu0 %v2641
        %v2731 = vpop.f32.mrb[0].mxu0
        %v2732 = vadd.f32 0.0, %v2731
        %v2733 = vpop.f32.mrb[0].mxu0
        %v2734 = vpop.f32.mrb[0].mxu0
        %v2735 = vadd.f32 0.0, %v2734
        %v2736 = vpop.f32.mrb[0].mxu0
        %2737 = vmatprep.mubr.bf16.mxu0 0
        %2738 = vmatmul.mubr.bf16.gmra.mrb[0].mxu0 %v2644
        %v2739 = vpop.f32.mrb[0].mxu0
        %v2740 = vadd.f32 0.0, %v2739
        %v2741 = vpop.f32.mrb[0].mxu0
        %v2742 = vpop.f32.mrb[0].mxu0
        %v2743 = vadd.f32 0.0, %v2742
        %v2744 = vpop.f32.mrb[0].mxu0
        %2745 = vmatprep.mubr.bf16.mxu0 0
        %2746 = vmatmul.mubr.bf16.gmra.mrb[0].mxu0 %v2647
        %v2747 = vpop.f32.mrb[0].mxu0
        %v2748 = vadd.f32 0.0, %v2747
        %v2749 = vpop.f32.mrb[0].mxu0
        %v2750 = vpop.f32.mrb[0].mxu0
        %v2751 = vadd.f32 0.0, %v2750
        %v2752 = vpop.f32.mrb[0].mxu0
        %2753 = vmatprep.mubr.bf16.mxu0 0
        %2754 = vmatmul.mubr.bf16.gmra.mrb[0].mxu0 %v2650
        %v2755 = vpop.f32.mrb[0].mxu0
        %v2756 = vadd.f32 0.0, %v2755
        %v2757 = vpop.f32.mrb[0].mxu0
        %v2758 = vpop.f32.mrb[0].mxu0
        %v2759 = vadd.f32 0.0, %v2758
        %v2760 = vpop.f32.mrb[0].mxu0
        %2761 = vmatprep.mubr.bf16.mxu0 0
        %2762 = vmatmul.mubr.bf16.gmra.mrb[0].mxu0 %v2653
        %v2763 = vpop.f32.mrb[0].mxu0
        %v2764 = vadd.f32 0.0, %v2763
        %v2765 = vpop.f32.mrb[0].mxu0
        %v2766 = vpop.f32.mrb[0].mxu0
        %v2767 = vadd.f32 0.0, %v2766
        %v2768 = vpop.f32.mrb[0].mxu0
        %2769 = vmatprep.mubr.bf16.mxu0 0
        %2770 = vmatmul.mubr.bf16.gmra.mrb[0].mxu0 %v2656
        %v2771 = vpop.f32.mrb[0].mxu0
        %v2772 = vadd.f32 0.0, %v2771
        %v2773 = vpop.f32.mrb[0].mxu0
        %v2774 = vpop.f32.mrb[0].mxu0
        %v2775 = vadd.f32 0.0, %v2774
        %v2776 = vpop.f32.mrb[0].mxu0
        %2777 = vmatprep.mubr.bf16.mxu0 0
        %2778 = vmatmul.mubr.bf16.gmra.mrb[0].mxu0 %v2659
        %v2779 = vpop.f32.mrb[0].mxu0
        %v2780 = vadd.f32 0.0, %v2779
        %v2781 = vpop.f32.mrb[0].mxu0
        %v2782 = vpop.f32.mrb[0].mxu0
        %v2783 = vadd.f32 0.0, %v2782
        %v2784 = vpop.f32.mrb[0].mxu0
        %2785 = vmatprep.mubr.bf16.mxu0 0
        %2786 = vmatmul.mubr.bf16.gmra.mrb[0].mxu0 %v2662
        %v2787 = vpop.f32.mrb[0].mxu0
        %v2788 = vadd.f32 0.0, %v2787
        %v2789 = vpop.f32.mrb[0].mxu0
        %v2790 = vpop.f32.mrb[0].mxu0
        %v2791 = vadd.f32 0.0, %v2790
        %v2792 = vpop.f32.mrb[0].mxu0
        %2793 = vmatprep.mubr.bf16.mxu0 0
        %2794 = vmatmul.mubr.bf16.gmra.mrb[0].mxu0 %v2665
        %v2795 = vpop.f32.mrb[0].mxu0
        %v2796 = vadd.f32 0.0, %v2795
        %v2797 = vpop.f32.mrb[0].mxu0
        %v2798 = vpop.f32.mrb[0].mxu0
        %v2799 = vadd.f32 0.0, %v2798
        %v2800 = vpop.f32.mrb[0].mxu0
        %2801 = vmatprep.mubr.bf16.mxu0 0
        %2802 = vmatmul.mubr.bf16.gmra.mrb[0].mxu0 %v2668
        %v2803 = vpop.f32.mrb[0].mxu0
        %v2804 = vadd.f32 0.0, %v2803
        %v2805 = vpop.f32.mrb[0].mxu0
        %v2806 = vpop.f32.mrb[0].mxu0
        %v2807 = vadd.f32 0.0, %v2806
        %v2808 = vpop.f32.mrb[0].mxu0
        %2809 = vmatprep.mubr.bf16.mxu0 0
        %2810 = vmatmul.mubr.bf16.gmra.mrb[0].mxu0 %v2671
        %v2811 = vpop.f32.mrb[0].mxu0
        %v2812 = vadd.f32 0.0, %v2811
        %v2813 = vpop.f32.mrb[0].mxu0
        %v2814 = vpop.f32.mrb[0].mxu0
        %v2815 = vadd.f32 0.0, %v2814
        %v2816 = vpop.f32.mrb[0].mxu0
        %2817 = vmatprep.mubr.bf16.mxu0 0
        %2818 = vmatmul.mubr.bf16.gmra.mrb[0].mxu0 %v2674
        %v2819 = vpop.f32.mrb[0].mxu0
        %v2820 = vadd.f32 0.0, %v2819
        %v2821 = vpop.f32.mrb[0].mxu0
        %v2822 = vpop.f32.mrb[0].mxu0
        %v2823 = vadd.f32 0.0, %v2822
        %v2824 = vpop.f32.mrb[0].mxu0
        %2825 = vmatprep.mubr.bf16.mxu0 0
        %2826 = vmatmul.mubr.bf16.gmra.mrb[0].mxu0 %v2677
        %v2827 = vpop.f32.mrb[0].mxu0
        %v2828 = vadd.f32 0.0, %v2827
        %v2829 = vpop.f32.mrb[0].mxu0
        %v2830 = vpop.f32.mrb[0].mxu0
        %v2831 = vadd.f32 0.0, %v2830
        %v2832 = vpop.f32.mrb[0].mxu0
        %2833 = vmatprep.mubr.bf16.mxu0 0
        %2834 = vmatmul.mubr.bf16.gmra.mrb[0].mxu0 %v2680
        %v2835 = vpop.f32.mrb[0].mxu0
        %v2836 = vadd.f32 0.0, %v2835
        %v2837 = vpop.f32.mrb[0].mxu0
        %v2838 = vpop.f32.mrb[0].mxu0
        %v2839 = vadd.f32 0.0, %v2838
        %v2840 = vpop.f32.mrb[0].mxu0
        %2841 = vmatprep.mubr.bf16.mxu0 0
        %2842 = vmatmul.mubr.bf16.gmra.mrb[0].mxu0 %v2683
        %v2843 = vpop.f32.mrb[0].mxu0
        %v2844 = vadd.f32 0.0, %v2843
        %v2845 = vpop.f32.mrb[0].mxu0
        %v2846 = vpop.f32.mrb[0].mxu0
        %v2847 = vadd.f32 0.0, %v2846
        %v2848 = vpop.f32.mrb[0].mxu0
        %2849 = vmatprep.mubr.bf16.mxu0 0
        %2850 = vmatmul.mubr.bf16.gmra.mrb[0].mxu0 %v2686
        %v2851 = vpop.f32.mrb[0].mxu0
        %v2852 = vadd.f32 0.0, %v2851
        %v2853 = vpop.f32.mrb[0].mxu0
        %v2854 = vpop.f32.mrb[0].mxu0
        %v2855 = vadd.f32 0.0, %v2854
        %v2856 = vpop.f32.mrb[0].mxu0
        %2857 = vmatprep.mubr.bf16.mxu0 0
        %2858 = vmatmul.mubr.bf16.gmra.mrb[0].mxu0 %v2689
        %v2859 = vpop.f32.mrb[0].mxu0
        %v2860 = vadd.f32 0.0, %v2859
        %v2861 = vpop.f32.mrb[0].mxu0
        %v2862 = vpop.f32.mrb[0].mxu0
        %v2863 = vadd.f32 0.0, %v2862
        %v2864 = vpop.f32.mrb[0].mxu0
        %2865 = vmatprep.mubr.bf16.mxu0 0
        %2866 = vmatmul.mubr.bf16.gmra.mrb[0].mxu0 %v2692
        %v2867 = vpop.f32.mrb[0].mxu0
        %v2868 = vadd.f32 0.0, %v2867
        %v2869 = vpop.f32.mrb[0].mxu0
        %v2870 = vpop.f32.mrb[0].mxu0
        %v2871 = vadd.f32 0.0, %v2870
        %v2872 = vpop.f32.mrb[0].mxu0
        %2873 = vdwg.mxu0
        %v2874 = vadd.f32 %v2560, %v2732
        %v2875 = vadd.f32 %v2561, %v2735
        %v2876 = vadd.f32 %v2562, %v2740
        %v2877 = vadd.f32 %v2563, %v2743
        %v2878 = vadd.f32 %v2564, %v2748
        %v2879 = vadd.f32 %v2565, %v2751
        %v2880 = vadd.f32 %v2566, %v2756
        %v2881 = vadd.f32 %v2567, %v2759
        %v2882 = vadd.f32 %v2568, %v2764
        %v2883 = vadd.f32 %v2569, %v2767
        %v2884 = vadd.f32 %v2570, %v2772
        %v2885 = vadd.f32 %v2571, %v2775
        %v2886 = vadd.f32 %v2572, %v2780
        %v2887 = vadd.f32 %v2573, %v2783
        %v2888 = vadd.f32 %v2574, %v2788
        %v2889 = vadd.f32 %v2575, %v2791
        %v2890 = vadd.f32 %v2576, %v2796
        %v2891 = vadd.f32 %v2577, %v2799
        %v2892 = vadd.f32 %v2578, %v2804
        %v2893 = vadd.f32 %v2579, %v2807
        %v2894 = vadd.f32 %v2580, %v2812
        %v2895 = vadd.f32 %v2581, %v2815
        %v2896 = vadd.f32 %v2582, %v2820
        %v2897 = vadd.f32 %v2583, %v2823
        %v2898 = vadd.f32 %v2584, %v2828
        %v2899 = vadd.f32 %v2585, %v2831
        %v2900 = vadd.f32 %v2586, %v2836
        %v2901 = vadd.f32 %v2587, %v2839
        %v2902 = vadd.f32 %v2588, %v2844
        %v2903 = vadd.f32 %v2589, %v2847
        %v2904 = vadd.f32 %v2590, %v2852
        %v2905 = vadd.f32 %v2591, %v2855
        %v2906 = vadd.f32 %v2592, %v2860
        %v2907 = vadd.f32 %v2593, %v2863
        %v2908 = vadd.f32 %v2594, %v2868
        %v2909 = vadd.f32 %v2595, %v2871
        %v2910 = vld [vmem:[%s331 + $0x10] sm:$0xc]
        %v2911 = vld [vmem:[%s331 + $0x14] sm:$0xf]
        %v2912 = vld [vmem:[%s331 + $0x18] sm:$0xf]
        %v2913 = vld [vmem:[%s331 + $0x1c] sm:$0xf]
        %v2914 = vld [vmem:[%s331 + $0x20] sm:$0xf]
        %v2915 = vld [vmem:[%s331 + $0x24] sm:$0xf]
        %v2916 = vld [vmem:[%s331 + $0x28] sm:$0xf]
        %v2917 = vld [vmem:[%s331 + $0x2c] sm:$0xf]
        %v2918 = vld [vmem:[%s331 + $0x30] sm:$0xf]
        %v2919 = vld [vmem:[%s331 + $0x34] sm:$0xf]
        %v2920 = vld [vmem:[%s331 + $0x38] sm:$0xf]
        %v2921 = vld [vmem:[%s331 + $0x3c] sm:$0xf]
        %v2922 = vld [vmem:[%s331 + $0x40] sm:$0xf]
        %v2923 = vld [vmem:[%s331 + $0x44] sm:$0xf]
        %v2924 = vld [vmem:[%s331 + $0x48] sm:$0xf]
        %v2925 = vld [vmem:[%s331 + $0x4c] sm:$0xf]
        %v2926 = vld [vmem:[%s331 + $0x50] sm:$0xf]
        %v2927 = vld [vmem:[%s331 + $0x54] sm:$0xf]
        %v2928 = vld [vmem:[%s331 + $0x58] sm:$0xf]
        %v2929 = vld [vmem:[%s331 + $0x5c] sm:$0xf]
        %v2930 = vld [vmem:[%s331 + $0x60] sm:$0xf]
        %v2931 = vld [vmem:[%s331 + $0x64] sm:$0xf]
        %v2932 = vld [vmem:[%s331 + $0x68] sm:$0xf]
        %v2933 = vld [vmem:[%s331 + $0x6c] sm:$0xf]
        %v2934 = vld [vmem:[%s331 + $0x70] sm:$0xf]
        %v2935 = vld [vmem:[%s331 + $0x74] sm:$0xf]
        %v2936 = vld [vmem:[%s331 + $0x78] sm:$0xf]
        %v2937 = vld [vmem:[%s331 + $0x7c] sm:$0xf]
        %v2938 = vld [vmem:[%s331 + $0x80] sm:$0xf]
        %v2939 = vld [vmem:[%s331 + $0x84] sm:$0xf]
        %v2940 = vld [vmem:[%s331 + $0x88] sm:$0xf]
        %v2941 = vld [vmem:[%s331 + $0x8c] sm:$0xf]
        %v2942 = vld [vmem:[%s331 + $0x90] sm:$0xf]
        %v2943 = vld [vmem:[%s331 + $0x94] sm:$0xf]
        %v2944 = vld [vmem:[%s331 + $0x98] sm:$0xf]
        %v2945 = vld [vmem:[%s331 + $0x9c] sm:$0xf]
        %v2946 = vld [vmem:[%s331 + $0xa0] sm:$0x3]
        %s2947 = scalar_lea.vmem %s342, 24
        %v2948 = vld [vmem:[%s2947] sm:$0xf]
        %v2986 = vunpack.c.l.b16 %v2910
        %v2987 = vunpack.c.l.b16 %v2911
        %v2988 = vunpack.c.l.b16 %v2912
        %v2989 = vunpack.c.l.b16 %v2913
        %v2990 = vunpack.c.l.b16 %v2914
        %v2991 = vunpack.c.l.b16 %v2915
        %v2992 = vunpack.c.l.b16 %v2916
        %v2993 = vunpack.c.l.b16 %v2917
        %v2994 = vunpack.c.l.b16 %v2918
        %v2995 = vunpack.c.l.b16 %v2919
        %v2996 = vunpack.c.l.b16 %v2920
        %v2997 = vunpack.c.l.b16 %v2921
        %v2998 = vunpack.c.l.b16 %v2922
        %v2999 = vunpack.c.l.b16 %v2923
        %v3000 = vunpack.c.l.b16 %v2924
        %v3001 = vunpack.c.l.b16 %v2925
        %v3002 = vunpack.c.l.b16 %v2926
        %v3003 = vunpack.c.l.b16 %v2927
        %v3004 = vunpack.c.l.b16 %v2928
        %v3005 = vunpack.c.l.b16 %v2929
        %v3006 = vunpack.c.l.b16 %v2930
        %v3007 = vunpack.c.l.b16 %v2931
        %v3008 = vunpack.c.l.b16 %v2932
        %v3009 = vunpack.c.l.b16 %v2933
        %v3010 = vunpack.c.l.b16 %v2934
        %v3011 = vunpack.c.l.b16 %v2935
        %v3012 = vunpack.c.l.b16 %v2936
        %v3013 = vunpack.c.l.b16 %v2937
        %v3014 = vunpack.c.l.b16 %v2938
        %v3015 = vunpack.c.l.b16 %v2939
        %v3016 = vunpack.c.l.b16 %v2940
        %v3017 = vunpack.c.l.b16 %v2941
        %v3018 = vunpack.c.l.b16 %v2942
        %v3019 = vunpack.c.l.b16 %v2943
        %v3020 = vunpack.c.l.b16 %v2944
        %v3021 = vunpack.c.l.b16 %v2945
        %v3022 = vunpack.c.l.b16 %v2946
        %v3023 = vpack.c.b16 %v2987, %v2986
        %v3024 = vpack.c.b16 %v2989, %v2988
        %v3025 = vpack.c.b16 %v2991, %v2990
        %v3026 = vpack.c.b16 %v2993, %v2992
        %v3027 = vpack.c.b16 %v2995, %v2994
        %v3028 = vpack.c.b16 %v2997, %v2996
        %v3029 = vpack.c.b16 %v2999, %v2998
        %v3030 = vpack.c.b16 %v3001, %v3000
        %v3031 = vpack.c.b16 %v3003, %v3002
        %v3032 = vpack.c.b16 %v3005, %v3004
        %v3033 = vpack.c.b16 %v3007, %v3006
        %v3034 = vpack.c.b16 %v3009, %v3008
        %v3035 = vpack.c.b16 %v3011, %v3010
        %v3036 = vpack.c.b16 %v3013, %v3012
        %v3037 = vpack.c.b16 %v3015, %v3014
        %v3038 = vpack.c.b16 %v3017, %v3016
        %v3039 = vpack.c.b16 %v3019, %v3018
        %v3040 = vpack.c.b16 %v3021, %v3020
        %v3041 = vpack.c.b16 %v3022, %v3022
        %v3042 = vrot.slane %v3023, 2
        %v3043 = vrot.slane %v3024, 2
        %v3044 = vsel %vm2602, %v3042, %v3043
        %v3045 = vrot.slane %v3025, 2
        %v3046 = vsel %vm2602, %v3043, %v3045
        %v3047 = vrot.slane %v3026, 2
        %v3048 = vsel %vm2602, %v3045, %v3047
        %v3049 = vrot.slane %v3027, 2
        %v3050 = vsel %vm2602, %v3047, %v3049
        %v3051 = vrot.slane %v3028, 2
        %v3052 = vsel %vm2602, %v3049, %v3051
        %v3053 = vrot.slane %v3029, 2
        %v3054 = vsel %vm2602, %v3051, %v3053
        %v3055 = vrot.slane %v3030, 2
        %v3056 = vsel %vm2602, %v3053, %v3055
        %v3057 = vrot.slane %v3031, 2
        %v3058 = vsel %vm2602, %v3055, %v3057
        %v3059 = vrot.slane %v3032, 2
        %v3060 = vsel %vm2602, %v3057, %v3059
        %v3061 = vrot.slane %v3033, 2
        %v3062 = vsel %vm2602, %v3059, %v3061
        %v3063 = vrot.slane %v3034, 2
        %v3064 = vsel %vm2602, %v3061, %v3063
        %v3065 = vrot.slane %v3035, 2
        %v3066 = vsel %vm2602, %v3063, %v3065
        %v3067 = vrot.slane %v3036, 2
        %v3068 = vsel %vm2602, %v3065, %v3067
        %v3069 = vrot.slane %v3037, 2
        %v3070 = vsel %vm2602, %v3067, %v3069
        %v3071 = vrot.slane %v3038, 2
        %v3072 = vsel %vm2602, %v3069, %v3071
        %v3073 = vrot.slane %v3039, 2
        %v3074 = vsel %vm2602, %v3071, %v3073
        %v3075 = vrot.slane %v3040, 2
        %v3076 = vsel %vm2602, %v3073, %v3075
        %v3077 = vrot.slane %v3041, 2
        %v3078 = vsel %vm2602, %v3075, %v3077
        %v3080 = vsel %vm573, %v3044, 0
        %v3083 = vsel %vm573, %v3046, 0
        %v3086 = vsel %vm573, %v3048, 0
        %v3089 = vsel %vm573, %v3050, 0
        %v3092 = vsel %vm573, %v3052, 0
        %v3095 = vsel %vm573, %v3054, 0
        %v3098 = vsel %vm573, %v3056, 0
        %v3101 = vsel %vm573, %v3058, 0
        %v3104 = vsel %vm573, %v3060, 0
        %v3107 = vsel %vm573, %v3062, 0
        %v3110 = vsel %vm573, %v3064, 0
        %v3113 = vsel %vm573, %v3066, 0
        %v3116 = vsel %vm573, %v3068, 0
        %v3119 = vsel %vm573, %v3070, 0
        %v3122 = vsel %vm573, %v3072, 0
        %v3125 = vsel %vm573, %v3074, 0
        %v3128 = vsel %vm573, %v3076, 0
        %v3131 = vsel %vm573, %v3078, 0
        %v3134 = vsel %vm628, %v2948, 0
        %3136 = vmatprep.subr.bf16.mxu0 0
        %3137 = vmatpush1.bf16.msra.mxu0 %v3134
        %3138 = vmatprep.subr.bf16.mxu0 0
        %3139 = vmatpush1.bf16.msra.mxu0 0
        %3140 = vmatprep.subr.bf16.mxu0 0
        %3141 = vmatpush1.bf16.msra.mxu0 0
        %3142 = vmatprep.subr.bf16.mxu0 0
        %3143 = vmatpush1.bf16.msra.mxu0 0
        %3144 = vmatprep.subr.bf16.mxu0 0
        %3145 = vmatpush1.bf16.msra.mxu0 0
        %3146 = vmatprep.subr.bf16.mxu0 0
        %3147 = vmatpush1.bf16.msra.mxu0 0
        %3148 = vmatprep.subr.bf16.mxu0 0
        %3149 = vmatpush1.bf16.msra.mxu0 0
        %3150 = vmatprep.subr.bf16.mxu0 0
        %3151 = vmatpush1.bf16.msra.mxu0 0
        %3152 = vmatprep.subr.bf16.mxu0 0
        %3153 = vmatpush1.bf16.msra.mxu0 0
        %3154 = vmatprep.subr.bf16.mxu0 0
        %3155 = vmatpush1.bf16.msra.mxu0 0
        %3156 = vmatprep.subr.bf16.mxu0 0
        %3157 = vmatpush1.bf16.msra.mxu0 0
        %3158 = vmatprep.subr.bf16.mxu0 0
        %3159 = vmatpush1.bf16.msra.mxu0 0
        %3160 = vmatprep.subr.bf16.mxu0 0
        %3161 = vmatpush1.bf16.msra.mxu0 0
        %3162 = vmatprep.subr.bf16.mxu0 0
        %3163 = vmatpush1.bf16.msra.mxu0 0
        %3164 = vmatprep.subr.bf16.mxu0 0
        %3165 = vmatpush1.bf16.msra.mxu0 0
        %3166 = vmatprep.subr.bf16.mxu0 0
        %3167 = vmatpush1.bf16.msra.mxu0 0
        %3168 = vmatprep.mubr.bf16.mxu0 0
        %3169 = vmatmul.mubr.bf16.gmra.mrb[0].mxu0 %v3080
        %v3170 = vpop.f32.mrb[0].mxu0
        %v3171 = vadd.f32 0.0, %v3170
        %v3172 = vpop.f32.mrb[0].mxu0
        %v3173 = vpop.f32.mrb[0].mxu0
        %v3174 = vadd.f32 0.0, %v3173
        %v3175 = vpop.f32.mrb[0].mxu0
        %3176 = vmatprep.mubr.bf16.mxu0 0
        %3177 = vmatmul.mubr.bf16.gmra.mrb[0].mxu0 %v3083
        %v3178 = vpop.f32.mrb[0].mxu0
        %v3179 = vadd.f32 0.0, %v3178
        %v3180 = vpop.f32.mrb[0].mxu0
        %v3181 = vpop.f32.mrb[0].mxu0
        %v3182 = vadd.f32 0.0, %v3181
        %v3183 = vpop.f32.mrb[0].mxu0
        %3184 = vmatprep.mubr.bf16.mxu0 0
        %3185 = vmatmul.mubr.bf16.gmra.mrb[0].mxu0 %v3086
        %v3186 = vpop.f32.mrb[0].mxu0
        %v3187 = vadd.f32 0.0, %v3186
        %v3188 = vpop.f32.mrb[0].mxu0
        %v3189 = vpop.f32.mrb[0].mxu0
        %v3190 = vadd.f32 0.0, %v3189
        %v3191 = vpop.f32.mrb[0].mxu0
        %3192 = vmatprep.mubr.bf16.mxu0 0
        %3193 = vmatmul.mubr.bf16.gmra.mrb[0].mxu0 %v3089
        %v3194 = vpop.f32.mrb[0].mxu0
        %v3195 = vadd.f32 0.0, %v3194
        %v3196 = vpop.f32.mrb[0].mxu0
        %v3197 = vpop.f32.mrb[0].mxu0
        %v3198 = vadd.f32 0.0, %v3197
        %v3199 = vpop.f32.mrb[0].mxu0
        %3200 = vmatprep.mubr.bf16.mxu0 0
        %3201 = vmatmul.mubr.bf16.gmra.mrb[0].mxu0 %v3092
        %v3202 = vpop.f32.mrb[0].mxu0
        %v3203 = vadd.f32 0.0, %v3202
        %v3204 = vpop.f32.mrb[0].mxu0
        %v3205 = vpop.f32.mrb[0].mxu0
        %v3206 = vadd.f32 0.0, %v3205
        %v3207 = vpop.f32.mrb[0].mxu0
        %3208 = vmatprep.mubr.bf16.mxu0 0
        %3209 = vmatmul.mubr.bf16.gmra.mrb[0].mxu0 %v3095
        %v3210 = vpop.f32.mrb[0].mxu0
        %v3211 = vadd.f32 0.0, %v3210
        %v3212 = vpop.f32.mrb[0].mxu0
        %v3213 = vpop.f32.mrb[0].mxu0
        %v3214 = vadd.f32 0.0, %v3213
        %v3215 = vpop.f32.mrb[0].mxu0
        %3216 = vmatprep.mubr.bf16.mxu0 0
        %3217 = vmatmul.mubr.bf16.gmra.mrb[0].mxu0 %v3098
        %v3218 = vpop.f32.mrb[0].mxu0
        %v3219 = vadd.f32 0.0, %v3218
        %v3220 = vpop.f32.mrb[0].mxu0
        %v3221 = vpop.f32.mrb[0].mxu0
        %v3222 = vadd.f32 0.0, %v3221
        %v3223 = vpop.f32.mrb[0].mxu0
        %3224 = vmatprep.mubr.bf16.mxu0 0
        %3225 = vmatmul.mubr.bf16.gmra.mrb[0].mxu0 %v3101
        %v3226 = vpop.f32.mrb[0].mxu0
        %v3227 = vadd.f32 0.0, %v3226
        %v3228 = vpop.f32.mrb[0].mxu0
        %v3229 = vpop.f32.mrb[0].mxu0
        %v3230 = vadd.f32 0.0, %v3229
        %v3231 = vpop.f32.mrb[0].mxu0
        %3232 = vmatprep.mubr.bf16.mxu0 0
        %3233 = vmatmul.mubr.bf16.gmra.mrb[0].mxu0 %v3104
        %v3234 = vpop.f32.mrb[0].mxu0
        %v3235 = vadd.f32 0.0, %v3234
        %v3236 = vpop.f32.mrb[0].mxu0
        %v3237 = vpop.f32.mrb[0].mxu0
        %v3238 = vadd.f32 0.0, %v3237
        %v3239 = vpop.f32.mrb[0].mxu0
        %3240 = vmatprep.mubr.bf16.mxu0 0
        %3241 = vmatmul.mubr.bf16.gmra.mrb[0].mxu0 %v3107
        %v3242 = vpop.f32.mrb[0].mxu0
        %v3243 = vadd.f32 0.0, %v3242
        %v3244 = vpop.f32.mrb[0].mxu0
        %v3245 = vpop.f32.mrb[0].mxu0
        %v3246 = vadd.f32 0.0, %v3245
        %v3247 = vpop.f32.mrb[0].mxu0
        %3248 = vmatprep.mubr.bf16.mxu0 0
        %3249 = vmatmul.mubr.bf16.gmra.mrb[0].mxu0 %v3110
        %v3250 = vpop.f32.mrb[0].mxu0
        %v3251 = vadd.f32 0.0, %v3250
        %v3252 = vpop.f32.mrb[0].mxu0
        %v3253 = vpop.f32.mrb[0].mxu0
        %v3254 = vadd.f32 0.0, %v3253
        %v3255 = vpop.f32.mrb[0].mxu0
        %3256 = vmatprep.mubr.bf16.mxu0 0
        %3257 = vmatmul.mubr.bf16.gmra.mrb[0].mxu0 %v3113
        %v3258 = vpop.f32.mrb[0].mxu0
        %v3259 = vadd.f32 0.0, %v3258
        %v3260 = vpop.f32.mrb[0].mxu0
        %v3261 = vpop.f32.mrb[0].mxu0
        %v3262 = vadd.f32 0.0, %v3261
        %v3263 = vpop.f32.mrb[0].mxu0
        %3264 = vmatprep.mubr.bf16.mxu0 0
        %3265 = vmatmul.mubr.bf16.gmra.mrb[0].mxu0 %v3116
        %v3266 = vpop.f32.mrb[0].mxu0
        %v3267 = vadd.f32 0.0, %v3266
        %v3268 = vpop.f32.mrb[0].mxu0
        %v3269 = vpop.f32.mrb[0].mxu0
        %v3270 = vadd.f32 0.0, %v3269
        %v3271 = vpop.f32.mrb[0].mxu0
        %3272 = vmatprep.mubr.bf16.mxu0 0
        %3273 = vmatmul.mubr.bf16.gmra.mrb[0].mxu0 %v3119
        %v3274 = vpop.f32.mrb[0].mxu0
        %v3275 = vadd.f32 0.0, %v3274
        %v3276 = vpop.f32.mrb[0].mxu0
        %v3277 = vpop.f32.mrb[0].mxu0
        %v3278 = vadd.f32 0.0, %v3277
        %v3279 = vpop.f32.mrb[0].mxu0
        %3280 = vmatprep.mubr.bf16.mxu0 0
        %3281 = vmatmul.mubr.bf16.gmra.mrb[0].mxu0 %v3122
        %v3282 = vpop.f32.mrb[0].mxu0
        %v3283 = vadd.f32 0.0, %v3282
        %v3284 = vpop.f32.mrb[0].mxu0
        %v3285 = vpop.f32.mrb[0].mxu0
        %v3286 = vadd.f32 0.0, %v3285
        %v3287 = vpop.f32.mrb[0].mxu0
        %3288 = vmatprep.mubr.bf16.mxu0 0
        %3289 = vmatmul.mubr.bf16.gmra.mrb[0].mxu0 %v3125
        %v3290 = vpop.f32.mrb[0].mxu0
        %v3291 = vadd.f32 0.0, %v3290
        %v3292 = vpop.f32.mrb[0].mxu0
        %v3293 = vpop.f32.mrb[0].mxu0
        %v3294 = vadd.f32 0.0, %v3293
        %v3295 = vpop.f32.mrb[0].mxu0
        %3296 = vmatprep.mubr.bf16.mxu0 0
        %3297 = vmatmul.mubr.bf16.gmra.mrb[0].mxu0 %v3128
        %v3298 = vpop.f32.mrb[0].mxu0
        %v3299 = vadd.f32 0.0, %v3298
        %v3300 = vpop.f32.mrb[0].mxu0
        %v3301 = vpop.f32.mrb[0].mxu0
        %v3302 = vadd.f32 0.0, %v3301
        %v3303 = vpop.f32.mrb[0].mxu0
        %3304 = vmatprep.mubr.bf16.mxu0 0
        %3305 = vmatmul.mubr.bf16.gmra.mrb[0].mxu0 %v3131
        %v3306 = vpop.f32.mrb[0].mxu0
        %v3307 = vadd.f32 0.0, %v3306
        %v3308 = vpop.f32.mrb[0].mxu0
        %v3309 = vpop.f32.mrb[0].mxu0
        %v3310 = vadd.f32 0.0, %v3309
        %v3311 = vpop.f32.mrb[0].mxu0
        %3312 = vdwg.mxu0
        %v3313 = vadd.f32 %v2874, %v3171
        %v3314 = vadd.f32 %v2875, %v3174
        %v3315 = vadd.f32 %v2876, %v3179
        %v3316 = vadd.f32 %v2877, %v3182
        %v3317 = vadd.f32 %v2878, %v3187
        %v3318 = vadd.f32 %v2879, %v3190
        %v3319 = vadd.f32 %v2880, %v3195
        %v3320 = vadd.f32 %v2881, %v3198
        %v3321 = vadd.f32 %v2882, %v3203
        %v3322 = vadd.f32 %v2883, %v3206
        %v3323 = vadd.f32 %v2884, %v3211
        %v3324 = vadd.f32 %v2885, %v3214
        %v3325 = vadd.f32 %v2886, %v3219
        %v3326 = vadd.f32 %v2887, %v3222
        %v3327 = vadd.f32 %v2888, %v3227
        %v3328 = vadd.f32 %v2889, %v3230
        %v3329 = vadd.f32 %v2890, %v3235
        %v3330 = vadd.f32 %v2891, %v3238
        %v3331 = vadd.f32 %v2892, %v3243
        %v3332 = vadd.f32 %v2893, %v3246
        %v3333 = vadd.f32 %v2894, %v3251
        %v3334 = vadd.f32 %v2895, %v3254
        %v3335 = vadd.f32 %v2896, %v3259
        %v3336 = vadd.f32 %v2897, %v3262
        %v3337 = vadd.f32 %v2898, %v3267
        %v3338 = vadd.f32 %v2899, %v3270
        %v3339 = vadd.f32 %v2900, %v3275
        %v3340 = vadd.f32 %v2901, %v3278
        %v3341 = vadd.f32 %v2902, %v3283
        %v3342 = vadd.f32 %v2903, %v3286
        %v3343 = vadd.f32 %v2904, %v3291
        %v3344 = vadd.f32 %v2905, %v3294
        %v3345 = vadd.f32 %v2906, %v3299
        %v3346 = vadd.f32 %v2907, %v3302
        %v3347 = vadd.f32 %v2908, %v3307
        %v3348 = vadd.f32 %v2909, %v3310
        %v3349 = vld [vmem:[%s331 + $0xa0] sm:$0x7]
        %s3350 = scalar_lea.vmem %s342, 28
        %v3351 = vld [vmem:[%s3350] sm:$0xf]
        %v3353 = vunpack.c.l.b16 %v3349
        %v3354 = vpack.c.b16 %v3353, %v3353
        %vm3355 = vsmask.f32 5376
        %v3357 = vshrl.u32 %v3023, 16
        %v3359 = vrot.slane %v3357, 2
        %v3360 = vshll.u32 %v3023, 16
        %v3362 = vrot.slane %v3360, 3
        %v3363 = vor.u32 %v3359, %v3362
        %v3365 = vshrl.u32 %v3024, 16
        %v3367 = vrot.slane %v3365, 2
        %v3368 = vshll.u32 %v3024, 16
        %v3370 = vrot.slane %v3368, 3
        %v3371 = vor.u32 %v3367, %v3370
        %v3372 = vsel %vm3355, %v3363, %v3371
        %v3374 = vshrl.u32 %v3025, 16
        %v3376 = vrot.slane %v3374, 2
        %v3377 = vshll.u32 %v3025, 16
        %v3379 = vrot.slane %v3377, 3
        %v3380 = vor.u32 %v3376, %v3379
        %v3381 = vsel %vm3355, %v3371, %v3380
        %v3383 = vshrl.u32 %v3026, 16
        %v3385 = vrot.slane %v3383, 2
        %v3386 = vshll.u32 %v3026, 16
        %v3388 = vrot.slane %v3386, 3
        %v3389 = vor.u32 %v3385, %v3388
        %v3390 = vsel %vm3355, %v3380, %v3389
        %v3392 = vshrl.u32 %v3027, 16
        %v3394 = vrot.slane %v3392, 2
        %v3395 = vshll.u32 %v3027, 16
        %v3397 = vrot.slane %v3395, 3
        %v3398 = vor.u32 %v3394, %v3397
        %v3399 = vsel %vm3355, %v3389, %v3398
        %v3401 = vshrl.u32 %v3028, 16
        %v3403 = vrot.slane %v3401, 2
        %v3404 = vshll.u32 %v3028, 16
        %v3406 = vrot.slane %v3404, 3
        %v3407 = vor.u32 %v3403, %v3406
        %v3408 = vsel %vm3355, %v3398, %v3407
        %v3410 = vshrl.u32 %v3029, 16
        %v3412 = vrot.slane %v3410, 2
        %v3413 = vshll.u32 %v3029, 16
        %v3415 = vrot.slane %v3413, 3
        %v3416 = vor.u32 %v3412, %v3415
        %v3417 = vsel %vm3355, %v3407, %v3416
        %v3419 = vshrl.u32 %v3030, 16
        %v3421 = vrot.slane %v3419, 2
        %v3422 = vshll.u32 %v3030, 16
        %v3424 = vrot.slane %v3422, 3
        %v3425 = vor.u32 %v3421, %v3424
        %v3426 = vsel %vm3355, %v3416, %v3425
        %v3428 = vshrl.u32 %v3031, 16
        %v3430 = vrot.slane %v3428, 2
        %v3431 = vshll.u32 %v3031, 16
        %v3433 = vrot.slane %v3431, 3
        %v3434 = vor.u32 %v3430, %v3433
        %v3435 = vsel %vm3355, %v3425, %v3434
        %v3437 = vshrl.u32 %v3032, 16
        %v3439 = vrot.slane %v3437, 2
        %v3440 = vshll.u32 %v3032, 16
        %v3442 = vrot.slane %v3440, 3
        %v3443 = vor.u32 %v3439, %v3442
        %v3444 = vsel %vm3355, %v3434, %v3443
        %v3446 = vshrl.u32 %v3033, 16
        %v3448 = vrot.slane %v3446, 2
        %v3449 = vshll.u32 %v3033, 16
        %v3451 = vrot.slane %v3449, 3
        %v3452 = vor.u32 %v3448, %v3451
        %v3453 = vsel %vm3355, %v3443, %v3452
        %v3455 = vshrl.u32 %v3034, 16
        %v3457 = vrot.slane %v3455, 2
        %v3458 = vshll.u32 %v3034, 16
        %v3460 = vrot.slane %v3458, 3
        %v3461 = vor.u32 %v3457, %v3460
        %v3462 = vsel %vm3355, %v3452, %v3461
        %v3464 = vshrl.u32 %v3035, 16
        %v3466 = vrot.slane %v3464, 2
        %v3467 = vshll.u32 %v3035, 16
        %v3469 = vrot.slane %v3467, 3
        %v3470 = vor.u32 %v3466, %v3469
        %v3471 = vsel %vm3355, %v3461, %v3470
        %v3473 = vshrl.u32 %v3036, 16
        %v3475 = vrot.slane %v3473, 2
        %v3476 = vshll.u32 %v3036, 16
        %v3478 = vrot.slane %v3476, 3
        %v3479 = vor.u32 %v3475, %v3478
        %v3480 = vsel %vm3355, %v3470, %v3479
        %v3482 = vshrl.u32 %v3037, 16
        %v3484 = vrot.slane %v3482, 2
        %v3485 = vshll.u32 %v3037, 16
        %v3487 = vrot.slane %v3485, 3
        %v3488 = vor.u32 %v3484, %v3487
        %v3489 = vsel %vm3355, %v3479, %v3488
        %v3491 = vshrl.u32 %v3038, 16
        %v3493 = vrot.slane %v3491, 2
        %v3494 = vshll.u32 %v3038, 16
        %v3496 = vrot.slane %v3494, 3
        %v3497 = vor.u32 %v3493, %v3496
        %v3498 = vsel %vm3355, %v3488, %v3497
        %v3500 = vshrl.u32 %v3039, 16
        %v3502 = vrot.slane %v3500, 2
        %v3503 = vshll.u32 %v3039, 16
        %v3505 = vrot.slane %v3503, 3
        %v3506 = vor.u32 %v3502, %v3505
        %v3507 = vsel %vm3355, %v3497, %v3506
        %v3509 = vshrl.u32 %v3040, 16
        %v3511 = vrot.slane %v3509, 2
        %v3512 = vshll.u32 %v3040, 16
        %v3514 = vrot.slane %v3512, 3
        %v3515 = vor.u32 %v3511, %v3514
        %v3516 = vsel %vm3355, %v3506, %v3515
        %v3518 = vshrl.u32 %v3354, 16
        %v3520 = vrot.slane %v3518, 2
        %v3521 = vshll.u32 %v3354, 16
        %v3523 = vrot.slane %v3521, 3
        %v3524 = vor.u32 %v3520, %v3523
        %v3525 = vsel %vm3355, %v3515, %v3524
        %v3527 = vsel %vm573, %v3372, 0
        %v3530 = vsel %vm573, %v3381, 0
        %v3533 = vsel %vm573, %v3390, 0
        %v3536 = vsel %vm573, %v3399, 0
        %v3539 = vsel %vm573, %v3408, 0
        %v3542 = vsel %vm573, %v3417, 0
        %v3545 = vsel %vm573, %v3426, 0
        %v3548 = vsel %vm573, %v3435, 0
        %v3551 = vsel %vm573, %v3444, 0
        %v3554 = vsel %vm573, %v3453, 0
        %v3557 = vsel %vm573, %v3462, 0
        %v3560 = vsel %vm573, %v3471, 0
        %v3563 = vsel %vm573, %v3480, 0
        %v3566 = vsel %vm573, %v3489, 0
        %v3569 = vsel %vm573, %v3498, 0
        %v3572 = vsel %vm573, %v3507, 0
        %v3575 = vsel %vm573, %v3516, 0
        %v3578 = vsel %vm573, %v3525, 0
        %v3581 = vsel %vm628, %v3351, 0
        %3583 = vmatprep.subr.bf16.mxu0 0
        %3584 = vmatpush1.bf16.msra.mxu0 %v3581
        %3585 = vmatprep.subr.bf16.mxu0 0
        %3586 = vmatpush1.bf16.msra.mxu0 0
        %3587 = vmatprep.subr.bf16.mxu0 0
        %3588 = vmatpush1.bf16.msra.mxu0 0
        %3589 = vmatprep.subr.bf16.mxu0 0
        %3590 = vmatpush1.bf16.msra.mxu0 0
        %3591 = vmatprep.subr.bf16.mxu0 0
        %3592 = vmatpush1.bf16.msra.mxu0 0
        %3593 = vmatprep.subr.bf16.mxu0 0
        %3594 = vmatpush1.bf16.msra.mxu0 0
        %3595 = vmatprep.subr.bf16.mxu0 0
        %3596 = vmatpush1.bf16.msra.mxu0 0
        %3597 = vmatprep.subr.bf16.mxu0 0
        %3598 = vmatpush1.bf16.msra.mxu0 0
        %3599 = vmatprep.subr.bf16.mxu0 0
        %3600 = vmatpush1.bf16.msra.mxu0 0
        %3601 = vmatprep.subr.bf16.mxu0 0
        %3602 = vmatpush1.bf16.msra.mxu0 0
        %3603 = vmatprep.subr.bf16.mxu0 0
        %3604 = vmatpush1.bf16.msra.mxu0 0
        %3605 = vmatprep.subr.bf16.mxu0 0
        %3606 = vmatpush1.bf16.msra.mxu0 0
        %3607 = vmatprep.subr.bf16.mxu0 0
        %3608 = vmatpush1.bf16.msra.mxu0 0
        %3609 = vmatprep.subr.bf16.mxu0 0
        %3610 = vmatpush1.bf16.msra.mxu0 0
        %3611 = vmatprep.subr.bf16.mxu0 0
        %3612 = vmatpush1.bf16.msra.mxu0 0
        %3613 = vmatprep.subr.bf16.mxu0 0
        %3614 = vmatpush1.bf16.msra.mxu0 0
        %3615 = vmatprep.mubr.bf16.mxu0 0
        %3616 = vmatmul.mubr.bf16.gmra.mrb[0].mxu0 %v3527
        %v3617 = vpop.f32.mrb[0].mxu0
        %v3618 = vadd.f32 0.0, %v3617
        %v3619 = vpop.f32.mrb[0].mxu0
        %v3620 = vpop.f32.mrb[0].mxu0
        %v3621 = vadd.f32 0.0, %v3620
        %v3622 = vpop.f32.mrb[0].mxu0
        %3623 = vmatprep.mubr.bf16.mxu0 0
        %3624 = vmatmul.mubr.bf16.gmra.mrb[0].mxu0 %v3530
        %v3625 = vpop.f32.mrb[0].mxu0
        %v3626 = vadd.f32 0.0, %v3625
        %v3627 = vpop.f32.mrb[0].mxu0
        %v3628 = vpop.f32.mrb[0].mxu0
        %v3629 = vadd.f32 0.0, %v3628
        %v3630 = vpop.f32.mrb[0].mxu0
        %3631 = vmatprep.mubr.bf16.mxu0 0
        %3632 = vmatmul.mubr.bf16.gmra.mrb[0].mxu0 %v3533
        %v3633 = vpop.f32.mrb[0].mxu0
        %v3634 = vadd.f32 0.0, %v3633
        %v3635 = vpop.f32.mrb[0].mxu0
        %v3636 = vpop.f32.mrb[0].mxu0
        %v3637 = vadd.f32 0.0, %v3636
        %v3638 = vpop.f32.mrb[0].mxu0
        %3639 = vmatprep.mubr.bf16.mxu0 0
        %3640 = vmatmul.mubr.bf16.gmra.mrb[0].mxu0 %v3536
        %v3641 = vpop.f32.mrb[0].mxu0
        %v3642 = vadd.f32 0.0, %v3641
        %v3643 = vpop.f32.mrb[0].mxu0
        %v3644 = vpop.f32.mrb[0].mxu0
        %v3645 = vadd.f32 0.0, %v3644
        %v3646 = vpop.f32.mrb[0].mxu0
        %3647 = vmatprep.mubr.bf16.mxu0 0
        %3648 = vmatmul.mubr.bf16.gmra.mrb[0].mxu0 %v3539
        %v3649 = vpop.f32.mrb[0].mxu0
        %v3650 = vadd.f32 0.0, %v3649
        %v3651 = vpop.f32.mrb[0].mxu0
        %v3652 = vpop.f32.mrb[0].mxu0
        %v3653 = vadd.f32 0.0, %v3652
        %v3654 = vpop.f32.mrb[0].mxu0
        %3655 = vmatprep.mubr.bf16.mxu0 0
        %3656 = vmatmul.mubr.bf16.gmra.mrb[0].mxu0 %v3542
        %v3657 = vpop.f32.mrb[0].mxu0
        %v3658 = vadd.f32 0.0, %v3657
        %v3659 = vpop.f32.mrb[0].mxu0
        %v3660 = vpop.f32.mrb[0].mxu0
        %v3661 = vadd.f32 0.0, %v3660
        %v3662 = vpop.f32.mrb[0].mxu0
        %3663 = vmatprep.mubr.bf16.mxu0 0
        %3664 = vmatmul.mubr.bf16.gmra.mrb[0].mxu0 %v3545
        %v3665 = vpop.f32.mrb[0].mxu0
        %v3666 = vadd.f32 0.0, %v3665
        %v3667 = vpop.f32.mrb[0].mxu0
        %v3668 = vpop.f32.mrb[0].mxu0
        %v3669 = vadd.f32 0.0, %v3668
        %v3670 = vpop.f32.mrb[0].mxu0
        %3671 = vmatprep.mubr.bf16.mxu0 0
        %3672 = vmatmul.mubr.bf16.gmra.mrb[0].mxu0 %v3548
        %v3673 = vpop.f32.mrb[0].mxu0
        %v3674 = vadd.f32 0.0, %v3673
        %v3675 = vpop.f32.mrb[0].mxu0
        %v3676 = vpop.f32.mrb[0].mxu0
        %v3677 = vadd.f32 0.0, %v3676
        %v3678 = vpop.f32.mrb[0].mxu0
        %3679 = vmatprep.mubr.bf16.mxu0 0
        %3680 = vmatmul.mubr.bf16.gmra.mrb[0].mxu0 %v3551
        %v3681 = vpop.f32.mrb[0].mxu0
        %v3682 = vadd.f32 0.0, %v3681
        %v3683 = vpop.f32.mrb[0].mxu0
        %v3684 = vpop.f32.mrb[0].mxu0
        %v3685 = vadd.f32 0.0, %v3684
        %v3686 = vpop.f32.mrb[0].mxu0
        %3687 = vmatprep.mubr.bf16.mxu0 0
        %3688 = vmatmul.mubr.bf16.gmra.mrb[0].mxu0 %v3554
        %v3689 = vpop.f32.mrb[0].mxu0
        %v3690 = vadd.f32 0.0, %v3689
        %v3691 = vpop.f32.mrb[0].mxu0
        %v3692 = vpop.f32.mrb[0].mxu0
        %v3693 = vadd.f32 0.0, %v3692
        %v3694 = vpop.f32.mrb[0].mxu0
        %3695 = vmatprep.mubr.bf16.mxu0 0
        %3696 = vmatmul.mubr.bf16.gmra.mrb[0].mxu0 %v3557
        %v3697 = vpop.f32.mrb[0].mxu0
        %v3698 = vadd.f32 0.0, %v3697
        %v3699 = vpop.f32.mrb[0].mxu0
        %v3700 = vpop.f32.mrb[0].mxu0
        %v3701 = vadd.f32 0.0, %v3700
        %v3702 = vpop.f32.mrb[0].mxu0
        %3703 = vmatprep.mubr.bf16.mxu0 0
        %3704 = vmatmul.mubr.bf16.gmra.mrb[0].mxu0 %v3560
        %v3705 = vpop.f32.mrb[0].mxu0
        %v3706 = vadd.f32 0.0, %v3705
        %v3707 = vpop.f32.mrb[0].mxu0
        %v3708 = vpop.f32.mrb[0].mxu0
        %v3709 = vadd.f32 0.0, %v3708
        %v3710 = vpop.f32.mrb[0].mxu0
        %3711 = vmatprep.mubr.bf16.mxu0 0
        %3712 = vmatmul.mubr.bf16.gmra.mrb[0].mxu0 %v3563
        %v3713 = vpop.f32.mrb[0].mxu0
        %v3714 = vadd.f32 0.0, %v3713
        %v3715 = vpop.f32.mrb[0].mxu0
        %v3716 = vpop.f32.mrb[0].mxu0
        %v3717 = vadd.f32 0.0, %v3716
        %v3718 = vpop.f32.mrb[0].mxu0
        %3719 = vmatprep.mubr.bf16.mxu0 0
        %3720 = vmatmul.mubr.bf16.gmra.mrb[0].mxu0 %v3566
        %v3721 = vpop.f32.mrb[0].mxu0
        %v3722 = vadd.f32 0.0, %v3721
        %v3723 = vpop.f32.mrb[0].mxu0
        %v3724 = vpop.f32.mrb[0].mxu0
        %v3725 = vadd.f32 0.0, %v3724
        %v3726 = vpop.f32.mrb[0].mxu0
        %3727 = vmatprep.mubr.bf16.mxu0 0
        %3728 = vmatmul.mubr.bf16.gmra.mrb[0].mxu0 %v3569
        %v3729 = vpop.f32.mrb[0].mxu0
        %v3730 = vadd.f32 0.0, %v3729
        %v3731 = vpop.f32.mrb[0].mxu0
        %v3732 = vpop.f32.mrb[0].mxu0
        %v3733 = vadd.f32 0.0, %v3732
        %v3734 = vpop.f32.mrb[0].mxu0
        %3735 = vmatprep.mubr.bf16.mxu0 0
        %3736 = vmatmul.mubr.bf16.gmra.mrb[0].mxu0 %v3572
        %v3737 = vpop.f32.mrb[0].mxu0
        %v3738 = vadd.f32 0.0, %v3737
        %v3739 = vpop.f32.mrb[0].mxu0
        %v3740 = vpop.f32.mrb[0].mxu0
        %v3741 = vadd.f32 0.0, %v3740
        %v3742 = vpop.f32.mrb[0].mxu0
        %3743 = vmatprep.mubr.bf16.mxu0 0
        %3744 = vmatmul.mubr.bf16.gmra.mrb[0].mxu0 %v3575
        %v3745 = vpop.f32.mrb[0].mxu0
        %v3746 = vadd.f32 0.0, %v3745
        %v3747 = vpop.f32.mrb[0].mxu0
        %v3748 = vpop.f32.mrb[0].mxu0
        %v3749 = vadd.f32 0.0, %v3748
        %v3750 = vpop.f32.mrb[0].mxu0
        %3751 = vmatprep.mubr.bf16.mxu0 0
        %3752 = vmatmul.mubr.bf16.gmra.mrb[0].mxu0 %v3578
        %v3753 = vpop.f32.mrb[0].mxu0
        %v3754 = vadd.f32 0.0, %v3753
        %v3755 = vpop.f32.mrb[0].mxu0
        %v3756 = vpop.f32.mrb[0].mxu0
        %v3757 = vadd.f32 0.0, %v3756
        %v3758 = vpop.f32.mrb[0].mxu0
        %3759 = vdwg.mxu0
        %v3760 = vadd.f32 %v3313, %v3618
        %v3761 = vadd.f32 %v3314, %v3621
        %v3762 = vadd.f32 %v3315, %v3626
        %v3763 = vadd.f32 %v3316, %v3629
        %v3764 = vadd.f32 %v3317, %v3634
        %v3765 = vadd.f32 %v3318, %v3637
        %v3766 = vadd.f32 %v3319, %v3642
        %v3767 = vadd.f32 %v3320, %v3645
        %v3768 = vadd.f32 %v3321, %v3650
        %v3769 = vadd.f32 %v3322, %v3653
        %v3770 = vadd.f32 %v3323, %v3658
        %v3771 = vadd.f32 %v3324, %v3661
        %v3772 = vadd.f32 %v3325, %v3666
        %v3773 = vadd.f32 %v3326, %v3669
        %v3774 = vadd.f32 %v3327, %v3674
        %v3775 = vadd.f32 %v3328, %v3677
        %v3776 = vadd.f32 %v3329, %v3682
        %v3777 = vadd.f32 %v3330, %v3685
        %v3778 = vadd.f32 %v3331, %v3690
        %v3779 = vadd.f32 %v3332, %v3693
        %v3780 = vadd.f32 %v3333, %v3698
        %v3781 = vadd.f32 %v3334, %v3701
        %v3782 = vadd.f32 %v3335, %v3706
        %v3783 = vadd.f32 %v3336, %v3709
        %v3784 = vadd.f32 %v3337, %v3714
        %v3785 = vadd.f32 %v3338, %v3717
        %v3786 = vadd.f32 %v3339, %v3722
        %v3787 = vadd.f32 %v3340, %v3725
        %v3788 = vadd.f32 %v3341, %v3730
        %v3789 = vadd.f32 %v3342, %v3733
        %v3790 = vadd.f32 %v3343, %v3738
        %v3791 = vadd.f32 %v3344, %v3741
        %v3792 = vadd.f32 %v3345, %v3746
        %v3793 = vadd.f32 %v3346, %v3749
        %v3794 = vadd.f32 %v3347, %v3754
        %v3795 = vadd.f32 %v3348, %v3757
        %v3796 = vld [vmem:[%s331 + $0x10] sm:$0x8]
        %s3797 = scalar_lea.vmem %s342, 32
        %v3798 = vld [vmem:[%s3797] sm:$0xf]
        %v3800 = vunpack.c.l.b16 %v3796
        %v3801 = vpack.c.b16 %v2987, %v3800
        %vm3802 = vcmask 1044480
        %v3803 = vrot.slane %v3801, 3
        %v3804 = vrot.slane %v3024, 3
        %v3805 = vsel %vm3802, %v3803, %v3804
        %v3806 = vrot.slane %v3025, 3
        %v3807 = vsel %vm3802, %v3804, %v3806
        %v3808 = vrot.slane %v3026, 3
        %v3809 = vsel %vm3802, %v3806, %v3808
        %v3810 = vrot.slane %v3027, 3
        %v3811 = vsel %vm3802, %v3808, %v3810
        %v3812 = vrot.slane %v3028, 3
        %v3813 = vsel %vm3802, %v3810, %v3812
        %v3814 = vrot.slane %v3029, 3
        %v3815 = vsel %vm3802, %v3812, %v3814
        %v3816 = vrot.slane %v3030, 3
        %v3817 = vsel %vm3802, %v3814, %v3816
        %v3818 = vrot.slane %v3031, 3
        %v3819 = vsel %vm3802, %v3816, %v3818
        %v3820 = vrot.slane %v3032, 3
        %v3821 = vsel %vm3802, %v3818, %v3820
        %v3822 = vrot.slane %v3033, 3
        %v3823 = vsel %vm3802, %v3820, %v3822
        %v3824 = vrot.slane %v3034, 3
        %v3825 = vsel %vm3802, %v3822, %v3824
        %v3826 = vrot.slane %v3035, 3
        %v3827 = vsel %vm3802, %v3824, %v3826
        %v3828 = vrot.slane %v3036, 3
        %v3829 = vsel %vm3802, %v3826, %v3828
        %v3830 = vrot.slane %v3037, 3
        %v3831 = vsel %vm3802, %v3828, %v3830
        %v3832 = vrot.slane %v3038, 3
        %v3833 = vsel %vm3802, %v3830, %v3832
        %v3834 = vrot.slane %v3039, 3
        %v3835 = vsel %vm3802, %v3832, %v3834
        %v3836 = vrot.slane %v3040, 3
        %v3837 = vsel %vm3802, %v3834, %v3836
        %v3838 = vrot.slane %v3354, 3
        %v3839 = vsel %vm3802, %v3836, %v3838
        %v3841 = vsel %vm573, %v3805, 0
        %v3844 = vsel %vm573, %v3807, 0
        %v3847 = vsel %vm573, %v3809, 0
        %v3850 = vsel %vm573, %v3811, 0
        %v3853 = vsel %vm573, %v3813, 0
        %v3856 = vsel %vm573, %v3815, 0
        %v3859 = vsel %vm573, %v3817, 0
        %v3862 = vsel %vm573, %v3819, 0
        %v3865 = vsel %vm573, %v3821, 0
        %v3868 = vsel %vm573, %v3823, 0
        %v3871 = vsel %vm573, %v3825, 0
        %v3874 = vsel %vm573, %v3827, 0
        %v3877 = vsel %vm573, %v3829, 0
        %v3880 = vsel %vm573, %v3831, 0
        %v3883 = vsel %vm573, %v3833, 0
        %v3886 = vsel %vm573, %v3835, 0
        %v3889 = vsel %vm573, %v3837, 0
        %v3892 = vsel %vm573, %v3839, 0
        %v3895 = vsel %vm628, %v3798, 0
        %3897 = vmatprep.subr.bf16.mxu0 0
        %3898 = vmatpush1.bf16.msra.mxu0 %v3895
        %3899 = vmatprep.subr.bf16.mxu0 0
        %3900 = vmatpush1.bf16.msra.mxu0 0
        %3901 = vmatprep.subr.bf16.mxu0 0
        %3902 = vmatpush1.bf16.msra.mxu0 0
        %3903 = vmatprep.subr.bf16.mxu0 0
        %3904 = vmatpush1.bf16.msra.mxu0 0
        %3905 = vmatprep.subr.bf16.mxu0 0
        %3906 = vmatpush1.bf16.msra.mxu0 0
        %3907 = vmatprep.subr.bf16.mxu0 0
        %3908 = vmatpush1.bf16.msra.mxu0 0
        %3909 = vmatprep.subr.bf16.mxu0 0
        %3910 = vmatpush1.bf16.msra.mxu0 0
        %3911 = vmatprep.subr.bf16.mxu0 0
        %3912 = vmatpush1.bf16.msra.mxu0 0
        %3913 = vmatprep.subr.bf16.mxu0 0
        %3914 = vmatpush1.bf16.msra.mxu0 0
        %3915 = vmatprep.subr.bf16.mxu0 0
        %3916 = vmatpush1.bf16.msra.mxu0 0
        %3917 = vmatprep.subr.bf16.mxu0 0
        %3918 = vmatpush1.bf16.msra.mxu0 0
        %3919 = vmatprep.subr.bf16.mxu0 0
        %3920 = vmatpush1.bf16.msra.mxu0 0
        %3921 = vmatprep.subr.bf16.mxu0 0
        %3922 = vmatpush1.bf16.msra.mxu0 0
        %3923 = vmatprep.subr.bf16.mxu0 0
        %3924 = vmatpush1.bf16.msra.mxu0 0
        %3925 = vmatprep.subr.bf16.mxu0 0
        %3926 = vmatpush1.bf16.msra.mxu0 0
        %3927 = vmatprep.subr.bf16.mxu0 0
        %3928 = vmatpush1.bf16.msra.mxu0 0
        %3929 = vmatprep.mubr.bf16.mxu0 0
        %3930 = vmatmul.mubr.bf16.gmra.mrb[0].mxu0 %v3841
        %v3931 = vpop.f32.mrb[0].mxu0
        %v3932 = vadd.f32 0.0, %v3931
        %v3933 = vpop.f32.mrb[0].mxu0
        %v3934 = vpop.f32.mrb[0].mxu0
        %v3935 = vadd.f32 0.0, %v3934
        %v3936 = vpop.f32.mrb[0].mxu0
        %3937 = vmatprep.mubr.bf16.mxu0 0
        %3938 = vmatmul.mubr.bf16.gmra.mrb[0].mxu0 %v3844
        %v3939 = vpop.f32.mrb[0].mxu0
        %v3940 = vadd.f32 0.0, %v3939
        %v3941 = vpop.f32.mrb[0].mxu0
        %v3942 = vpop.f32.mrb[0].mxu0
        %v3943 = vadd.f32 0.0, %v3942
        %v3944 = vpop.f32.mrb[0].mxu0
        %3945 = vmatprep.mubr.bf16.mxu0 0
        %3946 = vmatmul.mubr.bf16.gmra.mrb[0].mxu0 %v3847
        %v3947 = vpop.f32.mrb[0].mxu0
        %v3948 = vadd.f32 0.0, %v3947
        %v3949 = vpop.f32.mrb[0].mxu0
        %v3950 = vpop.f32.mrb[0].mxu0
        %v3951 = vadd.f32 0.0, %v3950
        %v3952 = vpop.f32.mrb[0].mxu0
        %3953 = vmatprep.mubr.bf16.mxu0 0
        %3954 = vmatmul.mubr.bf16.gmra.mrb[0].mxu0 %v3850
        %v3955 = vpop.f32.mrb[0].mxu0
        %v3956 = vadd.f32 0.0, %v3955
        %v3957 = vpop.f32.mrb[0].mxu0
        %v3958 = vpop.f32.mrb[0].mxu0
        %v3959 = vadd.f32 0.0, %v3958
        %v3960 = vpop.f32.mrb[0].mxu0
        %3961 = vmatprep.mubr.bf16.mxu0 0
        %3962 = vmatmul.mubr.bf16.gmra.mrb[0].mxu0 %v3853
        %v3963 = vpop.f32.mrb[0].mxu0
        %v3964 = vadd.f32 0.0, %v3963
        %v3965 = vpop.f32.mrb[0].mxu0
        %v3966 = vpop.f32.mrb[0].mxu0
        %v3967 = vadd.f32 0.0, %v3966
        %v3968 = vpop.f32.mrb[0].mxu0
        %3969 = vmatprep.mubr.bf16.mxu0 0
        %3970 = vmatmul.mubr.bf16.gmra.mrb[0].mxu0 %v3856
        %v3971 = vpop.f32.mrb[0].mxu0
        %v3972 = vadd.f32 0.0, %v3971
        %v3973 = vpop.f32.mrb[0].mxu0
        %v3974 = vpop.f32.mrb[0].mxu0
        %v3975 = vadd.f32 0.0, %v3974
        %v3976 = vpop.f32.mrb[0].mxu0
        %3977 = vmatprep.mubr.bf16.mxu0 0
        %3978 = vmatmul.mubr.bf16.gmra.mrb[0].mxu0 %v3859
        %v3979 = vpop.f32.mrb[0].mxu0
        %v3980 = vadd.f32 0.0, %v3979
        %v3981 = vpop.f32.mrb[0].mxu0
        %v3982 = vpop.f32.mrb[0].mxu0
        %v3983 = vadd.f32 0.0, %v3982
        %v3984 = vpop.f32.mrb[0].mxu0
        %3985 = vmatprep.mubr.bf16.mxu0 0
        %3986 = vmatmul.mubr.bf16.gmra.mrb[0].mxu0 %v3862
        %v3987 = vpop.f32.mrb[0].mxu0
        %v3988 = vadd.f32 0.0, %v3987
        %v3989 = vpop.f32.mrb[0].mxu0
        %v3990 = vpop.f32.mrb[0].mxu0
        %v3991 = vadd.f32 0.0, %v3990
        %v3992 = vpop.f32.mrb[0].mxu0
        %3993 = vmatprep.mubr.bf16.mxu0 0
        %3994 = vmatmul.mubr.bf16.gmra.mrb[0].mxu0 %v3865
        %v3995 = vpop.f32.mrb[0].mxu0
        %v3996 = vadd.f32 0.0, %v3995
        %v3997 = vpop.f32.mrb[0].mxu0
        %v3998 = vpop.f32.mrb[0].mxu0
        %v3999 = vadd.f32 0.0, %v3998
        %v4000 = vpop.f32.mrb[0].mxu0
        %4001 = vmatprep.mubr.bf16.mxu0 0
        %4002 = vmatmul.mubr.bf16.gmra.mrb[0].mxu0 %v3868
        %v4003 = vpop.f32.mrb[0].mxu0
        %v4004 = vadd.f32 0.0, %v4003
        %v4005 = vpop.f32.mrb[0].mxu0
        %v4006 = vpop.f32.mrb[0].mxu0
        %v4007 = vadd.f32 0.0, %v4006
        %v4008 = vpop.f32.mrb[0].mxu0
        %4009 = vmatprep.mubr.bf16.mxu0 0
        %4010 = vmatmul.mubr.bf16.gmra.mrb[0].mxu0 %v3871
        %v4011 = vpop.f32.mrb[0].mxu0
        %v4012 = vadd.f32 0.0, %v4011
        %v4013 = vpop.f32.mrb[0].mxu0
        %v4014 = vpop.f32.mrb[0].mxu0
        %v4015 = vadd.f32 0.0, %v4014
        %v4016 = vpop.f32.mrb[0].mxu0
        %4017 = vmatprep.mubr.bf16.mxu0 0
        %4018 = vmatmul.mubr.bf16.gmra.mrb[0].mxu0 %v3874
        %v4019 = vpop.f32.mrb[0].mxu0
        %v4020 = vadd.f32 0.0, %v4019
        %v4021 = vpop.f32.mrb[0].mxu0
        %v4022 = vpop.f32.mrb[0].mxu0
        %v4023 = vadd.f32 0.0, %v4022
        %v4024 = vpop.f32.mrb[0].mxu0
        %4025 = vmatprep.mubr.bf16.mxu0 0
        %4026 = vmatmul.mubr.bf16.gmra.mrb[0].mxu0 %v3877
        %v4027 = vpop.f32.mrb[0].mxu0
        %v4028 = vadd.f32 0.0, %v4027
        %v4029 = vpop.f32.mrb[0].mxu0
        %v4030 = vpop.f32.mrb[0].mxu0
        %v4031 = vadd.f32 0.0, %v4030
        %v4032 = vpop.f32.mrb[0].mxu0
        %4033 = vmatprep.mubr.bf16.mxu0 0
        %4034 = vmatmul.mubr.bf16.gmra.mrb[0].mxu0 %v3880
        %v4035 = vpop.f32.mrb[0].mxu0
        %v4036 = vadd.f32 0.0, %v4035
        %v4037 = vpop.f32.mrb[0].mxu0
        %v4038 = vpop.f32.mrb[0].mxu0
        %v4039 = vadd.f32 0.0, %v4038
        %v4040 = vpop.f32.mrb[0].mxu0
        %4041 = vmatprep.mubr.bf16.mxu0 0
        %4042 = vmatmul.mubr.bf16.gmra.mrb[0].mxu0 %v3883
        %v4043 = vpop.f32.mrb[0].mxu0
        %v4044 = vadd.f32 0.0, %v4043
        %v4045 = vpop.f32.mrb[0].mxu0
        %v4046 = vpop.f32.mrb[0].mxu0
        %v4047 = vadd.f32 0.0, %v4046
        %v4048 = vpop.f32.mrb[0].mxu0
        %4049 = vmatprep.mubr.bf16.mxu0 0
        %4050 = vmatmul.mubr.bf16.gmra.mrb[0].mxu0 %v3886
        %v4051 = vpop.f32.mrb[0].mxu0
        %v4052 = vadd.f32 0.0, %v4051
        %v4053 = vpop.f32.mrb[0].mxu0
        %v4054 = vpop.f32.mrb[0].mxu0
        %v4055 = vadd.f32 0.0, %v4054
        %v4056 = vpop.f32.mrb[0].mxu0
        %4057 = vmatprep.mubr.bf16.mxu0 0
        %4058 = vmatmul.mubr.bf16.gmra.mrb[0].mxu0 %v3889
        %v4059 = vpop.f32.mrb[0].mxu0
        %v4060 = vadd.f32 0.0, %v4059
        %v4061 = vpop.f32.mrb[0].mxu0
        %v4062 = vpop.f32.mrb[0].mxu0
        %v4063 = vadd.f32 0.0, %v4062
        %v4064 = vpop.f32.mrb[0].mxu0
        %4065 = vmatprep.mubr.bf16.mxu0 0
        %4066 = vmatmul.mubr.bf16.gmra.mrb[0].mxu0 %v3892
        %v4067 = vpop.f32.mrb[0].mxu0
        %v4068 = vadd.f32 0.0, %v4067
        %v4069 = vpop.f32.mrb[0].mxu0
        %v4070 = vpop.f32.mrb[0].mxu0
        %v4071 = vadd.f32 0.0, %v4070
        %v4072 = vpop.f32.mrb[0].mxu0
        %4073 = vdwg.mxu0
        %v4074 = vadd.f32 %v3760, %v3932
        %v4075 = vadd.f32 %v3761, %v3935
        %v4076 = vadd.f32 %v3762, %v3940
        %v4077 = vadd.f32 %v3763, %v3943
        %v4078 = vadd.f32 %v3764, %v3948
        %v4079 = vadd.f32 %v3765, %v3951
        %v4080 = vadd.f32 %v3766, %v3956
        %v4081 = vadd.f32 %v3767, %v3959
        %v4082 = vadd.f32 %v3768, %v3964
        %v4083 = vadd.f32 %v3769, %v3967
        %v4084 = vadd.f32 %v3770, %v3972
        %v4085 = vadd.f32 %v3771, %v3975
        %v4086 = vadd.f32 %v3772, %v3980
        %v4087 = vadd.f32 %v3773, %v3983
        %v4088 = vadd.f32 %v3774, %v3988
        %v4089 = vadd.f32 %v3775, %v3991
        %v4090 = vadd.f32 %v3776, %v3996
        %v4091 = vadd.f32 %v3777, %v3999
        %v4092 = vadd.f32 %v3778, %v4004
        %v4093 = vadd.f32 %v3779, %v4007
        %v4094 = vadd.f32 %v3780, %v4012
        %v4095 = vadd.f32 %v3781, %v4015
        %v4096 = vadd.f32 %v3782, %v4020
        %v4097 = vadd.f32 %v3783, %v4023
        %v4098 = vadd.f32 %v3784, %v4028
        %v4099 = vadd.f32 %v3785, %v4031
        %v4100 = vadd.f32 %v3786, %v4036
        %v4101 = vadd.f32 %v3787, %v4039
        %v4102 = vadd.f32 %v3788, %v4044
        %v4103 = vadd.f32 %v3789, %v4047
        %v4104 = vadd.f32 %v3790, %v4052
        %v4105 = vadd.f32 %v3791, %v4055
        %v4106 = vadd.f32 %v3792, %v4060
        %v4107 = vadd.f32 %v3793, %v4063
        %v4108 = vadd.f32 %v3794, %v4068
        %v4109 = vadd.f32 %v3795, %v4071
        %vm4110 = vcmask 31744
        %4111 = vst.msk [vmem:[#allocation2] sm:$0xff] %vm4110, %v4074
        %4112 = vst.msk [vmem:[#allocation2 + $0x8] sm:$0xff] %vm4110, %v4075
        %4113 = vst.msk [vmem:[#allocation2 + $0x10] sm:$0xff] %vm4110, %v4076
        %4114 = vst.msk [vmem:[#allocation2 + $0x18] sm:$0xff] %vm4110, %v4077
        %4115 = vst.msk [vmem:[#allocation2 + $0x20] sm:$0xff] %vm4110, %v4078
        %4116 = vst.msk [vmem:[#allocation2 + $0x28] sm:$0xff] %vm4110, %v4079
        %4117 = vst.msk [vmem:[#allocation2 + $0x30] sm:$0xff] %vm4110, %v4080
        %4118 = vst.msk [vmem:[#allocation2 + $0x38] sm:$0xff] %vm4110, %v4081
        %4119 = vst.msk [vmem:[#allocation2 + $0x40] sm:$0xff] %vm4110, %v4082
        %4120 = vst.msk [vmem:[#allocation2 + $0x48] sm:$0xff] %vm4110, %v4083
        %4121 = vst.msk [vmem:[#allocation2 + $0x50] sm:$0xff] %vm4110, %v4084
        %4122 = vst.msk [vmem:[#allocation2 + $0x58] sm:$0xff] %vm4110, %v4085
        %4123 = vst.msk [vmem:[#allocation2 + $0x60] sm:$0xff] %vm4110, %v4086
        %4124 = vst.msk [vmem:[#allocation2 + $0x68] sm:$0xff] %vm4110, %v4087
        %4125 = vst.msk [vmem:[#allocation2 + $0x70] sm:$0xff] %vm4110, %v4088
        %4126 = vst.msk [vmem:[#allocation2 + $0x78] sm:$0xff] %vm4110, %v4089
        %4127 = vst.msk [vmem:[#allocation2 + $0x80] sm:$0xff] %vm4110, %v4090
        %4128 = vst.msk [vmem:[#allocation2 + $0x88] sm:$0xff] %vm4110, %v4091
        %4129 = vst.msk [vmem:[#allocation2 + $0x90] sm:$0xff] %vm4110, %v4092
        %4130 = vst.msk [vmem:[#allocation2 + $0x98] sm:$0xff] %vm4110, %v4093
        %4131 = vst.msk [vmem:[#allocation2 + $0xa0] sm:$0xff] %vm4110, %v4094
        %4132 = vst.msk [vmem:[#allocation2 + $0xa8] sm:$0xff] %vm4110, %v4095
        %4133 = vst.msk [vmem:[#allocation2 + $0xb0] sm:$0xff] %vm4110, %v4096
        %4134 = vst.msk [vmem:[#allocation2 + $0xb8] sm:$0xff] %vm4110, %v4097
        %4135 = vst.msk [vmem:[#allocation2 + $0xc0] sm:$0xff] %vm4110, %v4098
        %4136 = vst.msk [vmem:[#allocation2 + $0xc8] sm:$0xff] %vm4110, %v4099
        %4137 = vst.msk [vmem:[#allocation2 + $0xd0] sm:$0xff] %vm4110, %v4100
        %4138 = vst.msk [vmem:[#allocation2 + $0xd8] sm:$0xff] %vm4110, %v4101
        %4139 = vst.msk [vmem:[#allocation2 + $0xe0] sm:$0xff] %vm4110, %v4102
        %4140 = vst.msk [vmem:[#allocation2 + $0xe8] sm:$0xff] %vm4110, %v4103
        %4141 = vst.msk [vmem:[#allocation2 + $0xf0] sm:$0xff] %vm4110, %v4104
        %4142 = vst.msk [vmem:[#allocation2 + $0xf8] sm:$0xff] %vm4110, %v4105
        %4143 = vst.msk [vmem:[#allocation2 + $0x100] sm:$0xff] %vm4110, %v4106
        %4144 = vst.msk [vmem:[#allocation2 + $0x108] sm:$0xff] %vm4110, %v4107
        %4145 = vst.msk [vmem:[#allocation2 + $0x110] sm:$0xff] %vm4110, %v4108
        %4146 = vst.msk [vmem:[#allocation2 + $0x118] sm:$0xff] %vm4110, %v4109
      $region48: #{pyramid_pooling_module.3} parent=39 // pred_fallthru
        _
      %p4147 = scmp.eq.s32.totalorder %s23, 1
      // Predicated region
      $region49: #{pyramid_pooling_module.3} parent=39 // pred_check
        %p4148 = pneg %p4147
      $region50: #{pyramid_pooling_module.3} parent=39 // pred_check_branch
        %4150 = sbr.rel (%p4148) target = $region52
      $region51: #{pyramid_pooling_module.3} parent=39 // pred_region
        %v4151 = vld [vmem:[#allocation2] sm:$0xff]
        %v4152 = vld [vmem:[#allocation2 + $0x8] sm:$0xff]
        %v4153 = vld [vmem:[#allocation2 + $0x10] sm:$0xff]
        %v4154 = vld [vmem:[#allocation2 + $0x18] sm:$0xff]
        %v4155 = vld [vmem:[#allocation2 + $0x20] sm:$0xff]
        %v4156 = vld [vmem:[#allocation2 + $0x28] sm:$0xff]
        %v4157 = vld [vmem:[#allocation2 + $0x30] sm:$0xff]
        %v4158 = vld [vmem:[#allocation2 + $0x38] sm:$0xff]
        %v4159 = vld [vmem:[#allocation2 + $0x40] sm:$0xff]
        %v4160 = vld [vmem:[#allocation2 + $0x48] sm:$0xff]
        %v4161 = vld [vmem:[#allocation2 + $0x50] sm:$0xff]
        %v4162 = vld [vmem:[#allocation2 + $0x58] sm:$0xff]
        %v4163 = vld [vmem:[#allocation2 + $0x60] sm:$0xff]
        %v4164 = vld [vmem:[#allocation2 + $0x68] sm:$0xff]
        %v4165 = vld [vmem:[#allocation2 + $0x70] sm:$0xff]
        %v4166 = vld [vmem:[#allocation2 + $0x78] sm:$0xff]
        %v4167 = vld [vmem:[#allocation2 + $0x80] sm:$0xff]
        %v4168 = vld [vmem:[#allocation2 + $0x88] sm:$0xff]
        %v4169 = vld [vmem:[#allocation2 + $0x90] sm:$0xff]
        %v4170 = vld [vmem:[#allocation2 + $0x98] sm:$0xff]
        %v4171 = vld [vmem:[#allocation2 + $0xa0] sm:$0xff]
        %v4172 = vld [vmem:[#allocation2 + $0xa8] sm:$0xff]
        %v4173 = vld [vmem:[#allocation2 + $0xb0] sm:$0xff]
        %v4174 = vld [vmem:[#allocation2 + $0xb8] sm:$0xff]
        %v4175 = vld [vmem:[#allocation2 + $0xc0] sm:$0xff]
        %v4176 = vld [vmem:[#allocation2 + $0xc8] sm:$0xff]
        %v4177 = vld [vmem:[#allocation2 + $0xd0] sm:$0xff]
        %v4178 = vld [vmem:[#allocation2 + $0xd8] sm:$0xff]
        %v4179 = vld [vmem:[#allocation2 + $0xe0] sm:$0xff]
        %v4180 = vld [vmem:[#allocation2 + $0xe8] sm:$0xff]
        %v4181 = vld [vmem:[#allocation2 + $0xf0] sm:$0xff]
        %v4182 = vld [vmem:[#allocation2 + $0xf8] sm:$0xff]
        %v4183 = vld [vmem:[#allocation2 + $0x100] sm:$0xff]
        %v4184 = vld [vmem:[#allocation2 + $0x108] sm:$0xff]
        %v4185 = vld [vmem:[#allocation2 + $0x110] sm:$0xff]
        %v4186 = vld [vmem:[#allocation2 + $0x118] sm:$0xff]
        %v4187 = vld [vmem:[%s2] sm:$0xff]
        %v4188 = vld [vmem:[%s2 + $0x8] sm:$0xff]
        %v4189 = vld [vmem:[%s2 + $0x10] sm:$0xff]
        %v4190 = vld [vmem:[%s2 + $0x18] sm:$0xff]
        %v4191 = vld [vmem:[%s2 + $0x20] sm:$0xff]
        %v4192 = vld [vmem:[%s2 + $0x28] sm:$0xff]
        %v4193 = vld [vmem:[%s2 + $0x30] sm:$0xff]
        %v4194 = vld [vmem:[%s2 + $0x38] sm:$0xff]
        %v4195 = vld [vmem:[%s2 + $0x40] sm:$0xff]
        %v4196 = vld [vmem:[%s2 + $0x48] sm:$0xff]
        %v4197 = vld [vmem:[%s2 + $0x50] sm:$0xff]
        %v4198 = vld [vmem:[%s2 + $0x58] sm:$0xff]
        %v4199 = vld [vmem:[%s2 + $0x60] sm:$0xff]
        %v4200 = vld [vmem:[%s2 + $0x68] sm:$0xff]
        %v4201 = vld [vmem:[%s2 + $0x70] sm:$0xff]
        %v4202 = vld [vmem:[%s2 + $0x78] sm:$0xff]
        %v4203 = vld [vmem:[%s2 + $0x80] sm:$0xff]
        %v4204 = vld [vmem:[%s2 + $0x88] sm:$0xff]
        %v4205 = vld [vmem:[%s2 + $0x90] sm:$0xff]
        %v4206 = vld [vmem:[%s2 + $0x98] sm:$0xff]
        %v4207 = vld [vmem:[%s2 + $0xa0] sm:$0xff]
        %v4208 = vld [vmem:[%s2 + $0xa8] sm:$0xff]
        %v4209 = vld [vmem:[%s2 + $0xb0] sm:$0xff]
        %v4210 = vld [vmem:[%s2 + $0xb8] sm:$0xff]
        %v4211 = vld [vmem:[%s2 + $0xc0] sm:$0xff]
        %v4212 = vld [vmem:[%s2 + $0xc8] sm:$0xff]
        %v4213 = vld [vmem:[%s2 + $0xd0] sm:$0xff]
        %v4214 = vld [vmem:[%s2 + $0xd8] sm:$0xff]
        %v4215 = vld [vmem:[%s2 + $0xe0] sm:$0xff]
        %v4216 = vld [vmem:[%s2 + $0xe8] sm:$0xff]
        %v4217 = vld [vmem:[%s2 + $0xf0] sm:$0xff]
        %v4218 = vld [vmem:[%s2 + $0xf8] sm:$0xff]
        %v4219 = vld [vmem:[%s2 + $0x100] sm:$0xff]
        %v4220 = vld [vmem:[%s2 + $0x108] sm:$0xff]
        %v4221 = vld [vmem:[%s2 + $0x110] sm:$0xff]
        %v4222 = vld [vmem:[%s2 + $0x118] sm:$0xff]
        %v4223 = vld [vmem:[%s2 + $0x120] sm:$0xff]
        %v4224 = vld [vmem:[%s2 + $0x128] sm:$0xff]
        %v4225 = vld [vmem:[%s2 + $0x130] sm:$0xff]
        %v4226 = vld [vmem:[%s2 + $0x138] sm:$0xff]
        %v4227 = vld [vmem:[%s2 + $0x140] sm:$0xff]
        %v4228 = vld [vmem:[%s2 + $0x148] sm:$0xff]
        %v4229 = vld [vmem:[%s2 + $0x150] sm:$0xff]
        %v4230 = vld [vmem:[%s2 + $0x158] sm:$0xff]
        %v4231 = vld [vmem:[%s2 + $0x160] sm:$0xff]
        %v4232 = vld [vmem:[%s2 + $0x168] sm:$0xff]
        %v4233 = vld [vmem:[%s2 + $0x170] sm:$0xff]
        %v4234 = vld [vmem:[%s2 + $0x178] sm:$0xff]
        %v4235 = vld [vmem:[%s2 + $0x180] sm:$0xff]
        %v4236 = vld [vmem:[%s2 + $0x188] sm:$0xff]
        %v4237 = vld [vmem:[%s2 + $0x190] sm:$0xff]
        %v4238 = vld [vmem:[%s2 + $0x198] sm:$0xff]
        %v4239 = vld [vmem:[%s2 + $0x1a0] sm:$0xff]
        %v4240 = vld [vmem:[%s2 + $0x1a8] sm:$0xff]
        %v4241 = vld [vmem:[%s2 + $0x1b0] sm:$0xff]
        %v4242 = vld [vmem:[%s2 + $0x1b8] sm:$0xff]
        %v4243 = vld [vmem:[%s2 + $0x1c0] sm:$0xff]
        %v4244 = vld [vmem:[%s2 + $0x1c8] sm:$0xff]
        %v4245 = vld [vmem:[%s2 + $0x1d0] sm:$0xff]
        %v4246 = vld [vmem:[%s2 + $0x1d8] sm:$0xff]
        %v4247 = vld [vmem:[%s2 + $0x1e0] sm:$0xff]
        %v4248 = vld [vmem:[%s2 + $0x1e8] sm:$0xff]
        %v4249 = vld [vmem:[%s2 + $0x1f0] sm:$0xff]
        %v4250 = vld [vmem:[%s2 + $0x1f8] sm:$0xff]
        %v4251 = vld [vmem:[%s2 + $0x200] sm:$0xff]
        %v4252 = vld [vmem:[%s2 + $0x208] sm:$0xff]
        %v4253 = vld [vmem:[%s2 + $0x210] sm:$0xff]
        %v4254 = vld [vmem:[%s2 + $0x218] sm:$0xff]
        %v4255 = vld [vmem:[%s2 + $0x220] sm:$0xff]
        %v4256 = vld [vmem:[%s2 + $0x228] sm:$0xff]
        %v4257 = vld [vmem:[%s2 + $0x230] sm:$0xff]
        %v4258 = vld [vmem:[%s2 + $0x238] sm:$0xff]
        %v4259 = vld [vmem:[%s2 + $0x240] sm:$0xff]
        %v4260 = vld [vmem:[%s2 + $0x248] sm:$0xff]
        %v4261 = vld [vmem:[%s2 + $0x250] sm:$0xff]
        %v4262 = vld [vmem:[%s2 + $0x258] sm:$0xff]
        %v4263 = vld [vmem:[%s2 + $0x260] sm:$0xff]
        %v4264 = vld [vmem:[%s2 + $0x268] sm:$0xff]
        %v4265 = vld [vmem:[%s2 + $0x270] sm:$0xff]
        %v4266 = vld [vmem:[%s2 + $0x278] sm:$0xff]
        %v4267 = vld [vmem:[%s2 + $0x280] sm:$0xff]
        %v4268 = vld [vmem:[%s2 + $0x288] sm:$0xff]
        %v4269 = vld [vmem:[%s2 + $0x290] sm:$0xff]
        %v4270 = vld [vmem:[%s2 + $0x298] sm:$0xff]
        %v4271 = vld [vmem:[%s2 + $0x2a0] sm:$0xff]
        %v4272 = vld [vmem:[%s2 + $0x2a8] sm:$0xff]
        %v4273 = vld [vmem:[%s2 + $0x2b0] sm:$0xff]
        %v4274 = vld [vmem:[%s2 + $0x2b8] sm:$0xff]
        %v4275 = vld [vmem:[%s2 + $0x2c0] sm:$0xff]
        %v4276 = vld [vmem:[%s2 + $0x2c8] sm:$0xff]
        %v4277 = vld [vmem:[%s2 + $0x2d0] sm:$0xff]
        %v4278 = vld [vmem:[%s2 + $0x2d8] sm:$0xff]
        %v4279 = vld [vmem:[%s2 + $0x2e0] sm:$0xff]
        %v4280 = vld [vmem:[%s2 + $0x2e8] sm:$0xff]
        %v4281 = vld [vmem:[%s2 + $0x2f0] sm:$0xff]
        %v4282 = vld [vmem:[%s2 + $0x2f8] sm:$0xff]
        %v4283 = vld [vmem:[%s2 + $0x300] sm:$0xff]
        %v4284 = vld [vmem:[%s2 + $0x308] sm:$0xff]
        %v4285 = vld [vmem:[%s2 + $0x310] sm:$0xff]
        %v4286 = vld [vmem:[%s2 + $0x318] sm:$0xff]
        %v4287 = vld [vmem:[%s2 + $0x320] sm:$0xff]
        %v4288 = vld [vmem:[%s2 + $0x328] sm:$0xff]
        %v4289 = vld [vmem:[%s2 + $0x330] sm:$0xff]
        %v4290 = vld [vmem:[%s2 + $0x338] sm:$0xff]
        %v4291 = vld [vmem:[%s2 + $0x340] sm:$0xff]
        %v4292 = vld [vmem:[%s2 + $0x348] sm:$0xff]
        %v4293 = vld [vmem:[%s2 + $0x350] sm:$0xff]
        %v4294 = vld [vmem:[%s2 + $0x358] sm:$0xff]
        %v4295 = vld [vmem:[%s352] sm:$0xf]
        %v4296 = vld [vmem:[%s352 + $0x4] sm:$0xf]
        %v4297 = vld [vmem:[%s352 + $0x8] sm:$0xf]
        %v4298 = vld [vmem:[%s352 + $0xc] sm:$0xf]
        %v4299 = vld [vmem:[%s352 + $0x10] sm:$0xf]
        %v4300 = vld [vmem:[%s352 + $0x14] sm:$0xf]
        %v4301 = vld [vmem:[%s352 + $0x18] sm:$0xf]
        %v4302 = vld [vmem:[%s352 + $0x1c] sm:$0xf]
        %v4303 = vld [vmem:[%s352 + $0x20] sm:$0xf]
        %v4304 = vld [vmem:[%s352 + $0x24] sm:$0xf]
        %v4305 = vld [vmem:[%s352 + $0x28] sm:$0xf]
        %v4306 = vld [vmem:[%s352 + $0x2c] sm:$0xf]
        %v4307 = vld [vmem:[%s352 + $0x30] sm:$0xf]
        %v4308 = vld [vmem:[%s352 + $0x34] sm:$0xf]
        %v4309 = vld [vmem:[%s352 + $0x38] sm:$0xf]
        %v4310 = vld [vmem:[%s352 + $0x3c] sm:$0xf]
        %v4311 = vld [vmem:[%s352 + $0x40] sm:$0xf]
        %v4312 = vld [vmem:[%s352 + $0x44] sm:$0xf]
        %v4313 = vld [vmem:[%s352 + $0x48] sm:$0xf]
        %v4314 = vld [vmem:[%s352 + $0x4c] sm:$0xf]
        %v4315 = vld [vmem:[%s352 + $0x50] sm:$0xf]
        %v4316 = vld [vmem:[%s352 + $0x54] sm:$0xf]
        %v4317 = vld [vmem:[%s352 + $0x58] sm:$0xf]
        %v4318 = vld [vmem:[%s352 + $0x5c] sm:$0xf]
        %v4319 = vld [vmem:[%s352 + $0x60] sm:$0xf]
        %v4320 = vld [vmem:[%s352 + $0x64] sm:$0xf]
        %v4321 = vld [vmem:[%s352 + $0x68] sm:$0xf]
        %v4322 = vld [vmem:[%s352 + $0x6c] sm:$0xf]
        %v4323 = vld [vmem:[%s352 + $0x70] sm:$0xf]
        %v4324 = vld [vmem:[%s352 + $0x74] sm:$0xf]
        %v4325 = vld [vmem:[%s352 + $0x78] sm:$0xf]
        %v4326 = vld [vmem:[%s352 + $0x7c] sm:$0xf]
        %v4327 = vld [vmem:[%s352 + $0x80] sm:$0xf]
        %v4328 = vld [vmem:[%s352 + $0x84] sm:$0xf]
        %v4329 = vld [vmem:[%s352 + $0x88] sm:$0xf]
        %v4330 = vld [vmem:[%s352 + $0x8c] sm:$0xf]
        %v4331 = vld [vmem:[%s352 + $0x90] sm:$0xf]
        %v4332 = vld [vmem:[%s352 + $0x94] sm:$0xf]
        %v4333 = vld [vmem:[%s352 + $0x98] sm:$0xf]
        %v4334 = vld [vmem:[%s352 + $0x9c] sm:$0xf]
        %v4335 = vld [vmem:[%s352 + $0xa0] sm:$0xf]
        %v4336 = vld [vmem:[%s352 + $0xa4] sm:$0xf]
        %v4337 = vld [vmem:[%s352 + $0xa8] sm:$0xf]
        %v4338 = vld [vmem:[%s352 + $0xac] sm:$0xf]
        %v4339 = vld [vmem:[%s352 + $0xb0] sm:$0xf]
        %v4340 = vld [vmem:[%s352 + $0xb4] sm:$0xf]
        %v4341 = vld [vmem:[%s352 + $0xb8] sm:$0xf]
        %v4342 = vld [vmem:[%s352 + $0xbc] sm:$0xf]
        %v4343 = vld [vmem:[%s352 + $0xc0] sm:$0xf]
        %v4344 = vld [vmem:[%s352 + $0xc4] sm:$0xf]
        %v4345 = vld [vmem:[%s352 + $0xc8] sm:$0xf]
        %v4346 = vld [vmem:[%s352 + $0xcc] sm:$0xf]
        %v4347 = vld [vmem:[%s352 + $0xd0] sm:$0xf]
        %v4348 = vld [vmem:[%s352 + $0xd4] sm:$0xf]
        %v4349 = vld [vmem:[%s352 + $0xd8] sm:$0xf]
        %v4350 = vld [vmem:[%s352 + $0xdc] sm:$0xf]
        %v4351 = vld [vmem:[%s352 + $0xe0] sm:$0xf]
        %v4352 = vld [vmem:[%s352 + $0xe4] sm:$0xf]
        %v4353 = vld [vmem:[%s352 + $0xe8] sm:$0xf]
        %v4354 = vld [vmem:[%s352 + $0xec] sm:$0xf]
        %v4355 = vld [vmem:[%s352 + $0xf0] sm:$0xf]
        %v4356 = vld [vmem:[%s352 + $0xf4] sm:$0xf]
        %v4357 = vld [vmem:[%s352 + $0xf8] sm:$0xf]
        %v4358 = vld [vmem:[%s352 + $0xfc] sm:$0xf]
        %v4359 = vld [vmem:[%s352 + $0x100] sm:$0xf]
        %v4360 = vld [vmem:[%s352 + $0x104] sm:$0xf]
        %v4361 = vld [vmem:[%s352 + $0x108] sm:$0xf]
        %v4362 = vld [vmem:[%s352 + $0x10c] sm:$0xf]
        %v4363 = vld [vmem:[%s352 + $0x110] sm:$0xf]
        %v4364 = vld [vmem:[%s352 + $0x114] sm:$0xf]
        %v4365 = vld [vmem:[%s352 + $0x118] sm:$0xf]
        %v4366 = vld [vmem:[%s352 + $0x11c] sm:$0xf]
        %v4367 = vld [vmem:[%s352 + $0x120] sm:$0xf]
        %v4368 = vld [vmem:[%s352 + $0x124] sm:$0xf]
        %v4369 = vld [vmem:[%s352 + $0x128] sm:$0xf]
        %v4370 = vld [vmem:[%s352 + $0x12c] sm:$0xf]
        %v4371 = vld [vmem:[%s352 + $0x130] sm:$0xf]
        %v4372 = vld [vmem:[%s352 + $0x134] sm:$0xf]
        %v4373 = vld [vmem:[%s352 + $0x138] sm:$0xf]
        %v4374 = vld [vmem:[%s352 + $0x13c] sm:$0xf]
        %v4375 = vld [vmem:[%s352 + $0x140] sm:$0xf]
        %v4484 = vunpack.c.l.b16 %v4187
        %v4485 = vunpack.c.h.b16 %v4187
        %v4486 = vunpack.c.l.b16 %v4188
        %v4487 = vunpack.c.h.b16 %v4188
        %v4488 = vunpack.c.l.b16 %v4189
        %v4489 = vunpack.c.h.b16 %v4189
        %v4490 = vunpack.c.l.b16 %v4190
        %v4491 = vunpack.c.h.b16 %v4190
        %v4492 = vunpack.c.l.b16 %v4191
        %v4493 = vunpack.c.h.b16 %v4191
        %v4494 = vunpack.c.l.b16 %v4192
        %v4495 = vunpack.c.h.b16 %v4192
        %v4496 = vunpack.c.l.b16 %v4193
        %v4497 = vunpack.c.h.b16 %v4193
        %v4498 = vunpack.c.l.b16 %v4194
        %v4499 = vunpack.c.h.b16 %v4194
        %v4500 = vunpack.c.l.b16 %v4195
        %v4501 = vunpack.c.h.b16 %v4195
        %v4502 = vunpack.c.l.b16 %v4196
        %v4503 = vunpack.c.h.b16 %v4196
        %v4504 = vunpack.c.l.b16 %v4197
        %v4505 = vunpack.c.h.b16 %v4197
        %v4506 = vunpack.c.l.b16 %v4198
        %v4507 = vunpack.c.h.b16 %v4198
        %v4508 = vunpack.c.l.b16 %v4199
        %v4509 = vunpack.c.h.b16 %v4199
        %v4510 = vunpack.c.l.b16 %v4200
        %v4511 = vunpack.c.h.b16 %v4200
        %v4512 = vunpack.c.l.b16 %v4201
        %v4513 = vunpack.c.h.b16 %v4201
        %v4514 = vunpack.c.l.b16 %v4202
        %v4515 = vunpack.c.h.b16 %v4202
        %v4516 = vunpack.c.l.b16 %v4203
        %v4517 = vunpack.c.h.b16 %v4203
        %v4518 = vunpack.c.l.b16 %v4204
        %v4519 = vunpack.c.h.b16 %v4204
        %v4520 = vunpack.c.l.b16 %v4205
        %v4521 = vunpack.c.h.b16 %v4205
        %v4522 = vunpack.c.l.b16 %v4206
        %v4523 = vunpack.c.h.b16 %v4206
        %v4524 = vunpack.c.l.b16 %v4207
        %v4525 = vunpack.c.h.b16 %v4207
        %v4526 = vunpack.c.l.b16 %v4208
        %v4527 = vunpack.c.h.b16 %v4208
        %v4528 = vunpack.c.l.b16 %v4209
        %v4529 = vunpack.c.h.b16 %v4209
        %v4530 = vunpack.c.l.b16 %v4210
        %v4531 = vunpack.c.h.b16 %v4210
        %v4532 = vunpack.c.l.b16 %v4211
        %v4533 = vunpack.c.h.b16 %v4211
        %v4534 = vunpack.c.l.b16 %v4212
        %v4535 = vunpack.c.h.b16 %v4212
        %v4536 = vunpack.c.l.b16 %v4213
        %v4537 = vunpack.c.h.b16 %v4213
        %v4538 = vunpack.c.l.b16 %v4214
        %v4539 = vunpack.c.h.b16 %v4214
        %v4540 = vunpack.c.l.b16 %v4215
        %v4541 = vunpack.c.h.b16 %v4215
        %v4542 = vunpack.c.l.b16 %v4216
        %v4543 = vunpack.c.h.b16 %v4216
        %v4544 = vunpack.c.l.b16 %v4217
        %v4545 = vunpack.c.h.b16 %v4217
        %v4546 = vunpack.c.l.b16 %v4218
        %v4547 = vunpack.c.h.b16 %v4218
        %v4548 = vunpack.c.l.b16 %v4219
        %v4549 = vunpack.c.h.b16 %v4219
        %v4550 = vunpack.c.l.b16 %v4220
        %v4551 = vunpack.c.h.b16 %v4220
        %v4552 = vunpack.c.l.b16 %v4221
        %v4553 = vunpack.c.h.b16 %v4221
        %v4554 = vunpack.c.l.b16 %v4222
        %v4555 = vunpack.c.h.b16 %v4222
        %v4556 = vunpack.c.l.b16 %v4223
        %v4557 = vunpack.c.h.b16 %v4223
        %v4558 = vunpack.c.l.b16 %v4224
        %v4559 = vunpack.c.h.b16 %v4224
        %v4560 = vunpack.c.l.b16 %v4225
        %v4561 = vunpack.c.h.b16 %v4225
        %v4562 = vunpack.c.l.b16 %v4226
        %v4563 = vunpack.c.h.b16 %v4226
        %v4564 = vunpack.c.l.b16 %v4227
        %v4565 = vunpack.c.h.b16 %v4227
        %v4566 = vunpack.c.l.b16 %v4228
        %v4567 = vunpack.c.h.b16 %v4228
        %v4568 = vunpack.c.l.b16 %v4229
        %v4569 = vunpack.c.h.b16 %v4229
        %v4570 = vunpack.c.l.b16 %v4230
        %v4571 = vunpack.c.h.b16 %v4230
        %v4572 = vunpack.c.l.b16 %v4231
        %v4573 = vunpack.c.h.b16 %v4231
        %v4574 = vunpack.c.l.b16 %v4232
        %v4575 = vunpack.c.h.b16 %v4232
        %v4576 = vunpack.c.l.b16 %v4233
        %v4577 = vunpack.c.h.b16 %v4233
        %v4578 = vunpack.c.l.b16 %v4234
        %v4579 = vunpack.c.h.b16 %v4234
        %v4580 = vunpack.c.l.b16 %v4235
        %v4581 = vunpack.c.h.b16 %v4235
        %v4582 = vunpack.c.l.b16 %v4236
        %v4583 = vunpack.c.h.b16 %v4236
        %v4584 = vunpack.c.l.b16 %v4237
        %v4585 = vunpack.c.h.b16 %v4237
        %v4586 = vunpack.c.l.b16 %v4238
        %v4587 = vunpack.c.h.b16 %v4238
        %v4588 = vunpack.c.l.b16 %v4239
        %v4589 = vunpack.c.h.b16 %v4239
        %v4590 = vunpack.c.l.b16 %v4240
        %v4591 = vunpack.c.h.b16 %v4240
        %v4592 = vunpack.c.l.b16 %v4241
        %v4593 = vunpack.c.h.b16 %v4241
        %v4594 = vunpack.c.l.b16 %v4242
        %v4595 = vunpack.c.h.b16 %v4242
        %v4596 = vunpack.c.l.b16 %v4243
        %v4597 = vunpack.c.h.b16 %v4243
        %v4598 = vunpack.c.l.b16 %v4244
        %v4599 = vunpack.c.h.b16 %v4244
        %v4600 = vunpack.c.l.b16 %v4245
        %v4601 = vunpack.c.h.b16 %v4245
        %v4602 = vunpack.c.l.b16 %v4246
        %v4603 = vunpack.c.h.b16 %v4246
        %v4604 = vunpack.c.l.b16 %v4247
        %v4605 = vunpack.c.h.b16 %v4247
        %v4606 = vunpack.c.l.b16 %v4248
        %v4607 = vunpack.c.h.b16 %v4248
        %v4608 = vunpack.c.l.b16 %v4249
        %v4609 = vunpack.c.h.b16 %v4249
        %v4610 = vunpack.c.l.b16 %v4250
        %v4611 = vunpack.c.h.b16 %v4250
        %v4612 = vunpack.c.l.b16 %v4251
        %v4613 = vunpack.c.h.b16 %v4251
        %v4614 = vunpack.c.l.b16 %v4252
        %v4615 = vunpack.c.h.b16 %v4252
        %v4616 = vunpack.c.l.b16 %v4253
        %v4617 = vunpack.c.h.b16 %v4253
        %v4618 = vunpack.c.l.b16 %v4254
        %v4619 = vunpack.c.h.b16 %v4254
        %v4620 = vunpack.c.l.b16 %v4255
        %v4621 = vunpack.c.h.b16 %v4255
        %v4622 = vunpack.c.l.b16 %v4256
        %v4623 = vunpack.c.h.b16 %v4256
        %v4624 = vunpack.c.l.b16 %v4257
        %v4625 = vunpack.c.h.b16 %v4257
        %v4626 = vunpack.c.l.b16 %v4258
        %v4627 = vunpack.c.h.b16 %v4258
        %v4628 = vunpack.c.l.b16 %v4259
        %v4629 = vunpack.c.h.b16 %v4259
        %v4630 = vunpack.c.l.b16 %v4260
        %v4631 = vunpack.c.h.b16 %v4260
        %v4632 = vunpack.c.l.b16 %v4261
        %v4633 = vunpack.c.h.b16 %v4261
        %v4634 = vunpack.c.l.b16 %v4262
        %v4635 = vunpack.c.h.b16 %v4262
        %v4636 = vunpack.c.l.b16 %v4263
        %v4637 = vunpack.c.h.b16 %v4263
        %v4638 = vunpack.c.l.b16 %v4264
        %v4639 = vunpack.c.h.b16 %v4264
        %v4640 = vunpack.c.l.b16 %v4265
        %v4641 = vunpack.c.h.b16 %v4265
        %v4642 = vunpack.c.l.b16 %v4266
        %v4643 = vunpack.c.h.b16 %v4266
        %v4644 = vunpack.c.l.b16 %v4267
        %v4645 = vunpack.c.h.b16 %v4267
        %v4646 = vunpack.c.l.b16 %v4268
        %v4647 = vunpack.c.h.b16 %v4268
        %v4648 = vunpack.c.l.b16 %v4269
        %v4649 = vunpack.c.h.b16 %v4269
        %v4650 = vunpack.c.l.b16 %v4270
        %v4651 = vunpack.c.h.b16 %v4270
        %v4652 = vunpack.c.l.b16 %v4271
        %v4653 = vunpack.c.h.b16 %v4271
        %v4654 = vunpack.c.l.b16 %v4272
        %v4655 = vunpack.c.h.b16 %v4272
        %v4656 = vunpack.c.l.b16 %v4273
        %v4657 = vunpack.c.h.b16 %v4273
        %v4658 = vunpack.c.l.b16 %v4274
        %v4659 = vunpack.c.h.b16 %v4274
        %v4660 = vunpack.c.l.b16 %v4275
        %v4661 = vunpack.c.h.b16 %v4275
        %v4662 = vunpack.c.l.b16 %v4276
        %v4663 = vunpack.c.h.b16 %v4276
        %v4664 = vunpack.c.l.b16 %v4277
        %v4665 = vunpack.c.h.b16 %v4277
        %v4666 = vunpack.c.l.b16 %v4278
        %v4667 = vunpack.c.h.b16 %v4278
        %v4668 = vunpack.c.l.b16 %v4279
        %v4669 = vunpack.c.h.b16 %v4279
        %v4670 = vunpack.c.l.b16 %v4280
        %v4671 = vunpack.c.h.b16 %v4280
        %v4672 = vunpack.c.l.b16 %v4281
        %v4673 = vunpack.c.h.b16 %v4281
        %v4674 = vunpack.c.l.b16 %v4282
        %v4675 = vunpack.c.h.b16 %v4282
        %v4676 = vunpack.c.l.b16 %v4283
        %v4677 = vunpack.c.h.b16 %v4283
        %v4678 = vunpack.c.l.b16 %v4284
        %v4679 = vunpack.c.h.b16 %v4284
        %v4680 = vunpack.c.l.b16 %v4285
        %v4681 = vunpack.c.h.b16 %v4285
        %v4682 = vunpack.c.l.b16 %v4286
        %v4683 = vunpack.c.h.b16 %v4286
        %v4684 = vunpack.c.l.b16 %v4287
        %v4685 = vunpack.c.h.b16 %v4287
        %v4686 = vunpack.c.l.b16 %v4288
        %v4687 = vunpack.c.h.b16 %v4288
        %v4688 = vunpack.c.l.b16 %v4289
        %v4689 = vunpack.c.h.b16 %v4289
        %v4690 = vunpack.c.l.b16 %v4290
        %v4691 = vunpack.c.h.b16 %v4290
        %v4692 = vunpack.c.l.b16 %v4291
        %v4693 = vunpack.c.h.b16 %v4291
        %v4694 = vunpack.c.l.b16 %v4292
        %v4695 = vunpack.c.h.b16 %v4292
        %v4696 = vunpack.c.l.b16 %v4293
        %v4697 = vunpack.c.h.b16 %v4293
        %v4698 = vunpack.c.l.b16 %v4294
        %v4699 = vunpack.c.h.b16 %v4294
        %v4700 = vpack.c.b16 %v4490, %v4484
        %v4701 = vpack.c.b16 %v4491, %v4485
        %v4702 = vpack.c.b16 %v4492, %v4486
        %v4703 = vpack.c.b16 %v4493, %v4487
        %v4704 = vpack.c.b16 %v4494, %v4488
        %v4705 = vpack.c.b16 %v4495, %v4489
        %v4706 = vpack.c.b16 %v4502, %v4496
        %v4707 = vpack.c.b16 %v4503, %v4497
        %v4708 = vpack.c.b16 %v4504, %v4498
        %v4709 = vpack.c.b16 %v4505, %v4499
        %v4710 = vpack.c.b16 %v4506, %v4500
        %v4711 = vpack.c.b16 %v4507, %v4501
        %v4712 = vpack.c.b16 %v4514, %v4508
        %v4713 = vpack.c.b16 %v4515, %v4509
        %v4714 = vpack.c.b16 %v4516, %v4510
        %v4715 = vpack.c.b16 %v4517, %v4511
        %v4716 = vpack.c.b16 %v4518, %v4512
        %v4717 = vpack.c.b16 %v4519, %v4513
        %v4718 = vpack.c.b16 %v4526, %v4520
        %v4719 = vpack.c.b16 %v4527, %v4521
        %v4720 = vpack.c.b16 %v4528, %v4522
        %v4721 = vpack.c.b16 %v4529, %v4523
        %v4722 = vpack.c.b16 %v4530, %v4524
        %v4723 = vpack.c.b16 %v4531, %v4525
        %v4724 = vpack.c.b16 %v4538, %v4532
        %v4725 = vpack.c.b16 %v4539, %v4533
        %v4726 = vpack.c.b16 %v4540, %v4534
        %v4727 = vpack.c.b16 %v4541, %v4535
        %v4728 = vpack.c.b16 %v4542, %v4536
        %v4729 = vpack.c.b16 %v4543, %v4537
        %v4730 = vpack.c.b16 %v4550, %v4544
        %v4731 = vpack.c.b16 %v4551, %v4545
        %v4732 = vpack.c.b16 %v4552, %v4546
        %v4733 = vpack.c.b16 %v4553, %v4547
        %v4734 = vpack.c.b16 %v4554, %v4548
        %v4735 = vpack.c.b16 %v4555, %v4549
        %v4736 = vpack.c.b16 %v4562, %v4556
        %v4737 = vpack.c.b16 %v4563, %v4557
        %v4738 = vpack.c.b16 %v4564, %v4558
        %v4739 = vpack.c.b16 %v4565, %v4559
        %v4740 = vpack.c.b16 %v4566, %v4560
        %v4741 = vpack.c.b16 %v4567, %v4561
        %v4742 = vpack.c.b16 %v4574, %v4568
        %v4743 = vpack.c.b16 %v4575, %v4569
        %v4744 = vpack.c.b16 %v4576, %v4570
        %v4745 = vpack.c.b16 %v4577, %v4571
        %v4746 = vpack.c.b16 %v4578, %v4572
        %v4747 = vpack.c.b16 %v4579, %v4573
        %v4748 = vpack.c.b16 %v4586, %v4580
        %v4749 = vpack.c.b16 %v4587, %v4581
        %v4750 = vpack.c.b16 %v4588, %v4582
        %v4751 = vpack.c.b16 %v4589, %v4583
        %v4752 = vpack.c.b16 %v4590, %v4584
        %v4753 = vpack.c.b16 %v4591, %v4585
        %v4754 = vpack.c.b16 %v4598, %v4592
        %v4755 = vpack.c.b16 %v4599, %v4593
        %v4756 = vpack.c.b16 %v4600, %v4594
        %v4757 = vpack.c.b16 %v4601, %v4595
        %v4758 = vpack.c.b16 %v4602, %v4596
        %v4759 = vpack.c.b16 %v4603, %v4597
        %v4760 = vpack.c.b16 %v4610, %v4604
        %v4761 = vpack.c.b16 %v4611, %v4605
        %v4762 = vpack.c.b16 %v4612, %v4606
        %v4763 = vpack.c.b16 %v4613, %v4607
        %v4764 = vpack.c.b16 %v4614, %v4608
        %v4765 = vpack.c.b16 %v4615, %v4609
        %v4766 = vpack.c.b16 %v4622, %v4616
        %v4767 = vpack.c.b16 %v4623, %v4617
        %v4768 = vpack.c.b16 %v4624, %v4618
        %v4769 = vpack.c.b16 %v4625, %v4619
        %v4770 = vpack.c.b16 %v4626, %v4620
        %v4771 = vpack.c.b16 %v4627, %v4621
        %v4772 = vpack.c.b16 %v4634, %v4628
        %v4773 = vpack.c.b16 %v4635, %v4629
        %v4774 = vpack.c.b16 %v4636, %v4630
        %v4775 = vpack.c.b16 %v4637, %v4631
        %v4776 = vpack.c.b16 %v4638, %v4632
        %v4777 = vpack.c.b16 %v4639, %v4633
        %v4778 = vpack.c.b16 %v4646, %v4640
        %v4779 = vpack.c.b16 %v4647, %v4641
        %v4780 = vpack.c.b16 %v4648, %v4642
        %v4781 = vpack.c.b16 %v4649, %v4643
        %v4782 = vpack.c.b16 %v4650, %v4644
        %v4783 = vpack.c.b16 %v4651, %v4645
        %v4784 = vpack.c.b16 %v4658, %v4652
        %v4785 = vpack.c.b16 %v4659, %v4653
        %v4786 = vpack.c.b16 %v4660, %v4654
        %v4787 = vpack.c.b16 %v4661, %v4655
        %v4788 = vpack.c.b16 %v4662, %v4656
        %v4789 = vpack.c.b16 %v4663, %v4657
        %v4790 = vpack.c.b16 %v4670, %v4664
        %v4791 = vpack.c.b16 %v4671, %v4665
        %v4792 = vpack.c.b16 %v4672, %v4666
        %v4793 = vpack.c.b16 %v4673, %v4667
        %v4794 = vpack.c.b16 %v4674, %v4668
        %v4795 = vpack.c.b16 %v4675, %v4669
        %v4796 = vpack.c.b16 %v4682, %v4676
        %v4797 = vpack.c.b16 %v4683, %v4677
        %v4798 = vpack.c.b16 %v4684, %v4678
        %v4799 = vpack.c.b16 %v4685, %v4679
        %v4800 = vpack.c.b16 %v4686, %v4680
        %v4801 = vpack.c.b16 %v4687, %v4681
        %v4802 = vpack.c.b16 %v4694, %v4688
        %v4803 = vpack.c.b16 %v4695, %v4689
        %v4804 = vpack.c.b16 %v4696, %v4690
        %v4805 = vpack.c.b16 %v4697, %v4691
        %v4806 = vpack.c.b16 %v4698, %v4692
        %v4807 = vpack.c.b16 %v4699, %v4693
        %v4979 = vunpack.c.l.b16 %v4295
        %v4980 = vunpack.c.l.b16 %v4296
        %v4981 = vunpack.c.l.b16 %v4297
        %v4982 = vunpack.c.l.b16 %v4298
        %v4983 = vunpack.c.l.b16 %v4299
        %v4984 = vunpack.c.l.b16 %v4300
        %v4985 = vunpack.c.l.b16 %v4301
        %v4986 = vunpack.c.l.b16 %v4302
        %v4987 = vunpack.c.l.b16 %v4303
        %v4988 = vunpack.c.l.b16 %v4304
        %v4989 = vunpack.c.l.b16 %v4305
        %v4990 = vunpack.c.l.b16 %v4306
        %v4991 = vunpack.c.l.b16 %v4307
        %v4992 = vunpack.c.l.b16 %v4308
        %v4993 = vunpack.c.l.b16 %v4309
        %v4994 = vunpack.c.l.b16 %v4310
        %v4995 = vunpack.c.l.b16 %v4311
        %v4996 = vunpack.c.l.b16 %v4312
        %v4997 = vunpack.c.l.b16 %v4313
        %v4998 = vunpack.c.l.b16 %v4314
        %v4999 = vunpack.c.l.b16 %v4315
        %v5000 = vunpack.c.l.b16 %v4316
        %v5001 = vunpack.c.l.b16 %v4317
        %v5002 = vunpack.c.l.b16 %v4318
        %v5003 = vunpack.c.l.b16 %v4319
        %v5004 = vunpack.c.l.b16 %v4320
        %v5005 = vunpack.c.l.b16 %v4321
        %v5006 = vunpack.c.l.b16 %v4322
        %v5007 = vunpack.c.l.b16 %v4323
        %v5008 = vunpack.c.l.b16 %v4324
        %v5009 = vunpack.c.l.b16 %v4325
        %v5010 = vunpack.c.l.b16 %v4326
        %v5011 = vunpack.c.l.b16 %v4327
        %v5012 = vunpack.c.l.b16 %v4328
        %v5013 = vunpack.c.l.b16 %v4329
        %v5014 = vunpack.c.l.b16 %v4330
        %v5015 = vunpack.c.l.b16 %v4331
        %v5016 = vunpack.c.l.b16 %v4332
        %v5017 = vunpack.c.l.b16 %v4333
        %v5018 = vunpack.c.l.b16 %v4334
        %v5019 = vunpack.c.l.b16 %v4335
        %v5020 = vunpack.c.l.b16 %v4336
        %v5021 = vunpack.c.l.b16 %v4337
        %v5022 = vunpack.c.l.b16 %v4338
        %v5023 = vunpack.c.l.b16 %v4339
        %v5024 = vunpack.c.l.b16 %v4340
        %v5025 = vunpack.c.l.b16 %v4341
        %v5026 = vunpack.c.l.b16 %v4342
        %v5027 = vunpack.c.l.b16 %v4343
        %v5028 = vunpack.c.l.b16 %v4344
        %v5029 = vunpack.c.l.b16 %v4345
        %v5030 = vunpack.c.l.b16 %v4346
        %v5031 = vunpack.c.l.b16 %v4347
        %v5032 = vunpack.c.l.b16 %v4348
        %v5033 = vunpack.c.l.b16 %v4349
        %v5034 = vunpack.c.l.b16 %v4350
        %v5035 = vunpack.c.l.b16 %v4351
        %v5036 = vunpack.c.l.b16 %v4352
        %v5037 = vunpack.c.l.b16 %v4353
        %v5038 = vunpack.c.l.b16 %v4354
        %v5039 = vunpack.c.l.b16 %v4355
        %v5040 = vunpack.c.l.b16 %v4356
        %v5041 = vunpack.c.l.b16 %v4357
        %v5042 = vunpack.c.l.b16 %v4358
        %v5043 = vunpack.c.l.b16 %v4359
        %v5044 = vunpack.c.l.b16 %v4360
        %v5045 = vunpack.c.l.b16 %v4361
        %v5046 = vunpack.c.l.b16 %v4362
        %v5047 = vunpack.c.l.b16 %v4363
        %v5048 = vunpack.c.l.b16 %v4364
        %v5049 = vunpack.c.l.b16 %v4365
        %v5050 = vunpack.c.l.b16 %v4366
        %v5051 = vunpack.c.l.b16 %v4367
        %v5052 = vunpack.c.l.b16 %v4368
        %v5053 = vunpack.c.l.b16 %v4369
        %v5054 = vunpack.c.l.b16 %v4370
        %v5055 = vunpack.c.l.b16 %v4371
        %v5056 = vunpack.c.l.b16 %v4372
        %v5057 = vunpack.c.l.b16 %v4373
        %v5058 = vunpack.c.l.b16 %v4374
        %v5059 = vunpack.c.l.b16 %v4375
        %v5060 = vpack.c.b16 %v4980, %v4979
        %v5061 = vpack.c.b16 %v4982, %v4981
        %v5062 = vpack.c.b16 %v4984, %v4983
        %v5063 = vpack.c.b16 %v4986, %v4985
        %v5064 = vpack.c.b16 %v4988, %v4987
        %v5065 = vpack.c.b16 %v4990, %v4989
        %v5066 = vpack.c.b16 %v4992, %v4991
        %v5067 = vpack.c.b16 %v4994, %v4993
        %v5068 = vpack.c.b16 %v4996, %v4995
        %v5069 = vpack.c.b16 %v4998, %v4997
        %v5070 = vpack.c.b16 %v5000, %v4999
        %v5071 = vpack.c.b16 %v5002, %v5001
        %v5072 = vpack.c.b16 %v5004, %v5003
        %v5073 = vpack.c.b16 %v5006, %v5005
        %v5074 = vpack.c.b16 %v5008, %v5007
        %v5075 = vpack.c.b16 %v5010, %v5009
        %v5076 = vpack.c.b16 %v5012, %v5011
        %v5077 = vpack.c.b16 %v5014, %v5013
        %v5078 = vpack.c.b16 %v5016, %v5015
        %v5079 = vpack.c.b16 %v5018, %v5017
        %v5080 = vpack.c.b16 %v5020, %v5019
        %v5081 = vpack.c.b16 %v5022, %v5021
        %v5082 = vpack.c.b16 %v5024, %v5023
        %v5083 = vpack.c.b16 %v5026, %v5025
        %v5084 = vpack.c.b16 %v5028, %v5027
        %v5085 = vpack.c.b16 %v5030, %v5029
        %v5086 = vpack.c.b16 %v5032, %v5031
        %v5087 = vpack.c.b16 %v5034, %v5033
        %v5088 = vpack.c.b16 %v5036, %v5035
        %v5089 = vpack.c.b16 %v5038, %v5037
        %v5090 = vpack.c.b16 %v5040, %v5039
        %v5091 = vpack.c.b16 %v5042, %v5041
        %v5092 = vpack.c.b16 %v5044, %v5043
        %v5093 = vpack.c.b16 %v5046, %v5045
        %v5094 = vpack.c.b16 %v5048, %v5047
        %v5095 = vpack.c.b16 %v5050, %v5049
        %v5096 = vpack.c.b16 %v5052, %v5051
        %v5097 = vpack.c.b16 %v5054, %v5053
        %v5098 = vpack.c.b16 %v5056, %v5055
        %v5099 = vpack.c.b16 %v5058, %v5057
        %v5100 = vpack.c.b16 %v5059, %v5059
        %vm5141 = vcmask 64512
        %v5143 = vsel %vm5141, %v4705, 0
        %v5146 = vsel %vm5141, %v4711, 0
        %v5149 = vsel %vm5141, %v4717, 0
        %v5152 = vsel %vm5141, %v4723, 0
        %v5155 = vsel %vm5141, %v4729, 0
        %v5158 = vsel %vm5141, %v4735, 0
        %v5161 = vsel %vm5141, %v4741, 0
        %v5164 = vsel %vm5141, %v4747, 0
        %v5167 = vsel %vm5141, %v4753, 0
        %v5170 = vsel %vm5141, %v4759, 0
        %v5173 = vsel %vm5141, %v4765, 0
        %v5176 = vsel %vm5141, %v4771, 0
        %v5179 = vsel %vm5141, %v4777, 0
        %v5182 = vsel %vm5141, %v4783, 0
        %v5185 = vsel %vm5141, %v4789, 0
        %v5188 = vsel %vm5141, %v4795, 0
        %v5191 = vsel %vm5141, %v4801, 0
        %v5194 = vsel %vm5141, %v4807, 0
        %vm5196 = vcmask 1043456
        %v5198 = vsel %vm5196, %v5100, 0
        %5200 = vmatprep.subr.bf16.mxu0 0
        %5201 = vmatpush1.bf16.msra.mxu0 %v5060
        %5202 = vmatprep.subr.bf16.mxu0 0
        %5203 = vmatpush1.bf16.msra.mxu0 %v5061
        %5204 = vmatprep.subr.bf16.mxu0 0
        %5205 = vmatpush1.bf16.msra.mxu0 %v5062
        %5206 = vmatprep.subr.bf16.mxu0 0
        %5207 = vmatpush1.bf16.msra.mxu0 %v5063
        %5208 = vmatprep.subr.bf16.mxu0 0
        %5209 = vmatpush1.bf16.msra.mxu0 %v5064
        %5210 = vmatprep.subr.bf16.mxu0 0
        %5211 = vmatpush1.bf16.msra.mxu0 %v5065
        %5212 = vmatprep.subr.bf16.mxu0 0
        %5213 = vmatpush1.bf16.msra.mxu0 %v5066
        %5214 = vmatprep.subr.bf16.mxu0 0
        %5215 = vmatpush1.bf16.msra.mxu0 %v5067
        %5216 = vmatprep.subr.bf16.mxu0 0
        %5217 = vmatpush1.bf16.msra.mxu0 %v5068
        %5218 = vmatprep.subr.bf16.mxu0 0
        %5219 = vmatpush1.bf16.msra.mxu0 %v5069
        %5220 = vmatprep.subr.bf16.mxu0 0
        %5221 = vmatpush1.bf16.msra.mxu0 %v5070
        %5222 = vmatprep.subr.bf16.mxu0 0
        %5223 = vmatpush1.bf16.msra.mxu0 %v5071
        %5224 = vmatprep.subr.bf16.mxu0 0
        %5225 = vmatpush1.bf16.msra.mxu0 %v5072
        %5226 = vmatprep.subr.bf16.mxu0 0
        %5227 = vmatpush1.bf16.msra.mxu0 %v5073
        %5228 = vmatprep.subr.bf16.mxu0 0
        %5229 = vmatpush1.bf16.msra.mxu0 %v5074
        %5230 = vmatprep.subr.bf16.mxu0 0
        %5231 = vmatpush1.bf16.msra.mxu0 %v5075
        %5232 = vmatprep.mubr.bf16.mxu0 %v4701
        %5233 = vmatmul.mubr.bf16.gmra.mrb[0].mxu0 %v4700
        %v5234 = vpop.f32.mrb[0].mxu0
        %v5235 = vadd.f32 0.0, %v5234
        %v5236 = vpop.f32.mrb[0].mxu0
        %v5237 = vpop.f32.mrb[0].mxu0
        %v5238 = vadd.f32 0.0, %v5237
        %v5239 = vpop.f32.mrb[0].mxu0
        %5240 = vmatprep.mubr.bf16.mxu0 %v4707
        %5241 = vmatmul.mubr.bf16.gmra.mrb[0].mxu0 %v4706
        %v5242 = vpop.f32.mrb[0].mxu0
        %v5243 = vadd.f32 0.0, %v5242
        %v5244 = vpop.f32.mrb[0].mxu0
        %v5245 = vpop.f32.mrb[0].mxu0
        %v5246 = vadd.f32 0.0, %v5245
        %v5247 = vpop.f32.mrb[0].mxu0
        %5248 = vmatprep.mubr.bf16.mxu0 %v4713
        %5249 = vmatmul.mubr.bf16.gmra.mrb[0].mxu0 %v4712
        %v5250 = vpop.f32.mrb[0].mxu0
        %v5251 = vadd.f32 0.0, %v5250
        %v5252 = vpop.f32.mrb[0].mxu0
        %v5253 = vpop.f32.mrb[0].mxu0
        %v5254 = vadd.f32 0.0, %v5253
        %v5255 = vpop.f32.mrb[0].mxu0
        %5256 = vmatprep.mubr.bf16.mxu0 %v4719
        %5257 = vmatmul.mubr.bf16.gmra.mrb[0].mxu0 %v4718
        %v5258 = vpop.f32.mrb[0].mxu0
        %v5259 = vadd.f32 0.0, %v5258
        %v5260 = vpop.f32.mrb[0].mxu0
        %v5261 = vpop.f32.mrb[0].mxu0
        %v5262 = vadd.f32 0.0, %v5261
        %v5263 = vpop.f32.mrb[0].mxu0
        %5264 = vmatprep.mubr.bf16.mxu0 %v4725
        %5265 = vmatmul.mubr.bf16.gmra.mrb[0].mxu0 %v4724
        %v5266 = vpop.f32.mrb[0].mxu0
        %v5267 = vadd.f32 0.0, %v5266
        %v5268 = vpop.f32.mrb[0].mxu0
        %v5269 = vpop.f32.mrb[0].mxu0
        %v5270 = vadd.f32 0.0, %v5269
        %v5271 = vpop.f32.mrb[0].mxu0
        %5272 = vmatprep.mubr.bf16.mxu0 %v4731
        %5273 = vmatmul.mubr.bf16.gmra.mrb[0].mxu0 %v4730
        %v5274 = vpop.f32.mrb[0].mxu0
        %v5275 = vadd.f32 0.0, %v5274
        %v5276 = vpop.f32.mrb[0].mxu0
        %v5277 = vpop.f32.mrb[0].mxu0
        %v5278 = vadd.f32 0.0, %v5277
        %v5279 = vpop.f32.mrb[0].mxu0
        %5280 = vmatprep.mubr.bf16.mxu0 %v4737
        %5281 = vmatmul.mubr.bf16.gmra.mrb[0].mxu0 %v4736
        %v5282 = vpop.f32.mrb[0].mxu0
        %v5283 = vadd.f32 0.0, %v5282
        %v5284 = vpop.f32.mrb[0].mxu0
        %v5285 = vpop.f32.mrb[0].mxu0
        %v5286 = vadd.f32 0.0, %v5285
        %v5287 = vpop.f32.mrb[0].mxu0
        %5288 = vmatprep.mubr.bf16.mxu0 %v4743
        %5289 = vmatmul.mubr.bf16.gmra.mrb[0].mxu0 %v4742
        %v5290 = vpop.f32.mrb[0].mxu0
        %v5291 = vadd.f32 0.0, %v5290
        %v5292 = vpop.f32.mrb[0].mxu0
        %v5293 = vpop.f32.mrb[0].mxu0
        %v5294 = vadd.f32 0.0, %v5293
        %v5295 = vpop.f32.mrb[0].mxu0
        %5296 = vmatprep.mubr.bf16.mxu0 %v4749
        %5297 = vmatmul.mubr.bf16.gmra.mrb[0].mxu0 %v4748
        %v5298 = vpop.f32.mrb[0].mxu0
        %v5299 = vadd.f32 0.0, %v5298
        %v5300 = vpop.f32.mrb[0].mxu0
        %v5301 = vpop.f32.mrb[0].mxu0
        %v5302 = vadd.f32 0.0, %v5301
        %v5303 = vpop.f32.mrb[0].mxu0
        %5304 = vmatprep.mubr.bf16.mxu0 %v4755
        %5305 = vmatmul.mubr.bf16.gmra.mrb[0].mxu0 %v4754
        %v5306 = vpop.f32.mrb[0].mxu0
        %v5307 = vadd.f32 0.0, %v5306
        %v5308 = vpop.f32.mrb[0].mxu0
        %v5309 = vpop.f32.mrb[0].mxu0
        %v5310 = vadd.f32 0.0, %v5309
        %v5311 = vpop.f32.mrb[0].mxu0
        %5312 = vmatprep.mubr.bf16.mxu0 %v4761
        %5313 = vmatmul.mubr.bf16.gmra.mrb[0].mxu0 %v4760
        %v5314 = vpop.f32.mrb[0].mxu0
        %v5315 = vadd.f32 0.0, %v5314
        %v5316 = vpop.f32.mrb[0].mxu0
        %v5317 = vpop.f32.mrb[0].mxu0
        %v5318 = vadd.f32 0.0, %v5317
        %v5319 = vpop.f32.mrb[0].mxu0
        %5320 = vmatprep.mubr.bf16.mxu0 %v4767
        %5321 = vmatmul.mubr.bf16.gmra.mrb[0].mxu0 %v4766
        %v5322 = vpop.f32.mrb[0].mxu0
        %v5323 = vadd.f32 0.0, %v5322
        %v5324 = vpop.f32.mrb[0].mxu0
        %v5325 = vpop.f32.mrb[0].mxu0
        %v5326 = vadd.f32 0.0, %v5325
        %v5327 = vpop.f32.mrb[0].mxu0
        %5328 = vmatprep.mubr.bf16.mxu0 %v4773
        %5329 = vmatmul.mubr.bf16.gmra.mrb[0].mxu0 %v4772
        %v5330 = vpop.f32.mrb[0].mxu0
        %v5331 = vadd.f32 0.0, %v5330
        %v5332 = vpop.f32.mrb[0].mxu0
        %v5333 = vpop.f32.mrb[0].mxu0
        %v5334 = vadd.f32 0.0, %v5333
        %v5335 = vpop.f32.mrb[0].mxu0
        %5336 = vmatprep.mubr.bf16.mxu0 %v4779
        %5337 = vmatmul.mubr.bf16.gmra.mrb[0].mxu0 %v4778
        %v5338 = vpop.f32.mrb[0].mxu0
        %v5339 = vadd.f32 0.0, %v5338
        %v5340 = vpop.f32.mrb[0].mxu0
        %v5341 = vpop.f32.mrb[0].mxu0
        %v5342 = vadd.f32 0.0, %v5341
        %v5343 = vpop.f32.mrb[0].mxu0
        %5344 = vmatprep.mubr.bf16.mxu0 %v4785
        %5345 = vmatmul.mubr.bf16.gmra.mrb[0].mxu0 %v4784
        %v5346 = vpop.f32.mrb[0].mxu0
        %v5347 = vadd.f32 0.0, %v5346
        %v5348 = vpop.f32.mrb[0].mxu0
        %v5349 = vpop.f32.mrb[0].mxu0
        %v5350 = vadd.f32 0.0, %v5349
        %v5351 = vpop.f32.mrb[0].mxu0
        %5352 = vmatprep.mubr.bf16.mxu0 %v4791
        %5353 = vmatmul.mubr.bf16.gmra.mrb[0].mxu0 %v4790
        %v5354 = vpop.f32.mrb[0].mxu0
        %v5355 = vadd.f32 0.0, %v5354
        %v5356 = vpop.f32.mrb[0].mxu0
        %v5357 = vpop.f32.mrb[0].mxu0
        %v5358 = vadd.f32 0.0, %v5357
        %v5359 = vpop.f32.mrb[0].mxu0
        %5360 = vmatprep.mubr.bf16.mxu0 %v4797
        %5361 = vmatmul.mubr.bf16.gmra.mrb[0].mxu0 %v4796
        %v5362 = vpop.f32.mrb[0].mxu0
        %v5363 = vadd.f32 0.0, %v5362
        %v5364 = vpop.f32.mrb[0].mxu0
        %v5365 = vpop.f32.mrb[0].mxu0
        %v5366 = vadd.f32 0.0, %v5365
        %v5367 = vpop.f32.mrb[0].mxu0
        %5368 = vmatprep.mubr.bf16.mxu0 %v4803
        %5369 = vmatmul.mubr.bf16.gmra.mrb[0].mxu0 %v4802
        %v5370 = vpop.f32.mrb[0].mxu0
        %v5371 = vadd.f32 0.0, %v5370
        %v5372 = vpop.f32.mrb[0].mxu0
        %v5373 = vpop.f32.mrb[0].mxu0
        %v5374 = vadd.f32 0.0, %v5373
        %v5375 = vpop.f32.mrb[0].mxu0
        %5376 = vdwg.mxu0
        %5377 = vmatprep.subr.bf16.mxu0 0
        %5378 = vmatpush1.bf16.msra.mxu0 %v5076
        %5379 = vmatprep.subr.bf16.mxu0 0
        %5380 = vmatpush1.bf16.msra.mxu0 %v5077
        %5381 = vmatprep.subr.bf16.mxu0 0
        %5382 = vmatpush1.bf16.msra.mxu0 %v5078
        %5383 = vmatprep.subr.bf16.mxu0 0
        %5384 = vmatpush1.bf16.msra.mxu0 %v5079
        %5385 = vmatprep.subr.bf16.mxu0 0
        %5386 = vmatpush1.bf16.msra.mxu0 %v5080
        %5387 = vmatprep.subr.bf16.mxu0 0
        %5388 = vmatpush1.bf16.msra.mxu0 %v5081
        %5389 = vmatprep.subr.bf16.mxu0 0
        %5390 = vmatpush1.bf16.msra.mxu0 %v5082
        %5391 = vmatprep.subr.bf16.mxu0 0
        %5392 = vmatpush1.bf16.msra.mxu0 %v5083
        %5393 = vmatprep.subr.bf16.mxu0 0
        %5394 = vmatpush1.bf16.msra.mxu0 %v5084
        %5395 = vmatprep.subr.bf16.mxu0 0
        %5396 = vmatpush1.bf16.msra.mxu0 %v5085
        %5397 = vmatprep.subr.bf16.mxu0 0
        %5398 = vmatpush1.bf16.msra.mxu0 %v5086
        %5399 = vmatprep.subr.bf16.mxu0 0
        %5400 = vmatpush1.bf16.msra.mxu0 %v5087
        %5401 = vmatprep.subr.bf16.mxu0 0
        %5402 = vmatpush1.bf16.msra.mxu0 %v5088
        %5403 = vmatprep.subr.bf16.mxu0 0
        %5404 = vmatpush1.bf16.msra.mxu0 %v5089
        %5405 = vmatprep.subr.bf16.mxu0 0
        %5406 = vmatpush1.bf16.msra.mxu0 %v5090
        %5407 = vmatprep.subr.bf16.mxu0 0
        %5408 = vmatpush1.bf16.msra.mxu0 %v5091
        %5409 = vmatprep.mubr.bf16.mxu0 %v4703
        %5410 = vmatmul.mubr.bf16.gmra.mrb[0].mxu0 %v4702
        %v5411 = vpop.f32.mrb[0].mxu0
        %v5412 = vadd.f32 %v5235, %v5411
        %v5413 = vpop.f32.mrb[0].mxu0
        %v5414 = vpop.f32.mrb[0].mxu0
        %v5415 = vadd.f32 %v5238, %v5414
        %v5416 = vpop.f32.mrb[0].mxu0
        %5417 = vmatprep.mubr.bf16.mxu0 %v4709
        %5418 = vmatmul.mubr.bf16.gmra.mrb[0].mxu0 %v4708
        %v5419 = vpop.f32.mrb[0].mxu0
        %v5420 = vadd.f32 %v5243, %v5419
        %v5421 = vpop.f32.mrb[0].mxu0
        %v5422 = vpop.f32.mrb[0].mxu0
        %v5423 = vadd.f32 %v5246, %v5422
        %v5424 = vpop.f32.mrb[0].mxu0
        %5425 = vmatprep.mubr.bf16.mxu0 %v4715
        %5426 = vmatmul.mubr.bf16.gmra.mrb[0].mxu0 %v4714
        %v5427 = vpop.f32.mrb[0].mxu0
        %v5428 = vadd.f32 %v5251, %v5427
        %v5429 = vpop.f32.mrb[0].mxu0
        %v5430 = vpop.f32.mrb[0].mxu0
        %v5431 = vadd.f32 %v5254, %v5430
        %v5432 = vpop.f32.mrb[0].mxu0
        %5433 = vmatprep.mubr.bf16.mxu0 %v4721
        %5434 = vmatmul.mubr.bf16.gmra.mrb[0].mxu0 %v4720
        %v5435 = vpop.f32.mrb[0].mxu0
        %v5436 = vadd.f32 %v5259, %v5435
        %v5437 = vpop.f32.mrb[0].mxu0
        %v5438 = vpop.f32.mrb[0].mxu0
        %v5439 = vadd.f32 %v5262, %v5438
        %v5440 = vpop.f32.mrb[0].mxu0
        %5441 = vmatprep.mubr.bf16.mxu0 %v4727
        %5442 = vmatmul.mubr.bf16.gmra.mrb[0].mxu0 %v4726
        %v5443 = vpop.f32.mrb[0].mxu0
        %v5444 = vadd.f32 %v5267, %v5443
        %v5445 = vpop.f32.mrb[0].mxu0
        %v5446 = vpop.f32.mrb[0].mxu0
        %v5447 = vadd.f32 %v5270, %v5446
        %v5448 = vpop.f32.mrb[0].mxu0
        %5449 = vmatprep.mubr.bf16.mxu0 %v4733
        %5450 = vmatmul.mubr.bf16.gmra.mrb[0].mxu0 %v4732
        %v5451 = vpop.f32.mrb[0].mxu0
        %v5452 = vadd.f32 %v5275, %v5451
        %v5453 = vpop.f32.mrb[0].mxu0
        %v5454 = vpop.f32.mrb[0].mxu0
        %v5455 = vadd.f32 %v5278, %v5454
        %v5456 = vpop.f32.mrb[0].mxu0
        %5457 = vmatprep.mubr.bf16.mxu0 %v4739
        %5458 = vmatmul.mubr.bf16.gmra.mrb[0].mxu0 %v4738
        %v5459 = vpop.f32.mrb[0].mxu0
        %v5460 = vadd.f32 %v5283, %v5459
        %v5461 = vpop.f32.mrb[0].mxu0
        %v5462 = vpop.f32.mrb[0].mxu0
        %v5463 = vadd.f32 %v5286, %v5462
        %v5464 = vpop.f32.mrb[0].mxu0
        %5465 = vmatprep.mubr.bf16.mxu0 %v4745
        %5466 = vmatmul.mubr.bf16.gmra.mrb[0].mxu0 %v4744
        %v5467 = vpop.f32.mrb[0].mxu0
        %v5468 = vadd.f32 %v5291, %v5467
        %v5469 = vpop.f32.mrb[0].mxu0
        %v5470 = vpop.f32.mrb[0].mxu0
        %v5471 = vadd.f32 %v5294, %v5470
        %v5472 = vpop.f32.mrb[0].mxu0
        %5473 = vmatprep.mubr.bf16.mxu0 %v4751
        %5474 = vmatmul.mubr.bf16.gmra.mrb[0].mxu0 %v4750
        %v5475 = vpop.f32.mrb[0].mxu0
        %v5476 = vadd.f32 %v5299, %v5475
        %v5477 = vpop.f32.mrb[0].mxu0
        %v5478 = vpop.f32.mrb[0].mxu0
        %v5479 = vadd.f32 %v5302, %v5478
        %v5480 = vpop.f32.mrb[0].mxu0
        %5481 = vmatprep.mubr.bf16.mxu0 %v4757
        %5482 = vmatmul.mubr.bf16.gmra.mrb[0].mxu0 %v4756
        %v5483 = vpop.f32.mrb[0].mxu0
        %v5484 = vadd.f32 %v5307, %v5483
        %v5485 = vpop.f32.mrb[0].mxu0
        %v5486 = vpop.f32.mrb[0].mxu0
        %v5487 = vadd.f32 %v5310, %v5486
        %v5488 = vpop.f32.mrb[0].mxu0
        %5489 = vmatprep.mubr.bf16.mxu0 %v4763
        %5490 = vmatmul.mubr.bf16.gmra.mrb[0].mxu0 %v4762
        %v5491 = vpop.f32.mrb[0].mxu0
        %v5492 = vadd.f32 %v5315, %v5491
        %v5493 = vpop.f32.mrb[0].mxu0
        %v5494 = vpop.f32.mrb[0].mxu0
        %v5495 = vadd.f32 %v5318, %v5494
        %v5496 = vpop.f32.mrb[0].mxu0
        %5497 = vmatprep.mubr.bf16.mxu0 %v4769
        %5498 = vmatmul.mubr.bf16.gmra.mrb[0].mxu0 %v4768
        %v5499 = vpop.f32.mrb[0].mxu0
        %v5500 = vadd.f32 %v5323, %v5499
        %v5501 = vpop.f32.mrb[0].mxu0
        %v5502 = vpop.f32.mrb[0].mxu0
        %v5503 = vadd.f32 %v5326, %v5502
        %v5504 = vpop.f32.mrb[0].mxu0
        %5505 = vmatprep.mubr.bf16.mxu0 %v4775
        %5506 = vmatmul.mubr.bf16.gmra.mrb[0].mxu0 %v4774
        %v5507 = vpop.f32.mrb[0].mxu0
        %v5508 = vadd.f32 %v5331, %v5507
        %v5509 = vpop.f32.mrb[0].mxu0
        %v5510 = vpop.f32.mrb[0].mxu0
        %v5511 = vadd.f32 %v5334, %v5510
        %v5512 = vpop.f32.mrb[0].mxu0
        %5513 = vmatprep.mubr.bf16.mxu0 %v4781
        %5514 = vmatmul.mubr.bf16.gmra.mrb[0].mxu0 %v4780
        %v5515 = vpop.f32.mrb[0].mxu0
        %v5516 = vadd.f32 %v5339, %v5515
        %v5517 = vpop.f32.mrb[0].mxu0
        %v5518 = vpop.f32.mrb[0].mxu0
        %v5519 = vadd.f32 %v5342, %v5518
        %v5520 = vpop.f32.mrb[0].mxu0
        %5521 = vmatprep.mubr.bf16.mxu0 %v4787
        %5522 = vmatmul.mubr.bf16.gmra.mrb[0].mxu0 %v4786
        %v5523 = vpop.f32.mrb[0].mxu0
        %v5524 = vadd.f32 %v5347, %v5523
        %v5525 = vpop.f32.mrb[0].mxu0
        %v5526 = vpop.f32.mrb[0].mxu0
        %v5527 = vadd.f32 %v5350, %v5526
        %v5528 = vpop.f32.mrb[0].mxu0
        %5529 = vmatprep.mubr.bf16.mxu0 %v4793
        %5530 = vmatmul.mubr.bf16.gmra.mrb[0].mxu0 %v4792
        %v5531 = vpop.f32.mrb[0].mxu0
        %v5532 = vadd.f32 %v5355, %v5531
        %v5533 = vpop.f32.mrb[0].mxu0
        %v5534 = vpop.f32.mrb[0].mxu0
        %v5535 = vadd.f32 %v5358, %v5534
        %v5536 = vpop.f32.mrb[0].mxu0
        %5537 = vmatprep.mubr.bf16.mxu0 %v4799
        %5538 = vmatmul.mubr.bf16.gmra.mrb[0].mxu0 %v4798
        %v5539 = vpop.f32.mrb[0].mxu0
        %v5540 = vadd.f32 %v5363, %v5539
        %v5541 = vpop.f32.mrb[0].mxu0
        %v5542 = vpop.f32.mrb[0].mxu0
        %v5543 = vadd.f32 %v5366, %v5542
        %v5544 = vpop.f32.mrb[0].mxu0
        %5545 = vmatprep.mubr.bf16.mxu0 %v4805
        %5546 = vmatmul.mubr.bf16.gmra.mrb[0].mxu0 %v4804
        %v5547 = vpop.f32.mrb[0].mxu0
        %v5548 = vadd.f32 %v5371, %v5547
        %v5549 = vpop.f32.mrb[0].mxu0
        %v5550 = vpop.f32.mrb[0].mxu0
        %v5551 = vadd.f32 %v5374, %v5550
        %v5552 = vpop.f32.mrb[0].mxu0
        %5553 = vdwg.mxu0
        %5554 = vmatprep.subr.bf16.mxu0 0
        %5555 = vmatpush1.bf16.msra.mxu0 %v5092
        %5556 = vmatprep.subr.bf16.mxu0 0
        %5557 = vmatpush1.bf16.msra.mxu0 %v5093
        %5558 = vmatprep.subr.bf16.mxu0 0
        %5559 = vmatpush1.bf16.msra.mxu0 %v5094
        %5560 = vmatprep.subr.bf16.mxu0 0
        %5561 = vmatpush1.bf16.msra.mxu0 %v5095
        %5562 = vmatprep.subr.bf16.mxu0 0
        %5563 = vmatpush1.bf16.msra.mxu0 %v5096
        %5564 = vmatprep.subr.bf16.mxu0 0
        %5565 = vmatpush1.bf16.msra.mxu0 %v5097
        %5566 = vmatprep.subr.bf16.mxu0 0
        %5567 = vmatpush1.bf16.msra.mxu0 %v5098
        %5568 = vmatprep.subr.bf16.mxu0 0
        %5569 = vmatpush1.bf16.msra.mxu0 %v5099
        %5570 = vmatprep.subr.bf16.mxu0 0
        %5571 = vmatpush1.bf16.msra.mxu0 %v5198
        %5572 = vmatprep.subr.bf16.mxu0 0
        %5573 = vmatpush1.bf16.msra.mxu0 0
        %5574 = vmatprep.subr.bf16.mxu0 0
        %5575 = vmatpush1.bf16.msra.mxu0 0
        %5576 = vmatprep.subr.bf16.mxu0 0
        %5577 = vmatpush1.bf16.msra.mxu0 0
        %5578 = vmatprep.subr.bf16.mxu0 0
        %5579 = vmatpush1.bf16.msra.mxu0 0
        %5580 = vmatprep.subr.bf16.mxu0 0
        %5581 = vmatpush1.bf16.msra.mxu0 0
        %5582 = vmatprep.subr.bf16.mxu0 0
        %5583 = vmatpush1.bf16.msra.mxu0 0
        %5584 = vmatprep.subr.bf16.mxu0 0
        %5585 = vmatpush1.bf16.msra.mxu0 0
        %5586 = vmatprep.mubr.bf16.mxu0 %v5143
        %5587 = vmatmul.mubr.bf16.gmra.mrb[0].mxu0 %v4704
        %v5588 = vpop.f32.mrb[0].mxu0
        %v5589 = vadd.f32 %v5412, %v5588
        %v5590 = vpop.f32.mrb[0].mxu0
        %v5591 = vpop.f32.mrb[0].mxu0
        %v5592 = vadd.f32 %v5415, %v5591
        %v5593 = vpop.f32.mrb[0].mxu0
        %5594 = vmatprep.mubr.bf16.mxu0 %v5146
        %5595 = vmatmul.mubr.bf16.gmra.mrb[0].mxu0 %v4710
        %v5596 = vpop.f32.mrb[0].mxu0
        %v5597 = vadd.f32 %v5420, %v5596
        %v5598 = vpop.f32.mrb[0].mxu0
        %v5599 = vpop.f32.mrb[0].mxu0
        %v5600 = vadd.f32 %v5423, %v5599
        %v5601 = vpop.f32.mrb[0].mxu0
        %5602 = vmatprep.mubr.bf16.mxu0 %v5149
        %5603 = vmatmul.mubr.bf16.gmra.mrb[0].mxu0 %v4716
        %v5604 = vpop.f32.mrb[0].mxu0
        %v5605 = vadd.f32 %v5428, %v5604
        %v5606 = vpop.f32.mrb[0].mxu0
        %v5607 = vpop.f32.mrb[0].mxu0
        %v5608 = vadd.f32 %v5431, %v5607
        %v5609 = vpop.f32.mrb[0].mxu0
        %5610 = vmatprep.mubr.bf16.mxu0 %v5152
        %5611 = vmatmul.mubr.bf16.gmra.mrb[0].mxu0 %v4722
        %v5612 = vpop.f32.mrb[0].mxu0
        %v5613 = vadd.f32 %v5436, %v5612
        %v5614 = vpop.f32.mrb[0].mxu0
        %v5615 = vpop.f32.mrb[0].mxu0
        %v5616 = vadd.f32 %v5439, %v5615
        %v5617 = vpop.f32.mrb[0].mxu0
        %5618 = vmatprep.mubr.bf16.mxu0 %v5155
        %5619 = vmatmul.mubr.bf16.gmra.mrb[0].mxu0 %v4728
        %v5620 = vpop.f32.mrb[0].mxu0
        %v5621 = vadd.f32 %v5444, %v5620
        %v5622 = vpop.f32.mrb[0].mxu0
        %v5623 = vpop.f32.mrb[0].mxu0
        %v5624 = vadd.f32 %v5447, %v5623
        %v5625 = vpop.f32.mrb[0].mxu0
        %5626 = vmatprep.mubr.bf16.mxu0 %v5158
        %5627 = vmatmul.mubr.bf16.gmra.mrb[0].mxu0 %v4734
        %v5628 = vpop.f32.mrb[0].mxu0
        %v5629 = vadd.f32 %v5452, %v5628
        %v5630 = vpop.f32.mrb[0].mxu0
        %v5631 = vpop.f32.mrb[0].mxu0
        %v5632 = vadd.f32 %v5455, %v5631
        %v5633 = vpop.f32.mrb[0].mxu0
        %5634 = vmatprep.mubr.bf16.mxu0 %v5161
        %5635 = vmatmul.mubr.bf16.gmra.mrb[0].mxu0 %v4740
        %v5636 = vpop.f32.mrb[0].mxu0
        %v5637 = vadd.f32 %v5460, %v5636
        %v5638 = vpop.f32.mrb[0].mxu0
        %v5639 = vpop.f32.mrb[0].mxu0
        %v5640 = vadd.f32 %v5463, %v5639
        %v5641 = vpop.f32.mrb[0].mxu0
        %5642 = vmatprep.mubr.bf16.mxu0 %v5164
        %5643 = vmatmul.mubr.bf16.gmra.mrb[0].mxu0 %v4746
        %v5644 = vpop.f32.mrb[0].mxu0
        %v5645 = vadd.f32 %v5468, %v5644
        %v5646 = vpop.f32.mrb[0].mxu0
        %v5647 = vpop.f32.mrb[0].mxu0
        %v5648 = vadd.f32 %v5471, %v5647
        %v5649 = vpop.f32.mrb[0].mxu0
        %5650 = vmatprep.mubr.bf16.mxu0 %v5167
        %5651 = vmatmul.mubr.bf16.gmra.mrb[0].mxu0 %v4752
        %v5652 = vpop.f32.mrb[0].mxu0
        %v5653 = vadd.f32 %v5476, %v5652
        %v5654 = vpop.f32.mrb[0].mxu0
        %v5655 = vpop.f32.mrb[0].mxu0
        %v5656 = vadd.f32 %v5479, %v5655
        %v5657 = vpop.f32.mrb[0].mxu0
        %5658 = vmatprep.mubr.bf16.mxu0 %v5170
        %5659 = vmatmul.mubr.bf16.gmra.mrb[0].mxu0 %v4758
        %v5660 = vpop.f32.mrb[0].mxu0
        %v5661 = vadd.f32 %v5484, %v5660
        %v5662 = vpop.f32.mrb[0].mxu0
        %v5663 = vpop.f32.mrb[0].mxu0
        %v5664 = vadd.f32 %v5487, %v5663
        %v5665 = vpop.f32.mrb[0].mxu0
        %5666 = vmatprep.mubr.bf16.mxu0 %v5173
        %5667 = vmatmul.mubr.bf16.gmra.mrb[0].mxu0 %v4764
        %v5668 = vpop.f32.mrb[0].mxu0
        %v5669 = vadd.f32 %v5492, %v5668
        %v5670 = vpop.f32.mrb[0].mxu0
        %v5671 = vpop.f32.mrb[0].mxu0
        %v5672 = vadd.f32 %v5495, %v5671
        %v5673 = vpop.f32.mrb[0].mxu0
        %5674 = vmatprep.mubr.bf16.mxu0 %v5176
        %5675 = vmatmul.mubr.bf16.gmra.mrb[0].mxu0 %v4770
        %v5676 = vpop.f32.mrb[0].mxu0
        %v5677 = vadd.f32 %v5500, %v5676
        %v5678 = vpop.f32.mrb[0].mxu0
        %v5679 = vpop.f32.mrb[0].mxu0
        %v5680 = vadd.f32 %v5503, %v5679
        %v5681 = vpop.f32.mrb[0].mxu0
        %5682 = vmatprep.mubr.bf16.mxu0 %v5179
        %5683 = vmatmul.mubr.bf16.gmra.mrb[0].mxu0 %v4776
        %v5684 = vpop.f32.mrb[0].mxu0
        %v5685 = vadd.f32 %v5508, %v5684
        %v5686 = vpop.f32.mrb[0].mxu0
        %v5687 = vpop.f32.mrb[0].mxu0
        %v5688 = vadd.f32 %v5511, %v5687
        %v5689 = vpop.f32.mrb[0].mxu0
        %5690 = vmatprep.mubr.bf16.mxu0 %v5182
        %5691 = vmatmul.mubr.bf16.gmra.mrb[0].mxu0 %v4782
        %v5692 = vpop.f32.mrb[0].mxu0
        %v5693 = vadd.f32 %v5516, %v5692
        %v5694 = vpop.f32.mrb[0].mxu0
        %v5695 = vpop.f32.mrb[0].mxu0
        %v5696 = vadd.f32 %v5519, %v5695
        %v5697 = vpop.f32.mrb[0].mxu0
        %5698 = vmatprep.mubr.bf16.mxu0 %v5185
        %5699 = vmatmul.mubr.bf16.gmra.mrb[0].mxu0 %v4788
        %v5700 = vpop.f32.mrb[0].mxu0
        %v5701 = vadd.f32 %v5524, %v5700
        %v5702 = vpop.f32.mrb[0].mxu0
        %v5703 = vpop.f32.mrb[0].mxu0
        %v5704 = vadd.f32 %v5527, %v5703
        %v5705 = vpop.f32.mrb[0].mxu0
        %5706 = vmatprep.mubr.bf16.mxu0 %v5188
        %5707 = vmatmul.mubr.bf16.gmra.mrb[0].mxu0 %v4794
        %v5708 = vpop.f32.mrb[0].mxu0
        %v5709 = vadd.f32 %v5532, %v5708
        %v5710 = vpop.f32.mrb[0].mxu0
        %v5711 = vpop.f32.mrb[0].mxu0
        %v5712 = vadd.f32 %v5535, %v5711
        %v5713 = vpop.f32.mrb[0].mxu0
        %5714 = vmatprep.mubr.bf16.mxu0 %v5191
        %5715 = vmatmul.mubr.bf16.gmra.mrb[0].mxu0 %v4800
        %v5716 = vpop.f32.mrb[0].mxu0
        %v5717 = vadd.f32 %v5540, %v5716
        %v5718 = vpop.f32.mrb[0].mxu0
        %v5719 = vpop.f32.mrb[0].mxu0
        %v5720 = vadd.f32 %v5543, %v5719
        %v5721 = vpop.f32.mrb[0].mxu0
        %5722 = vmatprep.mubr.bf16.mxu0 %v5194
        %5723 = vmatmul.mubr.bf16.gmra.mrb[0].mxu0 %v4806
        %v5724 = vpop.f32.mrb[0].mxu0
        %v5725 = vadd.f32 %v5548, %v5724
        %v5726 = vpop.f32.mrb[0].mxu0
        %v5727 = vpop.f32.mrb[0].mxu0
        %v5728 = vadd.f32 %v5551, %v5727
        %v5729 = vpop.f32.mrb[0].mxu0
        %5730 = vdwg.mxu0
        %v5731 = vadd.f32 %v4151, %v5589
        %v5732 = vadd.f32 %v4152, %v5592
        %v5733 = vadd.f32 %v4153, %v5597
        %v5734 = vadd.f32 %v4154, %v5600
        %v5735 = vadd.f32 %v4155, %v5605
        %v5736 = vadd.f32 %v4156, %v5608
        %v5737 = vadd.f32 %v4157, %v5613
        %v5738 = vadd.f32 %v4158, %v5616
        %v5739 = vadd.f32 %v4159, %v5621
        %v5740 = vadd.f32 %v4160, %v5624
        %v5741 = vadd.f32 %v4161, %v5629
        %v5742 = vadd.f32 %v4162, %v5632
        %v5743 = vadd.f32 %v4163, %v5637
        %v5744 = vadd.f32 %v4164, %v5640
        %v5745 = vadd.f32 %v4165, %v5645
        %v5746 = vadd.f32 %v4166, %v5648
        %v5747 = vadd.f32 %v4167, %v5653
        %v5748 = vadd.f32 %v4168, %v5656
        %v5749 = vadd.f32 %v4169, %v5661
        %v5750 = vadd.f32 %v4170, %v5664
        %v5751 = vadd.f32 %v4171, %v5669
        %v5752 = vadd.f32 %v4172, %v5672
        %v5753 = vadd.f32 %v4173, %v5677
        %v5754 = vadd.f32 %v4174, %v5680
        %v5755 = vadd.f32 %v4175, %v5685
        %v5756 = vadd.f32 %v4176, %v5688
        %v5757 = vadd.f32 %v4177, %v5693
        %v5758 = vadd.f32 %v4178, %v5696
        %v5759 = vadd.f32 %v4179, %v5701
        %v5760 = vadd.f32 %v4180, %v5704
        %v5761 = vadd.f32 %v4181, %v5709
        %v5762 = vadd.f32 %v4182, %v5712
        %v5763 = vadd.f32 %v4183, %v5717
        %v5764 = vadd.f32 %v4184, %v5720
        %v5765 = vadd.f32 %v4185, %v5725
        %v5766 = vadd.f32 %v4186, %v5728
        %v5767 = vld [vmem:[%s355] sm:$0x1]
        %v5769 = vlaneseq
        %v5770 = vshrl.u32 %v5769, 7
        %v5771 = vsub.s32 0, %v5770
        %v5772 = vrot.slane %v5767, %v5771
        %v5774 = vadd.f32 %v5731, %v5772
        %v5775 = vadd.f32 %v5732, %v5772
        %v5776 = vadd.f32 %v5733, %v5772
        %v5777 = vadd.f32 %v5734, %v5772
        %v5778 = vadd.f32 %v5735, %v5772
        %v5779 = vadd.f32 %v5736, %v5772
        %v5780 = vadd.f32 %v5737, %v5772
        %v5781 = vadd.f32 %v5738, %v5772
        %v5782 = vadd.f32 %v5739, %v5772
        %v5783 = vadd.f32 %v5740, %v5772
        %v5784 = vadd.f32 %v5741, %v5772
        %v5785 = vadd.f32 %v5742, %v5772
        %v5786 = vadd.f32 %v5743, %v5772
        %v5787 = vadd.f32 %v5744, %v5772
        %v5788 = vadd.f32 %v5745, %v5772
        %v5789 = vadd.f32 %v5746, %v5772
        %v5790 = vadd.f32 %v5747, %v5772
        %v5791 = vadd.f32 %v5748, %v5772
        %v5792 = vadd.f32 %v5749, %v5772
        %v5793 = vadd.f32 %v5750, %v5772
        %v5794 = vadd.f32 %v5751, %v5772
        %v5795 = vadd.f32 %v5752, %v5772
        %v5796 = vadd.f32 %v5753, %v5772
        %v5797 = vadd.f32 %v5754, %v5772
        %v5798 = vadd.f32 %v5755, %v5772
        %v5799 = vadd.f32 %v5756, %v5772
        %v5800 = vadd.f32 %v5757, %v5772
        %v5801 = vadd.f32 %v5758, %v5772
        %v5802 = vadd.f32 %v5759, %v5772
        %v5803 = vadd.f32 %v5760, %v5772
        %v5804 = vadd.f32 %v5761, %v5772
        %v5805 = vadd.f32 %v5762, %v5772
        %v5806 = vadd.f32 %v5763, %v5772
        %v5807 = vadd.f32 %v5764, %v5772
        %v5808 = vadd.f32 %v5765, %v5772
        %v5809 = vadd.f32 %v5766, %v5772
        %v5810 = vmax.f32 %v5774, 0.0
        %v5811 = vmax.f32 %v5775, 0.0
        %v5812 = vmax.f32 %v5776, 0.0
        %v5813 = vmax.f32 %v5777, 0.0
        %v5814 = vmax.f32 %v5778, 0.0
        %v5815 = vmax.f32 %v5779, 0.0
        %v5816 = vmax.f32 %v5780, 0.0
        %v5817 = vmax.f32 %v5781, 0.0
        %v5818 = vmax.f32 %v5782, 0.0
        %v5819 = vmax.f32 %v5783, 0.0
        %v5820 = vmax.f32 %v5784, 0.0
        %v5821 = vmax.f32 %v5785, 0.0
        %v5822 = vmax.f32 %v5786, 0.0
        %v5823 = vmax.f32 %v5787, 0.0
        %v5824 = vmax.f32 %v5788, 0.0
        %v5825 = vmax.f32 %v5789, 0.0
        %v5826 = vmax.f32 %v5790, 0.0
        %v5827 = vmax.f32 %v5791, 0.0
        %v5828 = vmax.f32 %v5792, 0.0
        %v5829 = vmax.f32 %v5793, 0.0
        %v5830 = vmax.f32 %v5794, 0.0
        %v5831 = vmax.f32 %v5795, 0.0
        %v5832 = vmax.f32 %v5796, 0.0
        %v5833 = vmax.f32 %v5797, 0.0
        %v5834 = vmax.f32 %v5798, 0.0
        %v5835 = vmax.f32 %v5799, 0.0
        %v5836 = vmax.f32 %v5800, 0.0
        %v5837 = vmax.f32 %v5801, 0.0
        %v5838 = vmax.f32 %v5802, 0.0
        %v5839 = vmax.f32 %v5803, 0.0
        %v5840 = vmax.f32 %v5804, 0.0
        %v5841 = vmax.f32 %v5805, 0.0
        %v5842 = vmax.f32 %v5806, 0.0
        %v5843 = vmax.f32 %v5807, 0.0
        %v5844 = vmax.f32 %v5808, 0.0
        %v5845 = vmax.f32 %v5809, 0.0
        %v5846 = vpack.c.bf16 %v5811, %v5810
        %v5847 = vpack.c.bf16 %v5813, %v5812
        %v5848 = vpack.c.bf16 %v5815, %v5814
        %v5849 = vpack.c.bf16 %v5817, %v5816
        %v5850 = vpack.c.bf16 %v5819, %v5818
        %v5851 = vpack.c.bf16 %v5821, %v5820
        %v5852 = vpack.c.bf16 %v5823, %v5822
        %v5853 = vpack.c.bf16 %v5825, %v5824
        %v5854 = vpack.c.bf16 %v5827, %v5826
        %v5855 = vpack.c.bf16 %v5829, %v5828
        %v5856 = vpack.c.bf16 %v5831, %v5830
        %v5857 = vpack.c.bf16 %v5833, %v5832
        %v5858 = vpack.c.bf16 %v5835, %v5834
        %v5859 = vpack.c.bf16 %v5837, %v5836
        %v5860 = vpack.c.bf16 %v5839, %v5838
        %v5861 = vpack.c.bf16 %v5841, %v5840
        %v5862 = vpack.c.bf16 %v5843, %v5842
        %v5863 = vpack.c.bf16 %v5845, %v5844
        %v5882 = vunpack.c.l.b16 %v5846
        %v5883 = vunpack.c.h.b16 %v5846
        %v5884 = vunpack.c.l.b16 %v5847
        %v5885 = vunpack.c.h.b16 %v5847
        %v5886 = vunpack.c.l.b16 %v5848
        %v5887 = vunpack.c.h.b16 %v5848
        %v5888 = vunpack.c.l.b16 %v5849
        %v5889 = vunpack.c.h.b16 %v5849
        %v5890 = vunpack.c.l.b16 %v5850
        %v5891 = vunpack.c.h.b16 %v5850
        %v5892 = vunpack.c.l.b16 %v5851
        %v5893 = vunpack.c.h.b16 %v5851
        %v5894 = vunpack.c.l.b16 %v5852
        %v5895 = vunpack.c.h.b16 %v5852
        %v5896 = vunpack.c.l.b16 %v5853
        %v5897 = vunpack.c.h.b16 %v5853
        %v5898 = vunpack.c.l.b16 %v5854
        %v5899 = vunpack.c.h.b16 %v5854
        %v5900 = vunpack.c.l.b16 %v5855
        %v5901 = vunpack.c.h.b16 %v5855
        %v5902 = vunpack.c.l.b16 %v5856
        %v5903 = vunpack.c.h.b16 %v5856
        %v5904 = vunpack.c.l.b16 %v5857
        %v5905 = vunpack.c.h.b16 %v5857
        %v5906 = vunpack.c.l.b16 %v5858
        %v5907 = vunpack.c.h.b16 %v5858
        %v5908 = vunpack.c.l.b16 %v5859
        %v5909 = vunpack.c.h.b16 %v5859
        %v5910 = vunpack.c.l.b16 %v5860
        %v5911 = vunpack.c.h.b16 %v5860
        %v5912 = vunpack.c.l.b16 %v5861
        %v5913 = vunpack.c.h.b16 %v5861
        %v5914 = vunpack.c.l.b16 %v5862
        %v5915 = vunpack.c.h.b16 %v5862
        %v5916 = vunpack.c.l.b16 %v5863
        %v5917 = vunpack.c.h.b16 %v5863
        %v5918 = vpack.c.b16 %v5882, %v5882
        %v5919 = vpack.c.b16 %v5883, %v5883
        %v5920 = vpack.c.b16 %v5884, %v5884
        %v5921 = vpack.c.b16 %v5885, %v5885
        %v5922 = vpack.c.b16 %v5886, %v5886
        %v5923 = vpack.c.b16 %v5887, %v5887
        %v5924 = vpack.c.b16 %v5888, %v5888
        %v5925 = vpack.c.b16 %v5889, %v5889
        %v5926 = vpack.c.b16 %v5890, %v5890
        %v5927 = vpack.c.b16 %v5891, %v5891
        %v5928 = vpack.c.b16 %v5892, %v5892
        %v5929 = vpack.c.b16 %v5893, %v5893
        %v5930 = vpack.c.b16 %v5894, %v5894
        %v5931 = vpack.c.b16 %v5895, %v5895
        %v5932 = vpack.c.b16 %v5896, %v5896
        %v5933 = vpack.c.b16 %v5897, %v5897
        %v5934 = vpack.c.b16 %v5898, %v5898
        %v5935 = vpack.c.b16 %v5899, %v5899
        %v5936 = vpack.c.b16 %v5900, %v5900
        %v5937 = vpack.c.b16 %v5901, %v5901
        %v5938 = vpack.c.b16 %v5902, %v5902
        %v5939 = vpack.c.b16 %v5903, %v5903
        %v5940 = vpack.c.b16 %v5904, %v5904
        %v5941 = vpack.c.b16 %v5905, %v5905
        %v5942 = vpack.c.b16 %v5906, %v5906
        %v5943 = vpack.c.b16 %v5907, %v5907
        %v5944 = vpack.c.b16 %v5908, %v5908
        %v5945 = vpack.c.b16 %v5909, %v5909
        %v5946 = vpack.c.b16 %v5910, %v5910
        %v5947 = vpack.c.b16 %v5911, %v5911
        %v5948 = vpack.c.b16 %v5912, %v5912
        %v5949 = vpack.c.b16 %v5913, %v5913
        %v5950 = vpack.c.b16 %v5914, %v5914
        %v5951 = vpack.c.b16 %v5915, %v5915
        %v5952 = vpack.c.b16 %v5916, %v5916
        %v5953 = vpack.c.b16 %v5917, %v5917
        %vm5990 = vcmask 27648
        %5991 = vst.msk [vmem:[%s363] sm:$0xf] %vm5990, %v5918
        %5992 = vst.msk [vmem:[%s363 + $0x4] sm:$0xf] %vm5990, %v5919
        %5993 = vst.msk [vmem:[%s363 + $0x8] sm:$0xf] %vm5990, %v5920
        %5994 = vst.msk [vmem:[%s363 + $0xc] sm:$0xf] %vm5990, %v5921
        %5995 = vst.msk [vmem:[%s363 + $0x10] sm:$0xf] %vm5990, %v5922
        %5996 = vst.msk [vmem:[%s363 + $0x14] sm:$0xf] %vm5990, %v5923
        %5997 = vst.msk [vmem:[%s363 + $0x18] sm:$0xf] %vm5990, %v5924
        %5998 = vst.msk [vmem:[%s363 + $0x1c] sm:$0xf] %vm5990, %v5925
        %5999 = vst.msk [vmem:[%s363 + $0x20] sm:$0xf] %vm5990, %v5926
        %6000 = vst.msk [vmem:[%s363 + $0x24] sm:$0xf] %vm5990, %v5927
        %6001 = vst.msk [vmem:[%s363 + $0x28] sm:$0xf] %vm5990, %v5928
        %6002 = vst.msk [vmem:[%s363 + $0x2c] sm:$0xf] %vm5990, %v5929
        %6003 = vst.msk [vmem:[%s363 + $0x30] sm:$0xf] %vm5990, %v5930
        %6004 = vst.msk [vmem:[%s363 + $0x34] sm:$0xf] %vm5990, %v5931
        %6005 = vst.msk [vmem:[%s363 + $0x38] sm:$0xf] %vm5990, %v5932
        %6006 = vst.msk [vmem:[%s363 + $0x3c] sm:$0xf] %vm5990, %v5933
        %6007 = vst.msk [vmem:[%s363 + $0x40] sm:$0xf] %vm5990, %v5934
        %6008 = vst.msk [vmem:[%s363 + $0x44] sm:$0xf] %vm5990, %v5935
        %6009 = vst.msk [vmem:[%s363 + $0x48] sm:$0xf] %vm5990, %v5936
        %6010 = vst.msk [vmem:[%s363 + $0x4c] sm:$0xf] %vm5990, %v5937
        %6011 = vst.msk [vmem:[%s363 + $0x50] sm:$0xf] %vm5990, %v5938
        %6012 = vst.msk [vmem:[%s363 + $0x54] sm:$0xf] %vm5990, %v5939
        %6013 = vst.msk [vmem:[%s363 + $0x58] sm:$0xf] %vm5990, %v5940
        %6014 = vst.msk [vmem:[%s363 + $0x5c] sm:$0xf] %vm5990, %v5941
        %6015 = vst.msk [vmem:[%s363 + $0x60] sm:$0xf] %vm5990, %v5942
        %6016 = vst.msk [vmem:[%s363 + $0x64] sm:$0xf] %vm5990, %v5943
        %6017 = vst.msk [vmem:[%s363 + $0x68] sm:$0xf] %vm5990, %v5944
        %6018 = vst.msk [vmem:[%s363 + $0x6c] sm:$0xf] %vm5990, %v5945
        %6019 = vst.msk [vmem:[%s363 + $0x70] sm:$0xf] %vm5990, %v5946
        %6020 = vst.msk [vmem:[%s363 + $0x74] sm:$0xf] %vm5990, %v5947
        %6021 = vst.msk [vmem:[%s363 + $0x78] sm:$0xf] %vm5990, %v5948
        %6022 = vst.msk [vmem:[%s363 + $0x7c] sm:$0xf] %vm5990, %v5949
        %6023 = vst.msk [vmem:[%s363 + $0x80] sm:$0xf] %vm5990, %v5950
        %6024 = vst.msk [vmem:[%s363 + $0x84] sm:$0xf] %vm5990, %v5951
        %6025 = vst.msk [vmem:[%s363 + $0x88] sm:$0xf] %vm5990, %v5952
        %6026 = vst.msk [vmem:[%s363 + $0x8c] sm:$0xf] %vm5990, %v5953
      $region52: #{pyramid_pooling_module.3} parent=39 // pred_fallthru
        _
      %p6027 = scmp.lt.s32.totalorder %s21, 1
      %s6028 = scalar_select %p6027, %s21, 1
      %p6029 = scmp.lt.s32.totalorder %s22, 0
      %s6030 = scalar_select %p6029, %s22, 0
      %s6031 = smul.addr %s6028, 36
      %s6032 = sadd.s32 %s6030, %s6031
      %s6033 = smul.addr %s6032, 4
      %s6034 = scalar_lea.vmem %s5, %s6033
      // Predicated region
      $region53: #{pyramid_pooling_module.3} parent=39 // pred_check
        %p6035 = pneg %p194
      $region54: #{pyramid_pooling_module.3} parent=39 // pred_check_branch
        %6037 = sbr.rel (%p6035) target = $region56
      $region55: #{pyramid_pooling_module.3} parent=39 // pred_region
        _
      $region56: #{pyramid_pooling_module.3} parent=39 // pred_fallthru
        _
    $region40: #{pyramid_pooling_module.3} parent=5 // pred_fallthru
      _
    %p6038 = scmp.le.s32.totalorder 2, %s11
    // Predicated region
    $region57: #{pyramid_pooling_module.3} parent=5 // pred_check
      %p6039 = pneg %p6038
    $region58: #{pyramid_pooling_module.3} parent=5 // pred_check_branch
      %6041 = sbr.rel (%p6039) target = $region60
    $region59: #{pyramid_pooling_module.3} parent=5 // pred_region
      %s6042 = ssub.s32 %s11, 2
      // Predicated region
      $region61: #{pyramid_pooling_module.3} parent=59 // pred_check
        %p6043 = pneg %p200
      $region62: #{pyramid_pooling_module.3} parent=59 // pred_check_branch
        %6045 = sbr.rel (%p6043) target = $region64
      $region63: #{pyramid_pooling_module.3} parent=59 // pred_region
        %p6046 = scmp.lt.s32.totalorder %s24, 1
        %s6047 = scalar_select %p6046, %s24, 1
        %p6048 = scmp.lt.s32.totalorder %s25, 0
        %s6049 = scalar_select %p6048, %s25, 0
        %s6050 = smul.addr %s6047, 36
        %s6051 = sadd.s32 %s6049, %s6050
        %s6052 = smul.addr %s6051, 4
        %s6053 = scalar_lea.vmem %s5, %s6052
      $region64: #{pyramid_pooling_module.3} parent=59 // pred_fallthru
        _
    $region60: #{pyramid_pooling_module.3} parent=5 // pred_fallthru
      _
  $region6: #{pyramid_pooling_module.3} parent=0 // loop_footer
    %s15 = sadd.s32 1, %s11
  $region7: #{pyramid_pooling_module.3} parent=0 // loop_footer_branch
    %10 = sbr.rel target = $region3
  $region8: #{pyramid_pooling_module.3} parent=0 // loop_exit
    _

</llo_original>
